<compile_context>
chip_gen: v6e
topology: v6e:2x2x1
jax: 0.10.0
libtpu: 0.0.40
codegen_flags: <defaults>
</compile_context>

<pallas_src>
import functools

import jax
import jax.numpy as jnp
from jax import lax
from jax.experimental import pallas as pl
from jax.experimental.pallas import tpu as pltpu


_MXU_DTYPE = jnp.bfloat16
_VMEM_SPEC = pl.BlockSpec(memory_space=pltpu.MemorySpace.VMEM)

# Window offsets (a, b) for the stride-2 forward conv (input phase decomposition).
_WINDOWS = ((0, 0), (0, 1), (1, 0), (1, 1))


# ----------------------------- Pallas kernels ------------------------------


def _down_conv_kernel(xph_ref, w_ref, *refs, ho, wo, pre_act, use_bn, eps):
    """Fused: [LeakyReLU] -> Conv2d(k4,s2,p1,no bias) -> [BatchNorm].

    xph_ref: (N, ho+1, wo+1, 4*Cin) bf16 phase-deinterleaved, zero-padded input.
    w_ref:   (16*Cin, Cout) bf16 K-fused weight (rows ordered window-major).
    output:  (N*ho*wo, Cout) f32.
    """
    if use_bn:
        gamma_ref, beta_ref, o_ref = refs
    else:
        (o_ref,) = refs
    nb = xph_ref.shape[0]
    c4 = xph_ref.shape[3]            # 4*Cin
    m = nb * ho * wo

    x = xph_ref[...]                 # bf16
    if pre_act == "leaky":
        # LeakyReLU(0.2); padding zeros map to zero, so padding-after-activation
        # and activation-after-padding are equivalent.
        x = jnp.where(x > 0, x, 0.2 * x)

    # Single K-fused MXU matmul: columns ordered (window, phase_y, phase_x, ci)
    # to match the packed weight rows.
    patch = jnp.concatenate(
        [x[:, a:a + ho, b:b + wo, :].reshape(m, c4) for a, b in _WINDOWS],
        axis=-1)                                            # (m, 16*Cin)
    acc = jnp.dot(patch, w_ref[...], preferred_element_type=jnp.float32)

    if use_bn:
        # One-pass batch stats (biased variance, like torch training mode).
        inv_m = jnp.float32(1.0 / m)
        mean = jnp.sum(acc, axis=0, keepdims=True) * inv_m
        ex2 = jnp.sum(acc * acc, axis=0, keepdims=True) * inv_m
        var = ex2 - mean * mean
        acc = (acc - mean) * lax.rsqrt(var + eps) * gamma_ref[...] + beta_ref[...]

    o_ref[...] = acc


def _up_conv_kernel(*refs, num_parts, h, w, cout, use_bias, use_bn, use_tanh, eps):
    """Fused: ReLU -> ConvTranspose2d(k4,s2,p1) -> [bias]/[BatchNorm]/[Tanh].

    The concat skip-connection is K-split across `num_parts` inputs and folded
    into the single packed weight.
    refs layout: x_refs[num_parts] (each (N,h+2,w+2,Cp) bf16, zero-padded),
                 w_packed (9*Cin_total, 4*Cout) bf16,
                 [bias (1,4*Cout)], [gamma (1,4*Cout), beta (1,4*Cout)],
                 out (N*h*w, 4*Cout) f32 with lane-packed phases:
                 column = (py*2+px)*Cout + c.
    """
    x_refs = refs[:num_parts]
    w_ref = refs[num_parts]
    idx = num_parts + 1
    bias_ref = gamma_ref = beta_ref = None
    if use_bias:
        bias_ref = refs[idx]
        idx += 1
    if use_bn:
        gamma_ref, beta_ref = refs[idx], refs[idx + 1]
        idx += 2
    o_ref = refs[idx]

    nb = x_refs[0].shape[0]
    m = nb * h * w

    # ReLU pre-activation (ReLU(0)=0, safe on the zero padding), stays bf16.
    xs = [jnp.maximum(x_refs[p][...], 0) for p in range(num_parts)]

    # Single K-fused MXU matmul over the 9 shifted windows; the packed weight
    # has zero blocks for (window, phase) pairs that do not interact, so the
    # dot directly produces all 4 output phases lane-packed along N.
    cols = []
    for sy in range(3):
        for sx in range(3):
            for p in range(num_parts):
                cp = xs[p].shape[-1]
                cols.append(xs[p][:, sy:sy + h, sx:sx + w, :].reshape(m, cp))
    patch = jnp.concatenate(cols, axis=-1)                  # (m, 9*Cin_total)
    out = jnp.dot(patch, w_ref[...], preferred_element_type=jnp.float32)

    if use_bias:
        out = out + bias_ref[...]
    if use_bn:
        # Per-channel stats over all rows AND all 4 phase column-groups.
        inv = jnp.float32(1.0 / (4 * m))
        s1 = jnp.sum(out, axis=0, keepdims=True)            # (1, 4*Cout)
        s2 = jnp.sum(out * out, axis=0, keepdims=True)
        mean_c = (s1[:, 0:cout] + s1[:, cout:2 * cout]
                  + s1[:, 2 * cout:3 * cout] + s1[:, 3 * cout:4 * cout]) * inv
        ex2_c = (s2[:, 0:cout] + s2[:, cout:2 * cout]
                 + s2[:, 2 * cout:3 * cout] + s2[:, 3 * cout:4 * cout]) * inv
        scale_c = lax.rsqrt(ex2_c - mean_c * mean_c + eps)
        mean = jnp.concatenate([mean_c] * 4, axis=-1)
        scale = jnp.concatenate([scale_c] * 4, axis=-1)
        out = (out - mean) * scale * gamma_ref[...] + beta_ref[...]
    if use_tanh:
        out = jnp.tanh(out)

    o_ref[...] = out


# --------------------------- layer wrappers (glue) ---------------------------


def conv_down(x, w_packed, *, pre_act, bn=None, eps=1e-5):
    """[LeakyReLU] -> Conv2d(k4,s2,p1,no bias) -> [BatchNorm].  x: NHWC."""
    n, hgt, wid, cin = x.shape
    cout = w_packed.shape[1]
    ho, wo = hgt // 2, wid // 2
    m = n * ho * wo

    # Stage input as bf16 (halves DMA bytes) and phase-deinterleave the padded
    # input: channel order (ph, pw, ci).
    xb = x.astype(_MXU_DTYPE)
    xp = jnp.pad(xb, ((0, 0), (1, 1), (1, 1), (0, 0)))
    xph = jnp.concatenate(
        [xp[:, ph::2, pw::2, :] for ph in (0, 1) for pw in (0, 1)], axis=-1)

    use_bn = bn is not None
    args = [xph, w_packed]
    if use_bn:
        args += [bn[0], bn[1]]

    kern = functools.partial(_down_conv_kernel, ho=ho, wo=wo, pre_act=pre_act,
                             use_bn=use_bn, eps=eps)
    out = pl.pallas_call(
        kern,
        out_shape=jax.ShapeDtypeStruct((m, cout), jnp.float32),
        in_specs=[_VMEM_SPEC] * len(args),
        out_specs=_VMEM_SPEC,
        cost_estimate=pl.CostEstimate(
            flops=2 * m * 16 * cin * cout,
            transcendentals=0,
            bytes_accessed=xph.size * 2 + w_packed.size * 2 + m * cout * 4),
    )(*args)
    return out.reshape(n, ho, wo, cout)


def conv_up(xs, w_packed, *, bias=None, bn=None, tanh=False, eps=1e-5):
    """ReLU -> ConvTranspose2d(k4,s2,p1) -> [bias] -> [BatchNorm] -> [Tanh].

    xs: list of NHWC inputs (the un-materialized concat parts).
    w_packed: (9*Cin_total, 4*Cout) bf16 pre-packed weight.
    """
    n, h, wd, _ = xs[0].shape
    cin_total = sum(xx.shape[-1] for xx in xs)
    cout4 = w_packed.shape[1]
    cout = cout4 // 4
    m = n * h * wd

    xpads = [jnp.pad(xx.astype(_MXU_DTYPE), ((0, 0), (1, 1), (1, 1), (0, 0)))
             for xx in xs]

    use_bias = bias is not None
    use_bn = bn is not None
    args = list(xpads) + [w_packed]
    if use_bias:
        args.append(bias)
    if use_bn:
        args += [bn[0], bn[1]]

    kern = functools.partial(_up_conv_kernel, num_parts=len(xs), h=h, w=wd,
                             cout=cout, use_bias=use_bias, use_bn=use_bn,
                             use_tanh=tanh, eps=eps)
    out = pl.pallas_call(
        kern,
        out_shape=jax.ShapeDtypeStruct((m, cout4), jnp.float32),
        in_specs=[_VMEM_SPEC] * len(args),
        out_specs=_VMEM_SPEC,
        cost_estimate=pl.CostEstimate(
            flops=2 * m * 9 * cin_total * cout4,
            transcendentals=(m * cout4) if tanh else 0,
            bytes_accessed=sum(xp.size for xp in xpads) * 2
                           + w_packed.size * 2 + m * cout4 * 4),
    )(*args)

    # Interleave lane-packed phases back to NHWC (tiny XLA transpose).
    out = out.reshape(n, h, wd, 2, 2, cout)
    out = jnp.transpose(out, (0, 1, 3, 2, 4, 5)).reshape(n, 2 * h, 2 * wd, cout)
    return out


# ---------------------- one-time parameter re-layout -------------------------


def _pack_down_w(w):
    """(Cout, Cin, 4, 4) torch Conv2d weight -> (16*Cin, Cout) bf16."""
    cout, cin = w.shape[0], w.shape[1]
    mats = []
    for a, b in _WINDOWS:
        sub = w[:, :, 2 * a:2 * a + 2, 2 * b:2 * b + 2]       # (Cout,Cin,2,2)
        mats.append(jnp.transpose(sub, (2, 3, 1, 0)).reshape(4 * cin, cout))
    return jnp.concatenate(mats, axis=0).astype(_MXU_DTYPE)


def _pack_up_w(w, parts_c):
    """(Cin_total, Cout, 4, 4) torch ConvTranspose2d weight -> (9*Cin_total, 4*Cout).

    Rows ordered (window(sy,sx), part, ci); columns ordered (phase(py,px), co).
    (window, phase) pairs that do not interact get zero blocks.
    """
    cout = w.shape[1]
    row_blocks = []
    for sy in range(3):
        for sx in range(3):
            off = 0
            for cp in parts_c:
                wp = w[off:off + cp]
                cols = []
                for py in (0, 1):
                    for px in (0, 1):
                        ky = py + 3 - 2 * sy
                        kx = px + 3 - 2 * sx
                        if 0 <= ky <= 3 and 0 <= kx <= 3:
                            cols.append(wp[:, :, ky, kx])     # (cp, Cout)
                        else:
                            cols.append(jnp.zeros((cp, cout), w.dtype))
                row_blocks.append(jnp.concatenate(cols, axis=-1))
                off += cp
    return jnp.concatenate(row_blocks, axis=0).astype(_MXU_DTYPE)


def _tile4(v):
    """(C,) -> (1, 4*C) f32, matching the lane-packed phase layout."""
    v = v.reshape(1, -1).astype(jnp.float32)
    return jnp.concatenate([v] * 4, axis=-1)


def pack_unet_params(p):
    """Hoisted weight re-layout: packed bf16 matmul weights + tiled BN/bias."""
    ni = p["downconv_w"].shape[0]
    q = {"outermost": p["outermost"], "innermost": p["innermost"],
         "down_w": _pack_down_w(p["downconv_w"]),
         "down_bn": None, "up_bias": None, "up_bn": None, "submodule": None}
    if not (p["outermost"] or p["innermost"]):
        q["down_bn"] = (p["downnorm_g"].reshape(1, -1).astype(jnp.float32),
                        p["downnorm_b"].reshape(1, -1).astype(jnp.float32))
    cin_total = p["upconv_w"].shape[0]
    parts_c = [cin_total] if p["innermost"] else [ni, cin_total - ni]
    q["up_w"] = _pack_up_w(p["upconv_w"], parts_c)
    if p["outermost"]:
        q["up_bias"] = _tile4(p["upconv_b"])
    else:
        q["up_bn"] = (_tile4(p["upnorm_g"]), _tile4(p["upnorm_b"]))
    if p["submodule"] is not None:
        q["submodule"] = pack_unet_params(p["submodule"])
    return q


# ------------------------------ parameter init ------------------------------


def _normal(key, shape, scale=0.02):
    return scale * jax.random.normal(key, shape, jnp.float32)


def init_block(key, nf, ni, submodule=None, input_c=None, dropout=False,
               innermost=False, outermost=False):
    if input_c is None:
        input_c = nf
    k = jax.random.split(key, 3)
    p = {
        "outermost": outermost,
        "innermost": innermost,
        "dropout": dropout,
        "submodule": submodule,
        "downconv_w": _normal(k[0], (ni, input_c, 4, 4)),  # torch Conv2d layout
    }
    if outermost:
        p["upconv_w"] = _normal(k[1], (ni * 2, nf, 4, 4))  # ConvTranspose2d layout
        p["upconv_b"] = _normal(k[2], (nf,))
    elif innermost:
        p["upconv_w"] = _normal(k[1], (ni, nf, 4, 4))
        p["upnorm_g"] = jnp.ones((nf,), jnp.float32)
        p["upnorm_b"] = jnp.zeros((nf,), jnp.float32)
    else:
        p["downnorm_g"] = jnp.ones((ni,), jnp.float32)
        p["downnorm_b"] = jnp.zeros((ni,), jnp.float32)
        p["upconv_w"] = _normal(k[1], (ni * 2, nf, 4, 4))
        p["upnorm_g"] = jnp.ones((nf,), jnp.float32)
        p["upnorm_b"] = jnp.zeros((nf,), jnp.float32)
    return p


def init_unet(key, input_c=1, output_c=2, n_down=5, num_filters=4):
    keys = iter(jax.random.split(key, n_down + 2))
    block = init_block(next(keys), num_filters * 8, num_filters * 8, innermost=True)
    for _ in range(n_down - 5):
        block = init_block(next(keys), num_filters * 8, num_filters * 8,
                           submodule=block, dropout=True)
    out_filters = num_filters * 8
    for _ in range(2):
        block = init_block(next(keys), out_filters // 2, out_filters, submodule=block)
        out_filters //= 2
    return init_block(next(keys), output_c, out_filters, input_c=input_c,
                      submodule=block, outermost=True)


# -------------------------------- forward -----------------------------------


def unet_block_forward(q, x):
    """x: [N,H,W,C] NHWC.  Mirrors UnetBlock.forward.

    Non-outermost blocks return the pair (x, up) instead of materializing
    torch.cat([x, up], 1); the parent's ConvTranspose kernel consumes the two
    parts with K-split packed weights, which is mathematically identical.
    """
    if q["outermost"]:
        d = conv_down(x, q["down_w"], pre_act="none")                 # downconv
        sa, sb = unet_block_forward(q["submodule"], d)                # submodule
        return conv_up([sa, sb], q["up_w"], bias=q["up_bias"], tanh=True)
    elif q["innermost"]:
        d = conv_down(x, q["down_w"], pre_act="leaky")                # LeakyReLU->conv
        u = conv_up([d], q["up_w"], bn=q["up_bn"])
        return x, u                                                   # deferred concat
    else:
        d = conv_down(x, q["down_w"], pre_act="leaky", bn=q["down_bn"])
        sa, sb = unet_block_forward(q["submodule"], d)
        u = conv_up([sa, sb], q["up_w"], bn=q["up_bn"])
        # TODO(synk): training-mode Dropout(0.2) for dropout blocks (n_down > 5)
        # not implemented (not present with n_down=5).
        return x, u                                                   # deferred concat


def unet_forward(packed_params, x_nchw):
    x = jnp.transpose(x_nchw, (0, 2, 3, 1))      # NCHW -> NHWC
    y = unet_block_forward(packed_params, x)
    return jnp.transpose(y, (0, 3, 1, 2))        # NHWC -> NCHW


# ---------------------------------- main -------------------------------------

if __name__ == "__main__":
    key = jax.random.PRNGKey(0)
    pkey, xkey = jax.random.split(key)

    # Small config consistent with the module: input_c=1, output_c=2,
    # n_down=5, num_filters=4  ->  4 downsampling levels, input 16x16.
    params = init_unet(pkey, input_c=1, output_c=2, n_down=5, num_filters=4)
    packed = jax.tree_util.tree_map(lambda a: a, pack_unet_params(params))  # one-time re-layout

    x = jax.random.normal(xkey, (2, 1, 16, 16), jnp.float32)   # NCHW like torch

    fwd = jax.jit(lambda inp: unet_forward(packed, inp))
    y = jax.block_until_ready(fwd(x))

    assert y.shape == (2, 2, 16, 16), y.shape
    assert bool(jnp.all(jnp.isfinite(y)))
    # Final Tanh bounds the output.
    assert bool(jnp.all(jnp.abs(y) <= 1.0 + 1e-6))
    print("KERNEL_OK")
</pallas_src>

<mosaic_0001>
module attributes {stable_mosaic.version = 11 : i64} {
  func.func @_down_conv_kernel(%arg0: memref<2x9x9x4xbf16, #tpu.memory_space<vmem>>, %arg1: memref<16x8xbf16, #tpu.memory_space<vmem>>, %arg2: memref<128x8xf32, #tpu.memory_space<vmem>>) attributes {dimension_semantics = [], scalar_prefetch = 0 : i64, scratch_operands = 0 : i64, tpu.core_type = #tpu.core_type<tc>} {
    %c0 = arith.constant 0 : index
    %c0_0 = arith.constant 0 : index
    %c0_1 = arith.constant 0 : index
    %c0_2 = arith.constant 0 : index
    %0 = vector.load %arg0[%c0, %c0_0, %c0_1, %c0_2] : memref<2x9x9x4xbf16, #tpu.memory_space<vmem>>, vector<2x9x9x4xbf16>
    %1 = vector.extract_strided_slice %0 {offsets = [0, 0, 0, 0], sizes = [2, 8, 8, 4], strides = [1, 1, 1, 1]} : vector<2x9x9x4xbf16> to vector<2x8x8x4xbf16>
    %2 = vector.shape_cast %1 : vector<2x8x8x4xbf16> to vector<128x4xbf16>
    %3 = vector.extract_strided_slice %0 {offsets = [0, 0, 1, 0], sizes = [2, 8, 8, 4], strides = [1, 1, 1, 1]} : vector<2x9x9x4xbf16> to vector<2x8x8x4xbf16>
    %4 = vector.shape_cast %3 : vector<2x8x8x4xbf16> to vector<128x4xbf16>
    %5 = vector.extract_strided_slice %0 {offsets = [0, 1, 0, 0], sizes = [2, 8, 8, 4], strides = [1, 1, 1, 1]} : vector<2x9x9x4xbf16> to vector<2x8x8x4xbf16>
    %6 = vector.shape_cast %5 : vector<2x8x8x4xbf16> to vector<128x4xbf16>
    %7 = vector.extract_strided_slice %0 {offsets = [0, 1, 1, 0], sizes = [2, 8, 8, 4], strides = [1, 1, 1, 1]} : vector<2x9x9x4xbf16> to vector<2x8x8x4xbf16>
    %8 = vector.shape_cast %7 : vector<2x8x8x4xbf16> to vector<128x4xbf16>
    %9 = tpu.concatenate %2, %4, %6, %8 in 1 : vector<128x4xbf16>, vector<128x4xbf16>, vector<128x4xbf16>, vector<128x4xbf16> -> vector<128x16xbf16>
    %c0_3 = arith.constant 0 : index
    %c0_4 = arith.constant 0 : index
    %10 = vector.load %arg1[%c0_3, %c0_4] : memref<16x8xbf16, #tpu.memory_space<vmem>>, vector<16x8xbf16>
    %cst = arith.constant dense<0.000000e+00> : vector<128x8xf32>
    %11 = tpu.matmul %9, %10, %cst {dimension_numbers = #tpu.dot_dimension_numbers<[1], [0], [0], [1], [0, 0, 1, 1], [], []>} : vector<128x16xbf16>, vector<16x8xbf16>, vector<128x8xf32> -> vector<128x8xf32>
    %c0_5 = arith.constant 0 : index
    %c0_6 = arith.constant 0 : index
    %12 = vector.load %arg2[%c0_5, %c0_6] : memref<128x8xf32, #tpu.memory_space<vmem>>, vector<128x8xf32>
    tpu.vector_store %arg2[%c0_5, %c0_6], %11 {strides = array<i32>} : memref<128x8xf32, #tpu.memory_space<vmem>>, vector<128x8xf32>,
    return
  }
}

module attributes {stable_mosaic.version = 11 : i64} {
  func.func @_down_conv_kernel(%arg0: memref<2x5x5x32xbf16, #tpu.memory_space<vmem>>, %arg1: memref<128x16xbf16, #tpu.memory_space<vmem>>, %arg2: memref<1x16xf32, #tpu.memory_space<vmem>>, %arg3: memref<1x16xf32, #tpu.memory_space<vmem>>, %arg4: memref<32x16xf32, #tpu.memory_space<vmem>>) attributes {dimension_semantics = [], scalar_prefetch = 0 : i64, scratch_operands = 0 : i64, tpu.core_type = #tpu.core_type<tc>} {
    %c0 = arith.constant 0 : index
    %c0_0 = arith.constant 0 : index
    %c0_1 = arith.constant 0 : index
    %c0_2 = arith.constant 0 : index
    %0 = vector.load %arg0[%c0, %c0_0, %c0_1, %c0_2] : memref<2x5x5x32xbf16, #tpu.memory_space<vmem>>, vector<2x5x5x32xbf16>
    %cst = arith.constant 0.000000e+00 : bf16
    %1 = vector.broadcast %cst : bf16 to vector<2x5x5x32xbf16>
    %2 = arith.cmpf ogt, %0, %1 : vector<2x5x5x32xbf16>
    %cst_3 = arith.constant 2.001950e-01 : bf16
    %3 = vector.broadcast %cst_3 : bf16 to vector<2x5x5x32xbf16>
    %4 = arith.mulf %3, %0 : vector<2x5x5x32xbf16>
    %5 = arith.select %2, %0, %4 : vector<2x5x5x32xi1>, vector<2x5x5x32xbf16>
    %6 = vector.extract_strided_slice %5 {offsets = [0, 0, 0, 0], sizes = [2, 4, 4, 32], strides = [1, 1, 1, 1]} : vector<2x5x5x32xbf16> to vector<2x4x4x32xbf16>
    %7 = vector.shape_cast %6 : vector<2x4x4x32xbf16> to vector<32x32xbf16>
    %8 = vector.extract_strided_slice %5 {offsets = [0, 0, 1, 0], sizes = [2, 4, 4, 32], strides = [1, 1, 1, 1]} : vector<2x5x5x32xbf16> to vector<2x4x4x32xbf16>
    %9 = vector.shape_cast %8 : vector<2x4x4x32xbf16> to vector<32x32xbf16>
    %10 = vector.extract_strided_slice %5 {offsets = [0, 1, 0, 0], sizes = [2, 4, 4, 32], strides = [1, 1, 1, 1]} : vector<2x5x5x32xbf16> to vector<2x4x4x32xbf16>
    %11 = vector.shape_cast %10 : vector<2x4x4x32xbf16> to vector<32x32xbf16>
    %12 = vector.extract_strided_slice %5 {offsets = [0, 1, 1, 0], sizes = [2, 4, 4, 32], strides = [1, 1, 1, 1]} : vector<2x5x5x32xbf16> to vector<2x4x4x32xbf16>
    %13 = vector.shape_cast %12 : vector<2x4x4x32xbf16> to vector<32x32xbf16>
    %14 = tpu.concatenate %7, %9, %11, %13 in 1 : vector<32x32xbf16>, vector<32x32xbf16>, vector<32x32xbf16>, vector<32x32xbf16> -> vector<32x128xbf16>
    %c0_4 = arith.constant 0 : index
    %c0_5 = arith.constant 0 : index
    %15 = vector.load %arg1[%c0_4, %c0_5] : memref<128x16xbf16, #tpu.memory_space<vmem>>, vector<128x16xbf16>
    %cst_6 = arith.constant dense<0.000000e+00> : vector<32x16xf32>
    %16 = tpu.matmul %14, %15, %cst_6 {dimension_numbers = #tpu.dot_dimension_numbers<[1], [0], [0], [1], [0, 0, 1, 1], [], []>} : vector<32x128xbf16>, vector<128x16xbf16>, vector<32x16xf32> -> vector<32x16xf32>
    %cst_7 = arith.constant dense<0.000000e+00> : vector<16xf32>
    %17 = vector.multi_reduction <add>, %16, %cst_7 [0] : vector<32x16xf32> to vector<16xf32>
    %18 = vector.shape_cast %17 : vector<16xf32> to vector<1x16xf32>
    %cst_8 = arith.constant 3.125000e-02 : f32
    %19 = vector.broadcast %cst_8 : f32 to vector<1x16xf32>
    %20 = arith.mulf %18, %19 : vector<1x16xf32>
    %21 = arith.mulf %16, %16 : vector<32x16xf32>
    %cst_9 = arith.constant dense<0.000000e+00> : vector<16xf32>
    %22 = vector.multi_reduction <add>, %21, %cst_9 [0] : vector<32x16xf32> to vector<16xf32>
    %23 = vector.shape_cast %22 : vector<16xf32> to vector<1x16xf32>
    %cst_10 = arith.constant 3.125000e-02 : f32
    %24 = vector.broadcast %cst_10 : f32 to vector<1x16xf32>
    %25 = arith.mulf %23, %24 : vector<1x16xf32>
    %26 = arith.mulf %20, %20 : vector<1x16xf32>
    %27 = arith.subf %25, %26 : vector<1x16xf32>
    %28 = vector.broadcast %20 : vector<1x16xf32> to vector<32x16xf32>
    %29 = arith.subf %16, %28 : vector<32x16xf32>
    %cst_11 = arith.constant 9.99999974E-6 : f32
    %30 = vector.broadcast %cst_11 : f32 to vector<1x16xf32>
    %31 = arith.addf %27, %30 : vector<1x16xf32>
    %32 = math.rsqrt %31 : vector<1x16xf32>
    %33 = vector.broadcast %32 : vector<1x16xf32> to vector<32x16xf32>
    %34 = arith.mulf %29, %33 : vector<32x16xf32>
    %c0_12 = arith.constant 0 : index
    %c0_13 = arith.constant 0 : index
    %35 = vector.load %arg2[%c0_12, %c0_13] : memref<1x16xf32, #tpu.memory_space<vmem>>, vector<1x16xf32>
    %36 = vector.broadcast %35 : vector<1x16xf32> to vector<32x16xf32>
    %37 = arith.mulf %34, %36 : vector<32x16xf32>
    %c0_14 = arith.constant 0 : index
    %c0_15 = arith.constant 0 : index
    %38 = vector.load %arg3[%c0_14, %c0_15] : memref<1x16xf32, #tpu.memory_space<vmem>>, vector<1x16xf32>
    %39 = vector.broadcast %38 : vector<1x16xf32> to vector<32x16xf32>
    %40 = arith.addf %37, %39 : vector<32x16xf32>
    %c0_16 = arith.constant 0 : index
    %c0_17 = arith.constant 0 : index
    %41 = vector.load %arg4[%c0_16, %c0_17] : memref<32x16xf32, #tpu.memory_space<vmem>>, vector<32x16xf32>
    tpu.vector_store %arg4[%c0_16, %c0_17], %40 {strides = array<i32>} : memref<32x16xf32, #tpu.memory_space<vmem>>, vector<32x16xf32>,
    return
  }
}

module attributes {stable_mosaic.version = 11 : i64} {
  func.func @_down_conv_kernel(%arg0: memref<2x3x3x64xbf16, #tpu.memory_space<vmem>>, %arg1: memref<256x32xbf16, #tpu.memory_space<vmem>>, %arg2: memref<1x32xf32, #tpu.memory_space<vmem>>, %arg3: memref<1x32xf32, #tpu.memory_space<vmem>>, %arg4: memref<8x32xf32, #tpu.memory_space<vmem>>) attributes {dimension_semantics = [], scalar_prefetch = 0 : i64, scratch_operands = 0 : i64, tpu.core_type = #tpu.core_type<tc>} {
    %c0 = arith.constant 0 : index
    %c0_0 = arith.constant 0 : index
    %c0_1 = arith.constant 0 : index
    %c0_2 = arith.constant 0 : index
    %0 = vector.load %arg0[%c0, %c0_0, %c0_1, %c0_2] : memref<2x3x3x64xbf16, #tpu.memory_space<vmem>>, vector<2x3x3x64xbf16>
    %cst = arith.constant 0.000000e+00 : bf16
    %1 = vector.broadcast %cst : bf16 to vector<2x3x3x64xbf16>
    %2 = arith.cmpf ogt, %0, %1 : vector<2x3x3x64xbf16>
    %cst_3 = arith.constant 2.001950e-01 : bf16
    %3 = vector.broadcast %cst_3 : bf16 to vector<2x3x3x64xbf16>
    %4 = arith.mulf %3, %0 : vector<2x3x3x64xbf16>
    %5 = arith.select %2, %0, %4 : vector<2x3x3x64xi1>, vector<2x3x3x64xbf16>
    %6 = vector.extract_strided_slice %5 {offsets = [0, 0, 0, 0], sizes = [2, 2, 2, 64], strides = [1, 1, 1, 1]} : vector<2x3x3x64xbf16> to vector<2x2x2x64xbf16>
    %7 = vector.shape_cast %6 : vector<2x2x2x64xbf16> to vector<8x64xbf16>
    %8 = vector.extract_strided_slice %5 {offsets = [0, 0, 1, 0], sizes = [2, 2, 2, 64], strides = [1, 1, 1, 1]} : vector<2x3x3x64xbf16> to vector<2x2x2x64xbf16>
    %9 = vector.shape_cast %8 : vector<2x2x2x64xbf16> to vector<8x64xbf16>
    %10 = vector.extract_strided_slice %5 {offsets = [0, 1, 0, 0], sizes = [2, 2, 2, 64], strides = [1, 1, 1, 1]} : vector<2x3x3x64xbf16> to vector<2x2x2x64xbf16>
    %11 = vector.shape_cast %10 : vector<2x2x2x64xbf16> to vector<8x64xbf16>
    %12 = vector.extract_strided_slice %5 {offsets = [0, 1, 1, 0], sizes = [2, 2, 2, 64], strides = [1, 1, 1, 1]} : vector<2x3x3x64xbf16> to vector<2x2x2x64xbf16>
    %13 = vector.shape_cast %12 : vector<2x2x2x64xbf16> to vector<8x64xbf16>
    %14 = tpu.concatenate %7, %9, %11, %13 in 1 : vector<8x64xbf16>, vector<8x64xbf16>, vector<8x64xbf16>, vector<8x64xbf16> -> vector<8x256xbf16>
    %c0_4 = arith.constant 0 : index
    %c0_5 = arith.constant 0 : index
    %15 = vector.load %arg1[%c0_4, %c0_5] : memref<256x32xbf16, #tpu.memory_space<vmem>>, vector<256x32xbf16>
    %cst_6 = arith.constant dense<0.000000e+00> : vector<8x32xf32>
    %16 = tpu.matmul %14, %15, %cst_6 {dimension_numbers = #tpu.dot_dimension_numbers<[1], [0], [0], [1], [0, 0, 1, 1], [], []>} : vector<8x256xbf16>, vector<256x32xbf16>, vector<8x32xf32> -> vector<8x32xf32>
    %cst_7 = arith.constant dense<0.000000e+00> : vector<32xf32>
    %17 = vector.multi_reduction <add>, %16, %cst_7 [0] : vector<8x32xf32> to vector<32xf32>
    %18 = vector.shape_cast %17 : vector<32xf32> to vector<1x32xf32>
    %cst_8 = arith.constant 1.250000e-01 : f32
    %19 = vector.broadcast %cst_8 : f32 to vector<1x32xf32>
    %20 = arith.mulf %18, %19 : vector<1x32xf32>
    %21 = arith.mulf %16, %16 : vector<8x32xf32>
    %cst_9 = arith.constant dense<0.000000e+00> : vector<32xf32>
    %22 = vector.multi_reduction <add>, %21, %cst_9 [0] : vector<8x32xf32> to vector<32xf32>
    %23 = vector.shape_cast %22 : vector<32xf32> to vector<1x32xf32>
    %cst_10 = arith.constant 1.250000e-01 : f32
    %24 = vector.broadcast %cst_10 : f32 to vector<1x32xf32>
    %25 = arith.mulf %23, %24 : vector<1x32xf32>
    %26 = arith.mulf %20, %20 : vector<1x32xf32>
    %27 = arith.subf %25, %26 : vector<1x32xf32>
    %28 = vector.broadcast %20 : vector<1x32xf32> to vector<8x32xf32>
    %29 = arith.subf %16, %28 : vector<8x32xf32>
    %cst_11 = arith.constant 9.99999974E-6 : f32
    %30 = vector.broadcast %cst_11 : f32 to vector<1x32xf32>
    %31 = arith.addf %27, %30 : vector<1x32xf32>
    %32 = math.rsqrt %31 : vector<1x32xf32>
    %33 = vector.broadcast %32 : vector<1x32xf32> to vector<8x32xf32>
    %34 = arith.mulf %29, %33 : vector<8x32xf32>
    %c0_12 = arith.constant 0 : index
    %c0_13 = arith.constant 0 : index
    %35 = vector.load %arg2[%c0_12, %c0_13] : memref<1x32xf32, #tpu.memory_space<vmem>>, vector<1x32xf32>
    %36 = vector.broadcast %35 : vector<1x32xf32> to vector<8x32xf32>
    %37 = arith.mulf %34, %36 : vector<8x32xf32>
    %c0_14 = arith.constant 0 : index
    %c0_15 = arith.constant 0 : index
    %38 = vector.load %arg3[%c0_14, %c0_15] : memref<1x32xf32, #tpu.memory_space<vmem>>, vector<1x32xf32>
    %39 = vector.broadcast %38 : vector<1x32xf32> to vector<8x32xf32>
    %40 = arith.addf %37, %39 : vector<8x32xf32>
    %c0_16 = arith.constant 0 : index
    %c0_17 = arith.constant 0 : index
    %41 = vector.load %arg4[%c0_16, %c0_17] : memref<8x32xf32, #tpu.memory_space<vmem>>, vector<8x32xf32>
    tpu.vector_store %arg4[%c0_16, %c0_17], %40 {strides = array<i32>} : memref<8x32xf32, #tpu.memory_space<vmem>>, vector<8x32xf32>,
    return
  }
}

module attributes {stable_mosaic.version = 11 : i64} {
  func.func @_down_conv_kernel(%arg0: memref<2x2x2x128xbf16, #tpu.memory_space<vmem>>, %arg1: memref<512x32xbf16, #tpu.memory_space<vmem>>, %arg2: memref<2x32xf32, #tpu.memory_space<vmem>>) attributes {dimension_semantics = [], scalar_prefetch = 0 : i64, scratch_operands = 0 : i64, tpu.core_type = #tpu.core_type<tc>} {
    %c0 = arith.constant 0 : index
    %c0_0 = arith.constant 0 : index
    %c0_1 = arith.constant 0 : index
    %c0_2 = arith.constant 0 : index
    %0 = vector.load %arg0[%c0, %c0_0, %c0_1, %c0_2] : memref<2x2x2x128xbf16, #tpu.memory_space<vmem>>, vector<2x2x2x128xbf16>
    %cst = arith.constant 0.000000e+00 : bf16
    %1 = vector.broadcast %cst : bf16 to vector<2x2x2x128xbf16>
    %2 = arith.cmpf ogt, %0, %1 : vector<2x2x2x128xbf16>
    %cst_3 = arith.constant 2.001950e-01 : bf16
    %3 = vector.broadcast %cst_3 : bf16 to vector<2x2x2x128xbf16>
    %4 = arith.mulf %3, %0 : vector<2x2x2x128xbf16>
    %5 = arith.select %2, %0, %4 : vector<2x2x2x128xi1>, vector<2x2x2x128xbf16>
    %6 = vector.extract_strided_slice %5 {offsets = [0, 0, 0, 0], sizes = [2, 1, 1, 128], strides = [1, 1, 1, 1]} : vector<2x2x2x128xbf16> to vector<2x1x1x128xbf16>
    %7 = vector.shape_cast %6 : vector<2x1x1x128xbf16> to vector<2x128xbf16>
    %8 = vector.extract_strided_slice %5 {offsets = [0, 0, 1, 0], sizes = [2, 1, 1, 128], strides = [1, 1, 1, 1]} : vector<2x2x2x128xbf16> to vector<2x1x1x128xbf16>
    %9 = vector.shape_cast %8 : vector<2x1x1x128xbf16> to vector<2x128xbf16>
    %10 = vector.extract_strided_slice %5 {offsets = [0, 1, 0, 0], sizes = [2, 1, 1, 128], strides = [1, 1, 1, 1]} : vector<2x2x2x128xbf16> to vector<2x1x1x128xbf16>
    %11 = vector.shape_cast %10 : vector<2x1x1x128xbf16> to vector<2x128xbf16>
    %12 = vector.extract_strided_slice %5 {offsets = [0, 1, 1, 0], sizes = [2, 1, 1, 128], strides = [1, 1, 1, 1]} : vector<2x2x2x128xbf16> to vector<2x1x1x128xbf16>
    %13 = vector.shape_cast %12 : vector<2x1x1x128xbf16> to vector<2x128xbf16>
    %14 = tpu.concatenate %7, %9, %11, %13 in 1 : vector<2x128xbf16>, vector<2x128xbf16>, vector<2x128xbf16>, vector<2x128xbf16> -> vector<2x512xbf16>
    %c0_4 = arith.constant 0 : index
    %c0_5 = arith.constant 0 : index
    %15 = vector.load %arg1[%c0_4, %c0_5] : memref<512x32xbf16, #tpu.memory_space<vmem>>, vector<512x32xbf16>
    %cst_6 = arith.constant dense<0.000000e+00> : vector<2x32xf32>
    %16 = tpu.matmul %14, %15, %cst_6 {dimension_numbers = #tpu.dot_dimension_numbers<[1], [0], [0], [1], [0, 0, 1, 1], [], []>} : vector<2x512xbf16>, vector<512x32xbf16>, vector<2x32xf32> -> vector<2x32xf32>
    %c0_7 = arith.constant 0 : index
    %c0_8 = arith.constant 0 : index
    %17 = vector.load %arg2[%c0_7, %c0_8] : memref<2x32xf32, #tpu.memory_space<vmem>>, vector<2x32xf32>
    tpu.vector_store %arg2[%c0_7, %c0_8], %16 {strides = array<i32>} : memref<2x32xf32, #tpu.memory_space<vmem>>, vector<2x32xf32>,
    return
  }
}

module attributes {stable_mosaic.version = 11 : i64} {
  func.func @_up_conv_kernel(%arg0: memref<2x3x3x32xbf16, #tpu.memory_space<vmem>>, %arg1: memref<288x128xbf16, #tpu.memory_space<vmem>>, %arg2: memref<1x128xf32, #tpu.memory_space<vmem>>, %arg3: memref<1x128xf32, #tpu.memory_space<vmem>>, %arg4: memref<2x128xf32, #tpu.memory_space<vmem>>) attributes {dimension_semantics = [], scalar_prefetch = 0 : i64, scratch_operands = 0 : i64, tpu.core_type = #tpu.core_type<tc>} {
    %c0 = arith.constant 0 : index
    %c0_0 = arith.constant 0 : index
    %c0_1 = arith.constant 0 : index
    %c0_2 = arith.constant 0 : index
    %0 = vector.load %arg0[%c0, %c0_0, %c0_1, %c0_2] : memref<2x3x3x32xbf16, #tpu.memory_space<vmem>>, vector<2x3x3x32xbf16>
    %cst = arith.constant 0.000000e+00 : bf16
    %1 = vector.broadcast %cst : bf16 to vector<2x3x3x32xbf16>
    %2 = arith.maximumf %0, %1 : vector<2x3x3x32xbf16>
    %3 = vector.extract_strided_slice %2 {offsets = [0, 0, 0, 0], sizes = [2, 1, 1, 32], strides = [1, 1, 1, 1]} : vector<2x3x3x32xbf16> to vector<2x1x1x32xbf16>
    %4 = vector.shape_cast %3 : vector<2x1x1x32xbf16> to vector<2x32xbf16>
    %5 = vector.extract_strided_slice %2 {offsets = [0, 0, 1, 0], sizes = [2, 1, 1, 32], strides = [1, 1, 1, 1]} : vector<2x3x3x32xbf16> to vector<2x1x1x32xbf16>
    %6 = vector.shape_cast %5 : vector<2x1x1x32xbf16> to vector<2x32xbf16>
    %7 = vector.extract_strided_slice %2 {offsets = [0, 0, 2, 0], sizes = [2, 1, 1, 32], strides = [1, 1, 1, 1]} : vector<2x3x3x32xbf16> to vector<2x1x1x32xbf16>
    %8 = vector.shape_cast %7 : vector<2x1x1x32xbf16> to vector<2x32xbf16>
    %9 = vector.extract_strided_slice %2 {offsets = [0, 1, 0, 0], sizes = [2, 1, 1, 32], strides = [1, 1, 1, 1]} : vector<2x3x3x32xbf16> to vector<2x1x1x32xbf16>
    %10 = vector.shape_cast %9 : vector<2x1x1x32xbf16> to vector<2x32xbf16>
    %11 = vector.extract_strided_slice %2 {offsets = [0, 1, 1, 0], sizes = [2, 1, 1, 32], strides = [1, 1, 1, 1]} : vector<2x3x3x32xbf16> to vector<2x1x1x32xbf16>
    %12 = vector.shape_cast %11 : vector<2x1x1x32xbf16> to vector<2x32xbf16>
    %13 = vector.extract_strided_slice %2 {offsets = [0, 1, 2, 0], sizes = [2, 1, 1, 32], strides = [1, 1, 1, 1]} : vector<2x3x3x32xbf16> to vector<2x1x1x32xbf16>
    %14 = vector.shape_cast %13 : vector<2x1x1x32xbf16> to vector<2x32xbf16>
    %15 = vector.extract_strided_slice %2 {offsets = [0, 2, 0, 0], sizes = [2, 1, 1, 32], strides = [1, 1, 1, 1]} : vector<2x3x3x32xbf16> to vector<2x1x1x32xbf16>
    %16 = vector.shape_cast %15 : vector<2x1x1x32xbf16> to vector<2x32xbf16>
    %17 = vector.extract_strided_slice %2 {offsets = [0, 2, 1, 0], sizes = [2, 1, 1, 32], strides = [1, 1, 1, 1]} : vector<2x3x3x32xbf16> to vector<2x1x1x32xbf16>
    %18 = vector.shape_cast %17 : vector<2x1x1x32xbf16> to vector<2x32xbf16>
    %19 = vector.extract_strided_slice %2 {offsets = [0, 2, 2, 0], sizes = [2, 1, 1, 32], strides = [1, 1, 1, 1]} : vector<2x3x3x32xbf16> to vector<2x1x1x32xbf16>
    %20 = vector.shape_cast %19 : vector<2x1x1x32xbf16> to vector<2x32xbf16>
    %21 = tpu.concatenate %4, %6, %8, %10, %12, %14, %16, %18, %20 in 1 : vector<2x32xbf16>, vector<2x32xbf16>, vector<2x32xbf16>, vector<2x32xbf16>, vector<2x32xbf16>, vector<2x32xbf16>, vector<2x32xbf16>, vector<2x32xbf16>, vector<2x32xbf16> -> vector<2x288xbf16>
    %c0_3 = arith.constant 0 : index
    %c0_4 = arith.constant 0 : index
    %22 = vector.load %arg1[%c0_3, %c0_4] : memref<288x128xbf16, #tpu.memory_space<vmem>>, vector<288x128xbf16>
    %cst_5 = arith.constant dense<0.000000e+00> : vector<2x128xf32>
    %23 = tpu.matmul %21, %22, %cst_5 {dimension_numbers = #tpu.dot_dimension_numbers<[1], [0], [0], [1], [0, 0, 1, 1], [], []>} : vector<2x288xbf16>, vector<288x128xbf16>, vector<2x128xf32> -> vector<2x128xf32>
    %cst_6 = arith.constant dense<0.000000e+00> : vector<128xf32>
    %24 = vector.multi_reduction <add>, %23, %cst_6 [0] : vector<2x128xf32> to vector<128xf32>
    %25 = vector.shape_cast %24 : vector<128xf32> to vector<1x128xf32>
    %26 = arith.mulf %23, %23 : vector<2x128xf32>
    %cst_7 = arith.constant dense<0.000000e+00> : vector<128xf32>
    %27 = vector.multi_reduction <add>, %26, %cst_7 [0] : vector<2x128xf32> to vector<128xf32>
    %28 = vector.shape_cast %27 : vector<128xf32> to vector<1x128xf32>
    %29 = vector.extract_strided_slice %25 {offsets = [0, 0], sizes = [1, 32], strides = [1, 1]} : vector<1x128xf32> to vector<1x32xf32>
    %30 = vector.extract_strided_slice %25 {offsets = [0, 32], sizes = [1, 32], strides = [1, 1]} : vector<1x128xf32> to vector<1x32xf32>
    %31 = arith.addf %29, %30 : vector<1x32xf32>
    %32 = vector.extract_strided_slice %25 {offsets = [0, 64], sizes = [1, 32], strides = [1, 1]} : vector<1x128xf32> to vector<1x32xf32>
    %33 = arith.addf %31, %32 : vector<1x32xf32>
    %34 = vector.extract_strided_slice %25 {offsets = [0, 96], sizes = [1, 32], strides = [1, 1]} : vector<1x128xf32> to vector<1x32xf32>
    %35 = arith.addf %33, %34 : vector<1x32xf32>
    %cst_8 = arith.constant 1.250000e-01 : f32
    %36 = vector.broadcast %cst_8 : f32 to vector<1x32xf32>
    %37 = arith.mulf %35, %36 : vector<1x32xf32>
    %38 = vector.extract_strided_slice %28 {offsets = [0, 0], sizes = [1, 32], strides = [1, 1]} : vector<1x128xf32> to vector<1x32xf32>
    %39 = vector.extract_strided_slice %28 {offsets = [0, 32], sizes = [1, 32], strides = [1, 1]} : vector<1x128xf32> to vector<1x32xf32>
    %40 = arith.addf %38, %39 : vector<1x32xf32>
    %41 = vector.extract_strided_slice %28 {offsets = [0, 64], sizes = [1, 32], strides = [1, 1]} : vector<1x128xf32> to vector<1x32xf32>
    %42 = arith.addf %40, %41 : vector<1x32xf32>
    %43 = vector.extract_strided_slice %28 {offsets = [0, 96], sizes = [1, 32], strides = [1, 1]} : vector<1x128xf32> to vector<1x32xf32>
    %44 = arith.addf %42, %43 : vector<1x32xf32>
    %cst_9 = arith.constant 1.250000e-01 : f32
    %45 = vector.broadcast %cst_9 : f32 to vector<1x32xf32>
    %46 = arith.mulf %44, %45 : vector<1x32xf32>
    %47 = arith.mulf %37, %37 : vector<1x32xf32>
    %48 = arith.subf %46, %47 : vector<1x32xf32>
    %cst_10 = arith.constant 9.99999974E-6 : f32
    %49 = vector.broadcast %cst_10 : f32 to vector<1x32xf32>
    %50 = arith.addf %48, %49 : vector<1x32xf32>
    %51 = math.rsqrt %50 : vector<1x32xf32>
    %52 = tpu.concatenate %37, %37, %37, %37 in 1 : vector<1x32xf32>, vector<1x32xf32>, vector<1x32xf32>, vector<1x32xf32> -> vector<1x128xf32>
    %53 = tpu.concatenate %51, %51, %51, %51 in 1 : vector<1x32xf32>, vector<1x32xf32>, vector<1x32xf32>, vector<1x32xf32> -> vector<1x128xf32>
    %54 = vector.broadcast %52 : vector<1x128xf32> to vector<2x128xf32>
    %55 = arith.subf %23, %54 : vector<2x128xf32>
    %56 = vector.broadcast %53 : vector<1x128xf32> to vector<2x128xf32>
    %57 = arith.mulf %55, %56 : vector<2x128xf32>
    %c0_11 = arith.constant 0 : index
    %c0_12 = arith.constant 0 : index
    %58 = vector.load %arg2[%c0_11, %c0_12] : memref<1x128xf32, #tpu.memory_space<vmem>>, vector<1x128xf32>
    %59 = vector.broadcast %58 : vector<1x128xf32> to vector<2x128xf32>
    %60 = arith.mulf %57, %59 : vector<2x128xf32>
    %c0_13 = arith.constant 0 : index
    %c0_14 = arith.constant 0 : index
    %61 = vector.load %arg3[%c0_13, %c0_14] : memref<1x128xf32, #tpu.memory_space<vmem>>, vector<1x128xf32>
    %62 = vector.broadcast %61 : vector<1x128xf32> to vector<2x128xf32>
    %63 = arith.addf %60, %62 : vector<2x128xf32>
    %c0_15 = arith.constant 0 : index
    %c0_16 = arith.constant 0 : index
    %64 = vector.load %arg4[%c0_15, %c0_16] : memref<2x128xf32, #tpu.memory_space<vmem>>, vector<2x128xf32>
    tpu.vector_store %arg4[%c0_15, %c0_16], %63 {strides = array<i32>} : memref<2x128xf32, #tpu.memory_space<vmem>>, vector<2x128xf32>,
    return
  }
}

module attributes {stable_mosaic.version = 11 : i64} {
  func.func @_up_conv_kernel(%arg0: memref<2x4x4x32xbf16, #tpu.memory_space<vmem>>, %arg1: memref<2x4x4x32xbf16, #tpu.memory_space<vmem>>, %arg2: memref<576x64xbf16, #tpu.memory_space<vmem>>, %arg3: memref<1x64xf32, #tpu.memory_space<vmem>>, %arg4: memref<1x64xf32, #tpu.memory_space<vmem>>, %arg5: memref<8x64xf32, #tpu.memory_space<vmem>>) attributes {dimension_semantics = [], scalar_prefetch = 0 : i64, scratch_operands = 0 : i64, tpu.core_type = #tpu.core_type<tc>} {
    %c0 = arith.constant 0 : index
    %c0_0 = arith.constant 0 : index
    %c0_1 = arith.constant 0 : index
    %c0_2 = arith.constant 0 : index
    %0 = vector.load %arg0[%c0, %c0_0, %c0_1, %c0_2] : memref<2x4x4x32xbf16, #tpu.memory_space<vmem>>, vector<2x4x4x32xbf16>
    %cst = arith.constant 0.000000e+00 : bf16
    %1 = vector.broadcast %cst : bf16 to vector<2x4x4x32xbf16>
    %2 = arith.maximumf %0, %1 : vector<2x4x4x32xbf16>
    %c0_3 = arith.constant 0 : index
    %c0_4 = arith.constant 0 : index
    %c0_5 = arith.constant 0 : index
    %c0_6 = arith.constant 0 : index
    %3 = vector.load %arg1[%c0_3, %c0_4, %c0_5, %c0_6] : memref<2x4x4x32xbf16, #tpu.memory_space<vmem>>, vector<2x4x4x32xbf16>
    %cst_7 = arith.constant 0.000000e+00 : bf16
    %4 = vector.broadcast %cst_7 : bf16 to vector<2x4x4x32xbf16>
    %5 = arith.maximumf %3, %4 : vector<2x4x4x32xbf16>
    %6 = vector.extract_strided_slice %2 {offsets = [0, 0, 0, 0], sizes = [2, 2, 2, 32], strides = [1, 1, 1, 1]} : vector<2x4x4x32xbf16> to vector<2x2x2x32xbf16>
    %7 = vector.shape_cast %6 : vector<2x2x2x32xbf16> to vector<8x32xbf16>
    %8 = vector.extract_strided_slice %5 {offsets = [0, 0, 0, 0], sizes = [2, 2, 2, 32], strides = [1, 1, 1, 1]} : vector<2x4x4x32xbf16> to vector<2x2x2x32xbf16>
    %9 = vector.shape_cast %8 : vector<2x2x2x32xbf16> to vector<8x32xbf16>
    %10 = vector.extract_strided_slice %2 {offsets = [0, 0, 1, 0], sizes = [2, 2, 2, 32], strides = [1, 1, 1, 1]} : vector<2x4x4x32xbf16> to vector<2x2x2x32xbf16>
    %11 = vector.shape_cast %10 : vector<2x2x2x32xbf16> to vector<8x32xbf16>
    %12 = vector.extract_strided_slice %5 {offsets = [0, 0, 1, 0], sizes = [2, 2, 2, 32], strides = [1, 1, 1, 1]} : vector<2x4x4x32xbf16> to vector<2x2x2x32xbf16>
    %13 = vector.shape_cast %12 : vector<2x2x2x32xbf16> to vector<8x32xbf16>
    %14 = vector.extract_strided_slice %2 {offsets = [0, 0, 2, 0], sizes = [2, 2, 2, 32], strides = [1, 1, 1, 1]} : vector<2x4x4x32xbf16> to vector<2x2x2x32xbf16>
    %15 = vector.shape_cast %14 : vector<2x2x2x32xbf16> to vector<8x32xbf16>
    %16 = vector.extract_strided_slice %5 {offsets = [0, 0, 2, 0], sizes = [2, 2, 2, 32], strides = [1, 1, 1, 1]} : vector<2x4x4x32xbf16> to vector<2x2x2x32xbf16>
    %17 = vector.shape_cast %16 : vector<2x2x2x32xbf16> to vector<8x32xbf16>
    %18 = vector.extract_strided_slice %2 {offsets = [0, 1, 0, 0], sizes = [2, 2, 2, 32], strides = [1, 1, 1, 1]} : vector<2x4x4x32xbf16> to vector<2x2x2x32xbf16>
    %19 = vector.shape_cast %18 : vector<2x2x2x32xbf16> to vector<8x32xbf16>
    %20 = vector.extract_strided_slice %5 {offsets = [0, 1, 0, 0], sizes = [2, 2, 2, 32], strides = [1, 1, 1, 1]} : vector<2x4x4x32xbf16> to vector<2x2x2x32xbf16>
    %21 = vector.shape_cast %20 : vector<2x2x2x32xbf16> to vector<8x32xbf16>
    %22 = vector.extract_strided_slice %2 {offsets = [0, 1, 1, 0], sizes = [2, 2, 2, 32], strides = [1, 1, 1, 1]} : vector<2x4x4x32xbf16> to vector<2x2x2x32xbf16>
    %23 = vector.shape_cast %22 : vector<2x2x2x32xbf16> to vector<8x32xbf16>
    %24 = vector.extract_strided_slice %5 {offsets = [0, 1, 1, 0], sizes = [2, 2, 2, 32], strides = [1, 1, 1, 1]} : vector<2x4x4x32xbf16> to vector<2x2x2x32xbf16>
    %25 = vector.shape_cast %24 : vector<2x2x2x32xbf16> to vector<8x32xbf16>
    %26 = vector.extract_strided_slice %2 {offsets = [0, 1, 2, 0], sizes = [2, 2, 2, 32], strides = [1, 1, 1, 1]} : vector<2x4x4x32xbf16> to vector<2x2x2x32xbf16>
    %27 = vector.shape_cast %26 : vector<2x2x2x32xbf16> to vector<8x32xbf16>
    %28 = vector.extract_strided_slice %5 {offsets = [0, 1, 2, 0], sizes = [2, 2, 2, 32], strides = [1, 1, 1, 1]} : vector<2x4x4x32xbf16> to vector<2x2x2x32xbf16>
    %29 = vector.shape_cast %28 : vector<2x2x2x32xbf16> to vector<8x32xbf16>
    %30 = vector.extract_strided_slice %2 {offsets = [0, 2, 0, 0], sizes = [2, 2, 2, 32], strides = [1, 1, 1, 1]} : vector<2x4x4x32xbf16> to vector<2x2x2x32xbf16>
    %31 = vector.shape_cast %30 : vector<2x2x2x32xbf16> to vector<8x32xbf16>
    %32 = vector.extract_strided_slice %5 {offsets = [0, 2, 0, 0], sizes = [2, 2, 2, 32], strides = [1, 1, 1, 1]} : vector<2x4x4x32xbf16> to vector<2x2x2x32xbf16>
    %33 = vector.shape_cast %32 : vector<2x2x2x32xbf16> to vector<8x32xbf16>
    %34 = vector.extract_strided_slice %2 {offsets = [0, 2, 1, 0], sizes = [2, 2, 2, 32], strides = [1, 1, 1, 1]} : vector<2x4x4x32xbf16> to vector<2x2x2x32xbf16>
    %35 = vector.shape_cast %34 : vector<2x2x2x32xbf16> to vector<8x32xbf16>
    %36 = vector.extract_strided_slice %5 {offsets = [0, 2, 1, 0], sizes = [2, 2, 2, 32], strides = [1, 1, 1, 1]} : vector<2x4x4x32xbf16> to vector<2x2x2x32xbf16>
    %37 = vector.shape_cast %36 : vector<2x2x2x32xbf16> to vector<8x32xbf16>
    %38 = vector.extract_strided_slice %2 {offsets = [0, 2, 2, 0], sizes = [2, 2, 2, 32], strides = [1, 1, 1, 1]} : vector<2x4x4x32xbf16> to vector<2x2x2x32xbf16>
    %39 = vector.shape_cast %38 : vector<2x2x2x32xbf16> to vector<8x32xbf16>
    %40 = vector.extract_strided_slice %5 {offsets = [0, 2, 2, 0], sizes = [2, 2, 2, 32], strides = [1, 1, 1, 1]} : vector<2x4x4x32xbf16> to vector<2x2x2x32xbf16>
    %41 = vector.shape_cast %40 : vector<2x2x2x32xbf16> to vector<8x32xbf16>
    %42 = tpu.concatenate %7, %9, %11, %13, %15, %17, %19, %21, %23, %25, %27, %29, %31, %33, %35, %37 in 1 : vector<8x32xbf16>, vector<8x32xbf16>, vector<8x32xbf16>, vector<8x32xbf16>, vector<8x32xbf16>, vector<8x32xbf16>, vector<8x32xbf16>, vector<8x32xbf16>, vector<8x32xbf16>, vector<8x32xbf16>, vector<8x32xbf16>, vector<8x32xbf16>, vector<8x32xbf16>, vector<8x32xbf16>, vector<8x32xbf16>, vector<8x32xbf16> -> vector<8x512xbf16>
    %43 = tpu.concatenate %39, %41 in 1 : vector<8x32xbf16>, vector<8x32xbf16> -> vector<8x64xbf16>
    %44 = tpu.concatenate %42, %43 in 1 : vector<8x512xbf16>, vector<8x64xbf16> -> vector<8x576xbf16>
    %c0_8 = arith.constant 0 : index
    %c0_9 = arith.constant 0 : index
    %45 = vector.load %arg2[%c0_8, %c0_9] : memref<576x64xbf16, #tpu.memory_space<vmem>>, vector<576x64xbf16>
    %cst_10 = arith.constant dense<0.000000e+00> : vector<8x64xf32>
    %46 = tpu.matmul %44, %45, %cst_10 {dimension_numbers = #tpu.dot_dimension_numbers<[1], [0], [0], [1], [0, 0, 1, 1], [], []>} : vector<8x576xbf16>, vector<576x64xbf16>, vector<8x64xf32> -> vector<8x64xf32>
    %cst_11 = arith.constant dense<0.000000e+00> : vector<64xf32>
    %47 = vector.multi_reduction <add>, %46, %cst_11 [0] : vector<8x64xf32> to vector<64xf32>
    %48 = vector.shape_cast %47 : vector<64xf32> to vector<1x64xf32>
    %49 = arith.mulf %46, %46 : vector<8x64xf32>
    %cst_12 = arith.constant dense<0.000000e+00> : vector<64xf32>
    %50 = vector.multi_reduction <add>, %49, %cst_12 [0] : vector<8x64xf32> to vector<64xf32>
    %51 = vector.shape_cast %50 : vector<64xf32> to vector<1x64xf32>
    %52 = vector.extract_strided_slice %48 {offsets = [0, 0], sizes = [1, 16], strides = [1, 1]} : vector<1x64xf32> to vector<1x16xf32>
    %53 = vector.extract_strided_slice %48 {offsets = [0, 16], sizes = [1, 16], strides = [1, 1]} : vector<1x64xf32> to vector<1x16xf32>
    %54 = arith.addf %52, %53 : vector<1x16xf32>
    %55 = vector.extract_strided_slice %48 {offsets = [0, 32], sizes = [1, 16], strides = [1, 1]} : vector<1x64xf32> to vector<1x16xf32>
    %56 = arith.addf %54, %55 : vector<1x16xf32>
    %57 = vector.extract_strided_slice %48 {offsets = [0, 48], sizes = [1, 16], strides = [1, 1]} : vector<1x64xf32> to vector<1x16xf32>
    %58 = arith.addf %56, %57 : vector<1x16xf32>
    %cst_13 = arith.constant 3.125000e-02 : f32
    %59 = vector.broadcast %cst_13 : f32 to vector<1x16xf32>
    %60 = arith.mulf %58, %59 : vector<1x16xf32>
    %61 = vector.extract_strided_slice %51 {offsets = [0, 0], sizes = [1, 16], strides = [1, 1]} : vector<1x64xf32> to vector<1x16xf32>
    %62 = vector.extract_strided_slice %51 {offsets = [0, 16], sizes = [1, 16], strides = [1, 1]} : vector<1x64xf32> to vector<1x16xf32>
    %63 = arith.addf %61, %62 : vector<1x16xf32>
    %64 = vector.extract_strided_slice %51 {offsets = [0, 32], sizes = [1, 16], strides = [1, 1]} : vector<1x64xf32> to vector<1x16xf32>
    %65 = arith.addf %63, %64 : vector<1x16xf32>
    %66 = vector.extract_strided_slice %51 {offsets = [0, 48], sizes = [1, 16], strides = [1, 1]} : vector<1x64xf32> to vector<1x16xf32>
    %67 = arith.addf %65, %66 : vector<1x16xf32>
    %cst_14 = arith.constant 3.125000e-02 : f32
    %68 = vector.broadcast %cst_14 : f32 to vector<1x16xf32>
    %69 = arith.mulf %67, %68 : vector<1x16xf32>
    %70 = arith.mulf %60, %60 : vector<1x16xf32>
    %71 = arith.subf %69, %70 : vector<1x16xf32>
    %cst_15 = arith.constant 9.99999974E-6 : f32
    %72 = vector.broadcast %cst_15 : f32 to vector<1x16xf32>
    %73 = arith.addf %71, %72 : vector<1x16xf32>
    %74 = math.rsqrt %73 : vector<1x16xf32>
    %75 = tpu.concatenate %60, %60, %60, %60 in 1 : vector<1x16xf32>, vector<1x16xf32>, vector<1x16xf32>, vector<1x16xf32> -> vector<1x64xf32>
    %76 = tpu.concatenate %74, %74, %74, %74 in 1 : vector<1x16xf32>, vector<1x16xf32>, vector<1x16xf32>, vector<1x16xf32> -> vector<1x64xf32>
    %77 = vector.broadcast %75 : vector<1x64xf32> to vector<8x64xf32>
    %78 = arith.subf %46, %77 : vector<8x64xf32>
    %79 = vector.broadcast %76 : vector<1x64xf32> to vector<8x64xf32>
    %80 = arith.mulf %78, %79 : vector<8x64xf32>
    %c0_16 = arith.constant 0 : index
    %c0_17 = arith.constant 0 : index
    %81 = vector.load %arg3[%c0_16, %c0_17] : memref<1x64xf32, #tpu.memory_space<vmem>>, vector<1x64xf32>
    %82 = vector.broadcast %81 : vector<1x64xf32> to vector<8x64xf32>
    %83 = arith.mulf %80, %82 : vector<8x64xf32>
    %c0_18 = arith.constant 0 : index
    %c0_19 = arith.constant 0 : index
    %84 = vector.load %arg4[%c0_18, %c0_19] : memref<1x64xf32, #tpu.memory_space<vmem>>, vector<1x64xf32>
    %85 = vector.broadcast %84 : vector<1x64xf32> to vector<8x64xf32>
    %86 = arith.addf %83, %85 : vector<8x64xf32>
    %c0_20 = arith.constant 0 : index
    %c0_21 = arith.constant 0 : index
    %87 = vector.load %arg5[%c0_20, %c0_21] : memref<8x64xf32, #tpu.memory_space<vmem>>, vector<8x64xf32>
    tpu.vector_store %arg5[%c0_20, %c0_21], %86 {strides = array<i32>} : memref<8x64xf32, #tpu.memory_space<vmem>>, vector<8x64xf32>,
    return
  }
}

module attributes {stable_mosaic.version = 11 : i64} {
  func.func @_up_conv_kernel(%arg0: memref<2x6x6x16xbf16, #tpu.memory_space<vmem>>, %arg1: memref<2x6x6x16xbf16, #tpu.memory_space<vmem>>, %arg2: memref<288x32xbf16, #tpu.memory_space<vmem>>, %arg3: memref<1x32xf32, #tpu.memory_space<vmem>>, %arg4: memref<1x32xf32, #tpu.memory_space<vmem>>, %arg5: memref<32x32xf32, #tpu.memory_space<vmem>>) attributes {dimension_semantics = [], scalar_prefetch = 0 : i64, scratch_operands = 0 : i64, tpu.core_type = #tpu.core_type<tc>} {
    %c0 = arith.constant 0 : index
    %c0_0 = arith.constant 0 : index
    %c0_1 = arith.constant 0 : index
    %c0_2 = arith.constant 0 : index
    %0 = vector.load %arg0[%c0, %c0_0, %c0_1, %c0_2] : memref<2x6x6x16xbf16, #tpu.memory_space<vmem>>, vector<2x6x6x16xbf16>
    %cst = arith.constant 0.000000e+00 : bf16
    %1 = vector.broadcast %cst : bf16 to vector<2x6x6x16xbf16>
    %2 = arith.maximumf %0, %1 : vector<2x6x6x16xbf16>
    %c0_3 = arith.constant 0 : index
    %c0_4 = arith.constant 0 : index
    %c0_5 = arith.constant 0 : index
    %c0_6 = arith.constant 0 : index
    %3 = vector.load %arg1[%c0_3, %c0_4, %c0_5, %c0_6] : memref<2x6x6x16xbf16, #tpu.memory_space<vmem>>, vector<2x6x6x16xbf16>
    %cst_7 = arith.constant 0.000000e+00 : bf16
    %4 = vector.broadcast %cst_7 : bf16 to vector<2x6x6x16xbf16>
    %5 = arith.maximumf %3, %4 : vector<2x6x6x16xbf16>
    %6 = vector.extract_strided_slice %2 {offsets = [0, 0, 0, 0], sizes = [2, 4, 4, 16], strides = [1, 1, 1, 1]} : vector<2x6x6x16xbf16> to vector<2x4x4x16xbf16>
    %7 = vector.shape_cast %6 : vector<2x4x4x16xbf16> to vector<32x16xbf16>
    %8 = vector.extract_strided_slice %5 {offsets = [0, 0, 0, 0], sizes = [2, 4, 4, 16], strides = [1, 1, 1, 1]} : vector<2x6x6x16xbf16> to vector<2x4x4x16xbf16>
    %9 = vector.shape_cast %8 : vector<2x4x4x16xbf16> to vector<32x16xbf16>
    %10 = vector.extract_strided_slice %2 {offsets = [0, 0, 1, 0], sizes = [2, 4, 4, 16], strides = [1, 1, 1, 1]} : vector<2x6x6x16xbf16> to vector<2x4x4x16xbf16>
    %11 = vector.shape_cast %10 : vector<2x4x4x16xbf16> to vector<32x16xbf16>
    %12 = vector.extract_strided_slice %5 {offsets = [0, 0, 1, 0], sizes = [2, 4, 4, 16], strides = [1, 1, 1, 1]} : vector<2x6x6x16xbf16> to vector<2x4x4x16xbf16>
    %13 = vector.shape_cast %12 : vector<2x4x4x16xbf16> to vector<32x16xbf16>
    %14 = vector.extract_strided_slice %2 {offsets = [0, 0, 2, 0], sizes = [2, 4, 4, 16], strides = [1, 1, 1, 1]} : vector<2x6x6x16xbf16> to vector<2x4x4x16xbf16>
    %15 = vector.shape_cast %14 : vector<2x4x4x16xbf16> to vector<32x16xbf16>
    %16 = vector.extract_strided_slice %5 {offsets = [0, 0, 2, 0], sizes = [2, 4, 4, 16], strides = [1, 1, 1, 1]} : vector<2x6x6x16xbf16> to vector<2x4x4x16xbf16>
    %17 = vector.shape_cast %16 : vector<2x4x4x16xbf16> to vector<32x16xbf16>
    %18 = vector.extract_strided_slice %2 {offsets = [0, 1, 0, 0], sizes = [2, 4, 4, 16], strides = [1, 1, 1, 1]} : vector<2x6x6x16xbf16> to vector<2x4x4x16xbf16>
    %19 = vector.shape_cast %18 : vector<2x4x4x16xbf16> to vector<32x16xbf16>
    %20 = vector.extract_strided_slice %5 {offsets = [0, 1, 0, 0], sizes = [2, 4, 4, 16], strides = [1, 1, 1, 1]} : vector<2x6x6x16xbf16> to vector<2x4x4x16xbf16>
    %21 = vector.shape_cast %20 : vector<2x4x4x16xbf16> to vector<32x16xbf16>
    %22 = vector.extract_strided_slice %2 {offsets = [0, 1, 1, 0], sizes = [2, 4, 4, 16], strides = [1, 1, 1, 1]} : vector<2x6x6x16xbf16> to vector<2x4x4x16xbf16>
    %23 = vector.shape_cast %22 : vector<2x4x4x16xbf16> to vector<32x16xbf16>
    %24 = vector.extract_strided_slice %5 {offsets = [0, 1, 1, 0], sizes = [2, 4, 4, 16], strides = [1, 1, 1, 1]} : vector<2x6x6x16xbf16> to vector<2x4x4x16xbf16>
    %25 = vector.shape_cast %24 : vector<2x4x4x16xbf16> to vector<32x16xbf16>
    %26 = vector.extract_strided_slice %2 {offsets = [0, 1, 2, 0], sizes = [2, 4, 4, 16], strides = [1, 1, 1, 1]} : vector<2x6x6x16xbf16> to vector<2x4x4x16xbf16>
    %27 = vector.shape_cast %26 : vector<2x4x4x16xbf16> to vector<32x16xbf16>
    %28 = vector.extract_strided_slice %5 {offsets = [0, 1, 2, 0], sizes = [2, 4, 4, 16], strides = [1, 1, 1, 1]} : vector<2x6x6x16xbf16> to vector<2x4x4x16xbf16>
    %29 = vector.shape_cast %28 : vector<2x4x4x16xbf16> to vector<32x16xbf16>
    %30 = vector.extract_strided_slice %2 {offsets = [0, 2, 0, 0], sizes = [2, 4, 4, 16], strides = [1, 1, 1, 1]} : vector<2x6x6x16xbf16> to vector<2x4x4x16xbf16>
    %31 = vector.shape_cast %30 : vector<2x4x4x16xbf16> to vector<32x16xbf16>
    %32 = vector.extract_strided_slice %5 {offsets = [0, 2, 0, 0], sizes = [2, 4, 4, 16], strides = [1, 1, 1, 1]} : vector<2x6x6x16xbf16> to vector<2x4x4x16xbf16>
    %33 = vector.shape_cast %32 : vector<2x4x4x16xbf16> to vector<32x16xbf16>
    %34 = vector.extract_strided_slice %2 {offsets = [0, 2, 1, 0], sizes = [2, 4, 4, 16], strides = [1, 1, 1, 1]} : vector<2x6x6x16xbf16> to vector<2x4x4x16xbf16>
    %35 = vector.shape_cast %34 : vector<2x4x4x16xbf16> to vector<32x16xbf16>
    %36 = vector.extract_strided_slice %5 {offsets = [0, 2, 1, 0], sizes = [2, 4, 4, 16], strides = [1, 1, 1, 1]} : vector<2x6x6x16xbf16> to vector<2x4x4x16xbf16>
    %37 = vector.shape_cast %36 : vector<2x4x4x16xbf16> to vector<32x16xbf16>
    %38 = vector.extract_strided_slice %2 {offsets = [0, 2, 2, 0], sizes = [2, 4, 4, 16], strides = [1, 1, 1, 1]} : vector<2x6x6x16xbf16> to vector<2x4x4x16xbf16>
    %39 = vector.shape_cast %38 : vector<2x4x4x16xbf16> to vector<32x16xbf16>
    %40 = vector.extract_strided_slice %5 {offsets = [0, 2, 2, 0], sizes = [2, 4, 4, 16], strides = [1, 1, 1, 1]} : vector<2x6x6x16xbf16> to vector<2x4x4x16xbf16>
    %41 = vector.shape_cast %40 : vector<2x4x4x16xbf16> to vector<32x16xbf16>
    %42 = tpu.concatenate %7, %9, %11, %13, %15, %17, %19, %21, %23, %25, %27, %29, %31, %33, %35, %37 in 1 : vector<32x16xbf16>, vector<32x16xbf16>, vector<32x16xbf16>, vector<32x16xbf16>, vector<32x16xbf16>, vector<32x16xbf16>, vector<32x16xbf16>, vector<32x16xbf16>, vector<32x16xbf16>, vector<32x16xbf16>, vector<32x16xbf16>, vector<32x16xbf16>, vector<32x16xbf16>, vector<32x16xbf16>, vector<32x16xbf16>, vector<32x16xbf16> -> vector<32x256xbf16>
    %43 = tpu.concatenate %39, %41 in 1 : vector<32x16xbf16>, vector<32x16xbf16> -> vector<32x32xbf16>
    %44 = tpu.concatenate %42, %43 in 1 : vector<32x256xbf16>, vector<32x32xbf16> -> vector<32x288xbf16>
    %c0_8 = arith.constant 0 : index
    %c0_9 = arith.constant 0 : index
    %45 = vector.load %arg2[%c0_8, %c0_9] : memref<288x32xbf16, #tpu.memory_space<vmem>>, vector<288x32xbf16>
    %cst_10 = arith.constant dense<0.000000e+00> : vector<32x32xf32>
    %46 = tpu.matmul %44, %45, %cst_10 {dimension_numbers = #tpu.dot_dimension_numbers<[1], [0], [0], [1], [0, 0, 1, 1], [], []>} : vector<32x288xbf16>, vector<288x32xbf16>, vector<32x32xf32> -> vector<32x32xf32>
    %cst_11 = arith.constant dense<0.000000e+00> : vector<32xf32>
    %47 = vector.multi_reduction <add>, %46, %cst_11 [0] : vector<32x32xf32> to vector<32xf32>
    %48 = vector.shape_cast %47 : vector<32xf32> to vector<1x32xf32>
    %49 = arith.mulf %46, %46 : vector<32x32xf32>
    %cst_12 = arith.constant dense<0.000000e+00> : vector<32xf32>
    %50 = vector.multi_reduction <add>, %49, %cst_12 [0] : vector<32x32xf32> to vector<32xf32>
    %51 = vector.shape_cast %50 : vector<32xf32> to vector<1x32xf32>
    %52 = vector.extract_strided_slice %48 {offsets = [0, 0], sizes = [1, 8], strides = [1, 1]} : vector<1x32xf32> to vector<1x8xf32>
    %53 = vector.extract_strided_slice %48 {offsets = [0, 8], sizes = [1, 8], strides = [1, 1]} : vector<1x32xf32> to vector<1x8xf32>
    %54 = arith.addf %52, %53 : vector<1x8xf32>
    %55 = vector.extract_strided_slice %48 {offsets = [0, 16], sizes = [1, 8], strides = [1, 1]} : vector<1x32xf32> to vector<1x8xf32>
    %56 = arith.addf %54, %55 : vector<1x8xf32>
    %57 = vector.extract_strided_slice %48 {offsets = [0, 24], sizes = [1, 8], strides = [1, 1]} : vector<1x32xf32> to vector<1x8xf32>
    %58 = arith.addf %56, %57 : vector<1x8xf32>
    %cst_13 = arith.constant 7.812500e-03 : f32
    %59 = vector.broadcast %cst_13 : f32 to vector<1x8xf32>
    %60 = arith.mulf %58, %59 : vector<1x8xf32>
    %61 = vector.extract_strided_slice %51 {offsets = [0, 0], sizes = [1, 8], strides = [1, 1]} : vector<1x32xf32> to vector<1x8xf32>
    %62 = vector.extract_strided_slice %51 {offsets = [0, 8], sizes = [1, 8], strides = [1, 1]} : vector<1x32xf32> to vector<1x8xf32>
    %63 = arith.addf %61, %62 : vector<1x8xf32>
    %64 = vector.extract_strided_slice %51 {offsets = [0, 16], sizes = [1, 8], strides = [1, 1]} : vector<1x32xf32> to vector<1x8xf32>
    %65 = arith.addf %63, %64 : vector<1x8xf32>
    %66 = vector.extract_strided_slice %51 {offsets = [0, 24], sizes = [1, 8], strides = [1, 1]} : vector<1x32xf32> to vector<1x8xf32>
    %67 = arith.addf %65, %66 : vector<1x8xf32>
    %cst_14 = arith.constant 7.812500e-03 : f32
    %68 = vector.broadcast %cst_14 : f32 to vector<1x8xf32>
    %69 = arith.mulf %67, %68 : vector<1x8xf32>
    %70 = arith.mulf %60, %60 : vector<1x8xf32>
    %71 = arith.subf %69, %70 : vector<1x8xf32>
    %cst_15 = arith.constant 9.99999974E-6 : f32
    %72 = vector.broadcast %cst_15 : f32 to vector<1x8xf32>
    %73 = arith.addf %71, %72 : vector<1x8xf32>
    %74 = math.rsqrt %73 : vector<1x8xf32>
    %75 = tpu.concatenate %60, %60, %60, %60 in 1 : vector<1x8xf32>, vector<1x8xf32>, vector<1x8xf32>, vector<1x8xf32> -> vector<1x32xf32>
    %76 = tpu.concatenate %74, %74, %74, %74 in 1 : vector<1x8xf32>, vector<1x8xf32>, vector<1x8xf32>, vector<1x8xf32> -> vector<1x32xf32>
    %77 = vector.broadcast %75 : vector<1x32xf32> to vector<32x32xf32>
    %78 = arith.subf %46, %77 : vector<32x32xf32>
    %79 = vector.broadcast %76 : vector<1x32xf32> to vector<32x32xf32>
    %80 = arith.mulf %78, %79 : vector<32x32xf32>
    %c0_16 = arith.constant 0 : index
    %c0_17 = arith.constant 0 : index
    %81 = vector.load %arg3[%c0_16, %c0_17] : memref<1x32xf32, #tpu.memory_space<vmem>>, vector<1x32xf32>
    %82 = vector.broadcast %81 : vector<1x32xf32> to vector<32x32xf32>
    %83 = arith.mulf %80, %82 : vector<32x32xf32>
    %c0_18 = arith.constant 0 : index
    %c0_19 = arith.constant 0 : index
    %84 = vector.load %arg4[%c0_18, %c0_19] : memref<1x32xf32, #tpu.memory_space<vmem>>, vector<1x32xf32>
    %85 = vector.broadcast %84 : vector<1x32xf32> to vector<32x32xf32>
    %86 = arith.addf %83, %85 : vector<32x32xf32>
    %c0_20 = arith.constant 0 : index
    %c0_21 = arith.constant 0 : index
    %87 = vector.load %arg5[%c0_20, %c0_21] : memref<32x32xf32, #tpu.memory_space<vmem>>, vector<32x32xf32>
    tpu.vector_store %arg5[%c0_20, %c0_21], %86 {strides = array<i32>} : memref<32x32xf32, #tpu.memory_space<vmem>>, vector<32x32xf32>,
    return
  }
}

module attributes {stable_mosaic.version = 11 : i64} {
  func.func @_up_conv_kernel(%arg0: memref<2x10x10x8xbf16, #tpu.memory_space<vmem>>, %arg1: memref<2x10x10x8xbf16, #tpu.memory_space<vmem>>, %arg2: memref<144x8xbf16, #tpu.memory_space<vmem>>, %arg3: memref<1x8xf32, #tpu.memory_space<vmem>>, %arg4: memref<128x8xf32, #tpu.memory_space<vmem>>) attributes {dimension_semantics = [], scalar_prefetch = 0 : i64, scratch_operands = 0 : i64, tpu.core_type = #tpu.core_type<tc>} {
    %c0 = arith.constant 0 : index
    %c0_0 = arith.constant 0 : index
    %c0_1 = arith.constant 0 : index
    %c0_2 = arith.constant 0 : index
    %0 = vector.load %arg0[%c0, %c0_0, %c0_1, %c0_2] : memref<2x10x10x8xbf16, #tpu.memory_space<vmem>>, vector<2x10x10x8xbf16>
    %cst = arith.constant 0.000000e+00 : bf16
    %1 = vector.broadcast %cst : bf16 to vector<2x10x10x8xbf16>
    %2 = arith.maximumf %0, %1 : vector<2x10x10x8xbf16>
    %c0_3 = arith.constant 0 : index
    %c0_4 = arith.constant 0 : index
    %c0_5 = arith.constant 0 : index
    %c0_6 = arith.constant 0 : index
    %3 = vector.load %arg1[%c0_3, %c0_4, %c0_5, %c0_6] : memref<2x10x10x8xbf16, #tpu.memory_space<vmem>>, vector<2x10x10x8xbf16>
    %cst_7 = arith.constant 0.000000e+00 : bf16
    %4 = vector.broadcast %cst_7 : bf16 to vector<2x10x10x8xbf16>
    %5 = arith.maximumf %3, %4 : vector<2x10x10x8xbf16>
    %6 = vector.extract_strided_slice %2 {offsets = [0, 0, 0, 0], sizes = [2, 8, 8, 8], strides = [1, 1, 1, 1]} : vector<2x10x10x8xbf16> to vector<2x8x8x8xbf16>
    %7 = vector.shape_cast %6 : vector<2x8x8x8xbf16> to vector<128x8xbf16>
    %8 = vector.extract_strided_slice %5 {offsets = [0, 0, 0, 0], sizes = [2, 8, 8, 8], strides = [1, 1, 1, 1]} : vector<2x10x10x8xbf16> to vector<2x8x8x8xbf16>
    %9 = vector.shape_cast %8 : vector<2x8x8x8xbf16> to vector<128x8xbf16>
    %10 = vector.extract_strided_slice %2 {offsets = [0, 0, 1, 0], sizes = [2, 8, 8, 8], strides = [1, 1, 1, 1]} : vector<2x10x10x8xbf16> to vector<2x8x8x8xbf16>
    %11 = vector.shape_cast %10 : vector<2x8x8x8xbf16> to vector<128x8xbf16>
    %12 = vector.extract_strided_slice %5 {offsets = [0, 0, 1, 0], sizes = [2, 8, 8, 8], strides = [1, 1, 1, 1]} : vector<2x10x10x8xbf16> to vector<2x8x8x8xbf16>
    %13 = vector.shape_cast %12 : vector<2x8x8x8xbf16> to vector<128x8xbf16>
    %14 = vector.extract_strided_slice %2 {offsets = [0, 0, 2, 0], sizes = [2, 8, 8, 8], strides = [1, 1, 1, 1]} : vector<2x10x10x8xbf16> to vector<2x8x8x8xbf16>
    %15 = vector.shape_cast %14 : vector<2x8x8x8xbf16> to vector<128x8xbf16>
    %16 = vector.extract_strided_slice %5 {offsets = [0, 0, 2, 0], sizes = [2, 8, 8, 8], strides = [1, 1, 1, 1]} : vector<2x10x10x8xbf16> to vector<2x8x8x8xbf16>
    %17 = vector.shape_cast %16 : vector<2x8x8x8xbf16> to vector<128x8xbf16>
    %18 = vector.extract_strided_slice %2 {offsets = [0, 1, 0, 0], sizes = [2, 8, 8, 8], strides = [1, 1, 1, 1]} : vector<2x10x10x8xbf16> to vector<2x8x8x8xbf16>
    %19 = vector.shape_cast %18 : vector<2x8x8x8xbf16> to vector<128x8xbf16>
    %20 = vector.extract_strided_slice %5 {offsets = [0, 1, 0, 0], sizes = [2, 8, 8, 8], strides = [1, 1, 1, 1]} : vector<2x10x10x8xbf16> to vector<2x8x8x8xbf16>
    %21 = vector.shape_cast %20 : vector<2x8x8x8xbf16> to vector<128x8xbf16>
    %22 = vector.extract_strided_slice %2 {offsets = [0, 1, 1, 0], sizes = [2, 8, 8, 8], strides = [1, 1, 1, 1]} : vector<2x10x10x8xbf16> to vector<2x8x8x8xbf16>
    %23 = vector.shape_cast %22 : vector<2x8x8x8xbf16> to vector<128x8xbf16>
    %24 = vector.extract_strided_slice %5 {offsets = [0, 1, 1, 0], sizes = [2, 8, 8, 8], strides = [1, 1, 1, 1]} : vector<2x10x10x8xbf16> to vector<2x8x8x8xbf16>
    %25 = vector.shape_cast %24 : vector<2x8x8x8xbf16> to vector<128x8xbf16>
    %26 = vector.extract_strided_slice %2 {offsets = [0, 1, 2, 0], sizes = [2, 8, 8, 8], strides = [1, 1, 1, 1]} : vector<2x10x10x8xbf16> to vector<2x8x8x8xbf16>
    %27 = vector.shape_cast %26 : vector<2x8x8x8xbf16> to vector<128x8xbf16>
    %28 = vector.extract_strided_slice %5 {offsets = [0, 1, 2, 0], sizes = [2, 8, 8, 8], strides = [1, 1, 1, 1]} : vector<2x10x10x8xbf16> to vector<2x8x8x8xbf16>
    %29 = vector.shape_cast %28 : vector<2x8x8x8xbf16> to vector<128x8xbf16>
    %30 = vector.extract_strided_slice %2 {offsets = [0, 2, 0, 0], sizes = [2, 8, 8, 8], strides = [1, 1, 1, 1]} : vector<2x10x10x8xbf16> to vector<2x8x8x8xbf16>
    %31 = vector.shape_cast %30 : vector<2x8x8x8xbf16> to vector<128x8xbf16>
    %32 = vector.extract_strided_slice %5 {offsets = [0, 2, 0, 0], sizes = [2, 8, 8, 8], strides = [1, 1, 1, 1]} : vector<2x10x10x8xbf16> to vector<2x8x8x8xbf16>
    %33 = vector.shape_cast %32 : vector<2x8x8x8xbf16> to vector<128x8xbf16>
    %34 = vector.extract_strided_slice %2 {offsets = [0, 2, 1, 0], sizes = [2, 8, 8, 8], strides = [1, 1, 1, 1]} : vector<2x10x10x8xbf16> to vector<2x8x8x8xbf16>
    %35 = vector.shape_cast %34 : vector<2x8x8x8xbf16> to vector<128x8xbf16>
    %36 = vector.extract_strided_slice %5 {offsets = [0, 2, 1, 0], sizes = [2, 8, 8, 8], strides = [1, 1, 1, 1]} : vector<2x10x10x8xbf16> to vector<2x8x8x8xbf16>
    %37 = vector.shape_cast %36 : vector<2x8x8x8xbf16> to vector<128x8xbf16>
    %38 = vector.extract_strided_slice %2 {offsets = [0, 2, 2, 0], sizes = [2, 8, 8, 8], strides = [1, 1, 1, 1]} : vector<2x10x10x8xbf16> to vector<2x8x8x8xbf16>
    %39 = vector.shape_cast %38 : vector<2x8x8x8xbf16> to vector<128x8xbf16>
    %40 = vector.extract_strided_slice %5 {offsets = [0, 2, 2, 0], sizes = [2, 8, 8, 8], strides = [1, 1, 1, 1]} : vector<2x10x10x8xbf16> to vector<2x8x8x8xbf16>
    %41 = vector.shape_cast %40 : vector<2x8x8x8xbf16> to vector<128x8xbf16>
    %42 = tpu.concatenate %7, %9, %11, %13, %15, %17, %19, %21, %23, %25, %27, %29, %31, %33, %35, %37 in 1 : vector<128x8xbf16>, vector<128x8xbf16>, vector<128x8xbf16>, vector<128x8xbf16>, vector<128x8xbf16>, vector<128x8xbf16>, vector<128x8xbf16>, vector<128x8xbf16>, vector<128x8xbf16>, vector<128x8xbf16>, vector<128x8xbf16>, vector<128x8xbf16>, vector<128x8xbf16>, vector<128x8xbf16>, vector<128x8xbf16>, vector<128x8xbf16> -> vector<128x128xbf16>
    %43 = tpu.concatenate %39, %41 in 1 : vector<128x8xbf16>, vector<128x8xbf16> -> vector<128x16xbf16>
    %44 = tpu.concatenate %42, %43 in 1 : vector<128x128xbf16>, vector<128x16xbf16> -> vector<128x144xbf16>
    %c0_8 = arith.constant 0 : index
    %c0_9 = arith.constant 0 : index
    %45 = vector.load %arg2[%c0_8, %c0_9] : memref<144x8xbf16, #tpu.memory_space<vmem>>, vector<144x8xbf16>
    %cst_10 = arith.constant dense<0.000000e+00> : vector<128x8xf32>
    %46 = tpu.matmul %44, %45, %cst_10 {dimension_numbers = #tpu.dot_dimension_numbers<[1], [0], [0], [1], [0, 0, 1, 1], [], []>} : vector<128x144xbf16>, vector<144x8xbf16>, vector<128x8xf32> -> vector<128x8xf32>
    %c0_11 = arith.constant 0 : index
    %c0_12 = arith.constant 0 : index
    %47 = vector.load %arg3[%c0_11, %c0_12] : memref<1x8xf32, #tpu.memory_space<vmem>>, vector<1x8xf32>
    %48 = vector.broadcast %47 : vector<1x8xf32> to vector<128x8xf32>
    %49 = arith.addf %46, %48 : vector<128x8xf32>
    %50 = math.tanh %49 : vector<128x8xf32>
    %c0_13 = arith.constant 0 : index
    %c0_14 = arith.constant 0 : index
    %51 = vector.load %arg4[%c0_13, %c0_14] : memref<128x8xf32, #tpu.memory_space<vmem>>, vector<128x8xf32>
    tpu.vector_store %arg4[%c0_13, %c0_14], %50 {strides = array<i32>} : memref<128x8xf32, #tpu.memory_space<vmem>>, vector<128x8xf32>,
    return
  }
}

</mosaic_0001>

<llo_original>
// kernel: _lambda_.8
$region0: #{_lambda_.8}
  #allocation0 [shape = 'u32[]', space=smem, size = 0x4, offset = 0x4, fixed_abs, tag = 'smem constant byte address 0x4 - core index']
  #allocation1 [shape = 'u32[144,128]{1,0:T(1,128)}', space=vmem, size = 0x12000, scoped, tag = 'internal scratch']
  %s0 = inlined_call_operand.vmem [shape: bf16[2,9,9,4], index: 0, kind: input, shape index: {}]
  %s1 = inlined_call_operand.vmem [shape: bf16[16,8], index: 1, kind: input, shape index: {}]
  %s2 = inlined_call_operand.vmem [shape: f32[128,8], index: 2, kind: output, shape index: {}]
  %s3 = sld [smem:[#allocation0]]
  $region18: #{_lambda_.8} parent=0
    _
  %s5 = ssub.s32 1, %s3
  %s6 = scalar_select 0, %s5, %s3
  // Predicated region
  $region2: #{_lambda_.8} parent=0 // pred_check
    _
  $region3: #{_lambda_.8} parent=0 // pred_check_branch
    %8 = sbr.rel (0) target = $region5
  $region4: #{_lambda_.8} parent=0 // pred_region
    _
  $region5: #{_lambda_.8} parent=0 // pred_fallthru
    _
  // Predicated region
  $region6: #{_lambda_.8} parent=0 // pred_check
    _
  $region7: #{_lambda_.8} parent=0 // pred_check_branch
    %10 = sbr.rel (0) target = $region9
  $region8: #{_lambda_.8} parent=0 // pred_region
    _
  $region9: #{_lambda_.8} parent=0 // pred_fallthru
    _
  %v12 = vld [vmem:[%s0] sm:$0xf]
  %v13 = vld [vmem:[%s0 + $0x4] sm:$0x1]
  %v14 = vld [vmem:[%s0 + $0x8] sm:$0xf]
  %v15 = vld [vmem:[%s0 + $0xc] sm:$0x1]
  %v16 = vld [vmem:[%s0 + $0x10] sm:$0xf]
  %v17 = vld [vmem:[%s0 + $0x14] sm:$0x1]
  %v18 = vld [vmem:[%s0 + $0x18] sm:$0xf]
  %v19 = vld [vmem:[%s0 + $0x1c] sm:$0x1]
  %v20 = vld [vmem:[%s0 + $0x20] sm:$0xf]
  %v21 = vld [vmem:[%s0 + $0x24] sm:$0x1]
  %v22 = vld [vmem:[%s0 + $0x28] sm:$0xf]
  %v23 = vld [vmem:[%s0 + $0x2c] sm:$0x1]
  %v24 = vld [vmem:[%s0 + $0x30] sm:$0xf]
  %v25 = vld [vmem:[%s0 + $0x34] sm:$0x1]
  %v26 = vld [vmem:[%s0 + $0x38] sm:$0xf]
  %v27 = vld [vmem:[%s0 + $0x3c] sm:$0x1]
  %v28 = vld [vmem:[%s0 + $0x40] sm:$0xf]
  %v29 = vld [vmem:[%s0 + $0x44] sm:$0x1]
  %v30 = vld [vmem:[%s0 + $0x48] sm:$0xf]
  %v31 = vld [vmem:[%s0 + $0x4c] sm:$0x1]
  %v32 = vld [vmem:[%s0 + $0x50] sm:$0xf]
  %v33 = vld [vmem:[%s0 + $0x54] sm:$0x1]
  %v34 = vld [vmem:[%s0 + $0x58] sm:$0xf]
  %v35 = vld [vmem:[%s0 + $0x5c] sm:$0x1]
  %v36 = vld [vmem:[%s0 + $0x60] sm:$0xf]
  %v37 = vld [vmem:[%s0 + $0x64] sm:$0x1]
  %v38 = vld [vmem:[%s0 + $0x68] sm:$0xf]
  %v39 = vld [vmem:[%s0 + $0x6c] sm:$0x1]
  %v40 = vld [vmem:[%s0 + $0x70] sm:$0xf]
  %v41 = vld [vmem:[%s0 + $0x74] sm:$0x1]
  %v42 = vld [vmem:[%s0 + $0x78] sm:$0xf]
  %v43 = vld [vmem:[%s0 + $0x7c] sm:$0x1]
  %v44 = vld [vmem:[%s0 + $0x80] sm:$0xf]
  %v45 = vld [vmem:[%s0 + $0x84] sm:$0x1]
  %v46 = vld [vmem:[%s0 + $0x88] sm:$0xf]
  %v47 = vld [vmem:[%s0 + $0x8c] sm:$0x1]
  %vm48 = vsmask.f32 3328
  %vm49 = vsmask.f32 7440
  %vm50 = vmor %vm48, %vm49
  %v52 = vshrl.u32 %v12, 16
  %v54 = vrot.slane %v52, 4
  %v55 = vshll.u32 %v12, 16
  %v57 = vrot.slane %v55, 5
  %v58 = vor.u32 %v54, %v57
  %v59 = vrot.slane %v58, 4
  %v61 = vshll.u32 %v13, 16
  %v63 = vrot.slane %v61, 5
  %v64 = vsel %vm50, %v59, %v63
  %v66 = vshrl.u32 %v14, 16
  %v68 = vrot.slane %v66, 4
  %v69 = vshll.u32 %v14, 16
  %v71 = vrot.slane %v69, 5
  %v72 = vor.u32 %v68, %v71
  %v73 = vrot.slane %v72, 4
  %v75 = vshll.u32 %v15, 16
  %v77 = vrot.slane %v75, 5
  %v78 = vsel %vm50, %v73, %v77
  %v80 = vshrl.u32 %v16, 16
  %v82 = vrot.slane %v80, 4
  %v83 = vshll.u32 %v16, 16
  %v85 = vrot.slane %v83, 5
  %v86 = vor.u32 %v82, %v85
  %v87 = vrot.slane %v86, 4
  %v89 = vshll.u32 %v17, 16
  %v91 = vrot.slane %v89, 5
  %v92 = vsel %vm50, %v87, %v91
  %v94 = vshrl.u32 %v18, 16
  %v96 = vrot.slane %v94, 4
  %v97 = vshll.u32 %v18, 16
  %v99 = vrot.slane %v97, 5
  %v100 = vor.u32 %v96, %v99
  %v101 = vrot.slane %v100, 4
  %v103 = vshll.u32 %v19, 16
  %v105 = vrot.slane %v103, 5
  %v106 = vsel %vm50, %v101, %v105
  %v108 = vshrl.u32 %v20, 16
  %v110 = vrot.slane %v108, 4
  %v111 = vshll.u32 %v20, 16
  %v113 = vrot.slane %v111, 5
  %v114 = vor.u32 %v110, %v113
  %v115 = vrot.slane %v114, 4
  %v117 = vshll.u32 %v21, 16
  %v119 = vrot.slane %v117, 5
  %v120 = vsel %vm50, %v115, %v119
  %v122 = vshrl.u32 %v22, 16
  %v124 = vrot.slane %v122, 4
  %v125 = vshll.u32 %v22, 16
  %v127 = vrot.slane %v125, 5
  %v128 = vor.u32 %v124, %v127
  %v129 = vrot.slane %v128, 4
  %v131 = vshll.u32 %v23, 16
  %v133 = vrot.slane %v131, 5
  %v134 = vsel %vm50, %v129, %v133
  %v136 = vshrl.u32 %v24, 16
  %v138 = vrot.slane %v136, 4
  %v139 = vshll.u32 %v24, 16
  %v141 = vrot.slane %v139, 5
  %v142 = vor.u32 %v138, %v141
  %v143 = vrot.slane %v142, 4
  %v145 = vshll.u32 %v25, 16
  %v147 = vrot.slane %v145, 5
  %v148 = vsel %vm50, %v143, %v147
  %v150 = vshrl.u32 %v26, 16
  %v152 = vrot.slane %v150, 4
  %v153 = vshll.u32 %v26, 16
  %v155 = vrot.slane %v153, 5
  %v156 = vor.u32 %v152, %v155
  %v157 = vrot.slane %v156, 4
  %v159 = vshll.u32 %v27, 16
  %v161 = vrot.slane %v159, 5
  %v162 = vsel %vm50, %v157, %v161
  %v164 = vshrl.u32 %v30, 16
  %v166 = vrot.slane %v164, 4
  %v167 = vshll.u32 %v30, 16
  %v169 = vrot.slane %v167, 5
  %v170 = vor.u32 %v166, %v169
  %v171 = vrot.slane %v170, 4
  %v173 = vshll.u32 %v31, 16
  %v175 = vrot.slane %v173, 5
  %v176 = vsel %vm50, %v171, %v175
  %v178 = vshrl.u32 %v32, 16
  %v180 = vrot.slane %v178, 4
  %v181 = vshll.u32 %v32, 16
  %v183 = vrot.slane %v181, 5
  %v184 = vor.u32 %v180, %v183
  %v185 = vrot.slane %v184, 4
  %v187 = vshll.u32 %v33, 16
  %v189 = vrot.slane %v187, 5
  %v190 = vsel %vm50, %v185, %v189
  %v192 = vshrl.u32 %v34, 16
  %v194 = vrot.slane %v192, 4
  %v195 = vshll.u32 %v34, 16
  %v197 = vrot.slane %v195, 5
  %v198 = vor.u32 %v194, %v197
  %v199 = vrot.slane %v198, 4
  %v201 = vshll.u32 %v35, 16
  %v203 = vrot.slane %v201, 5
  %v204 = vsel %vm50, %v199, %v203
  %v206 = vshrl.u32 %v36, 16
  %v208 = vrot.slane %v206, 4
  %v209 = vshll.u32 %v36, 16
  %v211 = vrot.slane %v209, 5
  %v212 = vor.u32 %v208, %v211
  %v213 = vrot.slane %v212, 4
  %v215 = vshll.u32 %v37, 16
  %v217 = vrot.slane %v215, 5
  %v218 = vsel %vm50, %v213, %v217
  %v220 = vshrl.u32 %v38, 16
  %v222 = vrot.slane %v220, 4
  %v223 = vshll.u32 %v38, 16
  %v225 = vrot.slane %v223, 5
  %v226 = vor.u32 %v222, %v225
  %v227 = vrot.slane %v226, 4
  %v229 = vshll.u32 %v39, 16
  %v231 = vrot.slane %v229, 5
  %v232 = vsel %vm50, %v227, %v231
  %v234 = vshrl.u32 %v40, 16
  %v236 = vrot.slane %v234, 4
  %v237 = vshll.u32 %v40, 16
  %v239 = vrot.slane %v237, 5
  %v240 = vor.u32 %v236, %v239
  %v241 = vrot.slane %v240, 4
  %v243 = vshll.u32 %v41, 16
  %v245 = vrot.slane %v243, 5
  %v246 = vsel %vm50, %v241, %v245
  %v248 = vshrl.u32 %v42, 16
  %v250 = vrot.slane %v248, 4
  %v251 = vshll.u32 %v42, 16
  %v253 = vrot.slane %v251, 5
  %v254 = vor.u32 %v250, %v253
  %v255 = vrot.slane %v254, 4
  %v257 = vshll.u32 %v43, 16
  %v259 = vrot.slane %v257, 5
  %v260 = vsel %vm50, %v255, %v259
  %v262 = vshrl.u32 %v44, 16
  %v264 = vrot.slane %v262, 4
  %v265 = vshll.u32 %v44, 16
  %v267 = vrot.slane %v265, 5
  %v268 = vor.u32 %v264, %v267
  %v269 = vrot.slane %v268, 4
  %v271 = vshll.u32 %v45, 16
  %v273 = vrot.slane %v271, 5
  %v274 = vsel %vm50, %v269, %v273
  %v276 = vshrl.u32 %v28, 16
  %v278 = vrot.slane %v276, 4
  %v279 = vshll.u32 %v28, 16
  %v281 = vrot.slane %v279, 5
  %v282 = vor.u32 %v278, %v281
  %v283 = vrot.slane %v282, 4
  %v285 = vshll.u32 %v29, 16
  %v287 = vrot.slane %v285, 5
  %v288 = vsel %vm50, %v283, %v287
  %v290 = vshrl.u32 %v46, 16
  %v292 = vrot.slane %v290, 4
  %v293 = vshll.u32 %v46, 16
  %v295 = vrot.slane %v293, 5
  %v296 = vor.u32 %v292, %v295
  %v297 = vrot.slane %v296, 4
  %v299 = vshll.u32 %v47, 16
  %v301 = vrot.slane %v299, 5
  %v302 = vsel %vm50, %v297, %v301
  %v319 = vunpack.c.l.b16 %v12
  %v320 = vunpack.c.l.b16 %v14
  %v321 = vunpack.c.l.b16 %v16
  %v322 = vunpack.c.l.b16 %v18
  %v323 = vunpack.c.l.b16 %v20
  %v324 = vunpack.c.l.b16 %v22
  %v325 = vunpack.c.l.b16 %v24
  %v326 = vunpack.c.l.b16 %v26
  %v327 = vunpack.c.l.b16 %v30
  %v328 = vunpack.c.l.b16 %v32
  %v329 = vunpack.c.l.b16 %v34
  %v330 = vunpack.c.l.b16 %v36
  %v331 = vunpack.c.l.b16 %v38
  %v332 = vunpack.c.l.b16 %v40
  %v333 = vunpack.c.l.b16 %v42
  %v334 = vunpack.c.l.b16 %v44
  %v335 = vpack.c.b16 %v320, %v319
  %v336 = vpack.c.b16 %v322, %v321
  %v337 = vpack.c.b16 %v324, %v323
  %v338 = vpack.c.b16 %v326, %v325
  %v339 = vpack.c.b16 %v328, %v327
  %v340 = vpack.c.b16 %v330, %v329
  %v341 = vpack.c.b16 %v332, %v331
  %v342 = vpack.c.b16 %v334, %v333
  %v343 = vunpack.c.l.b16 %v64
  %v344 = vunpack.c.l.b16 %v78
  %v345 = vunpack.c.l.b16 %v92
  %v346 = vunpack.c.l.b16 %v106
  %v347 = vunpack.c.l.b16 %v120
  %v348 = vunpack.c.l.b16 %v134
  %v349 = vunpack.c.l.b16 %v148
  %v350 = vunpack.c.l.b16 %v162
  %v351 = vunpack.c.l.b16 %v176
  %v352 = vunpack.c.l.b16 %v190
  %v353 = vunpack.c.l.b16 %v204
  %v354 = vunpack.c.l.b16 %v218
  %v355 = vunpack.c.l.b16 %v232
  %v356 = vunpack.c.l.b16 %v246
  %v357 = vunpack.c.l.b16 %v260
  %v358 = vunpack.c.l.b16 %v274
  %v359 = vpack.c.b16 %v344, %v343
  %v360 = vpack.c.b16 %v346, %v345
  %v361 = vpack.c.b16 %v348, %v347
  %v362 = vpack.c.b16 %v350, %v349
  %v363 = vpack.c.b16 %v352, %v351
  %v364 = vpack.c.b16 %v354, %v353
  %v365 = vpack.c.b16 %v356, %v355
  %v366 = vpack.c.b16 %v358, %v357
  %367 = vrot.lane.b32.xlu0 %v359, 4
  %v368 = vpop.permute.xlu0 %367
  %369 = vrot.lane.b32.xlu0 %v360, 4
  %v370 = vpop.permute.xlu0 %369
  %371 = vrot.lane.b32.xlu0 %v361, 4
  %v372 = vpop.permute.xlu0 %371
  %373 = vrot.lane.b32.xlu0 %v362, 4
  %v374 = vpop.permute.xlu0 %373
  %375 = vrot.lane.b32.xlu0 %v363, 4
  %v376 = vpop.permute.xlu0 %375
  %377 = vrot.lane.b32.xlu0 %v364, 4
  %v378 = vpop.permute.xlu0 %377
  %379 = vrot.lane.b32.xlu0 %v365, 4
  %v380 = vpop.permute.xlu0 %379
  %381 = vrot.lane.b32.xlu0 %v366, 4
  %v382 = vpop.permute.xlu0 %381
  %v385 = vunpack.c.l.b16 %v28
  %v386 = vunpack.c.l.b16 %v46
  %v387 = vpack.c.b16 %v321, %v320
  %v388 = vpack.c.b16 %v323, %v322
  %v389 = vpack.c.b16 %v325, %v324
  %v390 = vpack.c.b16 %v385, %v326
  %v391 = vpack.c.b16 %v329, %v328
  %v392 = vpack.c.b16 %v331, %v330
  %v393 = vpack.c.b16 %v333, %v332
  %v394 = vpack.c.b16 %v386, %v334
  %395 = vrot.lane.b32.xlu0 %v387, 8
  %v396 = vpop.permute.xlu0 %395
  %397 = vrot.lane.b32.xlu0 %v388, 8
  %v398 = vpop.permute.xlu0 %397
  %399 = vrot.lane.b32.xlu0 %v389, 8
  %v400 = vpop.permute.xlu0 %399
  %401 = vrot.lane.b32.xlu0 %v390, 8
  %v402 = vpop.permute.xlu0 %401
  %403 = vrot.lane.b32.xlu0 %v391, 8
  %v404 = vpop.permute.xlu0 %403
  %405 = vrot.lane.b32.xlu0 %v392, 8
  %v406 = vpop.permute.xlu0 %405
  %407 = vrot.lane.b32.xlu0 %v393, 8
  %v408 = vpop.permute.xlu0 %407
  %409 = vrot.lane.b32.xlu0 %v394, 8
  %v410 = vpop.permute.xlu0 %409
  %v411 = vunpack.c.l.b16 %v288
  %v412 = vunpack.c.l.b16 %v302
  %v413 = vpack.c.b16 %v345, %v344
  %v414 = vpack.c.b16 %v347, %v346
  %v415 = vpack.c.b16 %v349, %v348
  %v416 = vpack.c.b16 %v411, %v350
  %v417 = vpack.c.b16 %v353, %v352
  %v418 = vpack.c.b16 %v355, %v354
  %v419 = vpack.c.b16 %v357, %v356
  %v420 = vpack.c.b16 %v412, %v358
  %421 = vrot.lane.b32.xlu0 %v413, 12
  %v422 = vpop.permute.xlu0 %421
  %423 = vrot.lane.b32.xlu0 %v414, 12
  %v424 = vpop.permute.xlu0 %423
  %425 = vrot.lane.b32.xlu0 %v415, 12
  %v426 = vpop.permute.xlu0 %425
  %427 = vrot.lane.b32.xlu0 %v416, 12
  %v428 = vpop.permute.xlu0 %427
  %429 = vrot.lane.b32.xlu0 %v417, 12
  %v430 = vpop.permute.xlu0 %429
  %431 = vrot.lane.b32.xlu0 %v418, 12
  %v432 = vpop.permute.xlu0 %431
  %433 = vrot.lane.b32.xlu0 %v419, 12
  %v434 = vpop.permute.xlu0 %433
  %435 = vrot.lane.b32.xlu0 %v420, 12
  %v436 = vpop.permute.xlu0 %435
  %vm437 = vcmask 31744
  %v440 = vsel %vm437, %v335, %v368
  %v443 = vsel %vm437, %v336, %v370
  %v446 = vsel %vm437, %v337, %v372
  %v449 = vsel %vm437, %v338, %v374
  %v452 = vsel %vm437, %v339, %v376
  %v455 = vsel %vm437, %v340, %v378
  %v458 = vsel %vm437, %v341, %v380
  %v461 = vsel %vm437, %v342, %v382
  %vm462 = vcmask 64512
  %v464 = vsel %vm462, %v440, %v396
  %v466 = vsel %vm462, %v443, %v398
  %v468 = vsel %vm462, %v446, %v400
  %v470 = vsel %vm462, %v449, %v402
  %v472 = vsel %vm462, %v452, %v404
  %v474 = vsel %vm462, %v455, %v406
  %v476 = vsel %vm462, %v458, %v408
  %v478 = vsel %vm462, %v461, %v410
  %vm479 = vcmask 97280
  %v481 = vsel %vm479, %v464, %v422
  %v483 = vsel %vm479, %v466, %v424
  %v485 = vsel %vm479, %v468, %v426
  %v487 = vsel %vm479, %v470, %v428
  %v489 = vsel %vm479, %v472, %v430
  %v491 = vsel %vm479, %v474, %v432
  %v493 = vsel %vm479, %v476, %v434
  %v495 = vsel %vm479, %v478, %v436
  %v496 = vld [vmem:[%s1] sm:$0xf]
  %v497 = vld [vmem:[%s1 + $0x4] sm:$0xf]
  %v500 = vunpack.c.l.b16 %v496
  %v501 = vunpack.c.l.b16 %v497
  %v502 = vpack.c.b16 %v501, %v500
  %vm504 = vcmask 130048
  %v505 = vsel %vm504, %v481, 0
  %v507 = vsel %vm504, %v483, 0
  %v509 = vsel %vm504, %v485, 0
  %v511 = vsel %vm504, %v487, 0
  %v513 = vsel %vm504, %v489, 0
  %v515 = vsel %vm504, %v491, 0
  %v517 = vsel %vm504, %v493, 0
  %v519 = vsel %vm504, %v495, 0
  %521 = vmatprep.subr.bf16.mxu0 0
  %522 = vmatpush1.bf16.msra.mxu0 0
  %523 = vmatprep.subr.bf16.mxu0 0
  %524 = vmatpush1.bf16.msra.mxu0 0
  %525 = vmatprep.subr.bf16.mxu0 0
  %526 = vmatpush1.bf16.msra.mxu0 0
  %527 = vmatprep.subr.bf16.mxu0 0
  %528 = vmatpush1.bf16.msra.mxu0 0
  %529 = vmatprep.subr.bf16.mxu0 0
  %530 = vmatpush1.bf16.msra.mxu0 0
  %531 = vmatprep.subr.bf16.mxu0 0
  %532 = vmatpush1.bf16.msra.mxu0 0
  %533 = vmatprep.subr.bf16.mxu0 0
  %534 = vmatpush1.bf16.msra.mxu0 0
  %535 = vmatprep.subr.bf16.mxu0 0
  %536 = vmatpush1.bf16.msra.mxu0 %v502
  %537 = vmatprep.subr.bf16.mxu0 0
  %538 = vmatpush2.bf16.msra.mxu0 0
  %539 = vmatprep.subr.bf16.mxu0 0
  %540 = vmatpush2.bf16.msra.mxu0 0
  %541 = vmatprep.subr.bf16.mxu0 0
  %542 = vmatpush2.bf16.msra.mxu0 0
  %543 = vmatprep.subr.bf16.mxu0 0
  %544 = vmatpush2.bf16.msra.mxu0 0
  %545 = vmatprep.subr.bf16.mxu0 0
  %546 = vmatpush2.bf16.msra.mxu0 0
  %547 = vmatprep.subr.bf16.mxu0 0
  %548 = vmatpush2.bf16.msra.mxu0 0
  %549 = vmatprep.subr.bf16.mxu0 0
  %550 = vmatpush2.bf16.msra.mxu0 0
  %551 = vmatprep.subr.bf16.mxu0 0
  %552 = vmatpush2.bf16.msra.mxu0 0
  %553 = vmatprep.mubr.bf16.mxu0 0
  %554 = vmatmul.mubr.bf16.gmra.mxu0 %v505
  %v555 = vpop.f32.mrf.mxu0
  %v556 = vadd.f32 0.0, %v555
  %v557 = vpop.f32.mrf.mxu0
  %v558 = vpop.f32.mrf.mxu0
  %v559 = vadd.f32 0.0, %v558
  %v560 = vpop.f32.mrf.mxu0
  %561 = vmatprep.mubr.bf16.mxu0 0
  %562 = vmatmul.mubr.bf16.gmra.mxu0 %v507
  %v563 = vpop.f32.mrf.mxu0
  %v564 = vadd.f32 0.0, %v563
  %v565 = vpop.f32.mrf.mxu0
  %v566 = vpop.f32.mrf.mxu0
  %v567 = vadd.f32 0.0, %v566
  %v568 = vpop.f32.mrf.mxu0
  %569 = vmatprep.mubr.bf16.mxu0 0
  %570 = vmatmul.mubr.bf16.gmra.mxu0 %v509
  %v571 = vpop.f32.mrf.mxu0
  %v572 = vadd.f32 0.0, %v571
  %v573 = vpop.f32.mrf.mxu0
  %v574 = vpop.f32.mrf.mxu0
  %v575 = vadd.f32 0.0, %v574
  %v576 = vpop.f32.mrf.mxu0
  %577 = vmatprep.mubr.bf16.mxu0 0
  %578 = vmatmul.mubr.bf16.gmra.mxu0 %v511
  %v579 = vpop.f32.mrf.mxu0
  %v580 = vadd.f32 0.0, %v579
  %v581 = vpop.f32.mrf.mxu0
  %v582 = vpop.f32.mrf.mxu0
  %v583 = vadd.f32 0.0, %v582
  %v584 = vpop.f32.mrf.mxu0
  %585 = vmatprep.mubr.bf16.mxu0 0
  %586 = vmatmul.mubr.bf16.gmra.mxu0 %v513
  %v587 = vpop.f32.mrf.mxu0
  %v588 = vadd.f32 0.0, %v587
  %v589 = vpop.f32.mrf.mxu0
  %v590 = vpop.f32.mrf.mxu0
  %v591 = vadd.f32 0.0, %v590
  %v592 = vpop.f32.mrf.mxu0
  %593 = vmatprep.mubr.bf16.mxu0 0
  %594 = vmatmul.mubr.bf16.gmra.mxu0 %v515
  %v595 = vpop.f32.mrf.mxu0
  %v596 = vadd.f32 0.0, %v595
  %v597 = vpop.f32.mrf.mxu0
  %v598 = vpop.f32.mrf.mxu0
  %v599 = vadd.f32 0.0, %v598
  %v600 = vpop.f32.mrf.mxu0
  %601 = vmatprep.mubr.bf16.mxu0 0
  %602 = vmatmul.mubr.bf16.gmra.mxu0 %v517
  %v603 = vpop.f32.mrf.mxu0
  %v604 = vadd.f32 0.0, %v603
  %v605 = vpop.f32.mrf.mxu0
  %v606 = vpop.f32.mrf.mxu0
  %v607 = vadd.f32 0.0, %v606
  %v608 = vpop.f32.mrf.mxu0
  %609 = vmatprep.mubr.bf16.mxu0 0
  %610 = vmatmul.mubr.bf16.gmra.mxu0 %v519
  %v611 = vpop.f32.mrf.mxu0
  %v612 = vadd.f32 0.0, %v611
  %v613 = vpop.f32.mrf.mxu0
  %v614 = vpop.f32.mrf.mxu0
  %v615 = vadd.f32 0.0, %v614
  %v616 = vpop.f32.mrf.mxu0
  %617 = vdwg.mxu0
  %618 = vst.msk [vmem:[%s2] sm:$0xff] %vm462, %v556
  %619 = vst.msk [vmem:[%s2 + $0x8] sm:$0xff] %vm462, %v559
  %620 = vst.msk [vmem:[%s2 + $0x10] sm:$0xff] %vm462, %v564
  %621 = vst.msk [vmem:[%s2 + $0x18] sm:$0xff] %vm462, %v567
  %622 = vst.msk [vmem:[%s2 + $0x20] sm:$0xff] %vm462, %v572
  %623 = vst.msk [vmem:[%s2 + $0x28] sm:$0xff] %vm462, %v575
  %624 = vst.msk [vmem:[%s2 + $0x30] sm:$0xff] %vm462, %v580
  %625 = vst.msk [vmem:[%s2 + $0x38] sm:$0xff] %vm462, %v583
  %626 = vst.msk [vmem:[%s2 + $0x40] sm:$0xff] %vm462, %v588
  %627 = vst.msk [vmem:[%s2 + $0x48] sm:$0xff] %vm462, %v591
  %628 = vst.msk [vmem:[%s2 + $0x50] sm:$0xff] %vm462, %v596
  %629 = vst.msk [vmem:[%s2 + $0x58] sm:$0xff] %vm462, %v599
  %630 = vst.msk [vmem:[%s2 + $0x60] sm:$0xff] %vm462, %v604
  %631 = vst.msk [vmem:[%s2 + $0x68] sm:$0xff] %vm462, %v607
  %632 = vst.msk [vmem:[%s2 + $0x70] sm:$0xff] %vm462, %v612
  %633 = vst.msk [vmem:[%s2 + $0x78] sm:$0xff] %vm462, %v615
  // Predicated region
  $region10: #{_lambda_.8} parent=0 // pred_check
    _
  $region11: #{_lambda_.8} parent=0 // pred_check_branch
    %635 = sbr.rel (0) target = $region13
  $region12: #{_lambda_.8} parent=0 // pred_region
    _
  $region13: #{_lambda_.8} parent=0 // pred_fallthru
    _
  // Predicated region
  $region14: #{_lambda_.8} parent=0 // pred_check
    _
  $region15: #{_lambda_.8} parent=0 // pred_check_branch
    %637 = sbr.rel (0) target = $region17
  $region16: #{_lambda_.8} parent=0 // pred_region
    _
  $region17: #{_lambda_.8} parent=0 // pred_fallthru
    _

// kernel: _lambda_.9
$region0: #{_lambda_.9}
  #allocation0 [shape = 'u32[]', space=smem, size = 0x4, offset = 0x4, fixed_abs, tag = 'smem constant byte address 0x4 - core index']
  #allocation1 [shape = 'u32[144,128]{1,0:T(1,128)}', space=vmem, size = 0x12000, scoped, tag = 'internal scratch']
  %s0 = inlined_call_operand.vmem [shape: bf16[2,5,5,32], index: 0, kind: input, shape index: {}]
  %s1 = inlined_call_operand.vmem [shape: bf16[128,16], index: 1, kind: input, shape index: {}]
  %s2 = inlined_call_operand.vmem [shape: f32[1,16], index: 2, kind: input, shape index: {}]
  %s3 = inlined_call_operand.vmem [shape: f32[1,16], index: 3, kind: input, shape index: {}]
  %s4 = inlined_call_operand.vmem [shape: f32[32,16], index: 4, kind: output, shape index: {}]
  %s5 = sld [smem:[#allocation0]]
  $region26: #{_lambda_.9} parent=0
    _
  %s7 = ssub.s32 1, %s5
  %s8 = scalar_select 0, %s7, %s5
  // Predicated region
  $region2: #{_lambda_.9} parent=0 // pred_check
    _
  $region3: #{_lambda_.9} parent=0 // pred_check_branch
    %10 = sbr.rel (0) target = $region5
  $region4: #{_lambda_.9} parent=0 // pred_region
    _
  $region5: #{_lambda_.9} parent=0 // pred_fallthru
    _
  // Predicated region
  $region6: #{_lambda_.9} parent=0 // pred_check
    _
  $region7: #{_lambda_.9} parent=0 // pred_check_branch
    %12 = sbr.rel (0) target = $region9
  $region8: #{_lambda_.9} parent=0 // pred_region
    _
  $region9: #{_lambda_.9} parent=0 // pred_fallthru
    _
  // Predicated region
  $region10: #{_lambda_.9} parent=0 // pred_check
    _
  $region11: #{_lambda_.9} parent=0 // pred_check_branch
    %14 = sbr.rel (0) target = $region13
  $region12: #{_lambda_.9} parent=0 // pred_region
    _
  $region13: #{_lambda_.9} parent=0 // pred_fallthru
    _
  // Predicated region
  $region14: #{_lambda_.9} parent=0 // pred_check
    _
  $region15: #{_lambda_.9} parent=0 // pred_check_branch
    %16 = sbr.rel (0) target = $region17
  $region16: #{_lambda_.9} parent=0 // pred_region
    _
  $region17: #{_lambda_.9} parent=0 // pred_fallthru
    _
  %v19 = vld [vmem:[%s0] sm:$0x7]
  %v20 = vld [vmem:[%s0 + $0x4] sm:$0x7]
  %v21 = vld [vmem:[%s0 + $0x8] sm:$0x7]
  %v22 = vld [vmem:[%s0 + $0xc] sm:$0x7]
  %v23 = vld [vmem:[%s0 + $0x10] sm:$0x7]
  %v24 = vld [vmem:[%s0 + $0x14] sm:$0x7]
  %v25 = vld [vmem:[%s0 + $0x18] sm:$0x7]
  %v26 = vld [vmem:[%s0 + $0x1c] sm:$0x7]
  %v27 = vld [vmem:[%s0 + $0x20] sm:$0x7]
  %v28 = vld [vmem:[%s0 + $0x24] sm:$0x7]
  %vm29 = vcmp.gt.bf16.partialorder %v19, 0
  %vm30 = vcmp.gt.bf16.partialorder %v20, 0
  %vm31 = vcmp.gt.bf16.partialorder %v21, 0
  %vm32 = vcmp.gt.bf16.partialorder %v22, 0
  %vm33 = vcmp.gt.bf16.partialorder %v23, 0
  %vm34 = vcmp.gt.bf16.partialorder %v24, 0
  %vm35 = vcmp.gt.bf16.partialorder %v25, 0
  %vm36 = vcmp.gt.bf16.partialorder %v26, 0
  %vm37 = vcmp.gt.bf16.partialorder %v27, 0
  %vm38 = vcmp.gt.bf16.partialorder %v28, 0
  %v39 = vmul.bf16 %v19, 1045249613
  %v40 = vmul.bf16 %v20, 1045249613
  %v41 = vmul.bf16 %v21, 1045249613
  %v42 = vmul.bf16 %v22, 1045249613
  %v43 = vmul.bf16 %v23, 1045249613
  %v44 = vmul.bf16 %v24, 1045249613
  %v45 = vmul.bf16 %v25, 1045249613
  %v46 = vmul.bf16 %v26, 1045249613
  %v47 = vmul.bf16 %v27, 1045249613
  %v48 = vmul.bf16 %v28, 1045249613
  %v49 = vsel %vm29, %v19, %v39
  %v50 = vsel %vm30, %v20, %v40
  %v51 = vsel %vm31, %v21, %v41
  %v52 = vsel %vm32, %v22, %v42
  %v53 = vsel %vm33, %v23, %v43
  %v54 = vsel %vm34, %v24, %v44
  %v55 = vsel %vm35, %v25, %v45
  %v56 = vsel %vm36, %v26, %v46
  %v57 = vsel %vm37, %v27, %v47
  %v58 = vsel %vm38, %v28, %v48
  %v68 = vunpack.c.l.s4 1983009808
  %v69 = vunpack.c.0.s8 %v68
  %v70 = vlaneseq
  %v71 = vshrl.u32 %v70, 7
  %v72 = vsub.s32 %v69, %v71
  %v73 = vrot.slane %v49, %v72
  %v74 = vcombine.high %v73, %v73
  %v76 = vunpack.c.l.s4 1983009808
  %v77 = vunpack.c.0.s8 %v76
  %v78 = vlaneseq
  %v79 = vshrl.u32 %v78, 7
  %v80 = vsub.s32 %v77, %v79
  %v81 = vrot.slane %v50, %v80
  %v82 = vcombine.high %v81, %v81
  %v84 = vunpack.c.l.s4 1983009808
  %v85 = vunpack.c.0.s8 %v84
  %v86 = vlaneseq
  %v87 = vshrl.u32 %v86, 7
  %v88 = vsub.s32 %v85, %v87
  %v89 = vrot.slane %v51, %v88
  %v90 = vcombine.high %v89, %v89
  %v92 = vunpack.c.l.s4 1983009808
  %v93 = vunpack.c.0.s8 %v92
  %v94 = vlaneseq
  %v95 = vshrl.u32 %v94, 7
  %v96 = vsub.s32 %v93, %v95
  %v97 = vrot.slane %v52, %v96
  %v98 = vcombine.high %v97, %v97
  %v100 = vunpack.c.l.s4 1983009808
  %v101 = vunpack.c.0.s8 %v100
  %v102 = vlaneseq
  %v103 = vshrl.u32 %v102, 7
  %v104 = vsub.s32 %v101, %v103
  %v105 = vrot.slane %v54, %v104
  %v106 = vcombine.high %v105, %v105
  %v108 = vunpack.c.l.s4 1983009808
  %v109 = vunpack.c.0.s8 %v108
  %v110 = vlaneseq
  %v111 = vshrl.u32 %v110, 7
  %v112 = vsub.s32 %v109, %v111
  %v113 = vrot.slane %v55, %v112
  %v114 = vcombine.high %v113, %v113
  %v116 = vunpack.c.l.s4 1983009808
  %v117 = vunpack.c.0.s8 %v116
  %v118 = vlaneseq
  %v119 = vshrl.u32 %v118, 7
  %v120 = vsub.s32 %v117, %v119
  %v121 = vrot.slane %v56, %v120
  %v122 = vcombine.high %v121, %v121
  %v124 = vunpack.c.l.s4 1983009808
  %v125 = vunpack.c.0.s8 %v124
  %v126 = vlaneseq
  %v127 = vshrl.u32 %v126, 7
  %v128 = vsub.s32 %v125, %v127
  %v129 = vrot.slane %v57, %v128
  %v130 = vcombine.high %v129, %v129
  %vm131 = vsmask.f32 1280
  %vm132 = vsmask.f32 3336
  %vm133 = vmor %vm131, %vm132
  %vm134 = vsmask.f32 5392
  %vm135 = vmor %vm133, %vm134
  %vm136 = vsmask.f32 7448
  %vm137 = vmor %vm135, %vm136
  %v139 = vshrl.u32 %v73, 16
  %v141 = vrot.slane %v139, 6
  %v142 = vshll.u32 %v73, 16
  %v144 = vrot.slane %v142, 7
  %v145 = vor.u32 %v141, %v144
  %v146 = vrot.slane %v145, 2
  %v148 = vshll.u32 %v74, 16
  %v150 = vrot.slane %v148, 7
  %v151 = vsel %vm137, %v146, %v150
  %v153 = vshrl.u32 %v81, 16
  %v155 = vrot.slane %v153, 6
  %v156 = vshll.u32 %v81, 16
  %v158 = vrot.slane %v156, 7
  %v159 = vor.u32 %v155, %v158
  %v160 = vrot.slane %v159, 2
  %v162 = vshll.u32 %v82, 16
  %v164 = vrot.slane %v162, 7
  %v165 = vsel %vm137, %v160, %v164
  %v167 = vshrl.u32 %v89, 16
  %v169 = vrot.slane %v167, 6
  %v170 = vshll.u32 %v89, 16
  %v172 = vrot.slane %v170, 7
  %v173 = vor.u32 %v169, %v172
  %v174 = vrot.slane %v173, 2
  %v176 = vshll.u32 %v90, 16
  %v178 = vrot.slane %v176, 7
  %v179 = vsel %vm137, %v174, %v178
  %v181 = vshrl.u32 %v97, 16
  %v183 = vrot.slane %v181, 6
  %v184 = vshll.u32 %v97, 16
  %v186 = vrot.slane %v184, 7
  %v187 = vor.u32 %v183, %v186
  %v188 = vrot.slane %v187, 2
  %v190 = vshll.u32 %v98, 16
  %v192 = vrot.slane %v190, 7
  %v193 = vsel %vm137, %v188, %v192
  %v195 = vshrl.u32 %v105, 16
  %v197 = vrot.slane %v195, 6
  %v198 = vshll.u32 %v105, 16
  %v200 = vrot.slane %v198, 7
  %v201 = vor.u32 %v197, %v200
  %v202 = vrot.slane %v201, 2
  %v204 = vshll.u32 %v106, 16
  %v206 = vrot.slane %v204, 7
  %v207 = vsel %vm137, %v202, %v206
  %v209 = vshrl.u32 %v113, 16
  %v211 = vrot.slane %v209, 6
  %v212 = vshll.u32 %v113, 16
  %v214 = vrot.slane %v212, 7
  %v215 = vor.u32 %v211, %v214
  %v216 = vrot.slane %v215, 2
  %v218 = vshll.u32 %v114, 16
  %v220 = vrot.slane %v218, 7
  %v221 = vsel %vm137, %v216, %v220
  %v223 = vshrl.u32 %v121, 16
  %v225 = vrot.slane %v223, 6
  %v226 = vshll.u32 %v121, 16
  %v228 = vrot.slane %v226, 7
  %v229 = vor.u32 %v225, %v228
  %v230 = vrot.slane %v229, 2
  %v232 = vshll.u32 %v122, 16
  %v234 = vrot.slane %v232, 7
  %v235 = vsel %vm137, %v230, %v234
  %v237 = vshrl.u32 %v129, 16
  %v239 = vrot.slane %v237, 6
  %v240 = vshll.u32 %v129, 16
  %v242 = vrot.slane %v240, 7
  %v243 = vor.u32 %v239, %v242
  %v244 = vrot.slane %v243, 2
  %v246 = vshll.u32 %v130, 16
  %v248 = vrot.slane %v246, 7
  %v249 = vsel %vm137, %v244, %v248
  %v253 = vunpack.c.l.s4 1983009808
  %v254 = vunpack.c.0.s8 %v253
  %v255 = vlaneseq
  %v256 = vshrl.u32 %v255, 7
  %v257 = vsub.s32 %v254, %v256
  %v258 = vrot.slane %v53, %v257
  %v259 = vcombine.high %v258, %v258
  %v261 = vunpack.c.l.s4 1983009808
  %v262 = vunpack.c.0.s8 %v261
  %v263 = vlaneseq
  %v264 = vshrl.u32 %v263, 7
  %v265 = vsub.s32 %v262, %v264
  %v266 = vrot.slane %v58, %v265
  %v267 = vcombine.high %v266, %v266
  %v269 = vshrl.u32 %v258, 16
  %v271 = vrot.slane %v269, 6
  %v272 = vshll.u32 %v258, 16
  %v274 = vrot.slane %v272, 7
  %v275 = vor.u32 %v271, %v274
  %v276 = vrot.slane %v275, 2
  %v278 = vshll.u32 %v259, 16
  %v280 = vrot.slane %v278, 7
  %v281 = vsel %vm137, %v276, %v280
  %v283 = vshrl.u32 %v266, 16
  %v285 = vrot.slane %v283, 6
  %v286 = vshll.u32 %v266, 16
  %v288 = vrot.slane %v286, 7
  %v289 = vor.u32 %v285, %v288
  %v290 = vrot.slane %v289, 2
  %v292 = vshll.u32 %v267, 16
  %v294 = vrot.slane %v292, 7
  %v295 = vsel %vm137, %v290, %v294
  %v296 = vcombine.low %v49, %v50
  %v297 = vcombine.low %v51, %v52
  %v299 = vunpack.c.l.s4 1983009808
  %v300 = vunpack.c.0.s8 %v299
  %v301 = vlaneseq
  %v302 = vshrl.u32 %v301, 7
  %v303 = vsub.s32 %v300, %v302
  %v304 = vrot.slane %v296, %v303
  %v306 = vunpack.c.l.s4 1983009808
  %v307 = vunpack.c.0.s8 %v306
  %v308 = vlaneseq
  %v309 = vshrl.u32 %v308, 7
  %v310 = vsub.s32 %v307, %v309
  %v311 = vrot.slane %v297, %v310
  %v312 = vcombine.low %v304, %v311
  %v313 = vcombine.low %v54, %v55
  %v314 = vcombine.low %v56, %v57
  %v316 = vunpack.c.l.s4 1983009808
  %v317 = vunpack.c.0.s8 %v316
  %v318 = vlaneseq
  %v319 = vshrl.u32 %v318, 7
  %v320 = vsub.s32 %v317, %v319
  %v321 = vrot.slane %v313, %v320
  %v323 = vunpack.c.l.s4 1983009808
  %v324 = vunpack.c.0.s8 %v323
  %v325 = vlaneseq
  %v326 = vshrl.u32 %v325, 7
  %v327 = vsub.s32 %v324, %v326
  %v328 = vrot.slane %v314, %v327
  %v329 = vcombine.low %v321, %v328
  %v330 = vcombine.low %v151, %v165
  %v331 = vcombine.low %v179, %v193
  %v333 = vunpack.c.l.s4 1983009808
  %v334 = vunpack.c.0.s8 %v333
  %v335 = vlaneseq
  %v336 = vshrl.u32 %v335, 7
  %v337 = vsub.s32 %v334, %v336
  %v338 = vrot.slane %v330, %v337
  %v340 = vunpack.c.l.s4 1983009808
  %v341 = vunpack.c.0.s8 %v340
  %v342 = vlaneseq
  %v343 = vshrl.u32 %v342, 7
  %v344 = vsub.s32 %v341, %v343
  %v345 = vrot.slane %v331, %v344
  %v346 = vcombine.low %v338, %v345
  %v347 = vcombine.low %v207, %v221
  %v348 = vcombine.low %v235, %v249
  %v350 = vunpack.c.l.s4 1983009808
  %v351 = vunpack.c.0.s8 %v350
  %v352 = vlaneseq
  %v353 = vshrl.u32 %v352, 7
  %v354 = vsub.s32 %v351, %v353
  %v355 = vrot.slane %v347, %v354
  %v357 = vunpack.c.l.s4 1983009808
  %v358 = vunpack.c.0.s8 %v357
  %v359 = vlaneseq
  %v360 = vshrl.u32 %v359, 7
  %v361 = vsub.s32 %v358, %v360
  %v362 = vrot.slane %v348, %v361
  %v363 = vcombine.low %v355, %v362
  %364 = vrot.lane.b32.xlu0 %v346, 32
  %v365 = vpop.permute.xlu0 %364
  %366 = vrot.lane.b32.xlu0 %v363, 32
  %v367 = vpop.permute.xlu0 %366
  %v368 = vcombine.low %v50, %v51
  %v369 = vcombine.low %v52, %v53
  %v371 = vunpack.c.l.s4 1983009808
  %v372 = vunpack.c.0.s8 %v371
  %v373 = vlaneseq
  %v374 = vshrl.u32 %v373, 7
  %v375 = vsub.s32 %v372, %v374
  %v376 = vrot.slane %v368, %v375
  %v378 = vunpack.c.l.s4 1983009808
  %v379 = vunpack.c.0.s8 %v378
  %v380 = vlaneseq
  %v381 = vshrl.u32 %v380, 7
  %v382 = vsub.s32 %v379, %v381
  %v383 = vrot.slane %v369, %v382
  %v384 = vcombine.low %v376, %v383
  %v385 = vcombine.low %v55, %v56
  %v386 = vcombine.low %v57, %v58
  %v388 = vunpack.c.l.s4 1983009808
  %v389 = vunpack.c.0.s8 %v388
  %v390 = vlaneseq
  %v391 = vshrl.u32 %v390, 7
  %v392 = vsub.s32 %v389, %v391
  %v393 = vrot.slane %v385, %v392
  %v395 = vunpack.c.l.s4 1983009808
  %v396 = vunpack.c.0.s8 %v395
  %v397 = vlaneseq
  %v398 = vshrl.u32 %v397, 7
  %v399 = vsub.s32 %v396, %v398
  %v400 = vrot.slane %v386, %v399
  %v401 = vcombine.low %v393, %v400
  %402 = vrot.lane.b32.xlu0 %v384, 64
  %v403 = vpop.permute.xlu0 %402
  %404 = vrot.lane.b32.xlu0 %v401, 64
  %v405 = vpop.permute.xlu0 %404
  %v406 = vcombine.low %v165, %v179
  %v407 = vcombine.low %v193, %v281
  %v409 = vunpack.c.l.s4 1983009808
  %v410 = vunpack.c.0.s8 %v409
  %v411 = vlaneseq
  %v412 = vshrl.u32 %v411, 7
  %v413 = vsub.s32 %v410, %v412
  %v414 = vrot.slane %v406, %v413
  %v416 = vunpack.c.l.s4 1983009808
  %v417 = vunpack.c.0.s8 %v416
  %v418 = vlaneseq
  %v419 = vshrl.u32 %v418, 7
  %v420 = vsub.s32 %v417, %v419
  %v421 = vrot.slane %v407, %v420
  %v422 = vcombine.low %v414, %v421
  %v423 = vcombine.low %v221, %v235
  %v424 = vcombine.low %v249, %v295
  %v426 = vunpack.c.l.s4 1983009808
  %v427 = vunpack.c.0.s8 %v426
  %v428 = vlaneseq
  %v429 = vshrl.u32 %v428, 7
  %v430 = vsub.s32 %v427, %v429
  %v431 = vrot.slane %v423, %v430
  %v433 = vunpack.c.l.s4 1983009808
  %v434 = vunpack.c.0.s8 %v433
  %v435 = vlaneseq
  %v436 = vshrl.u32 %v435, 7
  %v437 = vsub.s32 %v434, %v436
  %v438 = vrot.slane %v424, %v437
  %v439 = vcombine.low %v431, %v438
  %440 = vrot.lane.b32.xlu0 %v422, 96
  %v441 = vpop.permute.xlu0 %440
  %442 = vrot.lane.b32.xlu0 %v439, 96
  %v443 = vpop.permute.xlu0 %442
  %vm444 = vcmask 261120
  %v447 = vsel %vm444, %v312, %v365
  %v450 = vsel %vm444, %v329, %v367
  %vm451 = vcmask 523264
  %v453 = vsel %vm451, %v447, %v403
  %v455 = vsel %vm451, %v450, %v405
  %vm456 = vcmask 785408
  %v458 = vsel %vm456, %v453, %v441
  %v461 = vsel %vm456, %v455, %v443
  %v463 = vld [vmem:[%s1] sm:$0xf]
  %v464 = vld [vmem:[%s1 + $0x4] sm:$0xf]
  %v465 = vld [vmem:[%s1 + $0x8] sm:$0xf]
  %v466 = vld [vmem:[%s1 + $0xc] sm:$0xf]
  %v467 = vld [vmem:[%s1 + $0x10] sm:$0xf]
  %v468 = vld [vmem:[%s1 + $0x14] sm:$0xf]
  %v469 = vld [vmem:[%s1 + $0x18] sm:$0xf]
  %v470 = vld [vmem:[%s1 + $0x1c] sm:$0xf]
  %v471 = vld [vmem:[%s1 + $0x20] sm:$0xf]
  %v472 = vld [vmem:[%s1 + $0x24] sm:$0xf]
  %v473 = vld [vmem:[%s1 + $0x28] sm:$0xf]
  %v474 = vld [vmem:[%s1 + $0x2c] sm:$0xf]
  %v475 = vld [vmem:[%s1 + $0x30] sm:$0xf]
  %v476 = vld [vmem:[%s1 + $0x34] sm:$0xf]
  %v477 = vld [vmem:[%s1 + $0x38] sm:$0xf]
  %v478 = vld [vmem:[%s1 + $0x3c] sm:$0xf]
  %v495 = vunpack.c.l.b16 %v463
  %v496 = vunpack.c.l.b16 %v464
  %v497 = vunpack.c.l.b16 %v465
  %v498 = vunpack.c.l.b16 %v466
  %v499 = vunpack.c.l.b16 %v467
  %v500 = vunpack.c.l.b16 %v468
  %v501 = vunpack.c.l.b16 %v469
  %v502 = vunpack.c.l.b16 %v470
  %v503 = vunpack.c.l.b16 %v471
  %v504 = vunpack.c.l.b16 %v472
  %v505 = vunpack.c.l.b16 %v473
  %v506 = vunpack.c.l.b16 %v474
  %v507 = vunpack.c.l.b16 %v475
  %v508 = vunpack.c.l.b16 %v476
  %v509 = vunpack.c.l.b16 %v477
  %v510 = vunpack.c.l.b16 %v478
  %v511 = vpack.c.b16 %v496, %v495
  %v512 = vpack.c.b16 %v498, %v497
  %v513 = vpack.c.b16 %v500, %v499
  %v514 = vpack.c.b16 %v502, %v501
  %v515 = vpack.c.b16 %v504, %v503
  %v516 = vpack.c.b16 %v506, %v505
  %v517 = vpack.c.b16 %v508, %v507
  %v518 = vpack.c.b16 %v510, %v509
  %527 = vmatprep.subr.bf16.mxu0 0
  %528 = vmatpush1.bf16.msra.mxu0 %v518
  %529 = vmatprep.subr.bf16.mxu0 0
  %530 = vmatpush1.bf16.msra.mxu0 %v517
  %531 = vmatprep.subr.bf16.mxu0 0
  %532 = vmatpush1.bf16.msra.mxu0 %v516
  %533 = vmatprep.subr.bf16.mxu0 0
  %534 = vmatpush1.bf16.msra.mxu0 %v515
  %535 = vmatprep.subr.bf16.mxu0 0
  %536 = vmatpush1.bf16.msra.mxu0 %v514
  %537 = vmatprep.subr.bf16.mxu0 0
  %538 = vmatpush1.bf16.msra.mxu0 %v513
  %539 = vmatprep.subr.bf16.mxu0 0
  %540 = vmatpush1.bf16.msra.mxu0 %v512
  %541 = vmatprep.subr.bf16.mxu0 0
  %542 = vmatpush1.bf16.msra.mxu0 %v511
  %543 = vmatprep.subr.bf16.mxu0 0
  %544 = vmatpush2.bf16.msra.mxu0 0
  %545 = vmatprep.subr.bf16.mxu0 0
  %546 = vmatpush2.bf16.msra.mxu0 0
  %547 = vmatprep.subr.bf16.mxu0 0
  %548 = vmatpush2.bf16.msra.mxu0 0
  %549 = vmatprep.subr.bf16.mxu0 0
  %550 = vmatpush2.bf16.msra.mxu0 0
  %551 = vmatprep.subr.bf16.mxu0 0
  %552 = vmatpush2.bf16.msra.mxu0 0
  %553 = vmatprep.subr.bf16.mxu0 0
  %554 = vmatpush2.bf16.msra.mxu0 0
  %555 = vmatprep.subr.bf16.mxu0 0
  %556 = vmatpush2.bf16.msra.mxu0 0
  %557 = vmatprep.subr.bf16.mxu0 0
  %558 = vmatpush2.bf16.msra.mxu0 0
  %559 = vmatprep.mubr.bf16.mxu0 0
  %560 = vmatmul.mubr.bf16.gmra.mxu0 %v458
  %v561 = vpop.f32.mrf.mxu0
  %v562 = vadd.f32 0.0, %v561
  %v563 = vpop.f32.mrf.mxu0
  %v564 = vpop.f32.mrf.mxu0
  %v565 = vadd.f32 0.0, %v564
  %v566 = vpop.f32.mrf.mxu0
  %567 = vmatprep.mubr.bf16.mxu0 0
  %568 = vmatmul.mubr.bf16.gmra.mxu0 %v461
  %v569 = vpop.f32.mrf.mxu0
  %v570 = vadd.f32 0.0, %v569
  %v571 = vpop.f32.mrf.mxu0
  %v572 = vpop.f32.mrf.mxu0
  %v573 = vadd.f32 0.0, %v572
  %v574 = vpop.f32.mrf.mxu0
  %575 = vdwg.mxu0
  %vm576 = vcmask 130048
  %v577 = vsel %vm576, %v562, 0.0
  %v578 = vsel %vm576, %v565, 0.0
  %v579 = vadd.f32 %v577, %v578
  %v580 = vsel %vm576, %v570, 0.0
  %v581 = vadd.f32 %v579, %v580
  %v582 = vsel %vm576, %v573, 0.0
  %v583 = vadd.f32 %v581, %v582
  %v584 = vrot.slane %v583, 4
  %v585 = vadd.f32 %v583, %v584
  %v586 = vrot.slane %v585, 2
  %v587 = vadd.f32 %v585, %v586
  %v588 = vrot.slane %v587, 1
  %v589 = vadd.f32 %v587, %v588
  %v590 = vmul.f32 %v589, 0.03125
  %v591 = vmul.f32 %v562, %v562
  %v592 = vmul.f32 %v565, %v565
  %v593 = vmul.f32 %v570, %v570
  %v594 = vmul.f32 %v573, %v573
  %v595 = vsel %vm576, %v591, 0.0
  %v596 = vsel %vm576, %v592, 0.0
  %v597 = vadd.f32 %v595, %v596
  %v598 = vsel %vm576, %v593, 0.0
  %v599 = vadd.f32 %v597, %v598
  %v600 = vsel %vm576, %v594, 0.0
  %v601 = vadd.f32 %v599, %v600
  %v602 = vrot.slane %v601, 4
  %v603 = vadd.f32 %v601, %v602
  %v604 = vrot.slane %v603, 2
  %v605 = vadd.f32 %v603, %v604
  %v606 = vrot.slane %v605, 1
  %v607 = vadd.f32 %v605, %v606
  %v608 = vmul.f32 %v607, 0.03125
  %v609 = vmul.f32 %v590, %v590
  %v610 = vsub.f32 %v608, %v609
  %v611 = vsub.f32 %v562, %v590
  %v612 = vsub.f32 %v565, %v590
  %v613 = vsub.f32 %v570, %v590
  %v614 = vsub.f32 %v573, %v590
  %v615 = vadd.f32 %v610, 1e-05
  %v616 = vrsqrt.pop %v615
  %v617 = vmul.f32 %v611, %v616
  %v618 = vmul.f32 %v612, %v616
  %v619 = vmul.f32 %v613, %v616
  %v620 = vmul.f32 %v614, %v616
  %v621 = vld [vmem:[%s2] sm:$0x1]
  %v623 = vlaneseq
  %v624 = vshrl.u32 %v623, 7
  %v625 = vsub.s32 0, %v624
  %v626 = vrot.slane %v621, %v625
  %v628 = vmul.f32 %v617, %v626
  %v629 = vmul.f32 %v618, %v626
  %v630 = vmul.f32 %v619, %v626
  %v631 = vmul.f32 %v620, %v626
  %v632 = vld [vmem:[%s3] sm:$0x1]
  %v634 = vlaneseq
  %v635 = vshrl.u32 %v634, 7
  %v636 = vsub.s32 0, %v635
  %v637 = vrot.slane %v632, %v636
  %v639 = vadd.f32 %v628, %v637
  %v640 = vadd.f32 %v629, %v637
  %v641 = vadd.f32 %v630, %v637
  %v642 = vadd.f32 %v631, %v637
  %643 = vst.msk [vmem:[%s4] sm:$0xff] %vm576, %v639
  %644 = vst.msk [vmem:[%s4 + $0x8] sm:$0xff] %vm576, %v640
  %645 = vst.msk [vmem:[%s4 + $0x10] sm:$0xff] %vm576, %v641
  %646 = vst.msk [vmem:[%s4 + $0x18] sm:$0xff] %vm576, %v642
  // Predicated region
  $region18: #{_lambda_.9} parent=0 // pred_check
    _
  $region19: #{_lambda_.9} parent=0 // pred_check_branch
    %648 = sbr.rel (0) target = $region21
  $region20: #{_lambda_.9} parent=0 // pred_region
    _
  $region21: #{_lambda_.9} parent=0 // pred_fallthru
    _
  // Predicated region
  $region22: #{_lambda_.9} parent=0 // pred_check
    _
  $region23: #{_lambda_.9} parent=0 // pred_check_branch
    %650 = sbr.rel (0) target = $region25
  $region24: #{_lambda_.9} parent=0 // pred_region
    _
  $region25: #{_lambda_.9} parent=0 // pred_fallthru
    _

// kernel: _lambda_.10
$region0: #{_lambda_.10}
  #allocation0 [shape = 'u32[]', space=smem, size = 0x4, offset = 0x4, fixed_abs, tag = 'smem constant byte address 0x4 - core index']
  #allocation1 [shape = 'u32[144,128]{1,0:T(1,128)}', space=vmem, size = 0x12000, scoped, tag = 'internal scratch']
  %s0 = inlined_call_operand.vmem [shape: bf16[2,3,3,64], index: 0, kind: input, shape index: {}]
  %s1 = inlined_call_operand.vmem [shape: bf16[256,32], index: 1, kind: input, shape index: {}]
  %s2 = inlined_call_operand.vmem [shape: f32[1,32], index: 2, kind: input, shape index: {}]
  %s3 = inlined_call_operand.vmem [shape: f32[1,32], index: 3, kind: input, shape index: {}]
  %s4 = inlined_call_operand.vmem [shape: f32[8,32], index: 4, kind: output, shape index: {}]
  %s5 = sld [smem:[#allocation0]]
  $region26: #{_lambda_.10} parent=0
    _
  %s7 = ssub.s32 1, %s5
  %s8 = scalar_select 0, %s7, %s5
  // Predicated region
  $region2: #{_lambda_.10} parent=0 // pred_check
    _
  $region3: #{_lambda_.10} parent=0 // pred_check_branch
    %10 = sbr.rel (0) target = $region5
  $region4: #{_lambda_.10} parent=0 // pred_region
    _
  $region5: #{_lambda_.10} parent=0 // pred_fallthru
    _
  // Predicated region
  $region6: #{_lambda_.10} parent=0 // pred_check
    _
  $region7: #{_lambda_.10} parent=0 // pred_check_branch
    %12 = sbr.rel (0) target = $region9
  $region8: #{_lambda_.10} parent=0 // pred_region
    _
  $region9: #{_lambda_.10} parent=0 // pred_fallthru
    _
  // Predicated region
  $region10: #{_lambda_.10} parent=0 // pred_check
    _
  $region11: #{_lambda_.10} parent=0 // pred_check_branch
    %14 = sbr.rel (0) target = $region13
  $region12: #{_lambda_.10} parent=0 // pred_region
    _
  $region13: #{_lambda_.10} parent=0 // pred_fallthru
    _
  // Predicated region
  $region14: #{_lambda_.10} parent=0 // pred_check
    _
  $region15: #{_lambda_.10} parent=0 // pred_check_branch
    %16 = sbr.rel (0) target = $region17
  $region16: #{_lambda_.10} parent=0 // pred_region
    _
  $region17: #{_lambda_.10} parent=0 // pred_fallthru
    _
  %v19 = vld [vmem:[%s0] sm:$0x3]
  %v20 = vld [vmem:[%s0 + $0x2] sm:$0x3]
  %v21 = vld [vmem:[%s0 + $0x4] sm:$0x3]
  %v22 = vld [vmem:[%s0 + $0x6] sm:$0x3]
  %v23 = vld [vmem:[%s0 + $0x8] sm:$0x3]
  %v24 = vld [vmem:[%s0 + $0xa] sm:$0x3]
  %vm25 = vcmp.gt.bf16.partialorder %v19, 0
  %vm26 = vcmp.gt.bf16.partialorder %v20, 0
  %vm27 = vcmp.gt.bf16.partialorder %v21, 0
  %vm28 = vcmp.gt.bf16.partialorder %v22, 0
  %vm29 = vcmp.gt.bf16.partialorder %v23, 0
  %vm30 = vcmp.gt.bf16.partialorder %v24, 0
  %v31 = vmul.bf16 %v19, 1045249613
  %v32 = vmul.bf16 %v20, 1045249613
  %v33 = vmul.bf16 %v21, 1045249613
  %v34 = vmul.bf16 %v22, 1045249613
  %v35 = vmul.bf16 %v23, 1045249613
  %v36 = vmul.bf16 %v24, 1045249613
  %v37 = vsel %vm25, %v19, %v31
  %v38 = vsel %vm26, %v20, %v32
  %v39 = vsel %vm27, %v21, %v33
  %v40 = vsel %vm28, %v22, %v34
  %v41 = vsel %vm29, %v23, %v35
  %v42 = vsel %vm30, %v24, %v36
  %v48 = vunpack.c.l.s4 1966171168
  %v49 = vunpack.c.0.s8 %v48
  %v50 = vlaneseq
  %v51 = vshrl.u32 %v50, 7
  %v52 = vsub.s32 %v49, %v51
  %v53 = vrot.slane %v37, %v52
  %v54 = vcombine.high %v53, %v53
  %v56 = vunpack.c.l.s4 1966171168
  %v57 = vunpack.c.0.s8 %v56
  %v58 = vlaneseq
  %v59 = vshrl.u32 %v58, 7
  %v60 = vsub.s32 %v57, %v59
  %v61 = vrot.slane %v38, %v60
  %v62 = vcombine.high %v61, %v61
  %v64 = vunpack.c.l.s4 1966171168
  %v65 = vunpack.c.0.s8 %v64
  %v66 = vlaneseq
  %v67 = vshrl.u32 %v66, 7
  %v68 = vsub.s32 %v65, %v67
  %v69 = vrot.slane %v40, %v68
  %v70 = vcombine.high %v69, %v69
  %v72 = vunpack.c.l.s4 1966171168
  %v73 = vunpack.c.0.s8 %v72
  %v74 = vlaneseq
  %v75 = vshrl.u32 %v74, 7
  %v76 = vsub.s32 %v73, %v75
  %v77 = vrot.slane %v41, %v76
  %v78 = vcombine.high %v77, %v77
  %vm79 = vsmask.f32 256
  %vm80 = vsmask.f32 1284
  %vm81 = vmor %vm79, %vm80
  %vm82 = vsmask.f32 2312
  %vm83 = vmor %vm81, %vm82
  %vm84 = vsmask.f32 3340
  %vm85 = vmor %vm83, %vm84
  %vm86 = vsmask.f32 4368
  %vm87 = vmor %vm85, %vm86
  %vm88 = vsmask.f32 5396
  %vm89 = vmor %vm87, %vm88
  %vm90 = vsmask.f32 6424
  %vm91 = vmor %vm89, %vm90
  %vm92 = vsmask.f32 7452
  %vm93 = vmor %vm91, %vm92
  %v95 = vshrl.u32 %v53, 16
  %v97 = vrot.slane %v95, 7
  %v98 = vrot.slane %v97, 1
  %v100 = vshll.u32 %v54, 16
  %v102 = vsel %vm93, %v98, %v100
  %v104 = vshrl.u32 %v61, 16
  %v106 = vrot.slane %v104, 7
  %v107 = vrot.slane %v106, 1
  %v109 = vshll.u32 %v62, 16
  %v111 = vsel %vm93, %v107, %v109
  %v113 = vshrl.u32 %v69, 16
  %v115 = vrot.slane %v113, 7
  %v116 = vrot.slane %v115, 1
  %v118 = vshll.u32 %v70, 16
  %v120 = vsel %vm93, %v116, %v118
  %v122 = vshrl.u32 %v77, 16
  %v124 = vrot.slane %v122, 7
  %v125 = vrot.slane %v124, 1
  %v127 = vshll.u32 %v78, 16
  %v129 = vsel %vm93, %v125, %v127
  %v133 = vunpack.c.l.s4 1966171168
  %v134 = vunpack.c.0.s8 %v133
  %v135 = vlaneseq
  %v136 = vshrl.u32 %v135, 7
  %v137 = vsub.s32 %v134, %v136
  %v138 = vrot.slane %v39, %v137
  %v139 = vcombine.high %v138, %v138
  %v141 = vunpack.c.l.s4 1966171168
  %v142 = vunpack.c.0.s8 %v141
  %v143 = vlaneseq
  %v144 = vshrl.u32 %v143, 7
  %v145 = vsub.s32 %v142, %v144
  %v146 = vrot.slane %v42, %v145
  %v147 = vcombine.high %v146, %v146
  %v149 = vshrl.u32 %v138, 16
  %v151 = vrot.slane %v149, 7
  %v152 = vrot.slane %v151, 1
  %v154 = vshll.u32 %v139, 16
  %v156 = vsel %vm93, %v152, %v154
  %v158 = vshrl.u32 %v146, 16
  %v160 = vrot.slane %v158, 7
  %v161 = vrot.slane %v160, 1
  %v163 = vshll.u32 %v147, 16
  %v165 = vsel %vm93, %v161, %v163
  %v166 = vcombine.low %v37, %v38
  %v167 = vcombine.low %v40, %v41
  %v169 = vunpack.c.l.s4 1966171168
  %v170 = vunpack.c.0.s8 %v169
  %v171 = vlaneseq
  %v172 = vshrl.u32 %v171, 7
  %v173 = vsub.s32 %v170, %v172
  %v174 = vrot.slane %v166, %v173
  %v176 = vunpack.c.l.s4 1966171168
  %v177 = vunpack.c.0.s8 %v176
  %v178 = vlaneseq
  %v179 = vshrl.u32 %v178, 7
  %v180 = vsub.s32 %v177, %v179
  %v181 = vrot.slane %v167, %v180
  %v182 = vcombine.low %v174, %v181
  %v184 = vunpack.c.l.s4 1966171168
  %v185 = vunpack.c.0.s8 %v184
  %v186 = vlaneseq
  %v187 = vshrl.u32 %v186, 7
  %v188 = vsub.s32 %v185, %v187
  %v189 = vrot.slane %v182, %v188
  %v190 = vcombine.low %v102, %v111
  %v191 = vcombine.low %v120, %v129
  %v193 = vunpack.c.l.s4 1966171168
  %v194 = vunpack.c.0.s8 %v193
  %v195 = vlaneseq
  %v196 = vshrl.u32 %v195, 7
  %v197 = vsub.s32 %v194, %v196
  %v198 = vrot.slane %v190, %v197
  %v200 = vunpack.c.l.s4 1966171168
  %v201 = vunpack.c.0.s8 %v200
  %v202 = vlaneseq
  %v203 = vshrl.u32 %v202, 7
  %v204 = vsub.s32 %v201, %v203
  %v205 = vrot.slane %v191, %v204
  %v206 = vcombine.low %v198, %v205
  %v208 = vunpack.c.l.s4 1966171168
  %v209 = vunpack.c.0.s8 %v208
  %v210 = vlaneseq
  %v211 = vshrl.u32 %v210, 7
  %v212 = vsub.s32 %v209, %v211
  %v213 = vrot.slane %v206, %v212
  %214 = vrot.lane.b32.xlu0 %v213, 64
  %v215 = vpop.permute.xlu0 %214
  %v216 = vcombine.low %v38, %v39
  %v217 = vcombine.low %v41, %v42
  %v219 = vunpack.c.l.s4 1966171168
  %v220 = vunpack.c.0.s8 %v219
  %v221 = vlaneseq
  %v222 = vshrl.u32 %v221, 7
  %v223 = vsub.s32 %v220, %v222
  %v224 = vrot.slane %v216, %v223
  %v226 = vunpack.c.l.s4 1966171168
  %v227 = vunpack.c.0.s8 %v226
  %v228 = vlaneseq
  %v229 = vshrl.u32 %v228, 7
  %v230 = vsub.s32 %v227, %v229
  %v231 = vrot.slane %v217, %v230
  %v232 = vcombine.low %v224, %v231
  %v234 = vunpack.c.l.s4 1966171168
  %v235 = vunpack.c.0.s8 %v234
  %v236 = vlaneseq
  %v237 = vshrl.u32 %v236, 7
  %v238 = vsub.s32 %v235, %v237
  %v239 = vrot.slane %v232, %v238
  %v240 = vcombine.low %v111, %v156
  %v241 = vcombine.low %v129, %v165
  %v243 = vunpack.c.l.s4 1966171168
  %v244 = vunpack.c.0.s8 %v243
  %v245 = vlaneseq
  %v246 = vshrl.u32 %v245, 7
  %v247 = vsub.s32 %v244, %v246
  %v248 = vrot.slane %v240, %v247
  %v250 = vunpack.c.l.s4 1966171168
  %v251 = vunpack.c.0.s8 %v250
  %v252 = vlaneseq
  %v253 = vshrl.u32 %v252, 7
  %v254 = vsub.s32 %v251, %v253
  %v255 = vrot.slane %v241, %v254
  %v256 = vcombine.low %v248, %v255
  %v258 = vunpack.c.l.s4 1966171168
  %v259 = vunpack.c.0.s8 %v258
  %v260 = vlaneseq
  %v261 = vshrl.u32 %v260, 7
  %v262 = vsub.s32 %v259, %v261
  %v263 = vrot.slane %v256, %v262
  %264 = vrot.lane.b32.xlu0 %v263, 64
  %v265 = vpop.permute.xlu0 %264
  %vm266 = vcmask 523264
  %v269 = vsel %vm266, %v189, %v215
  %v273 = vsel %vm266, %v239, %v265
  %v275 = vld [vmem:[%s1] sm:$0xf]
  %v276 = vld [vmem:[%s1 + $0x4] sm:$0xf]
  %v277 = vld [vmem:[%s1 + $0x8] sm:$0xf]
  %v278 = vld [vmem:[%s1 + $0xc] sm:$0xf]
  %v279 = vld [vmem:[%s1 + $0x10] sm:$0xf]
  %v280 = vld [vmem:[%s1 + $0x14] sm:$0xf]
  %v281 = vld [vmem:[%s1 + $0x18] sm:$0xf]
  %v282 = vld [vmem:[%s1 + $0x1c] sm:$0xf]
  %v283 = vld [vmem:[%s1 + $0x20] sm:$0xf]
  %v284 = vld [vmem:[%s1 + $0x24] sm:$0xf]
  %v285 = vld [vmem:[%s1 + $0x28] sm:$0xf]
  %v286 = vld [vmem:[%s1 + $0x2c] sm:$0xf]
  %v287 = vld [vmem:[%s1 + $0x30] sm:$0xf]
  %v288 = vld [vmem:[%s1 + $0x34] sm:$0xf]
  %v289 = vld [vmem:[%s1 + $0x38] sm:$0xf]
  %v290 = vld [vmem:[%s1 + $0x3c] sm:$0xf]
  %v291 = vld [vmem:[%s1 + $0x40] sm:$0xf]
  %v292 = vld [vmem:[%s1 + $0x44] sm:$0xf]
  %v293 = vld [vmem:[%s1 + $0x48] sm:$0xf]
  %v294 = vld [vmem:[%s1 + $0x4c] sm:$0xf]
  %v295 = vld [vmem:[%s1 + $0x50] sm:$0xf]
  %v296 = vld [vmem:[%s1 + $0x54] sm:$0xf]
  %v297 = vld [vmem:[%s1 + $0x58] sm:$0xf]
  %v298 = vld [vmem:[%s1 + $0x5c] sm:$0xf]
  %v299 = vld [vmem:[%s1 + $0x60] sm:$0xf]
  %v300 = vld [vmem:[%s1 + $0x64] sm:$0xf]
  %v301 = vld [vmem:[%s1 + $0x68] sm:$0xf]
  %v302 = vld [vmem:[%s1 + $0x6c] sm:$0xf]
  %v303 = vld [vmem:[%s1 + $0x70] sm:$0xf]
  %v304 = vld [vmem:[%s1 + $0x74] sm:$0xf]
  %v305 = vld [vmem:[%s1 + $0x78] sm:$0xf]
  %v306 = vld [vmem:[%s1 + $0x7c] sm:$0xf]
  %v339 = vunpack.c.l.b16 %v275
  %v340 = vunpack.c.l.b16 %v276
  %v341 = vunpack.c.l.b16 %v277
  %v342 = vunpack.c.l.b16 %v278
  %v343 = vunpack.c.l.b16 %v279
  %v344 = vunpack.c.l.b16 %v280
  %v345 = vunpack.c.l.b16 %v281
  %v346 = vunpack.c.l.b16 %v282
  %v347 = vunpack.c.l.b16 %v283
  %v348 = vunpack.c.l.b16 %v284
  %v349 = vunpack.c.l.b16 %v285
  %v350 = vunpack.c.l.b16 %v286
  %v351 = vunpack.c.l.b16 %v287
  %v352 = vunpack.c.l.b16 %v288
  %v353 = vunpack.c.l.b16 %v289
  %v354 = vunpack.c.l.b16 %v290
  %v355 = vunpack.c.l.b16 %v291
  %v356 = vunpack.c.l.b16 %v292
  %v357 = vunpack.c.l.b16 %v293
  %v358 = vunpack.c.l.b16 %v294
  %v359 = vunpack.c.l.b16 %v295
  %v360 = vunpack.c.l.b16 %v296
  %v361 = vunpack.c.l.b16 %v297
  %v362 = vunpack.c.l.b16 %v298
  %v363 = vunpack.c.l.b16 %v299
  %v364 = vunpack.c.l.b16 %v300
  %v365 = vunpack.c.l.b16 %v301
  %v366 = vunpack.c.l.b16 %v302
  %v367 = vunpack.c.l.b16 %v303
  %v368 = vunpack.c.l.b16 %v304
  %v369 = vunpack.c.l.b16 %v305
  %v370 = vunpack.c.l.b16 %v306
  %v371 = vpack.c.b16 %v340, %v339
  %v372 = vpack.c.b16 %v342, %v341
  %v373 = vpack.c.b16 %v344, %v343
  %v374 = vpack.c.b16 %v346, %v345
  %v375 = vpack.c.b16 %v348, %v347
  %v376 = vpack.c.b16 %v350, %v349
  %v377 = vpack.c.b16 %v352, %v351
  %v378 = vpack.c.b16 %v354, %v353
  %v379 = vpack.c.b16 %v356, %v355
  %v380 = vpack.c.b16 %v358, %v357
  %v381 = vpack.c.b16 %v360, %v359
  %v382 = vpack.c.b16 %v362, %v361
  %v383 = vpack.c.b16 %v364, %v363
  %v384 = vpack.c.b16 %v366, %v365
  %v385 = vpack.c.b16 %v368, %v367
  %v386 = vpack.c.b16 %v370, %v369
  %403 = vmatprep.subr.bf16.mxu0 0
  %404 = vmatpush1.bf16.msra.mxu0 %v378
  %405 = vmatprep.subr.bf16.mxu0 0
  %406 = vmatpush1.bf16.msra.mxu0 %v377
  %407 = vmatprep.subr.bf16.mxu0 0
  %408 = vmatpush1.bf16.msra.mxu0 %v376
  %409 = vmatprep.subr.bf16.mxu0 0
  %410 = vmatpush1.bf16.msra.mxu0 %v375
  %411 = vmatprep.subr.bf16.mxu0 0
  %412 = vmatpush1.bf16.msra.mxu0 %v374
  %413 = vmatprep.subr.bf16.mxu0 0
  %414 = vmatpush1.bf16.msra.mxu0 %v373
  %415 = vmatprep.subr.bf16.mxu0 0
  %416 = vmatpush1.bf16.msra.mxu0 %v372
  %417 = vmatprep.subr.bf16.mxu0 0
  %418 = vmatpush1.bf16.msra.mxu0 %v371
  %419 = vmatprep.subr.bf16.mxu0 0
  %420 = vmatpush2.bf16.msra.mxu0 %v386
  %421 = vmatprep.subr.bf16.mxu0 0
  %422 = vmatpush2.bf16.msra.mxu0 %v385
  %423 = vmatprep.subr.bf16.mxu0 0
  %424 = vmatpush2.bf16.msra.mxu0 %v384
  %425 = vmatprep.subr.bf16.mxu0 0
  %426 = vmatpush2.bf16.msra.mxu0 %v383
  %427 = vmatprep.subr.bf16.mxu0 0
  %428 = vmatpush2.bf16.msra.mxu0 %v382
  %429 = vmatprep.subr.bf16.mxu0 0
  %430 = vmatpush2.bf16.msra.mxu0 %v381
  %431 = vmatprep.subr.bf16.mxu0 0
  %432 = vmatpush2.bf16.msra.mxu0 %v380
  %433 = vmatprep.subr.bf16.mxu0 0
  %434 = vmatpush2.bf16.msra.mxu0 %v379
  %435 = vmatprep.mubr.bf16.mxu0 %v273
  %436 = vmatmul.mubr.bf16.gmra.mxu0 %v269
  %v437 = vpop.f32.mrf.mxu0
  %v438 = vadd.f32 0.0, %v437
  %v439 = vpop.f32.mrf.mxu0
  %v440 = vpop.f32.mrf.mxu0
  %v441 = vpop.f32.mrf.mxu0
  %442 = vdwg.mxu0
  %vm443 = vcmask 261120
  %v444 = vsel %vm443, %v438, 0.0
  %v445 = vrot.slane %v444, 4
  %v446 = vadd.f32 %v444, %v445
  %v447 = vrot.slane %v446, 2
  %v448 = vadd.f32 %v446, %v447
  %v449 = vrot.slane %v448, 1
  %v450 = vadd.f32 %v448, %v449
  %v451 = vmul.f32 %v450, 0.125
  %v452 = vmul.f32 %v438, %v438
  %v453 = vsel %vm443, %v452, 0.0
  %v454 = vrot.slane %v453, 4
  %v455 = vadd.f32 %v453, %v454
  %v456 = vrot.slane %v455, 2
  %v457 = vadd.f32 %v455, %v456
  %v458 = vrot.slane %v457, 1
  %v459 = vadd.f32 %v457, %v458
  %v460 = vmul.f32 %v459, 0.125
  %v461 = vmul.f32 %v451, %v451
  %v462 = vsub.f32 %v460, %v461
  %v463 = vsub.f32 %v438, %v451
  %v464 = vadd.f32 %v462, 1e-05
  %v465 = vrsqrt.pop %v464
  %v466 = vmul.f32 %v463, %v465
  %v467 = vld [vmem:[%s2] sm:$0x1]
  %v469 = vlaneseq
  %v470 = vshrl.u32 %v469, 7
  %v471 = vsub.s32 0, %v470
  %v472 = vrot.slane %v467, %v471
  %v474 = vmul.f32 %v466, %v472
  %v475 = vld [vmem:[%s3] sm:$0x1]
  %v477 = vlaneseq
  %v478 = vshrl.u32 %v477, 7
  %v479 = vsub.s32 0, %v478
  %v480 = vrot.slane %v475, %v479
  %v482 = vadd.f32 %v474, %v480
  %483 = vst.msk [vmem:[%s4] sm:$0xff] %vm443, %v482
  // Predicated region
  $region18: #{_lambda_.10} parent=0 // pred_check
    _
  $region19: #{_lambda_.10} parent=0 // pred_check_branch
    %485 = sbr.rel (0) target = $region21
  $region20: #{_lambda_.10} parent=0 // pred_region
    _
  $region21: #{_lambda_.10} parent=0 // pred_fallthru
    _
  // Predicated region
  $region22: #{_lambda_.10} parent=0 // pred_check
    _
  $region23: #{_lambda_.10} parent=0 // pred_check_branch
    %487 = sbr.rel (0) target = $region25
  $region24: #{_lambda_.10} parent=0 // pred_region
    _
  $region25: #{_lambda_.10} parent=0 // pred_fallthru
    _

// kernel: _lambda_.11
$region0: #{_lambda_.11}
  #allocation0 [shape = 'u32[]', space=smem, size = 0x4, offset = 0x4, fixed_abs, tag = 'smem constant byte address 0x4 - core index']
  #allocation1 [shape = 'u32[144,128]{1,0:T(1,128)}', space=vmem, size = 0x12000, scoped, tag = 'internal scratch']
  %s0 = inlined_call_operand.vmem [shape: bf16[2,2,2,128], index: 0, kind: input, shape index: {}]
  %s1 = inlined_call_operand.vmem [shape: bf16[512,32], index: 1, kind: input, shape index: {}]
  %s2 = inlined_call_operand.vmem [shape: f32[2,32], index: 2, kind: output, shape index: {}]
  %s3 = sld [smem:[#allocation0]]
  $region18: #{_lambda_.11} parent=0
    _
  %s5 = ssub.s32 1, %s3
  %s6 = scalar_select 0, %s5, %s3
  // Predicated region
  $region2: #{_lambda_.11} parent=0 // pred_check
    _
  $region3: #{_lambda_.11} parent=0 // pred_check_branch
    %8 = sbr.rel (0) target = $region5
  $region4: #{_lambda_.11} parent=0 // pred_region
    _
  $region5: #{_lambda_.11} parent=0 // pred_fallthru
    _
  // Predicated region
  $region6: #{_lambda_.11} parent=0 // pred_check
    _
  $region7: #{_lambda_.11} parent=0 // pred_check_branch
    %10 = sbr.rel (0) target = $region9
  $region8: #{_lambda_.11} parent=0 // pred_region
    _
  $region9: #{_lambda_.11} parent=0 // pred_fallthru
    _
  %v13 = vld [vmem:[%s0] sm:$0x1]
  %v14 = vld [vmem:[%s0 + $0x1] sm:$0x1]
  %v15 = vld [vmem:[%s0 + $0x2] sm:$0x1]
  %v16 = vld [vmem:[%s0 + $0x3] sm:$0x1]
  %vm17 = vcmp.gt.bf16.partialorder %v13, 0
  %vm18 = vcmp.gt.bf16.partialorder %v14, 0
  %vm19 = vcmp.gt.bf16.partialorder %v15, 0
  %vm20 = vcmp.gt.bf16.partialorder %v16, 0
  %v21 = vmul.bf16 %v13, 1045249613
  %v22 = vmul.bf16 %v14, 1045249613
  %v23 = vmul.bf16 %v15, 1045249613
  %v24 = vmul.bf16 %v16, 1045249613
  %v25 = vsel %vm17, %v13, %v21
  %v26 = vsel %vm18, %v14, %v22
  %v27 = vsel %vm19, %v15, %v23
  %v28 = vsel %vm20, %v16, %v24
  %v32 = vunpack.c.l.s4 1966171168
  %v33 = vunpack.c.0.s8 %v32
  %v34 = vlaneseq
  %v35 = vshrl.u32 %v34, 7
  %v36 = vsub.s32 %v33, %v35
  %v37 = vrot.slane %v25, %v36
  %v39 = vunpack.c.l.s4 1966171168
  %v40 = vunpack.c.0.s8 %v39
  %v41 = vlaneseq
  %v42 = vshrl.u32 %v41, 7
  %v43 = vsub.s32 %v40, %v42
  %v44 = vrot.slane %v37, %v43
  %v46 = vunpack.c.l.s4 1966171168
  %v47 = vunpack.c.0.s8 %v46
  %v48 = vlaneseq
  %v49 = vshrl.u32 %v48, 7
  %v50 = vsub.s32 %v47, %v49
  %v51 = vrot.slane %v27, %v50
  %v53 = vunpack.c.l.s4 1966171168
  %v54 = vunpack.c.0.s8 %v53
  %v55 = vlaneseq
  %v56 = vshrl.u32 %v55, 7
  %v57 = vsub.s32 %v54, %v56
  %v58 = vrot.slane %v51, %v57
  %v59 = vunpack.c.l.b16 %v44
  %v60 = vunpack.c.l.b16 %v58
  %v61 = vrot.slane %v60, 7
  %vm62 = vcmask 1041409
  %v63 = vsel %vm62, %v61, %v59
  %v64 = vpack.c.b16 %v63, %v63
  %v66 = vrot.slane %v59, 1
  %v67 = vsel %vm62, %v60, %v66
  %v68 = vpack.c.b16 %v67, %v67
  %v73 = vunpack.c.l.s4 1966171168
  %v74 = vunpack.c.0.s8 %v73
  %v75 = vlaneseq
  %v76 = vshrl.u32 %v75, 7
  %v77 = vsub.s32 %v74, %v76
  %v78 = vrot.slane %v26, %v77
  %v80 = vunpack.c.l.s4 1966171168
  %v81 = vunpack.c.0.s8 %v80
  %v82 = vlaneseq
  %v83 = vshrl.u32 %v82, 7
  %v84 = vsub.s32 %v81, %v83
  %v85 = vrot.slane %v78, %v84
  %v87 = vunpack.c.l.s4 1966171168
  %v88 = vunpack.c.0.s8 %v87
  %v89 = vlaneseq
  %v90 = vshrl.u32 %v89, 7
  %v91 = vsub.s32 %v88, %v90
  %v92 = vrot.slane %v28, %v91
  %v94 = vunpack.c.l.s4 1966171168
  %v95 = vunpack.c.0.s8 %v94
  %v96 = vlaneseq
  %v97 = vshrl.u32 %v96, 7
  %v98 = vsub.s32 %v95, %v97
  %v99 = vrot.slane %v92, %v98
  %v100 = vunpack.c.l.b16 %v85
  %v101 = vunpack.c.l.b16 %v99
  %v102 = vrot.slane %v101, 7
  %v103 = vsel %vm62, %v102, %v100
  %v104 = vpack.c.b16 %v103, %v103
  %v106 = vrot.slane %v100, 1
  %v107 = vsel %vm62, %v101, %v106
  %v108 = vpack.c.b16 %v107, %v107
  %v110 = vld [vmem:[%s1] sm:$0xf]
  %v111 = vld [vmem:[%s1 + $0x4] sm:$0xf]
  %v112 = vld [vmem:[%s1 + $0x8] sm:$0xf]
  %v113 = vld [vmem:[%s1 + $0xc] sm:$0xf]
  %v114 = vld [vmem:[%s1 + $0x10] sm:$0xf]
  %v115 = vld [vmem:[%s1 + $0x14] sm:$0xf]
  %v116 = vld [vmem:[%s1 + $0x18] sm:$0xf]
  %v117 = vld [vmem:[%s1 + $0x1c] sm:$0xf]
  %v118 = vld [vmem:[%s1 + $0x20] sm:$0xf]
  %v119 = vld [vmem:[%s1 + $0x24] sm:$0xf]
  %v120 = vld [vmem:[%s1 + $0x28] sm:$0xf]
  %v121 = vld [vmem:[%s1 + $0x2c] sm:$0xf]
  %v122 = vld [vmem:[%s1 + $0x30] sm:$0xf]
  %v123 = vld [vmem:[%s1 + $0x34] sm:$0xf]
  %v124 = vld [vmem:[%s1 + $0x38] sm:$0xf]
  %v125 = vld [vmem:[%s1 + $0x3c] sm:$0xf]
  %v126 = vld [vmem:[%s1 + $0x40] sm:$0xf]
  %v127 = vld [vmem:[%s1 + $0x44] sm:$0xf]
  %v128 = vld [vmem:[%s1 + $0x48] sm:$0xf]
  %v129 = vld [vmem:[%s1 + $0x4c] sm:$0xf]
  %v130 = vld [vmem:[%s1 + $0x50] sm:$0xf]
  %v131 = vld [vmem:[%s1 + $0x54] sm:$0xf]
  %v132 = vld [vmem:[%s1 + $0x58] sm:$0xf]
  %v133 = vld [vmem:[%s1 + $0x5c] sm:$0xf]
  %v134 = vld [vmem:[%s1 + $0x60] sm:$0xf]
  %v135 = vld [vmem:[%s1 + $0x64] sm:$0xf]
  %v136 = vld [vmem:[%s1 + $0x68] sm:$0xf]
  %v137 = vld [vmem:[%s1 + $0x6c] sm:$0xf]
  %v138 = vld [vmem:[%s1 + $0x70] sm:$0xf]
  %v139 = vld [vmem:[%s1 + $0x74] sm:$0xf]
  %v140 = vld [vmem:[%s1 + $0x78] sm:$0xf]
  %v141 = vld [vmem:[%s1 + $0x7c] sm:$0xf]
  %v142 = vld [vmem:[%s1 + $0x80] sm:$0xf]
  %v143 = vld [vmem:[%s1 + $0x84] sm:$0xf]
  %v144 = vld [vmem:[%s1 + $0x88] sm:$0xf]
  %v145 = vld [vmem:[%s1 + $0x8c] sm:$0xf]
  %v146 = vld [vmem:[%s1 + $0x90] sm:$0xf]
  %v147 = vld [vmem:[%s1 + $0x94] sm:$0xf]
  %v148 = vld [vmem:[%s1 + $0x98] sm:$0xf]
  %v149 = vld [vmem:[%s1 + $0x9c] sm:$0xf]
  %v150 = vld [vmem:[%s1 + $0xa0] sm:$0xf]
  %v151 = vld [vmem:[%s1 + $0xa4] sm:$0xf]
  %v152 = vld [vmem:[%s1 + $0xa8] sm:$0xf]
  %v153 = vld [vmem:[%s1 + $0xac] sm:$0xf]
  %v154 = vld [vmem:[%s1 + $0xb0] sm:$0xf]
  %v155 = vld [vmem:[%s1 + $0xb4] sm:$0xf]
  %v156 = vld [vmem:[%s1 + $0xb8] sm:$0xf]
  %v157 = vld [vmem:[%s1 + $0xbc] sm:$0xf]
  %v158 = vld [vmem:[%s1 + $0xc0] sm:$0xf]
  %v159 = vld [vmem:[%s1 + $0xc4] sm:$0xf]
  %v160 = vld [vmem:[%s1 + $0xc8] sm:$0xf]
  %v161 = vld [vmem:[%s1 + $0xcc] sm:$0xf]
  %v162 = vld [vmem:[%s1 + $0xd0] sm:$0xf]
  %v163 = vld [vmem:[%s1 + $0xd4] sm:$0xf]
  %v164 = vld [vmem:[%s1 + $0xd8] sm:$0xf]
  %v165 = vld [vmem:[%s1 + $0xdc] sm:$0xf]
  %v166 = vld [vmem:[%s1 + $0xe0] sm:$0xf]
  %v167 = vld [vmem:[%s1 + $0xe4] sm:$0xf]
  %v168 = vld [vmem:[%s1 + $0xe8] sm:$0xf]
  %v169 = vld [vmem:[%s1 + $0xec] sm:$0xf]
  %v170 = vld [vmem:[%s1 + $0xf0] sm:$0xf]
  %v171 = vld [vmem:[%s1 + $0xf4] sm:$0xf]
  %v172 = vld [vmem:[%s1 + $0xf8] sm:$0xf]
  %v173 = vld [vmem:[%s1 + $0xfc] sm:$0xf]
  %v238 = vunpack.c.l.b16 %v110
  %v239 = vunpack.c.l.b16 %v111
  %v240 = vunpack.c.l.b16 %v112
  %v241 = vunpack.c.l.b16 %v113
  %v242 = vunpack.c.l.b16 %v114
  %v243 = vunpack.c.l.b16 %v115
  %v244 = vunpack.c.l.b16 %v116
  %v245 = vunpack.c.l.b16 %v117
  %v246 = vunpack.c.l.b16 %v118
  %v247 = vunpack.c.l.b16 %v119
  %v248 = vunpack.c.l.b16 %v120
  %v249 = vunpack.c.l.b16 %v121
  %v250 = vunpack.c.l.b16 %v122
  %v251 = vunpack.c.l.b16 %v123
  %v252 = vunpack.c.l.b16 %v124
  %v253 = vunpack.c.l.b16 %v125
  %v254 = vunpack.c.l.b16 %v126
  %v255 = vunpack.c.l.b16 %v127
  %v256 = vunpack.c.l.b16 %v128
  %v257 = vunpack.c.l.b16 %v129
  %v258 = vunpack.c.l.b16 %v130
  %v259 = vunpack.c.l.b16 %v131
  %v260 = vunpack.c.l.b16 %v132
  %v261 = vunpack.c.l.b16 %v133
  %v262 = vunpack.c.l.b16 %v134
  %v263 = vunpack.c.l.b16 %v135
  %v264 = vunpack.c.l.b16 %v136
  %v265 = vunpack.c.l.b16 %v137
  %v266 = vunpack.c.l.b16 %v138
  %v267 = vunpack.c.l.b16 %v139
  %v268 = vunpack.c.l.b16 %v140
  %v269 = vunpack.c.l.b16 %v141
  %v270 = vunpack.c.l.b16 %v142
  %v271 = vunpack.c.l.b16 %v143
  %v272 = vunpack.c.l.b16 %v144
  %v273 = vunpack.c.l.b16 %v145
  %v274 = vunpack.c.l.b16 %v146
  %v275 = vunpack.c.l.b16 %v147
  %v276 = vunpack.c.l.b16 %v148
  %v277 = vunpack.c.l.b16 %v149
  %v278 = vunpack.c.l.b16 %v150
  %v279 = vunpack.c.l.b16 %v151
  %v280 = vunpack.c.l.b16 %v152
  %v281 = vunpack.c.l.b16 %v153
  %v282 = vunpack.c.l.b16 %v154
  %v283 = vunpack.c.l.b16 %v155
  %v284 = vunpack.c.l.b16 %v156
  %v285 = vunpack.c.l.b16 %v157
  %v286 = vunpack.c.l.b16 %v158
  %v287 = vunpack.c.l.b16 %v159
  %v288 = vunpack.c.l.b16 %v160
  %v289 = vunpack.c.l.b16 %v161
  %v290 = vunpack.c.l.b16 %v162
  %v291 = vunpack.c.l.b16 %v163
  %v292 = vunpack.c.l.b16 %v164
  %v293 = vunpack.c.l.b16 %v165
  %v294 = vunpack.c.l.b16 %v166
  %v295 = vunpack.c.l.b16 %v167
  %v296 = vunpack.c.l.b16 %v168
  %v297 = vunpack.c.l.b16 %v169
  %v298 = vunpack.c.l.b16 %v170
  %v299 = vunpack.c.l.b16 %v171
  %v300 = vunpack.c.l.b16 %v172
  %v301 = vunpack.c.l.b16 %v173
  %v302 = vpack.c.b16 %v239, %v238
  %v303 = vpack.c.b16 %v241, %v240
  %v304 = vpack.c.b16 %v243, %v242
  %v305 = vpack.c.b16 %v245, %v244
  %v306 = vpack.c.b16 %v247, %v246
  %v307 = vpack.c.b16 %v249, %v248
  %v308 = vpack.c.b16 %v251, %v250
  %v309 = vpack.c.b16 %v253, %v252
  %v310 = vpack.c.b16 %v255, %v254
  %v311 = vpack.c.b16 %v257, %v256
  %v312 = vpack.c.b16 %v259, %v258
  %v313 = vpack.c.b16 %v261, %v260
  %v314 = vpack.c.b16 %v263, %v262
  %v315 = vpack.c.b16 %v265, %v264
  %v316 = vpack.c.b16 %v267, %v266
  %v317 = vpack.c.b16 %v269, %v268
  %v318 = vpack.c.b16 %v271, %v270
  %v319 = vpack.c.b16 %v273, %v272
  %v320 = vpack.c.b16 %v275, %v274
  %v321 = vpack.c.b16 %v277, %v276
  %v322 = vpack.c.b16 %v279, %v278
  %v323 = vpack.c.b16 %v281, %v280
  %v324 = vpack.c.b16 %v283, %v282
  %v325 = vpack.c.b16 %v285, %v284
  %v326 = vpack.c.b16 %v287, %v286
  %v327 = vpack.c.b16 %v289, %v288
  %v328 = vpack.c.b16 %v291, %v290
  %v329 = vpack.c.b16 %v293, %v292
  %v330 = vpack.c.b16 %v295, %v294
  %v331 = vpack.c.b16 %v297, %v296
  %v332 = vpack.c.b16 %v299, %v298
  %v333 = vpack.c.b16 %v301, %v300
  %366 = vmatprep.subr.bf16.mxu0 0
  %367 = vmatpush1.bf16.msra.mxu0 %v309
  %368 = vmatprep.subr.bf16.mxu0 0
  %369 = vmatpush1.bf16.msra.mxu0 %v308
  %370 = vmatprep.subr.bf16.mxu0 0
  %371 = vmatpush1.bf16.msra.mxu0 %v307
  %372 = vmatprep.subr.bf16.mxu0 0
  %373 = vmatpush1.bf16.msra.mxu0 %v306
  %374 = vmatprep.subr.bf16.mxu0 0
  %375 = vmatpush1.bf16.msra.mxu0 %v305
  %376 = vmatprep.subr.bf16.mxu0 0
  %377 = vmatpush1.bf16.msra.mxu0 %v304
  %378 = vmatprep.subr.bf16.mxu0 0
  %379 = vmatpush1.bf16.msra.mxu0 %v303
  %380 = vmatprep.subr.bf16.mxu0 0
  %381 = vmatpush1.bf16.msra.mxu0 %v302
  %382 = vmatprep.subr.bf16.mxu0 0
  %383 = vmatpush2.bf16.msra.mxu0 %v317
  %384 = vmatprep.subr.bf16.mxu0 0
  %385 = vmatpush2.bf16.msra.mxu0 %v316
  %386 = vmatprep.subr.bf16.mxu0 0
  %387 = vmatpush2.bf16.msra.mxu0 %v315
  %388 = vmatprep.subr.bf16.mxu0 0
  %389 = vmatpush2.bf16.msra.mxu0 %v314
  %390 = vmatprep.subr.bf16.mxu0 0
  %391 = vmatpush2.bf16.msra.mxu0 %v313
  %392 = vmatprep.subr.bf16.mxu0 0
  %393 = vmatpush2.bf16.msra.mxu0 %v312
  %394 = vmatprep.subr.bf16.mxu0 0
  %395 = vmatpush2.bf16.msra.mxu0 %v311
  %396 = vmatprep.subr.bf16.mxu0 0
  %397 = vmatpush2.bf16.msra.mxu0 %v310
  %398 = vmatprep.mubr.bf16.mxu0 %v68
  %399 = vmatmul.mubr.bf16.gmra.mxu0 %v64
  %v400 = vpop.f32.mrf.mxu0
  %v401 = vadd.f32 0.0, %v400
  %v402 = vpop.f32.mrf.mxu0
  %v403 = vpop.f32.mrf.mxu0
  %v404 = vpop.f32.mrf.mxu0
  %405 = vdwg.mxu0
  %406 = vmatprep.subr.bf16.mxu0 0
  %407 = vmatpush1.bf16.msra.mxu0 %v325
  %408 = vmatprep.subr.bf16.mxu0 0
  %409 = vmatpush1.bf16.msra.mxu0 %v324
  %410 = vmatprep.subr.bf16.mxu0 0
  %411 = vmatpush1.bf16.msra.mxu0 %v323
  %412 = vmatprep.subr.bf16.mxu0 0
  %413 = vmatpush1.bf16.msra.mxu0 %v322
  %414 = vmatprep.subr.bf16.mxu0 0
  %415 = vmatpush1.bf16.msra.mxu0 %v321
  %416 = vmatprep.subr.bf16.mxu0 0
  %417 = vmatpush1.bf16.msra.mxu0 %v320
  %418 = vmatprep.subr.bf16.mxu0 0
  %419 = vmatpush1.bf16.msra.mxu0 %v319
  %420 = vmatprep.subr.bf16.mxu0 0
  %421 = vmatpush1.bf16.msra.mxu0 %v318
  %422 = vmatprep.subr.bf16.mxu0 0
  %423 = vmatpush2.bf16.msra.mxu0 %v333
  %424 = vmatprep.subr.bf16.mxu0 0
  %425 = vmatpush2.bf16.msra.mxu0 %v332
  %426 = vmatprep.subr.bf16.mxu0 0
  %427 = vmatpush2.bf16.msra.mxu0 %v331
  %428 = vmatprep.subr.bf16.mxu0 0
  %429 = vmatpush2.bf16.msra.mxu0 %v330
  %430 = vmatprep.subr.bf16.mxu0 0
  %431 = vmatpush2.bf16.msra.mxu0 %v329
  %432 = vmatprep.subr.bf16.mxu0 0
  %433 = vmatpush2.bf16.msra.mxu0 %v328
  %434 = vmatprep.subr.bf16.mxu0 0
  %435 = vmatpush2.bf16.msra.mxu0 %v327
  %436 = vmatprep.subr.bf16.mxu0 0
  %437 = vmatpush2.bf16.msra.mxu0 %v326
  %438 = vmatprep.mubr.bf16.mxu0 %v108
  %439 = vmatmul.mubr.bf16.gmra.mxu0 %v104
  %v440 = vpop.f32.mrf.mxu0
  %v441 = vadd.f32 %v401, %v440
  %v442 = vpop.f32.mrf.mxu0
  %v443 = vpop.f32.mrf.mxu0
  %v444 = vpop.f32.mrf.mxu0
  %445 = vdwg.mxu0
  %vm446 = vcmask 254976
  %447 = vst.msk [vmem:[%s2] sm:$0x3] %vm446, %v441
  // Predicated region
  $region10: #{_lambda_.11} parent=0 // pred_check
    _
  $region11: #{_lambda_.11} parent=0 // pred_check_branch
    %449 = sbr.rel (0) target = $region13
  $region12: #{_lambda_.11} parent=0 // pred_region
    _
  $region13: #{_lambda_.11} parent=0 // pred_fallthru
    _
  // Predicated region
  $region14: #{_lambda_.11} parent=0 // pred_check
    _
  $region15: #{_lambda_.11} parent=0 // pred_check_branch
    %451 = sbr.rel (0) target = $region17
  $region16: #{_lambda_.11} parent=0 // pred_region
    _
  $region17: #{_lambda_.11} parent=0 // pred_fallthru
    _

// kernel: _lambda_.12
$region0: #{_lambda_.12}
  #allocation0 [shape = 'u32[]', space=smem, size = 0x4, offset = 0x4, fixed_abs, tag = 'smem constant byte address 0x4 - core index']
  #allocation1 [shape = 'u32[144,128]{1,0:T(1,128)}', space=vmem, size = 0x12000, scoped, tag = 'internal scratch']
  %s0 = inlined_call_operand.vmem [shape: bf16[2,3,3,32], index: 0, kind: input, shape index: {}]
  %s1 = inlined_call_operand.vmem [shape: bf16[288,128], index: 1, kind: input, shape index: {}]
  %s2 = inlined_call_operand.vmem [shape: f32[1,128], index: 2, kind: input, shape index: {}]
  %s3 = inlined_call_operand.vmem [shape: f32[1,128], index: 3, kind: input, shape index: {}]
  %s4 = inlined_call_operand.vmem [shape: f32[2,128], index: 4, kind: output, shape index: {}]
  %s5 = sld [smem:[#allocation0]]
  $region26: #{_lambda_.12} parent=0
    _
  %s7 = ssub.s32 1, %s5
  %s8 = scalar_select 0, %s7, %s5
  // Predicated region
  $region2: #{_lambda_.12} parent=0 // pred_check
    _
  $region3: #{_lambda_.12} parent=0 // pred_check_branch
    %10 = sbr.rel (0) target = $region5
  $region4: #{_lambda_.12} parent=0 // pred_region
    _
  $region5: #{_lambda_.12} parent=0 // pred_fallthru
    _
  // Predicated region
  $region6: #{_lambda_.12} parent=0 // pred_check
    _
  $region7: #{_lambda_.12} parent=0 // pred_check_branch
    %12 = sbr.rel (0) target = $region9
  $region8: #{_lambda_.12} parent=0 // pred_region
    _
  $region9: #{_lambda_.12} parent=0 // pred_fallthru
    _
  // Predicated region
  $region10: #{_lambda_.12} parent=0 // pred_check
    _
  $region11: #{_lambda_.12} parent=0 // pred_check_branch
    %14 = sbr.rel (0) target = $region13
  $region12: #{_lambda_.12} parent=0 // pred_region
    _
  $region13: #{_lambda_.12} parent=0 // pred_fallthru
    _
  // Predicated region
  $region14: #{_lambda_.12} parent=0 // pred_check
    _
  $region15: #{_lambda_.12} parent=0 // pred_check_branch
    %16 = sbr.rel (0) target = $region17
  $region16: #{_lambda_.12} parent=0 // pred_region
    _
  $region17: #{_lambda_.12} parent=0 // pred_fallthru
    _
  %v18 = vld [vmem:[%s0] sm:$0x3]
  %v19 = vld [vmem:[%s0 + $0x2] sm:$0x3]
  %v20 = vld [vmem:[%s0 + $0x4] sm:$0x3]
  %v21 = vld [vmem:[%s0 + $0x6] sm:$0x3]
  %v22 = vld [vmem:[%s0 + $0x8] sm:$0x3]
  %v23 = vld [vmem:[%s0 + $0xa] sm:$0x3]
  %v24 = vmax.bf16 %v18, 0
  %v25 = vmax.bf16 %v19, 0
  %v26 = vmax.bf16 %v20, 0
  %v27 = vmax.bf16 %v21, 0
  %v28 = vmax.bf16 %v22, 0
  %v29 = vmax.bf16 %v23, 0
  %v33 = vunpack.c.l.s4 1983009808
  %v34 = vunpack.c.0.s8 %v33
  %v35 = vlaneseq
  %v36 = vshrl.u32 %v35, 7
  %v37 = vsub.s32 %v34, %v36
  %v38 = vrot.slane %v24, %v37
  %v40 = vunpack.c.l.s4 1983009808
  %v41 = vunpack.c.0.s8 %v40
  %v42 = vlaneseq
  %v43 = vshrl.u32 %v42, 7
  %v44 = vsub.s32 %v41, %v43
  %v45 = vrot.slane %v27, %v44
  %v46 = vunpack.c.l.b16 %v38
  %v47 = vunpack.c.l.b16 %v45
  %v48 = vrot.slane %v47, 7
  %vm49 = vcmask 1041409
  %v50 = vsel %vm49, %v48, %v46
  %v51 = vpack.c.b16 %v50, %v50
  %v52 = vrot.slane %v46, 1
  %v53 = vsel %vm49, %v47, %v52
  %v54 = vpack.c.b16 %v53, %v53
  %55 = vrot.lane.b32.xlu0 %v54, 32
  %v56 = vpop.permute.xlu0 %55
  %v57 = vrot.slane %v46, 2
  %v58 = vrot.slane %v47, 1
  %v59 = vsel %vm49, %v58, %v57
  %v60 = vpack.c.b16 %v59, %v59
  %61 = vrot.lane.b32.xlu0 %v60, 64
  %v62 = vpop.permute.xlu0 %61
  %v66 = vunpack.c.l.s4 1983009808
  %v67 = vunpack.c.0.s8 %v66
  %v68 = vlaneseq
  %v69 = vshrl.u32 %v68, 7
  %v70 = vsub.s32 %v67, %v69
  %v71 = vrot.slane %v25, %v70
  %v73 = vunpack.c.l.s4 1983009808
  %v74 = vunpack.c.0.s8 %v73
  %v75 = vlaneseq
  %v76 = vshrl.u32 %v75, 7
  %v77 = vsub.s32 %v74, %v76
  %v78 = vrot.slane %v28, %v77
  %v79 = vunpack.c.l.b16 %v71
  %v80 = vunpack.c.l.b16 %v78
  %v81 = vrot.slane %v80, 7
  %v82 = vsel %vm49, %v81, %v79
  %v83 = vpack.c.b16 %v82, %v82
  %84 = vrot.lane.b32.xlu0 %v83, 96
  %v85 = vpop.permute.xlu0 %84
  %v86 = vrot.slane %v79, 1
  %v87 = vsel %vm49, %v80, %v86
  %v88 = vpack.c.b16 %v87, %v87
  %v89 = vrot.slane %v79, 2
  %v90 = vrot.slane %v80, 1
  %v91 = vsel %vm49, %v90, %v89
  %v92 = vpack.c.b16 %v91, %v91
  %93 = vrot.lane.b32.xlu0 %v92, 32
  %v94 = vpop.permute.xlu0 %93
  %v98 = vunpack.c.l.s4 1983009808
  %v99 = vunpack.c.0.s8 %v98
  %v100 = vlaneseq
  %v101 = vshrl.u32 %v100, 7
  %v102 = vsub.s32 %v99, %v101
  %v103 = vrot.slane %v26, %v102
  %v105 = vunpack.c.l.s4 1983009808
  %v106 = vunpack.c.0.s8 %v105
  %v107 = vlaneseq
  %v108 = vshrl.u32 %v107, 7
  %v109 = vsub.s32 %v106, %v108
  %v110 = vrot.slane %v29, %v109
  %v111 = vunpack.c.l.b16 %v103
  %v112 = vunpack.c.l.b16 %v110
  %v113 = vrot.slane %v112, 7
  %v114 = vsel %vm49, %v113, %v111
  %v115 = vpack.c.b16 %v114, %v114
  %116 = vrot.lane.b32.xlu0 %v115, 64
  %v117 = vpop.permute.xlu0 %116
  %v118 = vrot.slane %v111, 1
  %v119 = vsel %vm49, %v112, %v118
  %v120 = vpack.c.b16 %v119, %v119
  %121 = vrot.lane.b32.xlu0 %v120, 96
  %v122 = vpop.permute.xlu0 %121
  %v123 = vrot.slane %v111, 2
  %v124 = vrot.slane %v112, 1
  %v125 = vsel %vm49, %v124, %v123
  %v126 = vpack.c.b16 %v125, %v125
  %vm127 = vcmask 261120
  %v130 = vsel %vm127, %v51, %v56
  %vm131 = vcmask 523264
  %v133 = vsel %vm131, %v130, %v62
  %vm134 = vcmask 785408
  %v136 = vsel %vm134, %v133, %v85
  %v140 = vsel %vm127, %v88, %v94
  %v142 = vsel %vm131, %v140, %v117
  %v144 = vsel %vm134, %v142, %v122
  %v146 = vld [vmem:[%s1] sm:$0xf]
  %v147 = vld [vmem:[%s1 + $0x4] sm:$0xf]
  %v148 = vld [vmem:[%s1 + $0x8] sm:$0xf]
  %v149 = vld [vmem:[%s1 + $0xc] sm:$0xf]
  %v150 = vld [vmem:[%s1 + $0x10] sm:$0xf]
  %v151 = vld [vmem:[%s1 + $0x14] sm:$0xf]
  %v152 = vld [vmem:[%s1 + $0x18] sm:$0xf]
  %v153 = vld [vmem:[%s1 + $0x1c] sm:$0xf]
  %v154 = vld [vmem:[%s1 + $0x20] sm:$0xf]
  %v155 = vld [vmem:[%s1 + $0x24] sm:$0xf]
  %v156 = vld [vmem:[%s1 + $0x28] sm:$0xf]
  %v157 = vld [vmem:[%s1 + $0x2c] sm:$0xf]
  %v158 = vld [vmem:[%s1 + $0x30] sm:$0xf]
  %v159 = vld [vmem:[%s1 + $0x34] sm:$0xf]
  %v160 = vld [vmem:[%s1 + $0x38] sm:$0xf]
  %v161 = vld [vmem:[%s1 + $0x3c] sm:$0xf]
  %v162 = vld [vmem:[%s1 + $0x40] sm:$0xf]
  %v163 = vld [vmem:[%s1 + $0x44] sm:$0xf]
  %v164 = vld [vmem:[%s1 + $0x48] sm:$0xf]
  %v165 = vld [vmem:[%s1 + $0x4c] sm:$0xf]
  %v166 = vld [vmem:[%s1 + $0x50] sm:$0xf]
  %v167 = vld [vmem:[%s1 + $0x54] sm:$0xf]
  %v168 = vld [vmem:[%s1 + $0x58] sm:$0xf]
  %v169 = vld [vmem:[%s1 + $0x5c] sm:$0xf]
  %v170 = vld [vmem:[%s1 + $0x60] sm:$0xf]
  %v171 = vld [vmem:[%s1 + $0x64] sm:$0xf]
  %v172 = vld [vmem:[%s1 + $0x68] sm:$0xf]
  %v173 = vld [vmem:[%s1 + $0x6c] sm:$0xf]
  %v174 = vld [vmem:[%s1 + $0x70] sm:$0xf]
  %v175 = vld [vmem:[%s1 + $0x74] sm:$0xf]
  %v176 = vld [vmem:[%s1 + $0x78] sm:$0xf]
  %v177 = vld [vmem:[%s1 + $0x7c] sm:$0xf]
  %v178 = vld [vmem:[%s1 + $0x80] sm:$0xf]
  %v179 = vld [vmem:[%s1 + $0x84] sm:$0xf]
  %v180 = vld [vmem:[%s1 + $0x88] sm:$0xf]
  %v181 = vld [vmem:[%s1 + $0x8c] sm:$0xf]
  %v218 = vunpack.c.l.b16 %v146
  %v219 = vunpack.c.l.b16 %v147
  %v220 = vunpack.c.l.b16 %v148
  %v221 = vunpack.c.l.b16 %v149
  %v222 = vunpack.c.l.b16 %v150
  %v223 = vunpack.c.l.b16 %v151
  %v224 = vunpack.c.l.b16 %v152
  %v225 = vunpack.c.l.b16 %v153
  %v226 = vunpack.c.l.b16 %v154
  %v227 = vunpack.c.l.b16 %v155
  %v228 = vunpack.c.l.b16 %v156
  %v229 = vunpack.c.l.b16 %v157
  %v230 = vunpack.c.l.b16 %v158
  %v231 = vunpack.c.l.b16 %v159
  %v232 = vunpack.c.l.b16 %v160
  %v233 = vunpack.c.l.b16 %v161
  %v234 = vunpack.c.l.b16 %v162
  %v235 = vunpack.c.l.b16 %v163
  %v236 = vunpack.c.l.b16 %v164
  %v237 = vunpack.c.l.b16 %v165
  %v238 = vunpack.c.l.b16 %v166
  %v239 = vunpack.c.l.b16 %v167
  %v240 = vunpack.c.l.b16 %v168
  %v241 = vunpack.c.l.b16 %v169
  %v242 = vunpack.c.l.b16 %v170
  %v243 = vunpack.c.l.b16 %v171
  %v244 = vunpack.c.l.b16 %v172
  %v245 = vunpack.c.l.b16 %v173
  %v246 = vunpack.c.l.b16 %v174
  %v247 = vunpack.c.l.b16 %v175
  %v248 = vunpack.c.l.b16 %v176
  %v249 = vunpack.c.l.b16 %v177
  %v250 = vunpack.c.l.b16 %v178
  %v251 = vunpack.c.l.b16 %v179
  %v252 = vunpack.c.l.b16 %v180
  %v253 = vunpack.c.l.b16 %v181
  %v254 = vpack.c.b16 %v219, %v218
  %v255 = vpack.c.b16 %v221, %v220
  %v256 = vpack.c.b16 %v223, %v222
  %v257 = vpack.c.b16 %v225, %v224
  %v258 = vpack.c.b16 %v227, %v226
  %v259 = vpack.c.b16 %v229, %v228
  %v260 = vpack.c.b16 %v231, %v230
  %v261 = vpack.c.b16 %v233, %v232
  %v262 = vpack.c.b16 %v235, %v234
  %v263 = vpack.c.b16 %v237, %v236
  %v264 = vpack.c.b16 %v239, %v238
  %v265 = vpack.c.b16 %v241, %v240
  %v266 = vpack.c.b16 %v243, %v242
  %v267 = vpack.c.b16 %v245, %v244
  %v268 = vpack.c.b16 %v247, %v246
  %v269 = vpack.c.b16 %v249, %v248
  %v270 = vpack.c.b16 %v251, %v250
  %v271 = vpack.c.b16 %v253, %v252
  %v291 = vsel %vm127, %v126, 0
  %293 = vmatprep.subr.bf16.mxu0 0
  %294 = vmatpush1.bf16.msra.mxu0 %v261
  %295 = vmatprep.subr.bf16.mxu0 0
  %296 = vmatpush1.bf16.msra.mxu0 %v260
  %297 = vmatprep.subr.bf16.mxu0 0
  %298 = vmatpush1.bf16.msra.mxu0 %v259
  %299 = vmatprep.subr.bf16.mxu0 0
  %300 = vmatpush1.bf16.msra.mxu0 %v258
  %301 = vmatprep.subr.bf16.mxu0 0
  %302 = vmatpush1.bf16.msra.mxu0 %v257
  %303 = vmatprep.subr.bf16.mxu0 0
  %304 = vmatpush1.bf16.msra.mxu0 %v256
  %305 = vmatprep.subr.bf16.mxu0 0
  %306 = vmatpush1.bf16.msra.mxu0 %v255
  %307 = vmatprep.subr.bf16.mxu0 0
  %308 = vmatpush1.bf16.msra.mxu0 %v254
  %309 = vmatprep.subr.bf16.mxu0 0
  %310 = vmatpush2.bf16.msra.mxu0 %v269
  %311 = vmatprep.subr.bf16.mxu0 0
  %312 = vmatpush2.bf16.msra.mxu0 %v268
  %313 = vmatprep.subr.bf16.mxu0 0
  %314 = vmatpush2.bf16.msra.mxu0 %v267
  %315 = vmatprep.subr.bf16.mxu0 0
  %316 = vmatpush2.bf16.msra.mxu0 %v266
  %317 = vmatprep.subr.bf16.mxu0 0
  %318 = vmatpush2.bf16.msra.mxu0 %v265
  %319 = vmatprep.subr.bf16.mxu0 0
  %320 = vmatpush2.bf16.msra.mxu0 %v264
  %321 = vmatprep.subr.bf16.mxu0 0
  %322 = vmatpush2.bf16.msra.mxu0 %v263
  %323 = vmatprep.subr.bf16.mxu0 0
  %324 = vmatpush2.bf16.msra.mxu0 %v262
  %325 = vmatprep.mubr.bf16.mxu0 %v144
  %326 = vmatmul.mubr.bf16.gmra.mxu0 %v136
  %v327 = vpop.f32.mrf.mxu0
  %v328 = vadd.f32 0.0, %v327
  %v329 = vpop.f32.mrf.mxu0
  %v330 = vpop.f32.mrf.mxu0
  %v331 = vpop.f32.mrf.mxu0
  %332 = vdwg.mxu0
  %333 = vmatprep.subr.bf16.mxu0 0
  %334 = vmatpush1.bf16.msra.mxu0 0
  %335 = vmatprep.subr.bf16.mxu0 0
  %336 = vmatpush1.bf16.msra.mxu0 0
  %337 = vmatprep.subr.bf16.mxu0 0
  %338 = vmatpush1.bf16.msra.mxu0 0
  %339 = vmatprep.subr.bf16.mxu0 0
  %340 = vmatpush1.bf16.msra.mxu0 0
  %341 = vmatprep.subr.bf16.mxu0 0
  %342 = vmatpush1.bf16.msra.mxu0 0
  %343 = vmatprep.subr.bf16.mxu0 0
  %344 = vmatpush1.bf16.msra.mxu0 0
  %345 = vmatprep.subr.bf16.mxu0 0
  %346 = vmatpush1.bf16.msra.mxu0 %v271
  %347 = vmatprep.subr.bf16.mxu0 0
  %348 = vmatpush1.bf16.msra.mxu0 %v270
  %349 = vmatprep.subr.bf16.mxu0 0
  %350 = vmatpush2.bf16.msra.mxu0 0
  %351 = vmatprep.subr.bf16.mxu0 0
  %352 = vmatpush2.bf16.msra.mxu0 0
  %353 = vmatprep.subr.bf16.mxu0 0
  %354 = vmatpush2.bf16.msra.mxu0 0
  %355 = vmatprep.subr.bf16.mxu0 0
  %356 = vmatpush2.bf16.msra.mxu0 0
  %357 = vmatprep.subr.bf16.mxu0 0
  %358 = vmatpush2.bf16.msra.mxu0 0
  %359 = vmatprep.subr.bf16.mxu0 0
  %360 = vmatpush2.bf16.msra.mxu0 0
  %361 = vmatprep.subr.bf16.mxu0 0
  %362 = vmatpush2.bf16.msra.mxu0 0
  %363 = vmatprep.subr.bf16.mxu0 0
  %364 = vmatpush2.bf16.msra.mxu0 0
  %365 = vmatprep.mubr.bf16.mxu0 0
  %366 = vmatmul.mubr.bf16.gmra.mxu0 %v291
  %v367 = vpop.f32.mrf.mxu0
  %v368 = vadd.f32 %v328, %v367
  %v369 = vpop.f32.mrf.mxu0
  %v370 = vpop.f32.mrf.mxu0
  %v371 = vpop.f32.mrf.mxu0
  %372 = vdwg.mxu0
  %vm373 = vcmask 1041408
  %v374 = vsel %vm373, %v368, 0.0
  %v375 = vrot.slane %v374, 4
  %v376 = vadd.f32 %v374, %v375
  %v377 = vrot.slane %v376, 2
  %v378 = vadd.f32 %v376, %v377
  %v379 = vrot.slane %v378, 1
  %v380 = vadd.f32 %v378, %v379
  %v381 = vmul.f32 %v368, %v368
  %v382 = vsel %vm373, %v381, 0.0
  %v383 = vrot.slane %v382, 4
  %v384 = vadd.f32 %v382, %v383
  %v385 = vrot.slane %v384, 2
  %v386 = vadd.f32 %v384, %v385
  %v387 = vrot.slane %v386, 1
  %v388 = vadd.f32 %v386, %v387
  %390 = vrot.lane.b32.xlu0 %v380, 96
  %v391 = vpop.permute.xlu0 %390
  %v393 = vadd.f32 %v380, %v391
  %394 = vrot.lane.b32.xlu0 %v380, 64
  %v395 = vpop.permute.xlu0 %394
  %v397 = vadd.f32 %v393, %v395
  %398 = vrot.lane.b32.xlu0 %v380, 32
  %v399 = vpop.permute.xlu0 %398
  %v401 = vadd.f32 %v397, %v399
  %v402 = vmul.f32 %v401, 0.125
  %404 = vrot.lane.b32.xlu0 %v388, 96
  %v405 = vpop.permute.xlu0 %404
  %v407 = vadd.f32 %v388, %v405
  %408 = vrot.lane.b32.xlu0 %v388, 64
  %v409 = vpop.permute.xlu0 %408
  %v411 = vadd.f32 %v407, %v409
  %412 = vrot.lane.b32.xlu0 %v388, 32
  %v413 = vpop.permute.xlu0 %412
  %v415 = vadd.f32 %v411, %v413
  %v416 = vmul.f32 %v415, 0.125
  %v417 = vmul.f32 %v402, %v402
  %v418 = vsub.f32 %v416, %v417
  %v419 = vadd.f32 %v418, 1e-05
  %v420 = vrsqrt.pop %v419
  %422 = vrot.lane.b32.xlu0 %v402, 32
  %v423 = vpop.permute.xlu0 %422
  %425 = vrot.lane.b32.xlu0 %v402, 64
  %v426 = vpop.permute.xlu0 %425
  %428 = vrot.lane.b32.xlu0 %v402, 96
  %v429 = vpop.permute.xlu0 %428
  %v431 = vsel %vm127, %v402, %v423
  %v432 = vsel %vm131, %v431, %v426
  %v433 = vsel %vm134, %v432, %v429
  %435 = vrot.lane.b32.xlu0 %v420, 32
  %v436 = vpop.permute.xlu0 %435
  %438 = vrot.lane.b32.xlu0 %v420, 64
  %v439 = vpop.permute.xlu0 %438
  %441 = vrot.lane.b32.xlu0 %v420, 96
  %v442 = vpop.permute.xlu0 %441
  %v444 = vsel %vm127, %v420, %v436
  %v445 = vsel %vm131, %v444, %v439
  %v446 = vsel %vm134, %v445, %v442
  %v447 = vlaneseq
  %v448 = vshrl.u32 %v447, 7
  %v449 = vsub.s32 0, %v448
  %v450 = vrot.slane %v433, %v449
  %v451 = vsub.f32 %v368, %v450
  %v452 = vlaneseq
  %v453 = vshrl.u32 %v452, 7
  %v454 = vsub.s32 0, %v453
  %v455 = vrot.slane %v446, %v454
  %v456 = vmul.f32 %v451, %v455
  %v457 = vld [vmem:[%s2] sm:$0x1]
  %v459 = vlaneseq
  %v460 = vshrl.u32 %v459, 7
  %v461 = vsub.s32 0, %v460
  %v462 = vrot.slane %v457, %v461
  %v464 = vmul.f32 %v456, %v462
  %v465 = vld [vmem:[%s3] sm:$0x1]
  %v467 = vlaneseq
  %v468 = vshrl.u32 %v467, 7
  %v469 = vsub.s32 0, %v468
  %v470 = vrot.slane %v465, %v469
  %v472 = vadd.f32 %v464, %v470
  %473 = vst [vmem:[%s4] sm:$0x3] %v472
  // Predicated region
  $region18: #{_lambda_.12} parent=0 // pred_check
    _
  $region19: #{_lambda_.12} parent=0 // pred_check_branch
    %475 = sbr.rel (0) target = $region21
  $region20: #{_lambda_.12} parent=0 // pred_region
    _
  $region21: #{_lambda_.12} parent=0 // pred_fallthru
    _
  // Predicated region
  $region22: #{_lambda_.12} parent=0 // pred_check
    _
  $region23: #{_lambda_.12} parent=0 // pred_check_branch
    %477 = sbr.rel (0) target = $region25
  $region24: #{_lambda_.12} parent=0 // pred_region
    _
  $region25: #{_lambda_.12} parent=0 // pred_fallthru
    _

// kernel: _lambda_.13
$region0: #{_lambda_.13}
  #allocation0 [shape = 'u32[]', space=smem, size = 0x4, offset = 0x4, fixed_abs, tag = 'smem constant byte address 0x4 - core index']
  #allocation1 [shape = 'u32[144,128]{1,0:T(1,128)}', space=vmem, size = 0x12000, scoped, tag = 'internal scratch']
  %s0 = inlined_call_operand.vmem [shape: bf16[2,4,4,32], index: 0, kind: input, shape index: {}]
  %s1 = inlined_call_operand.vmem [shape: bf16[2,4,4,32], index: 1, kind: input, shape index: {}]
  %s2 = inlined_call_operand.vmem [shape: bf16[576,64], index: 2, kind: input, shape index: {}]
  %s3 = inlined_call_operand.vmem [shape: f32[1,64], index: 3, kind: input, shape index: {}]
  %s4 = inlined_call_operand.vmem [shape: f32[1,64], index: 4, kind: input, shape index: {}]
  %s5 = inlined_call_operand.vmem [shape: f32[8,64], index: 5, kind: output, shape index: {}]
  %s6 = sld [smem:[#allocation0]]
  $region30: #{_lambda_.13} parent=0
    _
  %s8 = ssub.s32 1, %s6
  %s9 = scalar_select 0, %s8, %s6
  // Predicated region
  $region2: #{_lambda_.13} parent=0 // pred_check
    _
  $region3: #{_lambda_.13} parent=0 // pred_check_branch
    %11 = sbr.rel (0) target = $region5
  $region4: #{_lambda_.13} parent=0 // pred_region
    _
  $region5: #{_lambda_.13} parent=0 // pred_fallthru
    _
  // Predicated region
  $region6: #{_lambda_.13} parent=0 // pred_check
    _
  $region7: #{_lambda_.13} parent=0 // pred_check_branch
    %13 = sbr.rel (0) target = $region9
  $region8: #{_lambda_.13} parent=0 // pred_region
    _
  $region9: #{_lambda_.13} parent=0 // pred_fallthru
    _
  // Predicated region
  $region10: #{_lambda_.13} parent=0 // pred_check
    _
  $region11: #{_lambda_.13} parent=0 // pred_check_branch
    %15 = sbr.rel (0) target = $region13
  $region12: #{_lambda_.13} parent=0 // pred_region
    _
  $region13: #{_lambda_.13} parent=0 // pred_fallthru
    _
  // Predicated region
  $region14: #{_lambda_.13} parent=0 // pred_check
    _
  $region15: #{_lambda_.13} parent=0 // pred_check_branch
    %17 = sbr.rel (0) target = $region17
  $region16: #{_lambda_.13} parent=0 // pred_region
    _
  $region17: #{_lambda_.13} parent=0 // pred_fallthru
    _
  // Predicated region
  $region18: #{_lambda_.13} parent=0 // pred_check
    _
  $region19: #{_lambda_.13} parent=0 // pred_check_branch
    %19 = sbr.rel (0) target = $region21
  $region20: #{_lambda_.13} parent=0 // pred_region
    _
  $region21: #{_lambda_.13} parent=0 // pred_fallthru
    _
  %v21 = vld [vmem:[%s0] sm:$0x3]
  %v22 = vld [vmem:[%s0 + $0x2] sm:$0x3]
  %v23 = vld [vmem:[%s0 + $0x4] sm:$0x3]
  %v24 = vld [vmem:[%s0 + $0x6] sm:$0x3]
  %v25 = vld [vmem:[%s0 + $0x8] sm:$0x3]
  %v26 = vld [vmem:[%s0 + $0xa] sm:$0x3]
  %v27 = vld [vmem:[%s0 + $0xc] sm:$0x3]
  %v28 = vld [vmem:[%s0 + $0xe] sm:$0x3]
  %v29 = vmax.bf16 %v21, 0
  %v30 = vmax.bf16 %v22, 0
  %v31 = vmax.bf16 %v23, 0
  %v32 = vmax.bf16 %v24, 0
  %v33 = vmax.bf16 %v25, 0
  %v34 = vmax.bf16 %v26, 0
  %v35 = vmax.bf16 %v27, 0
  %v36 = vmax.bf16 %v28, 0
  %v37 = vld [vmem:[%s1] sm:$0x3]
  %v38 = vld [vmem:[%s1 + $0x2] sm:$0x3]
  %v39 = vld [vmem:[%s1 + $0x4] sm:$0x3]
  %v40 = vld [vmem:[%s1 + $0x6] sm:$0x3]
  %v41 = vld [vmem:[%s1 + $0x8] sm:$0x3]
  %v42 = vld [vmem:[%s1 + $0xa] sm:$0x3]
  %v43 = vld [vmem:[%s1 + $0xc] sm:$0x3]
  %v44 = vld [vmem:[%s1 + $0xe] sm:$0x3]
  %v45 = vmax.bf16 %v37, 0
  %v46 = vmax.bf16 %v38, 0
  %v47 = vmax.bf16 %v39, 0
  %v48 = vmax.bf16 %v40, 0
  %v49 = vmax.bf16 %v41, 0
  %v50 = vmax.bf16 %v42, 0
  %v51 = vmax.bf16 %v43, 0
  %v52 = vmax.bf16 %v44, 0
  %v58 = vunpack.c.l.s4 1966171168
  %v59 = vunpack.c.0.s8 %v58
  %v60 = vlaneseq
  %v61 = vshrl.u32 %v60, 7
  %v62 = vsub.s32 %v59, %v61
  %v63 = vrot.slane %v29, %v62
  %v64 = vcombine.high %v63, %v63
  %v66 = vunpack.c.l.s4 1966171168
  %v67 = vunpack.c.0.s8 %v66
  %v68 = vlaneseq
  %v69 = vshrl.u32 %v68, 7
  %v70 = vsub.s32 %v67, %v69
  %v71 = vrot.slane %v30, %v70
  %v72 = vcombine.high %v71, %v71
  %v74 = vunpack.c.l.s4 1966171168
  %v75 = vunpack.c.0.s8 %v74
  %v76 = vlaneseq
  %v77 = vshrl.u32 %v76, 7
  %v78 = vsub.s32 %v75, %v77
  %v79 = vrot.slane %v33, %v78
  %v80 = vcombine.high %v79, %v79
  %v82 = vunpack.c.l.s4 1966171168
  %v83 = vunpack.c.0.s8 %v82
  %v84 = vlaneseq
  %v85 = vshrl.u32 %v84, 7
  %v86 = vsub.s32 %v83, %v85
  %v87 = vrot.slane %v34, %v86
  %v88 = vcombine.high %v87, %v87
  %vm89 = vsmask.f32 256
  %vm90 = vsmask.f32 1284
  %vm91 = vmor %vm89, %vm90
  %vm92 = vsmask.f32 2312
  %vm93 = vmor %vm91, %vm92
  %vm94 = vsmask.f32 3340
  %vm95 = vmor %vm93, %vm94
  %vm96 = vsmask.f32 4368
  %vm97 = vmor %vm95, %vm96
  %vm98 = vsmask.f32 5396
  %vm99 = vmor %vm97, %vm98
  %vm100 = vsmask.f32 6424
  %vm101 = vmor %vm99, %vm100
  %vm102 = vsmask.f32 7452
  %vm103 = vmor %vm101, %vm102
  %v105 = vshrl.u32 %v63, 16
  %v107 = vrot.slane %v105, 7
  %v108 = vrot.slane %v107, 1
  %v110 = vshll.u32 %v64, 16
  %v112 = vsel %vm103, %v108, %v110
  %v114 = vshrl.u32 %v71, 16
  %v116 = vrot.slane %v114, 7
  %v117 = vrot.slane %v116, 1
  %v119 = vshll.u32 %v72, 16
  %v121 = vsel %vm103, %v117, %v119
  %v123 = vshrl.u32 %v79, 16
  %v125 = vrot.slane %v123, 7
  %v126 = vrot.slane %v125, 1
  %v128 = vshll.u32 %v80, 16
  %v130 = vsel %vm103, %v126, %v128
  %v132 = vshrl.u32 %v87, 16
  %v134 = vrot.slane %v132, 7
  %v135 = vrot.slane %v134, 1
  %v137 = vshll.u32 %v88, 16
  %v139 = vsel %vm103, %v135, %v137
  %v145 = vunpack.c.l.s4 1966171168
  %v146 = vunpack.c.0.s8 %v145
  %v147 = vlaneseq
  %v148 = vshrl.u32 %v147, 7
  %v149 = vsub.s32 %v146, %v148
  %v150 = vrot.slane %v45, %v149
  %v151 = vcombine.high %v150, %v150
  %v153 = vunpack.c.l.s4 1966171168
  %v154 = vunpack.c.0.s8 %v153
  %v155 = vlaneseq
  %v156 = vshrl.u32 %v155, 7
  %v157 = vsub.s32 %v154, %v156
  %v158 = vrot.slane %v46, %v157
  %v159 = vcombine.high %v158, %v158
  %v161 = vunpack.c.l.s4 1966171168
  %v162 = vunpack.c.0.s8 %v161
  %v163 = vlaneseq
  %v164 = vshrl.u32 %v163, 7
  %v165 = vsub.s32 %v162, %v164
  %v166 = vrot.slane %v49, %v165
  %v167 = vcombine.high %v166, %v166
  %v169 = vunpack.c.l.s4 1966171168
  %v170 = vunpack.c.0.s8 %v169
  %v171 = vlaneseq
  %v172 = vshrl.u32 %v171, 7
  %v173 = vsub.s32 %v170, %v172
  %v174 = vrot.slane %v50, %v173
  %v175 = vcombine.high %v174, %v174
  %v177 = vshrl.u32 %v150, 16
  %v179 = vrot.slane %v177, 7
  %v180 = vrot.slane %v179, 1
  %v182 = vshll.u32 %v151, 16
  %v184 = vsel %vm103, %v180, %v182
  %v186 = vshrl.u32 %v158, 16
  %v188 = vrot.slane %v186, 7
  %v189 = vrot.slane %v188, 1
  %v191 = vshll.u32 %v159, 16
  %v193 = vsel %vm103, %v189, %v191
  %v195 = vshrl.u32 %v166, 16
  %v197 = vrot.slane %v195, 7
  %v198 = vrot.slane %v197, 1
  %v200 = vshll.u32 %v167, 16
  %v202 = vsel %vm103, %v198, %v200
  %v204 = vshrl.u32 %v174, 16
  %v206 = vrot.slane %v204, 7
  %v207 = vrot.slane %v206, 1
  %v209 = vshll.u32 %v175, 16
  %v211 = vsel %vm103, %v207, %v209
  %v215 = vunpack.c.l.s4 1966171168
  %v216 = vunpack.c.0.s8 %v215
  %v217 = vlaneseq
  %v218 = vshrl.u32 %v217, 7
  %v219 = vsub.s32 %v216, %v218
  %v220 = vrot.slane %v31, %v219
  %v221 = vcombine.high %v220, %v220
  %v223 = vunpack.c.l.s4 1966171168
  %v224 = vunpack.c.0.s8 %v223
  %v225 = vlaneseq
  %v226 = vshrl.u32 %v225, 7
  %v227 = vsub.s32 %v224, %v226
  %v228 = vrot.slane %v35, %v227
  %v229 = vcombine.high %v228, %v228
  %v231 = vshrl.u32 %v220, 16
  %v233 = vrot.slane %v231, 7
  %v234 = vrot.slane %v233, 1
  %v236 = vshll.u32 %v221, 16
  %v238 = vsel %vm103, %v234, %v236
  %v240 = vshrl.u32 %v228, 16
  %v242 = vrot.slane %v240, 7
  %v243 = vrot.slane %v242, 1
  %v245 = vshll.u32 %v229, 16
  %v247 = vsel %vm103, %v243, %v245
  %v251 = vunpack.c.l.s4 1966171168
  %v252 = vunpack.c.0.s8 %v251
  %v253 = vlaneseq
  %v254 = vshrl.u32 %v253, 7
  %v255 = vsub.s32 %v252, %v254
  %v256 = vrot.slane %v47, %v255
  %v257 = vcombine.high %v256, %v256
  %v259 = vunpack.c.l.s4 1966171168
  %v260 = vunpack.c.0.s8 %v259
  %v261 = vlaneseq
  %v262 = vshrl.u32 %v261, 7
  %v263 = vsub.s32 %v260, %v262
  %v264 = vrot.slane %v51, %v263
  %v265 = vcombine.high %v264, %v264
  %v267 = vshrl.u32 %v256, 16
  %v269 = vrot.slane %v267, 7
  %v270 = vrot.slane %v269, 1
  %v272 = vshll.u32 %v257, 16
  %v274 = vsel %vm103, %v270, %v272
  %v276 = vshrl.u32 %v264, 16
  %v278 = vrot.slane %v276, 7
  %v279 = vrot.slane %v278, 1
  %v281 = vshll.u32 %v265, 16
  %v283 = vsel %vm103, %v279, %v281
  %v287 = vunpack.c.l.s4 1966171168
  %v288 = vunpack.c.0.s8 %v287
  %v289 = vlaneseq
  %v290 = vshrl.u32 %v289, 7
  %v291 = vsub.s32 %v288, %v290
  %v292 = vrot.slane %v32, %v291
  %v293 = vcombine.high %v292, %v292
  %v295 = vunpack.c.l.s4 1966171168
  %v296 = vunpack.c.0.s8 %v295
  %v297 = vlaneseq
  %v298 = vshrl.u32 %v297, 7
  %v299 = vsub.s32 %v296, %v298
  %v300 = vrot.slane %v36, %v299
  %v301 = vcombine.high %v300, %v300
  %v303 = vshrl.u32 %v292, 16
  %v305 = vrot.slane %v303, 7
  %v306 = vrot.slane %v305, 1
  %v308 = vshll.u32 %v293, 16
  %v310 = vsel %vm103, %v306, %v308
  %v312 = vshrl.u32 %v300, 16
  %v314 = vrot.slane %v312, 7
  %v315 = vrot.slane %v314, 1
  %v317 = vshll.u32 %v301, 16
  %v319 = vsel %vm103, %v315, %v317
  %v323 = vunpack.c.l.s4 1966171168
  %v324 = vunpack.c.0.s8 %v323
  %v325 = vlaneseq
  %v326 = vshrl.u32 %v325, 7
  %v327 = vsub.s32 %v324, %v326
  %v328 = vrot.slane %v48, %v327
  %v329 = vcombine.high %v328, %v328
  %v331 = vunpack.c.l.s4 1966171168
  %v332 = vunpack.c.0.s8 %v331
  %v333 = vlaneseq
  %v334 = vshrl.u32 %v333, 7
  %v335 = vsub.s32 %v332, %v334
  %v336 = vrot.slane %v52, %v335
  %v337 = vcombine.high %v336, %v336
  %v339 = vshrl.u32 %v328, 16
  %v341 = vrot.slane %v339, 7
  %v342 = vrot.slane %v341, 1
  %v344 = vshll.u32 %v329, 16
  %v346 = vsel %vm103, %v342, %v344
  %v348 = vshrl.u32 %v336, 16
  %v350 = vrot.slane %v348, 7
  %v351 = vrot.slane %v350, 1
  %v353 = vshll.u32 %v337, 16
  %v355 = vsel %vm103, %v351, %v353
  %v356 = vcombine.low %v29, %v30
  %v357 = vcombine.low %v33, %v34
  %v359 = vunpack.c.l.s4 1966171168
  %v360 = vunpack.c.0.s8 %v359
  %v361 = vlaneseq
  %v362 = vshrl.u32 %v361, 7
  %v363 = vsub.s32 %v360, %v362
  %v364 = vrot.slane %v356, %v363
  %v366 = vunpack.c.l.s4 1966171168
  %v367 = vunpack.c.0.s8 %v366
  %v368 = vlaneseq
  %v369 = vshrl.u32 %v368, 7
  %v370 = vsub.s32 %v367, %v369
  %v371 = vrot.slane %v357, %v370
  %v372 = vcombine.low %v364, %v371
  %v374 = vunpack.c.l.s4 1966171168
  %v375 = vunpack.c.0.s8 %v374
  %v376 = vlaneseq
  %v377 = vshrl.u32 %v376, 7
  %v378 = vsub.s32 %v375, %v377
  %v379 = vrot.slane %v372, %v378
  %v380 = vcombine.low %v45, %v46
  %v381 = vcombine.low %v49, %v50
  %v383 = vunpack.c.l.s4 1966171168
  %v384 = vunpack.c.0.s8 %v383
  %v385 = vlaneseq
  %v386 = vshrl.u32 %v385, 7
  %v387 = vsub.s32 %v384, %v386
  %v388 = vrot.slane %v380, %v387
  %v390 = vunpack.c.l.s4 1966171168
  %v391 = vunpack.c.0.s8 %v390
  %v392 = vlaneseq
  %v393 = vshrl.u32 %v392, 7
  %v394 = vsub.s32 %v391, %v393
  %v395 = vrot.slane %v381, %v394
  %v396 = vcombine.low %v388, %v395
  %v398 = vunpack.c.l.s4 1966171168
  %v399 = vunpack.c.0.s8 %v398
  %v400 = vlaneseq
  %v401 = vshrl.u32 %v400, 7
  %v402 = vsub.s32 %v399, %v401
  %v403 = vrot.slane %v396, %v402
  %404 = vrot.lane.b32.xlu0 %v403, 32
  %v405 = vpop.permute.xlu0 %404
  %v406 = vcombine.low %v112, %v121
  %v407 = vcombine.low %v130, %v139
  %v409 = vunpack.c.l.s4 1966171168
  %v410 = vunpack.c.0.s8 %v409
  %v411 = vlaneseq
  %v412 = vshrl.u32 %v411, 7
  %v413 = vsub.s32 %v410, %v412
  %v414 = vrot.slane %v406, %v413
  %v416 = vunpack.c.l.s4 1966171168
  %v417 = vunpack.c.0.s8 %v416
  %v418 = vlaneseq
  %v419 = vshrl.u32 %v418, 7
  %v420 = vsub.s32 %v417, %v419
  %v421 = vrot.slane %v407, %v420
  %v422 = vcombine.low %v414, %v421
  %v424 = vunpack.c.l.s4 1966171168
  %v425 = vunpack.c.0.s8 %v424
  %v426 = vlaneseq
  %v427 = vshrl.u32 %v426, 7
  %v428 = vsub.s32 %v425, %v427
  %v429 = vrot.slane %v422, %v428
  %430 = vrot.lane.b32.xlu0 %v429, 64
  %v431 = vpop.permute.xlu0 %430
  %v432 = vcombine.low %v184, %v193
  %v433 = vcombine.low %v202, %v211
  %v435 = vunpack.c.l.s4 1966171168
  %v436 = vunpack.c.0.s8 %v435
  %v437 = vlaneseq
  %v438 = vshrl.u32 %v437, 7
  %v439 = vsub.s32 %v436, %v438
  %v440 = vrot.slane %v432, %v439
  %v442 = vunpack.c.l.s4 1966171168
  %v443 = vunpack.c.0.s8 %v442
  %v444 = vlaneseq
  %v445 = vshrl.u32 %v444, 7
  %v446 = vsub.s32 %v443, %v445
  %v447 = vrot.slane %v433, %v446
  %v448 = vcombine.low %v440, %v447
  %v450 = vunpack.c.l.s4 1966171168
  %v451 = vunpack.c.0.s8 %v450
  %v452 = vlaneseq
  %v453 = vshrl.u32 %v452, 7
  %v454 = vsub.s32 %v451, %v453
  %v455 = vrot.slane %v448, %v454
  %456 = vrot.lane.b32.xlu0 %v455, 96
  %v457 = vpop.permute.xlu0 %456
  %v458 = vcombine.low %v64, %v72
  %v459 = vcombine.low %v80, %v88
  %v461 = vunpack.c.l.s4 1966171168
  %v462 = vunpack.c.0.s8 %v461
  %v463 = vlaneseq
  %v464 = vshrl.u32 %v463, 7
  %v465 = vsub.s32 %v462, %v464
  %v466 = vrot.slane %v458, %v465
  %v468 = vunpack.c.l.s4 1966171168
  %v469 = vunpack.c.0.s8 %v468
  %v470 = vlaneseq
  %v471 = vshrl.u32 %v470, 7
  %v472 = vsub.s32 %v469, %v471
  %v473 = vrot.slane %v459, %v472
  %v474 = vcombine.low %v466, %v473
  %v476 = vunpack.c.l.s4 1966171168
  %v477 = vunpack.c.0.s8 %v476
  %v478 = vlaneseq
  %v479 = vshrl.u32 %v478, 7
  %v480 = vsub.s32 %v477, %v479
  %v481 = vrot.slane %v474, %v480
  %v482 = vcombine.low %v151, %v159
  %v483 = vcombine.low %v167, %v175
  %v485 = vunpack.c.l.s4 1966171168
  %v486 = vunpack.c.0.s8 %v485
  %v487 = vlaneseq
  %v488 = vshrl.u32 %v487, 7
  %v489 = vsub.s32 %v486, %v488
  %v490 = vrot.slane %v482, %v489
  %v492 = vunpack.c.l.s4 1966171168
  %v493 = vunpack.c.0.s8 %v492
  %v494 = vlaneseq
  %v495 = vshrl.u32 %v494, 7
  %v496 = vsub.s32 %v493, %v495
  %v497 = vrot.slane %v483, %v496
  %v498 = vcombine.low %v490, %v497
  %v500 = vunpack.c.l.s4 1966171168
  %v501 = vunpack.c.0.s8 %v500
  %v502 = vlaneseq
  %v503 = vshrl.u32 %v502, 7
  %v504 = vsub.s32 %v501, %v503
  %v505 = vrot.slane %v498, %v504
  %506 = vrot.lane.b32.xlu0 %v505, 32
  %v507 = vpop.permute.xlu0 %506
  %v508 = vcombine.low %v30, %v31
  %v509 = vcombine.low %v34, %v35
  %v511 = vunpack.c.l.s4 1966171168
  %v512 = vunpack.c.0.s8 %v511
  %v513 = vlaneseq
  %v514 = vshrl.u32 %v513, 7
  %v515 = vsub.s32 %v512, %v514
  %v516 = vrot.slane %v508, %v515
  %v518 = vunpack.c.l.s4 1966171168
  %v519 = vunpack.c.0.s8 %v518
  %v520 = vlaneseq
  %v521 = vshrl.u32 %v520, 7
  %v522 = vsub.s32 %v519, %v521
  %v523 = vrot.slane %v509, %v522
  %v524 = vcombine.low %v516, %v523
  %v526 = vunpack.c.l.s4 1966171168
  %v527 = vunpack.c.0.s8 %v526
  %v528 = vlaneseq
  %v529 = vshrl.u32 %v528, 7
  %v530 = vsub.s32 %v527, %v529
  %v531 = vrot.slane %v524, %v530
  %532 = vrot.lane.b32.xlu0 %v531, 64
  %v533 = vpop.permute.xlu0 %532
  %v534 = vcombine.low %v46, %v47
  %v535 = vcombine.low %v50, %v51
  %v537 = vunpack.c.l.s4 1966171168
  %v538 = vunpack.c.0.s8 %v537
  %v539 = vlaneseq
  %v540 = vshrl.u32 %v539, 7
  %v541 = vsub.s32 %v538, %v540
  %v542 = vrot.slane %v534, %v541
  %v544 = vunpack.c.l.s4 1966171168
  %v545 = vunpack.c.0.s8 %v544
  %v546 = vlaneseq
  %v547 = vshrl.u32 %v546, 7
  %v548 = vsub.s32 %v545, %v547
  %v549 = vrot.slane %v535, %v548
  %v550 = vcombine.low %v542, %v549
  %v552 = vunpack.c.l.s4 1966171168
  %v553 = vunpack.c.0.s8 %v552
  %v554 = vlaneseq
  %v555 = vshrl.u32 %v554, 7
  %v556 = vsub.s32 %v553, %v555
  %v557 = vrot.slane %v550, %v556
  %558 = vrot.lane.b32.xlu0 %v557, 96
  %v559 = vpop.permute.xlu0 %558
  %v560 = vcombine.low %v121, %v238
  %v561 = vcombine.low %v139, %v247
  %v563 = vunpack.c.l.s4 1966171168
  %v564 = vunpack.c.0.s8 %v563
  %v565 = vlaneseq
  %v566 = vshrl.u32 %v565, 7
  %v567 = vsub.s32 %v564, %v566
  %v568 = vrot.slane %v560, %v567
  %v570 = vunpack.c.l.s4 1966171168
  %v571 = vunpack.c.0.s8 %v570
  %v572 = vlaneseq
  %v573 = vshrl.u32 %v572, 7
  %v574 = vsub.s32 %v571, %v573
  %v575 = vrot.slane %v561, %v574
  %v576 = vcombine.low %v568, %v575
  %v578 = vunpack.c.l.s4 1966171168
  %v579 = vunpack.c.0.s8 %v578
  %v580 = vlaneseq
  %v581 = vshrl.u32 %v580, 7
  %v582 = vsub.s32 %v579, %v581
  %v583 = vrot.slane %v576, %v582
  %v584 = vcombine.low %v193, %v274
  %v585 = vcombine.low %v211, %v283
  %v587 = vunpack.c.l.s4 1966171168
  %v588 = vunpack.c.0.s8 %v587
  %v589 = vlaneseq
  %v590 = vshrl.u32 %v589, 7
  %v591 = vsub.s32 %v588, %v590
  %v592 = vrot.slane %v584, %v591
  %v594 = vunpack.c.l.s4 1966171168
  %v595 = vunpack.c.0.s8 %v594
  %v596 = vlaneseq
  %v597 = vshrl.u32 %v596, 7
  %v598 = vsub.s32 %v595, %v597
  %v599 = vrot.slane %v585, %v598
  %v600 = vcombine.low %v592, %v599
  %v602 = vunpack.c.l.s4 1966171168
  %v603 = vunpack.c.0.s8 %v602
  %v604 = vlaneseq
  %v605 = vshrl.u32 %v604, 7
  %v606 = vsub.s32 %v603, %v605
  %v607 = vrot.slane %v600, %v606
  %608 = vrot.lane.b32.xlu0 %v607, 32
  %v609 = vpop.permute.xlu0 %608
  %v610 = vcombine.low %v72, %v221
  %v611 = vcombine.low %v88, %v229
  %v613 = vunpack.c.l.s4 1966171168
  %v614 = vunpack.c.0.s8 %v613
  %v615 = vlaneseq
  %v616 = vshrl.u32 %v615, 7
  %v617 = vsub.s32 %v614, %v616
  %v618 = vrot.slane %v610, %v617
  %v620 = vunpack.c.l.s4 1966171168
  %v621 = vunpack.c.0.s8 %v620
  %v622 = vlaneseq
  %v623 = vshrl.u32 %v622, 7
  %v624 = vsub.s32 %v621, %v623
  %v625 = vrot.slane %v611, %v624
  %v626 = vcombine.low %v618, %v625
  %v628 = vunpack.c.l.s4 1966171168
  %v629 = vunpack.c.0.s8 %v628
  %v630 = vlaneseq
  %v631 = vshrl.u32 %v630, 7
  %v632 = vsub.s32 %v629, %v631
  %v633 = vrot.slane %v626, %v632
  %634 = vrot.lane.b32.xlu0 %v633, 64
  %v635 = vpop.permute.xlu0 %634
  %v636 = vcombine.low %v159, %v257
  %v637 = vcombine.low %v175, %v265
  %v639 = vunpack.c.l.s4 1966171168
  %v640 = vunpack.c.0.s8 %v639
  %v641 = vlaneseq
  %v642 = vshrl.u32 %v641, 7
  %v643 = vsub.s32 %v640, %v642
  %v644 = vrot.slane %v636, %v643
  %v646 = vunpack.c.l.s4 1966171168
  %v647 = vunpack.c.0.s8 %v646
  %v648 = vlaneseq
  %v649 = vshrl.u32 %v648, 7
  %v650 = vsub.s32 %v647, %v649
  %v651 = vrot.slane %v637, %v650
  %v652 = vcombine.low %v644, %v651
  %v654 = vunpack.c.l.s4 1966171168
  %v655 = vunpack.c.0.s8 %v654
  %v656 = vlaneseq
  %v657 = vshrl.u32 %v656, 7
  %v658 = vsub.s32 %v655, %v657
  %v659 = vrot.slane %v652, %v658
  %660 = vrot.lane.b32.xlu0 %v659, 96
  %v661 = vpop.permute.xlu0 %660
  %v662 = vcombine.low %v31, %v32
  %v663 = vcombine.low %v35, %v36
  %v665 = vunpack.c.l.s4 1966171168
  %v666 = vunpack.c.0.s8 %v665
  %v667 = vlaneseq
  %v668 = vshrl.u32 %v667, 7
  %v669 = vsub.s32 %v666, %v668
  %v670 = vrot.slane %v662, %v669
  %v672 = vunpack.c.l.s4 1966171168
  %v673 = vunpack.c.0.s8 %v672
  %v674 = vlaneseq
  %v675 = vshrl.u32 %v674, 7
  %v676 = vsub.s32 %v673, %v675
  %v677 = vrot.slane %v663, %v676
  %v678 = vcombine.low %v670, %v677
  %v680 = vunpack.c.l.s4 1966171168
  %v681 = vunpack.c.0.s8 %v680
  %v682 = vlaneseq
  %v683 = vshrl.u32 %v682, 7
  %v684 = vsub.s32 %v681, %v683
  %v685 = vrot.slane %v678, %v684
  %v686 = vcombine.low %v47, %v48
  %v687 = vcombine.low %v51, %v52
  %v689 = vunpack.c.l.s4 1966171168
  %v690 = vunpack.c.0.s8 %v689
  %v691 = vlaneseq
  %v692 = vshrl.u32 %v691, 7
  %v693 = vsub.s32 %v690, %v692
  %v694 = vrot.slane %v686, %v693
  %v696 = vunpack.c.l.s4 1966171168
  %v697 = vunpack.c.0.s8 %v696
  %v698 = vlaneseq
  %v699 = vshrl.u32 %v698, 7
  %v700 = vsub.s32 %v697, %v699
  %v701 = vrot.slane %v687, %v700
  %v702 = vcombine.low %v694, %v701
  %v704 = vunpack.c.l.s4 1966171168
  %v705 = vunpack.c.0.s8 %v704
  %v706 = vlaneseq
  %v707 = vshrl.u32 %v706, 7
  %v708 = vsub.s32 %v705, %v707
  %v709 = vrot.slane %v702, %v708
  %710 = vrot.lane.b32.xlu0 %v709, 32
  %v711 = vpop.permute.xlu0 %710
  %v712 = vcombine.low %v238, %v310
  %v713 = vcombine.low %v247, %v319
  %v715 = vunpack.c.l.s4 1966171168
  %v716 = vunpack.c.0.s8 %v715
  %v717 = vlaneseq
  %v718 = vshrl.u32 %v717, 7
  %v719 = vsub.s32 %v716, %v718
  %v720 = vrot.slane %v712, %v719
  %v722 = vunpack.c.l.s4 1966171168
  %v723 = vunpack.c.0.s8 %v722
  %v724 = vlaneseq
  %v725 = vshrl.u32 %v724, 7
  %v726 = vsub.s32 %v723, %v725
  %v727 = vrot.slane %v713, %v726
  %v728 = vcombine.low %v720, %v727
  %v730 = vunpack.c.l.s4 1966171168
  %v731 = vunpack.c.0.s8 %v730
  %v732 = vlaneseq
  %v733 = vshrl.u32 %v732, 7
  %v734 = vsub.s32 %v731, %v733
  %v735 = vrot.slane %v728, %v734
  %736 = vrot.lane.b32.xlu0 %v735, 64
  %v737 = vpop.permute.xlu0 %736
  %v738 = vcombine.low %v274, %v346
  %v739 = vcombine.low %v283, %v355
  %v741 = vunpack.c.l.s4 1966171168
  %v742 = vunpack.c.0.s8 %v741
  %v743 = vlaneseq
  %v744 = vshrl.u32 %v743, 7
  %v745 = vsub.s32 %v742, %v744
  %v746 = vrot.slane %v738, %v745
  %v748 = vunpack.c.l.s4 1966171168
  %v749 = vunpack.c.0.s8 %v748
  %v750 = vlaneseq
  %v751 = vshrl.u32 %v750, 7
  %v752 = vsub.s32 %v749, %v751
  %v753 = vrot.slane %v739, %v752
  %v754 = vcombine.low %v746, %v753
  %v756 = vunpack.c.l.s4 1966171168
  %v757 = vunpack.c.0.s8 %v756
  %v758 = vlaneseq
  %v759 = vshrl.u32 %v758, 7
  %v760 = vsub.s32 %v757, %v759
  %v761 = vrot.slane %v754, %v760
  %762 = vrot.lane.b32.xlu0 %v761, 96
  %v763 = vpop.permute.xlu0 %762
  %vm764 = vcmask 261120
  %v767 = vsel %vm764, %v379, %v405
  %vm768 = vcmask 523264
  %v770 = vsel %vm768, %v767, %v431
  %vm771 = vcmask 785408
  %v773 = vsel %vm771, %v770, %v457
  %v777 = vsel %vm764, %v481, %v507
  %v779 = vsel %vm768, %v777, %v533
  %v781 = vsel %vm771, %v779, %v559
  %v785 = vsel %vm764, %v583, %v609
  %v787 = vsel %vm768, %v785, %v635
  %v789 = vsel %vm771, %v787, %v661
  %v793 = vsel %vm764, %v685, %v711
  %v795 = vsel %vm768, %v793, %v737
  %v797 = vsel %vm771, %v795, %v763
  %v799 = vcombine.low %v221, %v293
  %v800 = vcombine.low %v229, %v301
  %v802 = vunpack.c.l.s4 1966171168
  %v803 = vunpack.c.0.s8 %v802
  %v804 = vlaneseq
  %v805 = vshrl.u32 %v804, 7
  %v806 = vsub.s32 %v803, %v805
  %v807 = vrot.slane %v799, %v806
  %v809 = vunpack.c.l.s4 1966171168
  %v810 = vunpack.c.0.s8 %v809
  %v811 = vlaneseq
  %v812 = vshrl.u32 %v811, 7
  %v813 = vsub.s32 %v810, %v812
  %v814 = vrot.slane %v800, %v813
  %v815 = vcombine.low %v807, %v814
  %v817 = vunpack.c.l.s4 1966171168
  %v818 = vunpack.c.0.s8 %v817
  %v819 = vlaneseq
  %v820 = vshrl.u32 %v819, 7
  %v821 = vsub.s32 %v818, %v820
  %v822 = vrot.slane %v815, %v821
  %v823 = vcombine.low %v257, %v329
  %v824 = vcombine.low %v265, %v337
  %v826 = vunpack.c.l.s4 1966171168
  %v827 = vunpack.c.0.s8 %v826
  %v828 = vlaneseq
  %v829 = vshrl.u32 %v828, 7
  %v830 = vsub.s32 %v827, %v829
  %v831 = vrot.slane %v823, %v830
  %v833 = vunpack.c.l.s4 1966171168
  %v834 = vunpack.c.0.s8 %v833
  %v835 = vlaneseq
  %v836 = vshrl.u32 %v835, 7
  %v837 = vsub.s32 %v834, %v836
  %v838 = vrot.slane %v824, %v837
  %v839 = vcombine.low %v831, %v838
  %v841 = vunpack.c.l.s4 1966171168
  %v842 = vunpack.c.0.s8 %v841
  %v843 = vlaneseq
  %v844 = vshrl.u32 %v843, 7
  %v845 = vsub.s32 %v842, %v844
  %v846 = vrot.slane %v839, %v845
  %847 = vrot.lane.b32.xlu0 %v846, 32
  %v848 = vpop.permute.xlu0 %847
  %v851 = vsel %vm764, %v822, %v848
  %v852 = vld [vmem:[%s2] sm:$0xf]
  %v853 = vld [vmem:[%s2 + $0x4] sm:$0xf]
  %v854 = vld [vmem:[%s2 + $0x8] sm:$0xf]
  %v855 = vld [vmem:[%s2 + $0xc] sm:$0xf]
  %v856 = vld [vmem:[%s2 + $0x10] sm:$0xf]
  %v857 = vld [vmem:[%s2 + $0x14] sm:$0xf]
  %v858 = vld [vmem:[%s2 + $0x18] sm:$0xf]
  %v859 = vld [vmem:[%s2 + $0x1c] sm:$0xf]
  %v860 = vld [vmem:[%s2 + $0x20] sm:$0xf]
  %v861 = vld [vmem:[%s2 + $0x24] sm:$0xf]
  %v862 = vld [vmem:[%s2 + $0x28] sm:$0xf]
  %v863 = vld [vmem:[%s2 + $0x2c] sm:$0xf]
  %v864 = vld [vmem:[%s2 + $0x30] sm:$0xf]
  %v865 = vld [vmem:[%s2 + $0x34] sm:$0xf]
  %v866 = vld [vmem:[%s2 + $0x38] sm:$0xf]
  %v867 = vld [vmem:[%s2 + $0x3c] sm:$0xf]
  %v868 = vld [vmem:[%s2 + $0x40] sm:$0xf]
  %v869 = vld [vmem:[%s2 + $0x44] sm:$0xf]
  %v870 = vld [vmem:[%s2 + $0x48] sm:$0xf]
  %v871 = vld [vmem:[%s2 + $0x4c] sm:$0xf]
  %v872 = vld [vmem:[%s2 + $0x50] sm:$0xf]
  %v873 = vld [vmem:[%s2 + $0x54] sm:$0xf]
  %v874 = vld [vmem:[%s2 + $0x58] sm:$0xf]
  %v875 = vld [vmem:[%s2 + $0x5c] sm:$0xf]
  %v876 = vld [vmem:[%s2 + $0x60] sm:$0xf]
  %v877 = vld [vmem:[%s2 + $0x64] sm:$0xf]
  %v878 = vld [vmem:[%s2 + $0x68] sm:$0xf]
  %v879 = vld [vmem:[%s2 + $0x6c] sm:$0xf]
  %v880 = vld [vmem:[%s2 + $0x70] sm:$0xf]
  %v881 = vld [vmem:[%s2 + $0x74] sm:$0xf]
  %v882 = vld [vmem:[%s2 + $0x78] sm:$0xf]
  %v883 = vld [vmem:[%s2 + $0x7c] sm:$0xf]
  %v884 = vld [vmem:[%s2 + $0x80] sm:$0xf]
  %v885 = vld [vmem:[%s2 + $0x84] sm:$0xf]
  %v886 = vld [vmem:[%s2 + $0x88] sm:$0xf]
  %v887 = vld [vmem:[%s2 + $0x8c] sm:$0xf]
  %v888 = vld [vmem:[%s2 + $0x90] sm:$0xf]
  %v889 = vld [vmem:[%s2 + $0x94] sm:$0xf]
  %v890 = vld [vmem:[%s2 + $0x98] sm:$0xf]
  %v891 = vld [vmem:[%s2 + $0x9c] sm:$0xf]
  %v892 = vld [vmem:[%s2 + $0xa0] sm:$0xf]
  %v893 = vld [vmem:[%s2 + $0xa4] sm:$0xf]
  %v894 = vld [vmem:[%s2 + $0xa8] sm:$0xf]
  %v895 = vld [vmem:[%s2 + $0xac] sm:$0xf]
  %v896 = vld [vmem:[%s2 + $0xb0] sm:$0xf]
  %v897 = vld [vmem:[%s2 + $0xb4] sm:$0xf]
  %v898 = vld [vmem:[%s2 + $0xb8] sm:$0xf]
  %v899 = vld [vmem:[%s2 + $0xbc] sm:$0xf]
  %v900 = vld [vmem:[%s2 + $0xc0] sm:$0xf]
  %v901 = vld [vmem:[%s2 + $0xc4] sm:$0xf]
  %v902 = vld [vmem:[%s2 + $0xc8] sm:$0xf]
  %v903 = vld [vmem:[%s2 + $0xcc] sm:$0xf]
  %v904 = vld [vmem:[%s2 + $0xd0] sm:$0xf]
  %v905 = vld [vmem:[%s2 + $0xd4] sm:$0xf]
  %v906 = vld [vmem:[%s2 + $0xd8] sm:$0xf]
  %v907 = vld [vmem:[%s2 + $0xdc] sm:$0xf]
  %v908 = vld [vmem:[%s2 + $0xe0] sm:$0xf]
  %v909 = vld [vmem:[%s2 + $0xe4] sm:$0xf]
  %v910 = vld [vmem:[%s2 + $0xe8] sm:$0xf]
  %v911 = vld [vmem:[%s2 + $0xec] sm:$0xf]
  %v912 = vld [vmem:[%s2 + $0xf0] sm:$0xf]
  %v913 = vld [vmem:[%s2 + $0xf4] sm:$0xf]
  %v914 = vld [vmem:[%s2 + $0xf8] sm:$0xf]
  %v915 = vld [vmem:[%s2 + $0xfc] sm:$0xf]
  %v916 = vld [vmem:[%s2 + $0x100] sm:$0xf]
  %v917 = vld [vmem:[%s2 + $0x104] sm:$0xf]
  %v918 = vld [vmem:[%s2 + $0x108] sm:$0xf]
  %v919 = vld [vmem:[%s2 + $0x10c] sm:$0xf]
  %v920 = vld [vmem:[%s2 + $0x110] sm:$0xf]
  %v921 = vld [vmem:[%s2 + $0x114] sm:$0xf]
  %v922 = vld [vmem:[%s2 + $0x118] sm:$0xf]
  %v923 = vld [vmem:[%s2 + $0x11c] sm:$0xf]
  %v996 = vunpack.c.l.b16 %v852
  %v997 = vunpack.c.l.b16 %v853
  %v998 = vunpack.c.l.b16 %v854
  %v999 = vunpack.c.l.b16 %v855
  %v1000 = vunpack.c.l.b16 %v856
  %v1001 = vunpack.c.l.b16 %v857
  %v1002 = vunpack.c.l.b16 %v858
  %v1003 = vunpack.c.l.b16 %v859
  %v1004 = vunpack.c.l.b16 %v860
  %v1005 = vunpack.c.l.b16 %v861
  %v1006 = vunpack.c.l.b16 %v862
  %v1007 = vunpack.c.l.b16 %v863
  %v1008 = vunpack.c.l.b16 %v864
  %v1009 = vunpack.c.l.b16 %v865
  %v1010 = vunpack.c.l.b16 %v866
  %v1011 = vunpack.c.l.b16 %v867
  %v1012 = vunpack.c.l.b16 %v868
  %v1013 = vunpack.c.l.b16 %v869
  %v1014 = vunpack.c.l.b16 %v870
  %v1015 = vunpack.c.l.b16 %v871
  %v1016 = vunpack.c.l.b16 %v872
  %v1017 = vunpack.c.l.b16 %v873
  %v1018 = vunpack.c.l.b16 %v874
  %v1019 = vunpack.c.l.b16 %v875
  %v1020 = vunpack.c.l.b16 %v876
  %v1021 = vunpack.c.l.b16 %v877
  %v1022 = vunpack.c.l.b16 %v878
  %v1023 = vunpack.c.l.b16 %v879
  %v1024 = vunpack.c.l.b16 %v880
  %v1025 = vunpack.c.l.b16 %v881
  %v1026 = vunpack.c.l.b16 %v882
  %v1027 = vunpack.c.l.b16 %v883
  %v1028 = vunpack.c.l.b16 %v884
  %v1029 = vunpack.c.l.b16 %v885
  %v1030 = vunpack.c.l.b16 %v886
  %v1031 = vunpack.c.l.b16 %v887
  %v1032 = vunpack.c.l.b16 %v888
  %v1033 = vunpack.c.l.b16 %v889
  %v1034 = vunpack.c.l.b16 %v890
  %v1035 = vunpack.c.l.b16 %v891
  %v1036 = vunpack.c.l.b16 %v892
  %v1037 = vunpack.c.l.b16 %v893
  %v1038 = vunpack.c.l.b16 %v894
  %v1039 = vunpack.c.l.b16 %v895
  %v1040 = vunpack.c.l.b16 %v896
  %v1041 = vunpack.c.l.b16 %v897
  %v1042 = vunpack.c.l.b16 %v898
  %v1043 = vunpack.c.l.b16 %v899
  %v1044 = vunpack.c.l.b16 %v900
  %v1045 = vunpack.c.l.b16 %v901
  %v1046 = vunpack.c.l.b16 %v902
  %v1047 = vunpack.c.l.b16 %v903
  %v1048 = vunpack.c.l.b16 %v904
  %v1049 = vunpack.c.l.b16 %v905
  %v1050 = vunpack.c.l.b16 %v906
  %v1051 = vunpack.c.l.b16 %v907
  %v1052 = vunpack.c.l.b16 %v908
  %v1053 = vunpack.c.l.b16 %v909
  %v1054 = vunpack.c.l.b16 %v910
  %v1055 = vunpack.c.l.b16 %v911
  %v1056 = vunpack.c.l.b16 %v912
  %v1057 = vunpack.c.l.b16 %v913
  %v1058 = vunpack.c.l.b16 %v914
  %v1059 = vunpack.c.l.b16 %v915
  %v1060 = vunpack.c.l.b16 %v916
  %v1061 = vunpack.c.l.b16 %v917
  %v1062 = vunpack.c.l.b16 %v918
  %v1063 = vunpack.c.l.b16 %v919
  %v1064 = vunpack.c.l.b16 %v920
  %v1065 = vunpack.c.l.b16 %v921
  %v1066 = vunpack.c.l.b16 %v922
  %v1067 = vunpack.c.l.b16 %v923
  %v1068 = vpack.c.b16 %v997, %v996
  %v1069 = vpack.c.b16 %v999, %v998
  %v1070 = vpack.c.b16 %v1001, %v1000
  %v1071 = vpack.c.b16 %v1003, %v1002
  %v1072 = vpack.c.b16 %v1005, %v1004
  %v1073 = vpack.c.b16 %v1007, %v1006
  %v1074 = vpack.c.b16 %v1009, %v1008
  %v1075 = vpack.c.b16 %v1011, %v1010
  %v1076 = vpack.c.b16 %v1013, %v1012
  %v1077 = vpack.c.b16 %v1015, %v1014
  %v1078 = vpack.c.b16 %v1017, %v1016
  %v1079 = vpack.c.b16 %v1019, %v1018
  %v1080 = vpack.c.b16 %v1021, %v1020
  %v1081 = vpack.c.b16 %v1023, %v1022
  %v1082 = vpack.c.b16 %v1025, %v1024
  %v1083 = vpack.c.b16 %v1027, %v1026
  %v1084 = vpack.c.b16 %v1029, %v1028
  %v1085 = vpack.c.b16 %v1031, %v1030
  %v1086 = vpack.c.b16 %v1033, %v1032
  %v1087 = vpack.c.b16 %v1035, %v1034
  %v1088 = vpack.c.b16 %v1037, %v1036
  %v1089 = vpack.c.b16 %v1039, %v1038
  %v1090 = vpack.c.b16 %v1041, %v1040
  %v1091 = vpack.c.b16 %v1043, %v1042
  %v1092 = vpack.c.b16 %v1045, %v1044
  %v1093 = vpack.c.b16 %v1047, %v1046
  %v1094 = vpack.c.b16 %v1049, %v1048
  %v1095 = vpack.c.b16 %v1051, %v1050
  %v1096 = vpack.c.b16 %v1053, %v1052
  %v1097 = vpack.c.b16 %v1055, %v1054
  %v1098 = vpack.c.b16 %v1057, %v1056
  %v1099 = vpack.c.b16 %v1059, %v1058
  %v1100 = vpack.c.b16 %v1061, %v1060
  %v1101 = vpack.c.b16 %v1063, %v1062
  %v1102 = vpack.c.b16 %v1065, %v1064
  %v1103 = vpack.c.b16 %v1067, %v1066
  %v1140 = vsel %vm768, %v851, 0
  %1142 = vmatprep.subr.bf16.mxu0 0
  %1143 = vmatpush1.bf16.msra.mxu0 %v1075
  %1144 = vmatprep.subr.bf16.mxu0 0
  %1145 = vmatpush1.bf16.msra.mxu0 %v1074
  %1146 = vmatprep.subr.bf16.mxu0 0
  %1147 = vmatpush1.bf16.msra.mxu0 %v1073
  %1148 = vmatprep.subr.bf16.mxu0 0
  %1149 = vmatpush1.bf16.msra.mxu0 %v1072
  %1150 = vmatprep.subr.bf16.mxu0 0
  %1151 = vmatpush1.bf16.msra.mxu0 %v1071
  %1152 = vmatprep.subr.bf16.mxu0 0
  %1153 = vmatpush1.bf16.msra.mxu0 %v1070
  %1154 = vmatprep.subr.bf16.mxu0 0
  %1155 = vmatpush1.bf16.msra.mxu0 %v1069
  %1156 = vmatprep.subr.bf16.mxu0 0
  %1157 = vmatpush1.bf16.msra.mxu0 %v1068
  %1158 = vmatprep.subr.bf16.mxu0 0
  %1159 = vmatpush2.bf16.msra.mxu0 %v1083
  %1160 = vmatprep.subr.bf16.mxu0 0
  %1161 = vmatpush2.bf16.msra.mxu0 %v1082
  %1162 = vmatprep.subr.bf16.mxu0 0
  %1163 = vmatpush2.bf16.msra.mxu0 %v1081
  %1164 = vmatprep.subr.bf16.mxu0 0
  %1165 = vmatpush2.bf16.msra.mxu0 %v1080
  %1166 = vmatprep.subr.bf16.mxu0 0
  %1167 = vmatpush2.bf16.msra.mxu0 %v1079
  %1168 = vmatprep.subr.bf16.mxu0 0
  %1169 = vmatpush2.bf16.msra.mxu0 %v1078
  %1170 = vmatprep.subr.bf16.mxu0 0
  %1171 = vmatpush2.bf16.msra.mxu0 %v1077
  %1172 = vmatprep.subr.bf16.mxu0 0
  %1173 = vmatpush2.bf16.msra.mxu0 %v1076
  %1174 = vmatprep.mubr.bf16.mxu0 %v781
  %1175 = vmatmul.mubr.bf16.gmra.mxu0 %v773
  %v1176 = vpop.f32.mrf.mxu0
  %v1177 = vadd.f32 0.0, %v1176
  %v1178 = vpop.f32.mrf.mxu0
  %v1179 = vpop.f32.mrf.mxu0
  %v1180 = vpop.f32.mrf.mxu0
  %1181 = vdwg.mxu0
  %1182 = vmatprep.subr.bf16.mxu0 0
  %1183 = vmatpush1.bf16.msra.mxu0 %v1091
  %1184 = vmatprep.subr.bf16.mxu0 0
  %1185 = vmatpush1.bf16.msra.mxu0 %v1090
  %1186 = vmatprep.subr.bf16.mxu0 0
  %1187 = vmatpush1.bf16.msra.mxu0 %v1089
  %1188 = vmatprep.subr.bf16.mxu0 0
  %1189 = vmatpush1.bf16.msra.mxu0 %v1088
  %1190 = vmatprep.subr.bf16.mxu0 0
  %1191 = vmatpush1.bf16.msra.mxu0 %v1087
  %1192 = vmatprep.subr.bf16.mxu0 0
  %1193 = vmatpush1.bf16.msra.mxu0 %v1086
  %1194 = vmatprep.subr.bf16.mxu0 0
  %1195 = vmatpush1.bf16.msra.mxu0 %v1085
  %1196 = vmatprep.subr.bf16.mxu0 0
  %1197 = vmatpush1.bf16.msra.mxu0 %v1084
  %1198 = vmatprep.subr.bf16.mxu0 0
  %1199 = vmatpush2.bf16.msra.mxu0 %v1099
  %1200 = vmatprep.subr.bf16.mxu0 0
  %1201 = vmatpush2.bf16.msra.mxu0 %v1098
  %1202 = vmatprep.subr.bf16.mxu0 0
  %1203 = vmatpush2.bf16.msra.mxu0 %v1097
  %1204 = vmatprep.subr.bf16.mxu0 0
  %1205 = vmatpush2.bf16.msra.mxu0 %v1096
  %1206 = vmatprep.subr.bf16.mxu0 0
  %1207 = vmatpush2.bf16.msra.mxu0 %v1095
  %1208 = vmatprep.subr.bf16.mxu0 0
  %1209 = vmatpush2.bf16.msra.mxu0 %v1094
  %1210 = vmatprep.subr.bf16.mxu0 0
  %1211 = vmatpush2.bf16.msra.mxu0 %v1093
  %1212 = vmatprep.subr.bf16.mxu0 0
  %1213 = vmatpush2.bf16.msra.mxu0 %v1092
  %1214 = vmatprep.mubr.bf16.mxu0 %v797
  %1215 = vmatmul.mubr.bf16.gmra.mxu0 %v789
  %v1216 = vpop.f32.mrf.mxu0
  %v1217 = vadd.f32 %v1177, %v1216
  %v1218 = vpop.f32.mrf.mxu0
  %v1219 = vpop.f32.mrf.mxu0
  %v1220 = vpop.f32.mrf.mxu0
  %1221 = vdwg.mxu0
  %1222 = vmatprep.subr.bf16.mxu0 0
  %1223 = vmatpush1.bf16.msra.mxu0 0
  %1224 = vmatprep.subr.bf16.mxu0 0
  %1225 = vmatpush1.bf16.msra.mxu0 0
  %1226 = vmatprep.subr.bf16.mxu0 0
  %1227 = vmatpush1.bf16.msra.mxu0 0
  %1228 = vmatprep.subr.bf16.mxu0 0
  %1229 = vmatpush1.bf16.msra.mxu0 0
  %1230 = vmatprep.subr.bf16.mxu0 0
  %1231 = vmatpush1.bf16.msra.mxu0 %v1103
  %1232 = vmatprep.subr.bf16.mxu0 0
  %1233 = vmatpush1.bf16.msra.mxu0 %v1102
  %1234 = vmatprep.subr.bf16.mxu0 0
  %1235 = vmatpush1.bf16.msra.mxu0 %v1101
  %1236 = vmatprep.subr.bf16.mxu0 0
  %1237 = vmatpush1.bf16.msra.mxu0 %v1100
  %1238 = vmatprep.subr.bf16.mxu0 0
  %1239 = vmatpush2.bf16.msra.mxu0 0
  %1240 = vmatprep.subr.bf16.mxu0 0
  %1241 = vmatpush2.bf16.msra.mxu0 0
  %1242 = vmatprep.subr.bf16.mxu0 0
  %1243 = vmatpush2.bf16.msra.mxu0 0
  %1244 = vmatprep.subr.bf16.mxu0 0
  %1245 = vmatpush2.bf16.msra.mxu0 0
  %1246 = vmatprep.subr.bf16.mxu0 0
  %1247 = vmatpush2.bf16.msra.mxu0 0
  %1248 = vmatprep.subr.bf16.mxu0 0
  %1249 = vmatpush2.bf16.msra.mxu0 0
  %1250 = vmatprep.subr.bf16.mxu0 0
  %1251 = vmatpush2.bf16.msra.mxu0 0
  %1252 = vmatprep.subr.bf16.mxu0 0
  %1253 = vmatpush2.bf16.msra.mxu0 0
  %1254 = vmatprep.mubr.bf16.mxu0 0
  %1255 = vmatmul.mubr.bf16.gmra.mxu0 %v1140
  %v1256 = vpop.f32.mrf.mxu0
  %v1257 = vadd.f32 %v1217, %v1256
  %v1258 = vpop.f32.mrf.mxu0
  %v1259 = vpop.f32.mrf.mxu0
  %v1260 = vpop.f32.mrf.mxu0
  %1261 = vdwg.mxu0
  %v1262 = vsel %vm768, %v1257, 0.0
  %v1263 = vrot.slane %v1262, 4
  %v1264 = vadd.f32 %v1262, %v1263
  %v1265 = vrot.slane %v1264, 2
  %v1266 = vadd.f32 %v1264, %v1265
  %v1267 = vrot.slane %v1266, 1
  %v1268 = vadd.f32 %v1266, %v1267
  %v1269 = vmul.f32 %v1257, %v1257
  %v1270 = vsel %vm768, %v1269, 0.0
  %v1271 = vrot.slane %v1270, 4
  %v1272 = vadd.f32 %v1270, %v1271
  %v1273 = vrot.slane %v1272, 2
  %v1274 = vadd.f32 %v1272, %v1273
  %v1275 = vrot.slane %v1274, 1
  %v1276 = vadd.f32 %v1274, %v1275
  %1278 = vrot.lane.b32.xlu0 %v1268, 112
  %v1279 = vpop.permute.xlu0 %1278
  %v1281 = vadd.f32 %v1268, %v1279
  %1282 = vrot.lane.b32.xlu0 %v1268, 96
  %v1283 = vpop.permute.xlu0 %1282
  %v1285 = vadd.f32 %v1281, %v1283
  %1286 = vrot.lane.b32.xlu0 %v1268, 80
  %v1287 = vpop.permute.xlu0 %1286
  %v1289 = vadd.f32 %v1285, %v1287
  %v1290 = vmul.f32 %v1289, 0.03125
  %1292 = vrot.lane.b32.xlu0 %v1276, 112
  %v1293 = vpop.permute.xlu0 %1292
  %v1295 = vadd.f32 %v1276, %v1293
  %1296 = vrot.lane.b32.xlu0 %v1276, 96
  %v1297 = vpop.permute.xlu0 %1296
  %v1299 = vadd.f32 %v1295, %v1297
  %1300 = vrot.lane.b32.xlu0 %v1276, 80
  %v1301 = vpop.permute.xlu0 %1300
  %v1303 = vadd.f32 %v1299, %v1301
  %v1304 = vmul.f32 %v1303, 0.03125
  %v1305 = vmul.f32 %v1290, %v1290
  %v1306 = vsub.f32 %v1304, %v1305
  %v1307 = vadd.f32 %v1306, 1e-05
  %v1308 = vrsqrt.pop %v1307
  %1310 = vrot.lane.b32.xlu0 %v1290, 16
  %v1311 = vpop.permute.xlu0 %1310
  %1313 = vrot.lane.b32.xlu0 %v1290, 32
  %v1314 = vpop.permute.xlu0 %1313
  %1316 = vrot.lane.b32.xlu0 %v1290, 48
  %v1317 = vpop.permute.xlu0 %1316
  %vm1319 = vcmask 130048
  %v1320 = vsel %vm1319, %v1290, %v1311
  %v1321 = vsel %vm764, %v1320, %v1314
  %vm1322 = vcmask 392192
  %v1323 = vsel %vm1322, %v1321, %v1317
  %1325 = vrot.lane.b32.xlu0 %v1308, 16
  %v1326 = vpop.permute.xlu0 %1325
  %1328 = vrot.lane.b32.xlu0 %v1308, 32
  %v1329 = vpop.permute.xlu0 %1328
  %1331 = vrot.lane.b32.xlu0 %v1308, 48
  %v1332 = vpop.permute.xlu0 %1331
  %v1334 = vsel %vm1319, %v1308, %v1326
  %v1335 = vsel %vm764, %v1334, %v1329
  %v1336 = vsel %vm1322, %v1335, %v1332
  %v1337 = vlaneseq
  %v1338 = vshrl.u32 %v1337, 7
  %v1339 = vsub.s32 0, %v1338
  %v1340 = vrot.slane %v1323, %v1339
  %v1341 = vsub.f32 %v1257, %v1340
  %v1342 = vlaneseq
  %v1343 = vshrl.u32 %v1342, 7
  %v1344 = vsub.s32 0, %v1343
  %v1345 = vrot.slane %v1336, %v1344
  %v1346 = vmul.f32 %v1341, %v1345
  %v1347 = vld [vmem:[%s3] sm:$0x1]
  %v1349 = vlaneseq
  %v1350 = vshrl.u32 %v1349, 7
  %v1351 = vsub.s32 0, %v1350
  %v1352 = vrot.slane %v1347, %v1351
  %v1354 = vmul.f32 %v1346, %v1352
  %v1355 = vld [vmem:[%s4] sm:$0x1]
  %v1357 = vlaneseq
  %v1358 = vshrl.u32 %v1357, 7
  %v1359 = vsub.s32 0, %v1358
  %v1360 = vrot.slane %v1355, %v1359
  %v1362 = vadd.f32 %v1354, %v1360
  %1363 = vst.msk [vmem:[%s5] sm:$0xff] %vm768, %v1362
  // Predicated region
  $region22: #{_lambda_.13} parent=0 // pred_check
    _
  $region23: #{_lambda_.13} parent=0 // pred_check_branch
    %1365 = sbr.rel (0) target = $region25
  $region24: #{_lambda_.13} parent=0 // pred_region
    _
  $region25: #{_lambda_.13} parent=0 // pred_fallthru
    _
  // Predicated region
  $region26: #{_lambda_.13} parent=0 // pred_check
    _
  $region27: #{_lambda_.13} parent=0 // pred_check_branch
    %1367 = sbr.rel (0) target = $region29
  $region28: #{_lambda_.13} parent=0 // pred_region
    _
  $region29: #{_lambda_.13} parent=0 // pred_fallthru
    _

// kernel: _lambda_.14
$region0: #{_lambda_.14}
  #allocation0 [shape = 'u32[]', space=smem, size = 0x4, offset = 0x4, fixed_abs, tag = 'smem constant byte address 0x4 - core index']
  #allocation1 [shape = 'u32[144,128]{1,0:T(1,128)}', space=vmem, size = 0x12000, scoped, tag = 'internal scratch']
  %s0 = inlined_call_operand.vmem [shape: bf16[2,6,6,16], index: 0, kind: input, shape index: {}]
  %s1 = inlined_call_operand.vmem [shape: bf16[2,6,6,16], index: 1, kind: input, shape index: {}]
  %s2 = inlined_call_operand.vmem [shape: bf16[288,32], index: 2, kind: input, shape index: {}]
  %s3 = inlined_call_operand.vmem [shape: f32[1,32], index: 3, kind: input, shape index: {}]
  %s4 = inlined_call_operand.vmem [shape: f32[1,32], index: 4, kind: input, shape index: {}]
  %s5 = inlined_call_operand.vmem [shape: f32[32,32], index: 5, kind: output, shape index: {}]
  %s6 = sld [smem:[#allocation0]]
  $region30: #{_lambda_.14} parent=0
    _
  %s8 = ssub.s32 1, %s6
  %s9 = scalar_select 0, %s8, %s6
  // Predicated region
  $region2: #{_lambda_.14} parent=0 // pred_check
    _
  $region3: #{_lambda_.14} parent=0 // pred_check_branch
    %11 = sbr.rel (0) target = $region5
  $region4: #{_lambda_.14} parent=0 // pred_region
    _
  $region5: #{_lambda_.14} parent=0 // pred_fallthru
    _
  // Predicated region
  $region6: #{_lambda_.14} parent=0 // pred_check
    _
  $region7: #{_lambda_.14} parent=0 // pred_check_branch
    %13 = sbr.rel (0) target = $region9
  $region8: #{_lambda_.14} parent=0 // pred_region
    _
  $region9: #{_lambda_.14} parent=0 // pred_fallthru
    _
  // Predicated region
  $region10: #{_lambda_.14} parent=0 // pred_check
    _
  $region11: #{_lambda_.14} parent=0 // pred_check_branch
    %15 = sbr.rel (0) target = $region13
  $region12: #{_lambda_.14} parent=0 // pred_region
    _
  $region13: #{_lambda_.14} parent=0 // pred_fallthru
    _
  // Predicated region
  $region14: #{_lambda_.14} parent=0 // pred_check
    _
  $region15: #{_lambda_.14} parent=0 // pred_check_branch
    %17 = sbr.rel (0) target = $region17
  $region16: #{_lambda_.14} parent=0 // pred_region
    _
  $region17: #{_lambda_.14} parent=0 // pred_fallthru
    _
  // Predicated region
  $region18: #{_lambda_.14} parent=0 // pred_check
    _
  $region19: #{_lambda_.14} parent=0 // pred_check_branch
    %19 = sbr.rel (0) target = $region21
  $region20: #{_lambda_.14} parent=0 // pred_region
    _
  $region21: #{_lambda_.14} parent=0 // pred_fallthru
    _
  %v21 = vld [vmem:[%s0] sm:$0x7]
  %v22 = vld [vmem:[%s0 + $0x4] sm:$0x7]
  %v23 = vld [vmem:[%s0 + $0x8] sm:$0x7]
  %v24 = vld [vmem:[%s0 + $0xc] sm:$0x7]
  %v25 = vld [vmem:[%s0 + $0x10] sm:$0x7]
  %v26 = vld [vmem:[%s0 + $0x14] sm:$0x7]
  %v27 = vld [vmem:[%s0 + $0x18] sm:$0x7]
  %v28 = vld [vmem:[%s0 + $0x1c] sm:$0x7]
  %v29 = vld [vmem:[%s0 + $0x20] sm:$0x7]
  %v30 = vld [vmem:[%s0 + $0x24] sm:$0x7]
  %v31 = vld [vmem:[%s0 + $0x28] sm:$0x7]
  %v32 = vld [vmem:[%s0 + $0x2c] sm:$0x7]
  %v33 = vmax.bf16 %v21, 0
  %v34 = vmax.bf16 %v22, 0
  %v35 = vmax.bf16 %v23, 0
  %v36 = vmax.bf16 %v24, 0
  %v37 = vmax.bf16 %v25, 0
  %v38 = vmax.bf16 %v26, 0
  %v39 = vmax.bf16 %v27, 0
  %v40 = vmax.bf16 %v28, 0
  %v41 = vmax.bf16 %v29, 0
  %v42 = vmax.bf16 %v30, 0
  %v43 = vmax.bf16 %v31, 0
  %v44 = vmax.bf16 %v32, 0
  %v45 = vld [vmem:[%s1] sm:$0x7]
  %v46 = vld [vmem:[%s1 + $0x4] sm:$0x7]
  %v47 = vld [vmem:[%s1 + $0x8] sm:$0x7]
  %v48 = vld [vmem:[%s1 + $0xc] sm:$0x7]
  %v49 = vld [vmem:[%s1 + $0x10] sm:$0x7]
  %v50 = vld [vmem:[%s1 + $0x14] sm:$0x7]
  %v51 = vld [vmem:[%s1 + $0x18] sm:$0x7]
  %v52 = vld [vmem:[%s1 + $0x1c] sm:$0x7]
  %v53 = vld [vmem:[%s1 + $0x20] sm:$0x7]
  %v54 = vld [vmem:[%s1 + $0x24] sm:$0x7]
  %v55 = vld [vmem:[%s1 + $0x28] sm:$0x7]
  %v56 = vld [vmem:[%s1 + $0x2c] sm:$0x7]
  %v57 = vmax.bf16 %v45, 0
  %v58 = vmax.bf16 %v46, 0
  %v59 = vmax.bf16 %v47, 0
  %v60 = vmax.bf16 %v48, 0
  %v61 = vmax.bf16 %v49, 0
  %v62 = vmax.bf16 %v50, 0
  %v63 = vmax.bf16 %v51, 0
  %v64 = vmax.bf16 %v52, 0
  %v65 = vmax.bf16 %v53, 0
  %v66 = vmax.bf16 %v54, 0
  %v67 = vmax.bf16 %v55, 0
  %v68 = vmax.bf16 %v56, 0
  %v78 = vunpack.c.l.s4 1983009808
  %v79 = vunpack.c.0.s8 %v78
  %v80 = vlaneseq
  %v81 = vshrl.u32 %v80, 7
  %v82 = vsub.s32 %v79, %v81
  %v83 = vrot.slane %v33, %v82
  %v84 = vcombine.high %v83, %v83
  %v86 = vunpack.c.l.s4 1983009808
  %v87 = vunpack.c.0.s8 %v86
  %v88 = vlaneseq
  %v89 = vshrl.u32 %v88, 7
  %v90 = vsub.s32 %v87, %v89
  %v91 = vrot.slane %v34, %v90
  %v92 = vcombine.high %v91, %v91
  %v94 = vunpack.c.l.s4 1983009808
  %v95 = vunpack.c.0.s8 %v94
  %v96 = vlaneseq
  %v97 = vshrl.u32 %v96, 7
  %v98 = vsub.s32 %v95, %v97
  %v99 = vrot.slane %v35, %v98
  %v100 = vcombine.high %v99, %v99
  %v102 = vunpack.c.l.s4 1983009808
  %v103 = vunpack.c.0.s8 %v102
  %v104 = vlaneseq
  %v105 = vshrl.u32 %v104, 7
  %v106 = vsub.s32 %v103, %v105
  %v107 = vrot.slane %v36, %v106
  %v108 = vcombine.high %v107, %v107
  %v110 = vunpack.c.l.s4 1983009808
  %v111 = vunpack.c.0.s8 %v110
  %v112 = vlaneseq
  %v113 = vshrl.u32 %v112, 7
  %v114 = vsub.s32 %v111, %v113
  %v115 = vrot.slane %v39, %v114
  %v116 = vcombine.high %v115, %v115
  %v118 = vunpack.c.l.s4 1983009808
  %v119 = vunpack.c.0.s8 %v118
  %v120 = vlaneseq
  %v121 = vshrl.u32 %v120, 7
  %v122 = vsub.s32 %v119, %v121
  %v123 = vrot.slane %v40, %v122
  %v124 = vcombine.high %v123, %v123
  %v126 = vunpack.c.l.s4 1983009808
  %v127 = vunpack.c.0.s8 %v126
  %v128 = vlaneseq
  %v129 = vshrl.u32 %v128, 7
  %v130 = vsub.s32 %v127, %v129
  %v131 = vrot.slane %v41, %v130
  %v132 = vcombine.high %v131, %v131
  %v134 = vunpack.c.l.s4 1983009808
  %v135 = vunpack.c.0.s8 %v134
  %v136 = vlaneseq
  %v137 = vshrl.u32 %v136, 7
  %v138 = vsub.s32 %v135, %v137
  %v139 = vrot.slane %v42, %v138
  %v140 = vcombine.high %v139, %v139
  %vm141 = vsmask.f32 1280
  %vm142 = vsmask.f32 3336
  %vm143 = vmor %vm141, %vm142
  %vm144 = vsmask.f32 5392
  %vm145 = vmor %vm143, %vm144
  %vm146 = vsmask.f32 7448
  %vm147 = vmor %vm145, %vm146
  %v149 = vshrl.u32 %v83, 16
  %v151 = vrot.slane %v149, 6
  %v152 = vshll.u32 %v83, 16
  %v154 = vrot.slane %v152, 7
  %v155 = vor.u32 %v151, %v154
  %v156 = vrot.slane %v155, 2
  %v158 = vshll.u32 %v84, 16
  %v160 = vrot.slane %v158, 7
  %v161 = vsel %vm147, %v156, %v160
  %v163 = vshrl.u32 %v91, 16
  %v165 = vrot.slane %v163, 6
  %v166 = vshll.u32 %v91, 16
  %v168 = vrot.slane %v166, 7
  %v169 = vor.u32 %v165, %v168
  %v170 = vrot.slane %v169, 2
  %v172 = vshll.u32 %v92, 16
  %v174 = vrot.slane %v172, 7
  %v175 = vsel %vm147, %v170, %v174
  %v177 = vshrl.u32 %v99, 16
  %v179 = vrot.slane %v177, 6
  %v180 = vshll.u32 %v99, 16
  %v182 = vrot.slane %v180, 7
  %v183 = vor.u32 %v179, %v182
  %v184 = vrot.slane %v183, 2
  %v186 = vshll.u32 %v100, 16
  %v188 = vrot.slane %v186, 7
  %v189 = vsel %vm147, %v184, %v188
  %v191 = vshrl.u32 %v107, 16
  %v193 = vrot.slane %v191, 6
  %v194 = vshll.u32 %v107, 16
  %v196 = vrot.slane %v194, 7
  %v197 = vor.u32 %v193, %v196
  %v198 = vrot.slane %v197, 2
  %v200 = vshll.u32 %v108, 16
  %v202 = vrot.slane %v200, 7
  %v203 = vsel %vm147, %v198, %v202
  %v205 = vshrl.u32 %v115, 16
  %v207 = vrot.slane %v205, 6
  %v208 = vshll.u32 %v115, 16
  %v210 = vrot.slane %v208, 7
  %v211 = vor.u32 %v207, %v210
  %v212 = vrot.slane %v211, 2
  %v214 = vshll.u32 %v116, 16
  %v216 = vrot.slane %v214, 7
  %v217 = vsel %vm147, %v212, %v216
  %v219 = vshrl.u32 %v123, 16
  %v221 = vrot.slane %v219, 6
  %v222 = vshll.u32 %v123, 16
  %v224 = vrot.slane %v222, 7
  %v225 = vor.u32 %v221, %v224
  %v226 = vrot.slane %v225, 2
  %v228 = vshll.u32 %v124, 16
  %v230 = vrot.slane %v228, 7
  %v231 = vsel %vm147, %v226, %v230
  %v233 = vshrl.u32 %v131, 16
  %v235 = vrot.slane %v233, 6
  %v236 = vshll.u32 %v131, 16
  %v238 = vrot.slane %v236, 7
  %v239 = vor.u32 %v235, %v238
  %v240 = vrot.slane %v239, 2
  %v242 = vshll.u32 %v132, 16
  %v244 = vrot.slane %v242, 7
  %v245 = vsel %vm147, %v240, %v244
  %v247 = vshrl.u32 %v139, 16
  %v249 = vrot.slane %v247, 6
  %v250 = vshll.u32 %v139, 16
  %v252 = vrot.slane %v250, 7
  %v253 = vor.u32 %v249, %v252
  %v254 = vrot.slane %v253, 2
  %v256 = vshll.u32 %v140, 16
  %v258 = vrot.slane %v256, 7
  %v259 = vsel %vm147, %v254, %v258
  %v269 = vunpack.c.l.s4 1983009808
  %v270 = vunpack.c.0.s8 %v269
  %v271 = vlaneseq
  %v272 = vshrl.u32 %v271, 7
  %v273 = vsub.s32 %v270, %v272
  %v274 = vrot.slane %v57, %v273
  %v275 = vcombine.high %v274, %v274
  %v277 = vunpack.c.l.s4 1983009808
  %v278 = vunpack.c.0.s8 %v277
  %v279 = vlaneseq
  %v280 = vshrl.u32 %v279, 7
  %v281 = vsub.s32 %v278, %v280
  %v282 = vrot.slane %v58, %v281
  %v283 = vcombine.high %v282, %v282
  %v285 = vunpack.c.l.s4 1983009808
  %v286 = vunpack.c.0.s8 %v285
  %v287 = vlaneseq
  %v288 = vshrl.u32 %v287, 7
  %v289 = vsub.s32 %v286, %v288
  %v290 = vrot.slane %v59, %v289
  %v291 = vcombine.high %v290, %v290
  %v293 = vunpack.c.l.s4 1983009808
  %v294 = vunpack.c.0.s8 %v293
  %v295 = vlaneseq
  %v296 = vshrl.u32 %v295, 7
  %v297 = vsub.s32 %v294, %v296
  %v298 = vrot.slane %v60, %v297
  %v299 = vcombine.high %v298, %v298
  %v301 = vunpack.c.l.s4 1983009808
  %v302 = vunpack.c.0.s8 %v301
  %v303 = vlaneseq
  %v304 = vshrl.u32 %v303, 7
  %v305 = vsub.s32 %v302, %v304
  %v306 = vrot.slane %v63, %v305
  %v307 = vcombine.high %v306, %v306
  %v309 = vunpack.c.l.s4 1983009808
  %v310 = vunpack.c.0.s8 %v309
  %v311 = vlaneseq
  %v312 = vshrl.u32 %v311, 7
  %v313 = vsub.s32 %v310, %v312
  %v314 = vrot.slane %v64, %v313
  %v315 = vcombine.high %v314, %v314
  %v317 = vunpack.c.l.s4 1983009808
  %v318 = vunpack.c.0.s8 %v317
  %v319 = vlaneseq
  %v320 = vshrl.u32 %v319, 7
  %v321 = vsub.s32 %v318, %v320
  %v322 = vrot.slane %v65, %v321
  %v323 = vcombine.high %v322, %v322
  %v325 = vunpack.c.l.s4 1983009808
  %v326 = vunpack.c.0.s8 %v325
  %v327 = vlaneseq
  %v328 = vshrl.u32 %v327, 7
  %v329 = vsub.s32 %v326, %v328
  %v330 = vrot.slane %v66, %v329
  %v331 = vcombine.high %v330, %v330
  %v333 = vshrl.u32 %v274, 16
  %v335 = vrot.slane %v333, 6
  %v336 = vshll.u32 %v274, 16
  %v338 = vrot.slane %v336, 7
  %v339 = vor.u32 %v335, %v338
  %v340 = vrot.slane %v339, 2
  %v342 = vshll.u32 %v275, 16
  %v344 = vrot.slane %v342, 7
  %v345 = vsel %vm147, %v340, %v344
  %v347 = vshrl.u32 %v282, 16
  %v349 = vrot.slane %v347, 6
  %v350 = vshll.u32 %v282, 16
  %v352 = vrot.slane %v350, 7
  %v353 = vor.u32 %v349, %v352
  %v354 = vrot.slane %v353, 2
  %v356 = vshll.u32 %v283, 16
  %v358 = vrot.slane %v356, 7
  %v359 = vsel %vm147, %v354, %v358
  %v361 = vshrl.u32 %v290, 16
  %v363 = vrot.slane %v361, 6
  %v364 = vshll.u32 %v290, 16
  %v366 = vrot.slane %v364, 7
  %v367 = vor.u32 %v363, %v366
  %v368 = vrot.slane %v367, 2
  %v370 = vshll.u32 %v291, 16
  %v372 = vrot.slane %v370, 7
  %v373 = vsel %vm147, %v368, %v372
  %v375 = vshrl.u32 %v298, 16
  %v377 = vrot.slane %v375, 6
  %v378 = vshll.u32 %v298, 16
  %v380 = vrot.slane %v378, 7
  %v381 = vor.u32 %v377, %v380
  %v382 = vrot.slane %v381, 2
  %v384 = vshll.u32 %v299, 16
  %v386 = vrot.slane %v384, 7
  %v387 = vsel %vm147, %v382, %v386
  %v389 = vshrl.u32 %v306, 16
  %v391 = vrot.slane %v389, 6
  %v392 = vshll.u32 %v306, 16
  %v394 = vrot.slane %v392, 7
  %v395 = vor.u32 %v391, %v394
  %v396 = vrot.slane %v395, 2
  %v398 = vshll.u32 %v307, 16
  %v400 = vrot.slane %v398, 7
  %v401 = vsel %vm147, %v396, %v400
  %v403 = vshrl.u32 %v314, 16
  %v405 = vrot.slane %v403, 6
  %v406 = vshll.u32 %v314, 16
  %v408 = vrot.slane %v406, 7
  %v409 = vor.u32 %v405, %v408
  %v410 = vrot.slane %v409, 2
  %v412 = vshll.u32 %v315, 16
  %v414 = vrot.slane %v412, 7
  %v415 = vsel %vm147, %v410, %v414
  %v417 = vshrl.u32 %v322, 16
  %v419 = vrot.slane %v417, 6
  %v420 = vshll.u32 %v322, 16
  %v422 = vrot.slane %v420, 7
  %v423 = vor.u32 %v419, %v422
  %v424 = vrot.slane %v423, 2
  %v426 = vshll.u32 %v323, 16
  %v428 = vrot.slane %v426, 7
  %v429 = vsel %vm147, %v424, %v428
  %v431 = vshrl.u32 %v330, 16
  %v433 = vrot.slane %v431, 6
  %v434 = vshll.u32 %v330, 16
  %v436 = vrot.slane %v434, 7
  %v437 = vor.u32 %v433, %v436
  %v438 = vrot.slane %v437, 2
  %v440 = vshll.u32 %v331, 16
  %v442 = vrot.slane %v440, 7
  %v443 = vsel %vm147, %v438, %v442
  %vm444 = vcmask 1040384
  %vm445 = vcmask 1042434
  %vm446 = vmor %vm444, %vm445
  %vm447 = vcmask 1044484
  %vm448 = vmor %vm446, %vm447
  %vm449 = vcmask 1046534
  %vm450 = vmor %vm448, %vm449
  %v451 = vrot.slane %v83, 7
  %v452 = vrot.slane %v451, 2
  %v453 = vrot.slane %v84, 7
  %v454 = vsel %vm450, %v452, %v453
  %v455 = vrot.slane %v91, 7
  %v456 = vrot.slane %v455, 2
  %v457 = vrot.slane %v92, 7
  %v458 = vsel %vm450, %v456, %v457
  %v459 = vrot.slane %v99, 7
  %v460 = vrot.slane %v459, 2
  %v461 = vrot.slane %v100, 7
  %v462 = vsel %vm450, %v460, %v461
  %v463 = vrot.slane %v107, 7
  %v464 = vrot.slane %v463, 2
  %v465 = vrot.slane %v108, 7
  %v466 = vsel %vm450, %v464, %v465
  %v467 = vrot.slane %v115, 7
  %v468 = vrot.slane %v467, 2
  %v469 = vrot.slane %v116, 7
  %v470 = vsel %vm450, %v468, %v469
  %v471 = vrot.slane %v123, 7
  %v472 = vrot.slane %v471, 2
  %v473 = vrot.slane %v124, 7
  %v474 = vsel %vm450, %v472, %v473
  %v475 = vrot.slane %v131, 7
  %v476 = vrot.slane %v475, 2
  %v477 = vrot.slane %v132, 7
  %v478 = vsel %vm450, %v476, %v477
  %v479 = vrot.slane %v139, 7
  %v480 = vrot.slane %v479, 2
  %v481 = vrot.slane %v140, 7
  %v482 = vsel %vm450, %v480, %v481
  %v483 = vrot.slane %v274, 7
  %v484 = vrot.slane %v483, 2
  %v485 = vrot.slane %v275, 7
  %v486 = vsel %vm450, %v484, %v485
  %v487 = vrot.slane %v282, 7
  %v488 = vrot.slane %v487, 2
  %v489 = vrot.slane %v283, 7
  %v490 = vsel %vm450, %v488, %v489
  %v491 = vrot.slane %v290, 7
  %v492 = vrot.slane %v491, 2
  %v493 = vrot.slane %v291, 7
  %v494 = vsel %vm450, %v492, %v493
  %v495 = vrot.slane %v298, 7
  %v496 = vrot.slane %v495, 2
  %v497 = vrot.slane %v299, 7
  %v498 = vsel %vm450, %v496, %v497
  %v499 = vrot.slane %v306, 7
  %v500 = vrot.slane %v499, 2
  %v501 = vrot.slane %v307, 7
  %v502 = vsel %vm450, %v500, %v501
  %v503 = vrot.slane %v314, 7
  %v504 = vrot.slane %v503, 2
  %v505 = vrot.slane %v315, 7
  %v506 = vsel %vm450, %v504, %v505
  %v507 = vrot.slane %v322, 7
  %v508 = vrot.slane %v507, 2
  %v509 = vrot.slane %v323, 7
  %v510 = vsel %vm450, %v508, %v509
  %v511 = vrot.slane %v330, 7
  %v512 = vrot.slane %v511, 2
  %v513 = vrot.slane %v331, 7
  %v514 = vsel %vm450, %v512, %v513
  %v518 = vunpack.c.l.s4 1983009808
  %v519 = vunpack.c.0.s8 %v518
  %v520 = vlaneseq
  %v521 = vshrl.u32 %v520, 7
  %v522 = vsub.s32 %v519, %v521
  %v523 = vrot.slane %v37, %v522
  %v524 = vcombine.high %v523, %v523
  %v526 = vunpack.c.l.s4 1983009808
  %v527 = vunpack.c.0.s8 %v526
  %v528 = vlaneseq
  %v529 = vshrl.u32 %v528, 7
  %v530 = vsub.s32 %v527, %v529
  %v531 = vrot.slane %v43, %v530
  %v532 = vcombine.high %v531, %v531
  %v534 = vshrl.u32 %v523, 16
  %v536 = vrot.slane %v534, 6
  %v537 = vshll.u32 %v523, 16
  %v539 = vrot.slane %v537, 7
  %v540 = vor.u32 %v536, %v539
  %v541 = vrot.slane %v540, 2
  %v543 = vshll.u32 %v524, 16
  %v545 = vrot.slane %v543, 7
  %v546 = vsel %vm147, %v541, %v545
  %v548 = vshrl.u32 %v531, 16
  %v550 = vrot.slane %v548, 6
  %v551 = vshll.u32 %v531, 16
  %v553 = vrot.slane %v551, 7
  %v554 = vor.u32 %v550, %v553
  %v555 = vrot.slane %v554, 2
  %v557 = vshll.u32 %v532, 16
  %v559 = vrot.slane %v557, 7
  %v560 = vsel %vm147, %v555, %v559
  %v564 = vunpack.c.l.s4 1983009808
  %v565 = vunpack.c.0.s8 %v564
  %v566 = vlaneseq
  %v567 = vshrl.u32 %v566, 7
  %v568 = vsub.s32 %v565, %v567
  %v569 = vrot.slane %v61, %v568
  %v570 = vcombine.high %v569, %v569
  %v572 = vunpack.c.l.s4 1983009808
  %v573 = vunpack.c.0.s8 %v572
  %v574 = vlaneseq
  %v575 = vshrl.u32 %v574, 7
  %v576 = vsub.s32 %v573, %v575
  %v577 = vrot.slane %v67, %v576
  %v578 = vcombine.high %v577, %v577
  %v580 = vshrl.u32 %v569, 16
  %v582 = vrot.slane %v580, 6
  %v583 = vshll.u32 %v569, 16
  %v585 = vrot.slane %v583, 7
  %v586 = vor.u32 %v582, %v585
  %v587 = vrot.slane %v586, 2
  %v589 = vshll.u32 %v570, 16
  %v591 = vrot.slane %v589, 7
  %v592 = vsel %vm147, %v587, %v591
  %v594 = vshrl.u32 %v577, 16
  %v596 = vrot.slane %v594, 6
  %v597 = vshll.u32 %v577, 16
  %v599 = vrot.slane %v597, 7
  %v600 = vor.u32 %v596, %v599
  %v601 = vrot.slane %v600, 2
  %v603 = vshll.u32 %v578, 16
  %v605 = vrot.slane %v603, 7
  %v606 = vsel %vm147, %v601, %v605
  %v607 = vrot.slane %v523, 7
  %v608 = vrot.slane %v607, 2
  %v609 = vrot.slane %v524, 7
  %v610 = vsel %vm450, %v608, %v609
  %v611 = vrot.slane %v531, 7
  %v612 = vrot.slane %v611, 2
  %v613 = vrot.slane %v532, 7
  %v614 = vsel %vm450, %v612, %v613
  %v615 = vrot.slane %v569, 7
  %v616 = vrot.slane %v615, 2
  %v617 = vrot.slane %v570, 7
  %v618 = vsel %vm450, %v616, %v617
  %v619 = vrot.slane %v577, 7
  %v620 = vrot.slane %v619, 2
  %v621 = vrot.slane %v578, 7
  %v622 = vsel %vm450, %v620, %v621
  %v626 = vunpack.c.l.s4 1983009808
  %v627 = vunpack.c.0.s8 %v626
  %v628 = vlaneseq
  %v629 = vshrl.u32 %v628, 7
  %v630 = vsub.s32 %v627, %v629
  %v631 = vrot.slane %v38, %v630
  %v632 = vcombine.high %v631, %v631
  %v634 = vunpack.c.l.s4 1983009808
  %v635 = vunpack.c.0.s8 %v634
  %v636 = vlaneseq
  %v637 = vshrl.u32 %v636, 7
  %v638 = vsub.s32 %v635, %v637
  %v639 = vrot.slane %v44, %v638
  %v640 = vcombine.high %v639, %v639
  %v642 = vshrl.u32 %v631, 16
  %v644 = vrot.slane %v642, 6
  %v645 = vshll.u32 %v631, 16
  %v647 = vrot.slane %v645, 7
  %v648 = vor.u32 %v644, %v647
  %v649 = vrot.slane %v648, 2
  %v651 = vshll.u32 %v632, 16
  %v653 = vrot.slane %v651, 7
  %v654 = vsel %vm147, %v649, %v653
  %v656 = vshrl.u32 %v639, 16
  %v658 = vrot.slane %v656, 6
  %v659 = vshll.u32 %v639, 16
  %v661 = vrot.slane %v659, 7
  %v662 = vor.u32 %v658, %v661
  %v663 = vrot.slane %v662, 2
  %v665 = vshll.u32 %v640, 16
  %v667 = vrot.slane %v665, 7
  %v668 = vsel %vm147, %v663, %v667
  %v672 = vunpack.c.l.s4 1983009808
  %v673 = vunpack.c.0.s8 %v672
  %v674 = vlaneseq
  %v675 = vshrl.u32 %v674, 7
  %v676 = vsub.s32 %v673, %v675
  %v677 = vrot.slane %v62, %v676
  %v678 = vcombine.high %v677, %v677
  %v680 = vunpack.c.l.s4 1983009808
  %v681 = vunpack.c.0.s8 %v680
  %v682 = vlaneseq
  %v683 = vshrl.u32 %v682, 7
  %v684 = vsub.s32 %v681, %v683
  %v685 = vrot.slane %v68, %v684
  %v686 = vcombine.high %v685, %v685
  %v688 = vshrl.u32 %v677, 16
  %v690 = vrot.slane %v688, 6
  %v691 = vshll.u32 %v677, 16
  %v693 = vrot.slane %v691, 7
  %v694 = vor.u32 %v690, %v693
  %v695 = vrot.slane %v694, 2
  %v697 = vshll.u32 %v678, 16
  %v699 = vrot.slane %v697, 7
  %v700 = vsel %vm147, %v695, %v699
  %v702 = vshrl.u32 %v685, 16
  %v704 = vrot.slane %v702, 6
  %v705 = vshll.u32 %v685, 16
  %v707 = vrot.slane %v705, 7
  %v708 = vor.u32 %v704, %v707
  %v709 = vrot.slane %v708, 2
  %v711 = vshll.u32 %v686, 16
  %v713 = vrot.slane %v711, 7
  %v714 = vsel %vm147, %v709, %v713
  %v715 = vrot.slane %v631, 7
  %v716 = vrot.slane %v715, 2
  %v717 = vrot.slane %v632, 7
  %v718 = vsel %vm450, %v716, %v717
  %v719 = vrot.slane %v639, 7
  %v720 = vrot.slane %v719, 2
  %v721 = vrot.slane %v640, 7
  %v722 = vsel %vm450, %v720, %v721
  %v723 = vrot.slane %v677, 7
  %v724 = vrot.slane %v723, 2
  %v725 = vrot.slane %v678, 7
  %v726 = vsel %vm450, %v724, %v725
  %v727 = vrot.slane %v685, 7
  %v728 = vrot.slane %v727, 2
  %v729 = vrot.slane %v686, 7
  %v730 = vsel %vm450, %v728, %v729
  %v731 = vcombine.low %v33, %v34
  %v732 = vcombine.low %v35, %v36
  %v734 = vunpack.c.l.s4 1983009808
  %v735 = vunpack.c.0.s8 %v734
  %v736 = vlaneseq
  %v737 = vshrl.u32 %v736, 7
  %v738 = vsub.s32 %v735, %v737
  %v739 = vrot.slane %v731, %v738
  %v741 = vunpack.c.l.s4 1983009808
  %v742 = vunpack.c.0.s8 %v741
  %v743 = vlaneseq
  %v744 = vshrl.u32 %v743, 7
  %v745 = vsub.s32 %v742, %v744
  %v746 = vrot.slane %v732, %v745
  %v747 = vcombine.low %v739, %v746
  %v748 = vcombine.low %v39, %v40
  %v749 = vcombine.low %v41, %v42
  %v751 = vunpack.c.l.s4 1983009808
  %v752 = vunpack.c.0.s8 %v751
  %v753 = vlaneseq
  %v754 = vshrl.u32 %v753, 7
  %v755 = vsub.s32 %v752, %v754
  %v756 = vrot.slane %v748, %v755
  %v758 = vunpack.c.l.s4 1983009808
  %v759 = vunpack.c.0.s8 %v758
  %v760 = vlaneseq
  %v761 = vshrl.u32 %v760, 7
  %v762 = vsub.s32 %v759, %v761
  %v763 = vrot.slane %v749, %v762
  %v764 = vcombine.low %v756, %v763
  %v765 = vcombine.low %v57, %v58
  %v766 = vcombine.low %v59, %v60
  %v768 = vunpack.c.l.s4 1983009808
  %v769 = vunpack.c.0.s8 %v768
  %v770 = vlaneseq
  %v771 = vshrl.u32 %v770, 7
  %v772 = vsub.s32 %v769, %v771
  %v773 = vrot.slane %v765, %v772
  %v775 = vunpack.c.l.s4 1983009808
  %v776 = vunpack.c.0.s8 %v775
  %v777 = vlaneseq
  %v778 = vshrl.u32 %v777, 7
  %v779 = vsub.s32 %v776, %v778
  %v780 = vrot.slane %v766, %v779
  %v781 = vcombine.low %v773, %v780
  %v782 = vcombine.low %v63, %v64
  %v783 = vcombine.low %v65, %v66
  %v785 = vunpack.c.l.s4 1983009808
  %v786 = vunpack.c.0.s8 %v785
  %v787 = vlaneseq
  %v788 = vshrl.u32 %v787, 7
  %v789 = vsub.s32 %v786, %v788
  %v790 = vrot.slane %v782, %v789
  %v792 = vunpack.c.l.s4 1983009808
  %v793 = vunpack.c.0.s8 %v792
  %v794 = vlaneseq
  %v795 = vshrl.u32 %v794, 7
  %v796 = vsub.s32 %v793, %v795
  %v797 = vrot.slane %v783, %v796
  %v798 = vcombine.low %v790, %v797
  %799 = vrot.lane.b32.xlu0 %v781, 16
  %v800 = vpop.permute.xlu0 %799
  %801 = vrot.lane.b32.xlu0 %v798, 16
  %v802 = vpop.permute.xlu0 %801
  %v803 = vcombine.low %v161, %v175
  %v804 = vcombine.low %v189, %v203
  %v806 = vunpack.c.l.s4 1983009808
  %v807 = vunpack.c.0.s8 %v806
  %v808 = vlaneseq
  %v809 = vshrl.u32 %v808, 7
  %v810 = vsub.s32 %v807, %v809
  %v811 = vrot.slane %v803, %v810
  %v813 = vunpack.c.l.s4 1983009808
  %v814 = vunpack.c.0.s8 %v813
  %v815 = vlaneseq
  %v816 = vshrl.u32 %v815, 7
  %v817 = vsub.s32 %v814, %v816
  %v818 = vrot.slane %v804, %v817
  %v819 = vcombine.low %v811, %v818
  %v820 = vcombine.low %v217, %v231
  %v821 = vcombine.low %v245, %v259
  %v823 = vunpack.c.l.s4 1983009808
  %v824 = vunpack.c.0.s8 %v823
  %v825 = vlaneseq
  %v826 = vshrl.u32 %v825, 7
  %v827 = vsub.s32 %v824, %v826
  %v828 = vrot.slane %v820, %v827
  %v830 = vunpack.c.l.s4 1983009808
  %v831 = vunpack.c.0.s8 %v830
  %v832 = vlaneseq
  %v833 = vshrl.u32 %v832, 7
  %v834 = vsub.s32 %v831, %v833
  %v835 = vrot.slane %v821, %v834
  %v836 = vcombine.low %v828, %v835
  %837 = vrot.lane.b32.xlu0 %v819, 32
  %v838 = vpop.permute.xlu0 %837
  %839 = vrot.lane.b32.xlu0 %v836, 32
  %v840 = vpop.permute.xlu0 %839
  %v841 = vcombine.low %v345, %v359
  %v842 = vcombine.low %v373, %v387
  %v844 = vunpack.c.l.s4 1983009808
  %v845 = vunpack.c.0.s8 %v844
  %v846 = vlaneseq
  %v847 = vshrl.u32 %v846, 7
  %v848 = vsub.s32 %v845, %v847
  %v849 = vrot.slane %v841, %v848
  %v851 = vunpack.c.l.s4 1983009808
  %v852 = vunpack.c.0.s8 %v851
  %v853 = vlaneseq
  %v854 = vshrl.u32 %v853, 7
  %v855 = vsub.s32 %v852, %v854
  %v856 = vrot.slane %v842, %v855
  %v857 = vcombine.low %v849, %v856
  %v858 = vcombine.low %v401, %v415
  %v859 = vcombine.low %v429, %v443
  %v861 = vunpack.c.l.s4 1983009808
  %v862 = vunpack.c.0.s8 %v861
  %v863 = vlaneseq
  %v864 = vshrl.u32 %v863, 7
  %v865 = vsub.s32 %v862, %v864
  %v866 = vrot.slane %v858, %v865
  %v868 = vunpack.c.l.s4 1983009808
  %v869 = vunpack.c.0.s8 %v868
  %v870 = vlaneseq
  %v871 = vshrl.u32 %v870, 7
  %v872 = vsub.s32 %v869, %v871
  %v873 = vrot.slane %v859, %v872
  %v874 = vcombine.low %v866, %v873
  %875 = vrot.lane.b32.xlu0 %v857, 48
  %v876 = vpop.permute.xlu0 %875
  %877 = vrot.lane.b32.xlu0 %v874, 48
  %v878 = vpop.permute.xlu0 %877
  %v879 = vcombine.low %v454, %v458
  %v880 = vcombine.low %v462, %v466
  %v882 = vunpack.c.l.s4 1983009808
  %v883 = vunpack.c.0.s8 %v882
  %v884 = vlaneseq
  %v885 = vshrl.u32 %v884, 7
  %v886 = vsub.s32 %v883, %v885
  %v887 = vrot.slane %v879, %v886
  %v889 = vunpack.c.l.s4 1983009808
  %v890 = vunpack.c.0.s8 %v889
  %v891 = vlaneseq
  %v892 = vshrl.u32 %v891, 7
  %v893 = vsub.s32 %v890, %v892
  %v894 = vrot.slane %v880, %v893
  %v895 = vcombine.low %v887, %v894
  %v896 = vcombine.low %v470, %v474
  %v897 = vcombine.low %v478, %v482
  %v899 = vunpack.c.l.s4 1983009808
  %v900 = vunpack.c.0.s8 %v899
  %v901 = vlaneseq
  %v902 = vshrl.u32 %v901, 7
  %v903 = vsub.s32 %v900, %v902
  %v904 = vrot.slane %v896, %v903
  %v906 = vunpack.c.l.s4 1983009808
  %v907 = vunpack.c.0.s8 %v906
  %v908 = vlaneseq
  %v909 = vshrl.u32 %v908, 7
  %v910 = vsub.s32 %v907, %v909
  %v911 = vrot.slane %v897, %v910
  %v912 = vcombine.low %v904, %v911
  %913 = vrot.lane.b32.xlu0 %v895, 64
  %v914 = vpop.permute.xlu0 %913
  %915 = vrot.lane.b32.xlu0 %v912, 64
  %v916 = vpop.permute.xlu0 %915
  %v917 = vcombine.low %v486, %v490
  %v918 = vcombine.low %v494, %v498
  %v920 = vunpack.c.l.s4 1983009808
  %v921 = vunpack.c.0.s8 %v920
  %v922 = vlaneseq
  %v923 = vshrl.u32 %v922, 7
  %v924 = vsub.s32 %v921, %v923
  %v925 = vrot.slane %v917, %v924
  %v927 = vunpack.c.l.s4 1983009808
  %v928 = vunpack.c.0.s8 %v927
  %v929 = vlaneseq
  %v930 = vshrl.u32 %v929, 7
  %v931 = vsub.s32 %v928, %v930
  %v932 = vrot.slane %v918, %v931
  %v933 = vcombine.low %v925, %v932
  %v934 = vcombine.low %v502, %v506
  %v935 = vcombine.low %v510, %v514
  %v937 = vunpack.c.l.s4 1983009808
  %v938 = vunpack.c.0.s8 %v937
  %v939 = vlaneseq
  %v940 = vshrl.u32 %v939, 7
  %v941 = vsub.s32 %v938, %v940
  %v942 = vrot.slane %v934, %v941
  %v944 = vunpack.c.l.s4 1983009808
  %v945 = vunpack.c.0.s8 %v944
  %v946 = vlaneseq
  %v947 = vshrl.u32 %v946, 7
  %v948 = vsub.s32 %v945, %v947
  %v949 = vrot.slane %v935, %v948
  %v950 = vcombine.low %v942, %v949
  %951 = vrot.lane.b32.xlu0 %v933, 80
  %v952 = vpop.permute.xlu0 %951
  %953 = vrot.lane.b32.xlu0 %v950, 80
  %v954 = vpop.permute.xlu0 %953
  %v955 = vcombine.low %v34, %v35
  %v956 = vcombine.low %v36, %v37
  %v958 = vunpack.c.l.s4 1983009808
  %v959 = vunpack.c.0.s8 %v958
  %v960 = vlaneseq
  %v961 = vshrl.u32 %v960, 7
  %v962 = vsub.s32 %v959, %v961
  %v963 = vrot.slane %v955, %v962
  %v965 = vunpack.c.l.s4 1983009808
  %v966 = vunpack.c.0.s8 %v965
  %v967 = vlaneseq
  %v968 = vshrl.u32 %v967, 7
  %v969 = vsub.s32 %v966, %v968
  %v970 = vrot.slane %v956, %v969
  %v971 = vcombine.low %v963, %v970
  %v972 = vcombine.low %v40, %v41
  %v973 = vcombine.low %v42, %v43
  %v975 = vunpack.c.l.s4 1983009808
  %v976 = vunpack.c.0.s8 %v975
  %v977 = vlaneseq
  %v978 = vshrl.u32 %v977, 7
  %v979 = vsub.s32 %v976, %v978
  %v980 = vrot.slane %v972, %v979
  %v982 = vunpack.c.l.s4 1983009808
  %v983 = vunpack.c.0.s8 %v982
  %v984 = vlaneseq
  %v985 = vshrl.u32 %v984, 7
  %v986 = vsub.s32 %v983, %v985
  %v987 = vrot.slane %v973, %v986
  %v988 = vcombine.low %v980, %v987
  %989 = vrot.lane.b32.xlu0 %v971, 96
  %v990 = vpop.permute.xlu0 %989
  %991 = vrot.lane.b32.xlu0 %v988, 96
  %v992 = vpop.permute.xlu0 %991
  %v993 = vcombine.low %v58, %v59
  %v994 = vcombine.low %v60, %v61
  %v996 = vunpack.c.l.s4 1983009808
  %v997 = vunpack.c.0.s8 %v996
  %v998 = vlaneseq
  %v999 = vshrl.u32 %v998, 7
  %v1000 = vsub.s32 %v997, %v999
  %v1001 = vrot.slane %v993, %v1000
  %v1003 = vunpack.c.l.s4 1983009808
  %v1004 = vunpack.c.0.s8 %v1003
  %v1005 = vlaneseq
  %v1006 = vshrl.u32 %v1005, 7
  %v1007 = vsub.s32 %v1004, %v1006
  %v1008 = vrot.slane %v994, %v1007
  %v1009 = vcombine.low %v1001, %v1008
  %v1010 = vcombine.low %v64, %v65
  %v1011 = vcombine.low %v66, %v67
  %v1013 = vunpack.c.l.s4 1983009808
  %v1014 = vunpack.c.0.s8 %v1013
  %v1015 = vlaneseq
  %v1016 = vshrl.u32 %v1015, 7
  %v1017 = vsub.s32 %v1014, %v1016
  %v1018 = vrot.slane %v1010, %v1017
  %v1020 = vunpack.c.l.s4 1983009808
  %v1021 = vunpack.c.0.s8 %v1020
  %v1022 = vlaneseq
  %v1023 = vshrl.u32 %v1022, 7
  %v1024 = vsub.s32 %v1021, %v1023
  %v1025 = vrot.slane %v1011, %v1024
  %v1026 = vcombine.low %v1018, %v1025
  %1027 = vrot.lane.b32.xlu0 %v1009, 112
  %v1028 = vpop.permute.xlu0 %1027
  %1029 = vrot.lane.b32.xlu0 %v1026, 112
  %v1030 = vpop.permute.xlu0 %1029
  %v1031 = vcombine.low %v175, %v189
  %v1032 = vcombine.low %v203, %v546
  %v1034 = vunpack.c.l.s4 1983009808
  %v1035 = vunpack.c.0.s8 %v1034
  %v1036 = vlaneseq
  %v1037 = vshrl.u32 %v1036, 7
  %v1038 = vsub.s32 %v1035, %v1037
  %v1039 = vrot.slane %v1031, %v1038
  %v1041 = vunpack.c.l.s4 1983009808
  %v1042 = vunpack.c.0.s8 %v1041
  %v1043 = vlaneseq
  %v1044 = vshrl.u32 %v1043, 7
  %v1045 = vsub.s32 %v1042, %v1044
  %v1046 = vrot.slane %v1032, %v1045
  %v1047 = vcombine.low %v1039, %v1046
  %v1048 = vcombine.low %v231, %v245
  %v1049 = vcombine.low %v259, %v560
  %v1051 = vunpack.c.l.s4 1983009808
  %v1052 = vunpack.c.0.s8 %v1051
  %v1053 = vlaneseq
  %v1054 = vshrl.u32 %v1053, 7
  %v1055 = vsub.s32 %v1052, %v1054
  %v1056 = vrot.slane %v1048, %v1055
  %v1058 = vunpack.c.l.s4 1983009808
  %v1059 = vunpack.c.0.s8 %v1058
  %v1060 = vlaneseq
  %v1061 = vshrl.u32 %v1060, 7
  %v1062 = vsub.s32 %v1059, %v1061
  %v1063 = vrot.slane %v1049, %v1062
  %v1064 = vcombine.low %v1056, %v1063
  %v1065 = vcombine.low %v359, %v373
  %v1066 = vcombine.low %v387, %v592
  %v1068 = vunpack.c.l.s4 1983009808
  %v1069 = vunpack.c.0.s8 %v1068
  %v1070 = vlaneseq
  %v1071 = vshrl.u32 %v1070, 7
  %v1072 = vsub.s32 %v1069, %v1071
  %v1073 = vrot.slane %v1065, %v1072
  %v1075 = vunpack.c.l.s4 1983009808
  %v1076 = vunpack.c.0.s8 %v1075
  %v1077 = vlaneseq
  %v1078 = vshrl.u32 %v1077, 7
  %v1079 = vsub.s32 %v1076, %v1078
  %v1080 = vrot.slane %v1066, %v1079
  %v1081 = vcombine.low %v1073, %v1080
  %v1082 = vcombine.low %v415, %v429
  %v1083 = vcombine.low %v443, %v606
  %v1085 = vunpack.c.l.s4 1983009808
  %v1086 = vunpack.c.0.s8 %v1085
  %v1087 = vlaneseq
  %v1088 = vshrl.u32 %v1087, 7
  %v1089 = vsub.s32 %v1086, %v1088
  %v1090 = vrot.slane %v1082, %v1089
  %v1092 = vunpack.c.l.s4 1983009808
  %v1093 = vunpack.c.0.s8 %v1092
  %v1094 = vlaneseq
  %v1095 = vshrl.u32 %v1094, 7
  %v1096 = vsub.s32 %v1093, %v1095
  %v1097 = vrot.slane %v1083, %v1096
  %v1098 = vcombine.low %v1090, %v1097
  %1099 = vrot.lane.b32.xlu0 %v1081, 16
  %v1100 = vpop.permute.xlu0 %1099
  %1101 = vrot.lane.b32.xlu0 %v1098, 16
  %v1102 = vpop.permute.xlu0 %1101
  %v1103 = vcombine.low %v458, %v462
  %v1104 = vcombine.low %v466, %v610
  %v1106 = vunpack.c.l.s4 1983009808
  %v1107 = vunpack.c.0.s8 %v1106
  %v1108 = vlaneseq
  %v1109 = vshrl.u32 %v1108, 7
  %v1110 = vsub.s32 %v1107, %v1109
  %v1111 = vrot.slane %v1103, %v1110
  %v1113 = vunpack.c.l.s4 1983009808
  %v1114 = vunpack.c.0.s8 %v1113
  %v1115 = vlaneseq
  %v1116 = vshrl.u32 %v1115, 7
  %v1117 = vsub.s32 %v1114, %v1116
  %v1118 = vrot.slane %v1104, %v1117
  %v1119 = vcombine.low %v1111, %v1118
  %v1120 = vcombine.low %v474, %v478
  %v1121 = vcombine.low %v482, %v614
  %v1123 = vunpack.c.l.s4 1983009808
  %v1124 = vunpack.c.0.s8 %v1123
  %v1125 = vlaneseq
  %v1126 = vshrl.u32 %v1125, 7
  %v1127 = vsub.s32 %v1124, %v1126
  %v1128 = vrot.slane %v1120, %v1127
  %v1130 = vunpack.c.l.s4 1983009808
  %v1131 = vunpack.c.0.s8 %v1130
  %v1132 = vlaneseq
  %v1133 = vshrl.u32 %v1132, 7
  %v1134 = vsub.s32 %v1131, %v1133
  %v1135 = vrot.slane %v1121, %v1134
  %v1136 = vcombine.low %v1128, %v1135
  %1137 = vrot.lane.b32.xlu0 %v1119, 32
  %v1138 = vpop.permute.xlu0 %1137
  %1139 = vrot.lane.b32.xlu0 %v1136, 32
  %v1140 = vpop.permute.xlu0 %1139
  %v1141 = vcombine.low %v490, %v494
  %v1142 = vcombine.low %v498, %v618
  %v1144 = vunpack.c.l.s4 1983009808
  %v1145 = vunpack.c.0.s8 %v1144
  %v1146 = vlaneseq
  %v1147 = vshrl.u32 %v1146, 7
  %v1148 = vsub.s32 %v1145, %v1147
  %v1149 = vrot.slane %v1141, %v1148
  %v1151 = vunpack.c.l.s4 1983009808
  %v1152 = vunpack.c.0.s8 %v1151
  %v1153 = vlaneseq
  %v1154 = vshrl.u32 %v1153, 7
  %v1155 = vsub.s32 %v1152, %v1154
  %v1156 = vrot.slane %v1142, %v1155
  %v1157 = vcombine.low %v1149, %v1156
  %v1158 = vcombine.low %v506, %v510
  %v1159 = vcombine.low %v514, %v622
  %v1161 = vunpack.c.l.s4 1983009808
  %v1162 = vunpack.c.0.s8 %v1161
  %v1163 = vlaneseq
  %v1164 = vshrl.u32 %v1163, 7
  %v1165 = vsub.s32 %v1162, %v1164
  %v1166 = vrot.slane %v1158, %v1165
  %v1168 = vunpack.c.l.s4 1983009808
  %v1169 = vunpack.c.0.s8 %v1168
  %v1170 = vlaneseq
  %v1171 = vshrl.u32 %v1170, 7
  %v1172 = vsub.s32 %v1169, %v1171
  %v1173 = vrot.slane %v1159, %v1172
  %v1174 = vcombine.low %v1166, %v1173
  %1175 = vrot.lane.b32.xlu0 %v1157, 48
  %v1176 = vpop.permute.xlu0 %1175
  %1177 = vrot.lane.b32.xlu0 %v1174, 48
  %v1178 = vpop.permute.xlu0 %1177
  %v1179 = vcombine.low %v37, %v38
  %v1181 = vunpack.c.l.s4 1983009808
  %v1182 = vunpack.c.0.s8 %v1181
  %v1183 = vlaneseq
  %v1184 = vshrl.u32 %v1183, 7
  %v1185 = vsub.s32 %v1182, %v1184
  %v1186 = vrot.slane %v1179, %v1185
  %v1187 = vcombine.low %v746, %v1186
  %v1188 = vcombine.low %v43, %v44
  %v1190 = vunpack.c.l.s4 1983009808
  %v1191 = vunpack.c.0.s8 %v1190
  %v1192 = vlaneseq
  %v1193 = vshrl.u32 %v1192, 7
  %v1194 = vsub.s32 %v1191, %v1193
  %v1195 = vrot.slane %v1188, %v1194
  %v1196 = vcombine.low %v763, %v1195
  %1197 = vrot.lane.b32.xlu0 %v1187, 64
  %v1198 = vpop.permute.xlu0 %1197
  %1199 = vrot.lane.b32.xlu0 %v1196, 64
  %v1200 = vpop.permute.xlu0 %1199
  %v1201 = vcombine.low %v61, %v62
  %v1203 = vunpack.c.l.s4 1983009808
  %v1204 = vunpack.c.0.s8 %v1203
  %v1205 = vlaneseq
  %v1206 = vshrl.u32 %v1205, 7
  %v1207 = vsub.s32 %v1204, %v1206
  %v1208 = vrot.slane %v1201, %v1207
  %v1209 = vcombine.low %v780, %v1208
  %v1210 = vcombine.low %v67, %v68
  %v1212 = vunpack.c.l.s4 1983009808
  %v1213 = vunpack.c.0.s8 %v1212
  %v1214 = vlaneseq
  %v1215 = vshrl.u32 %v1214, 7
  %v1216 = vsub.s32 %v1213, %v1215
  %v1217 = vrot.slane %v1210, %v1216
  %v1218 = vcombine.low %v797, %v1217
  %1219 = vrot.lane.b32.xlu0 %v1209, 80
  %v1220 = vpop.permute.xlu0 %1219
  %1221 = vrot.lane.b32.xlu0 %v1218, 80
  %v1222 = vpop.permute.xlu0 %1221
  %v1223 = vcombine.low %v546, %v654
  %v1225 = vunpack.c.l.s4 1983009808
  %v1226 = vunpack.c.0.s8 %v1225
  %v1227 = vlaneseq
  %v1228 = vshrl.u32 %v1227, 7
  %v1229 = vsub.s32 %v1226, %v1228
  %v1230 = vrot.slane %v1223, %v1229
  %v1231 = vcombine.low %v818, %v1230
  %v1232 = vcombine.low %v560, %v668
  %v1234 = vunpack.c.l.s4 1983009808
  %v1235 = vunpack.c.0.s8 %v1234
  %v1236 = vlaneseq
  %v1237 = vshrl.u32 %v1236, 7
  %v1238 = vsub.s32 %v1235, %v1237
  %v1239 = vrot.slane %v1232, %v1238
  %v1240 = vcombine.low %v835, %v1239
  %1241 = vrot.lane.b32.xlu0 %v1231, 96
  %v1242 = vpop.permute.xlu0 %1241
  %1243 = vrot.lane.b32.xlu0 %v1240, 96
  %v1244 = vpop.permute.xlu0 %1243
  %v1245 = vcombine.low %v592, %v700
  %v1247 = vunpack.c.l.s4 1983009808
  %v1248 = vunpack.c.0.s8 %v1247
  %v1249 = vlaneseq
  %v1250 = vshrl.u32 %v1249, 7
  %v1251 = vsub.s32 %v1248, %v1250
  %v1252 = vrot.slane %v1245, %v1251
  %v1253 = vcombine.low %v856, %v1252
  %v1254 = vcombine.low %v606, %v714
  %v1256 = vunpack.c.l.s4 1983009808
  %v1257 = vunpack.c.0.s8 %v1256
  %v1258 = vlaneseq
  %v1259 = vshrl.u32 %v1258, 7
  %v1260 = vsub.s32 %v1257, %v1259
  %v1261 = vrot.slane %v1254, %v1260
  %v1262 = vcombine.low %v873, %v1261
  %1263 = vrot.lane.b32.xlu0 %v1253, 112
  %v1264 = vpop.permute.xlu0 %1263
  %1265 = vrot.lane.b32.xlu0 %v1262, 112
  %v1266 = vpop.permute.xlu0 %1265
  %vm1267 = vcmask 130048
  %v1270 = vsel %vm1267, %v747, %v800
  %v1273 = vsel %vm1267, %v764, %v802
  %vm1274 = vcmask 261120
  %v1276 = vsel %vm1274, %v1270, %v838
  %v1278 = vsel %vm1274, %v1273, %v840
  %vm1279 = vcmask 392192
  %v1281 = vsel %vm1279, %v1276, %v876
  %v1283 = vsel %vm1279, %v1278, %v878
  %vm1284 = vcmask 523264
  %v1286 = vsel %vm1284, %v1281, %v914
  %v1288 = vsel %vm1284, %v1283, %v916
  %vm1289 = vcmask 654336
  %v1291 = vsel %vm1289, %v1286, %v952
  %v1293 = vsel %vm1289, %v1288, %v954
  %vm1294 = vcmask 785408
  %v1296 = vsel %vm1294, %v1291, %v990
  %v1298 = vsel %vm1294, %v1293, %v992
  %vm1299 = vcmask 916480
  %v1301 = vsel %vm1299, %v1296, %v1028
  %v1304 = vsel %vm1299, %v1298, %v1030
  %v1308 = vsel %vm1267, %v1047, %v1100
  %v1311 = vsel %vm1267, %v1064, %v1102
  %v1313 = vsel %vm1274, %v1308, %v1138
  %v1315 = vsel %vm1274, %v1311, %v1140
  %v1317 = vsel %vm1279, %v1313, %v1176
  %v1319 = vsel %vm1279, %v1315, %v1178
  %v1321 = vsel %vm1284, %v1317, %v1198
  %v1323 = vsel %vm1284, %v1319, %v1200
  %v1325 = vsel %vm1289, %v1321, %v1220
  %v1327 = vsel %vm1289, %v1323, %v1222
  %v1329 = vsel %vm1294, %v1325, %v1242
  %v1331 = vsel %vm1294, %v1327, %v1244
  %v1333 = vsel %vm1299, %v1329, %v1264
  %v1336 = vsel %vm1299, %v1331, %v1266
  %v1338 = vcombine.low %v610, %v718
  %v1340 = vunpack.c.l.s4 1983009808
  %v1341 = vunpack.c.0.s8 %v1340
  %v1342 = vlaneseq
  %v1343 = vshrl.u32 %v1342, 7
  %v1344 = vsub.s32 %v1341, %v1343
  %v1345 = vrot.slane %v1338, %v1344
  %v1346 = vcombine.low %v894, %v1345
  %v1347 = vcombine.low %v614, %v722
  %v1349 = vunpack.c.l.s4 1983009808
  %v1350 = vunpack.c.0.s8 %v1349
  %v1351 = vlaneseq
  %v1352 = vshrl.u32 %v1351, 7
  %v1353 = vsub.s32 %v1350, %v1352
  %v1354 = vrot.slane %v1347, %v1353
  %v1355 = vcombine.low %v911, %v1354
  %v1356 = vcombine.low %v618, %v726
  %v1358 = vunpack.c.l.s4 1983009808
  %v1359 = vunpack.c.0.s8 %v1358
  %v1360 = vlaneseq
  %v1361 = vshrl.u32 %v1360, 7
  %v1362 = vsub.s32 %v1359, %v1361
  %v1363 = vrot.slane %v1356, %v1362
  %v1364 = vcombine.low %v932, %v1363
  %v1365 = vcombine.low %v622, %v730
  %v1367 = vunpack.c.l.s4 1983009808
  %v1368 = vunpack.c.0.s8 %v1367
  %v1369 = vlaneseq
  %v1370 = vshrl.u32 %v1369, 7
  %v1371 = vsub.s32 %v1368, %v1370
  %v1372 = vrot.slane %v1365, %v1371
  %v1373 = vcombine.low %v949, %v1372
  %1374 = vrot.lane.b32.xlu0 %v1364, 16
  %v1375 = vpop.permute.xlu0 %1374
  %1376 = vrot.lane.b32.xlu0 %v1373, 16
  %v1377 = vpop.permute.xlu0 %1376
  %v1380 = vsel %vm1267, %v1346, %v1375
  %v1383 = vsel %vm1267, %v1355, %v1377
  %v1384 = vld [vmem:[%s2] sm:$0xf]
  %v1385 = vld [vmem:[%s2 + $0x4] sm:$0xf]
  %v1386 = vld [vmem:[%s2 + $0x8] sm:$0xf]
  %v1387 = vld [vmem:[%s2 + $0xc] sm:$0xf]
  %v1388 = vld [vmem:[%s2 + $0x10] sm:$0xf]
  %v1389 = vld [vmem:[%s2 + $0x14] sm:$0xf]
  %v1390 = vld [vmem:[%s2 + $0x18] sm:$0xf]
  %v1391 = vld [vmem:[%s2 + $0x1c] sm:$0xf]
  %v1392 = vld [vmem:[%s2 + $0x20] sm:$0xf]
  %v1393 = vld [vmem:[%s2 + $0x24] sm:$0xf]
  %v1394 = vld [vmem:[%s2 + $0x28] sm:$0xf]
  %v1395 = vld [vmem:[%s2 + $0x2c] sm:$0xf]
  %v1396 = vld [vmem:[%s2 + $0x30] sm:$0xf]
  %v1397 = vld [vmem:[%s2 + $0x34] sm:$0xf]
  %v1398 = vld [vmem:[%s2 + $0x38] sm:$0xf]
  %v1399 = vld [vmem:[%s2 + $0x3c] sm:$0xf]
  %v1400 = vld [vmem:[%s2 + $0x40] sm:$0xf]
  %v1401 = vld [vmem:[%s2 + $0x44] sm:$0xf]
  %v1402 = vld [vmem:[%s2 + $0x48] sm:$0xf]
  %v1403 = vld [vmem:[%s2 + $0x4c] sm:$0xf]
  %v1404 = vld [vmem:[%s2 + $0x50] sm:$0xf]
  %v1405 = vld [vmem:[%s2 + $0x54] sm:$0xf]
  %v1406 = vld [vmem:[%s2 + $0x58] sm:$0xf]
  %v1407 = vld [vmem:[%s2 + $0x5c] sm:$0xf]
  %v1408 = vld [vmem:[%s2 + $0x60] sm:$0xf]
  %v1409 = vld [vmem:[%s2 + $0x64] sm:$0xf]
  %v1410 = vld [vmem:[%s2 + $0x68] sm:$0xf]
  %v1411 = vld [vmem:[%s2 + $0x6c] sm:$0xf]
  %v1412 = vld [vmem:[%s2 + $0x70] sm:$0xf]
  %v1413 = vld [vmem:[%s2 + $0x74] sm:$0xf]
  %v1414 = vld [vmem:[%s2 + $0x78] sm:$0xf]
  %v1415 = vld [vmem:[%s2 + $0x7c] sm:$0xf]
  %v1416 = vld [vmem:[%s2 + $0x80] sm:$0xf]
  %v1417 = vld [vmem:[%s2 + $0x84] sm:$0xf]
  %v1418 = vld [vmem:[%s2 + $0x88] sm:$0xf]
  %v1419 = vld [vmem:[%s2 + $0x8c] sm:$0xf]
  %v1456 = vunpack.c.l.b16 %v1384
  %v1457 = vunpack.c.l.b16 %v1385
  %v1458 = vunpack.c.l.b16 %v1386
  %v1459 = vunpack.c.l.b16 %v1387
  %v1460 = vunpack.c.l.b16 %v1388
  %v1461 = vunpack.c.l.b16 %v1389
  %v1462 = vunpack.c.l.b16 %v1390
  %v1463 = vunpack.c.l.b16 %v1391
  %v1464 = vunpack.c.l.b16 %v1392
  %v1465 = vunpack.c.l.b16 %v1393
  %v1466 = vunpack.c.l.b16 %v1394
  %v1467 = vunpack.c.l.b16 %v1395
  %v1468 = vunpack.c.l.b16 %v1396
  %v1469 = vunpack.c.l.b16 %v1397
  %v1470 = vunpack.c.l.b16 %v1398
  %v1471 = vunpack.c.l.b16 %v1399
  %v1472 = vunpack.c.l.b16 %v1400
  %v1473 = vunpack.c.l.b16 %v1401
  %v1474 = vunpack.c.l.b16 %v1402
  %v1475 = vunpack.c.l.b16 %v1403
  %v1476 = vunpack.c.l.b16 %v1404
  %v1477 = vunpack.c.l.b16 %v1405
  %v1478 = vunpack.c.l.b16 %v1406
  %v1479 = vunpack.c.l.b16 %v1407
  %v1480 = vunpack.c.l.b16 %v1408
  %v1481 = vunpack.c.l.b16 %v1409
  %v1482 = vunpack.c.l.b16 %v1410
  %v1483 = vunpack.c.l.b16 %v1411
  %v1484 = vunpack.c.l.b16 %v1412
  %v1485 = vunpack.c.l.b16 %v1413
  %v1486 = vunpack.c.l.b16 %v1414
  %v1487 = vunpack.c.l.b16 %v1415
  %v1488 = vunpack.c.l.b16 %v1416
  %v1489 = vunpack.c.l.b16 %v1417
  %v1490 = vunpack.c.l.b16 %v1418
  %v1491 = vunpack.c.l.b16 %v1419
  %v1492 = vpack.c.b16 %v1457, %v1456
  %v1493 = vpack.c.b16 %v1459, %v1458
  %v1494 = vpack.c.b16 %v1461, %v1460
  %v1495 = vpack.c.b16 %v1463, %v1462
  %v1496 = vpack.c.b16 %v1465, %v1464
  %v1497 = vpack.c.b16 %v1467, %v1466
  %v1498 = vpack.c.b16 %v1469, %v1468
  %v1499 = vpack.c.b16 %v1471, %v1470
  %v1500 = vpack.c.b16 %v1473, %v1472
  %v1501 = vpack.c.b16 %v1475, %v1474
  %v1502 = vpack.c.b16 %v1477, %v1476
  %v1503 = vpack.c.b16 %v1479, %v1478
  %v1504 = vpack.c.b16 %v1481, %v1480
  %v1505 = vpack.c.b16 %v1483, %v1482
  %v1506 = vpack.c.b16 %v1485, %v1484
  %v1507 = vpack.c.b16 %v1487, %v1486
  %v1508 = vpack.c.b16 %v1489, %v1488
  %v1509 = vpack.c.b16 %v1491, %v1490
  %v1528 = vsel %vm1274, %v1380, 0
  %v1530 = vsel %vm1274, %v1383, 0
  %1532 = vmatprep.subr.bf16.mxu0 0
  %1533 = vmatpush1.bf16.msra.mxu0 %v1499
  %1534 = vmatprep.subr.bf16.mxu0 0
  %1535 = vmatpush1.bf16.msra.mxu0 %v1498
  %1536 = vmatprep.subr.bf16.mxu0 0
  %1537 = vmatpush1.bf16.msra.mxu0 %v1497
  %1538 = vmatprep.subr.bf16.mxu0 0
  %1539 = vmatpush1.bf16.msra.mxu0 %v1496
  %1540 = vmatprep.subr.bf16.mxu0 0
  %1541 = vmatpush1.bf16.msra.mxu0 %v1495
  %1542 = vmatprep.subr.bf16.mxu0 0
  %1543 = vmatpush1.bf16.msra.mxu0 %v1494
  %1544 = vmatprep.subr.bf16.mxu0 0
  %1545 = vmatpush1.bf16.msra.mxu0 %v1493
  %1546 = vmatprep.subr.bf16.mxu0 0
  %1547 = vmatpush1.bf16.msra.mxu0 %v1492
  %1548 = vmatprep.subr.bf16.mxu0 0
  %1549 = vmatpush2.bf16.msra.mxu0 %v1507
  %1550 = vmatprep.subr.bf16.mxu0 0
  %1551 = vmatpush2.bf16.msra.mxu0 %v1506
  %1552 = vmatprep.subr.bf16.mxu0 0
  %1553 = vmatpush2.bf16.msra.mxu0 %v1505
  %1554 = vmatprep.subr.bf16.mxu0 0
  %1555 = vmatpush2.bf16.msra.mxu0 %v1504
  %1556 = vmatprep.subr.bf16.mxu0 0
  %1557 = vmatpush2.bf16.msra.mxu0 %v1503
  %1558 = vmatprep.subr.bf16.mxu0 0
  %1559 = vmatpush2.bf16.msra.mxu0 %v1502
  %1560 = vmatprep.subr.bf16.mxu0 0
  %1561 = vmatpush2.bf16.msra.mxu0 %v1501
  %1562 = vmatprep.subr.bf16.mxu0 0
  %1563 = vmatpush2.bf16.msra.mxu0 %v1500
  %1564 = vmatprep.mubr.bf16.mxu0 %v1333
  %1565 = vmatmul.mubr.bf16.gmra.mxu0 %v1301
  %v1566 = vpop.f32.mrf.mxu0
  %v1567 = vadd.f32 0.0, %v1566
  %v1568 = vpop.f32.mrf.mxu0
  %v1569 = vpop.f32.mrf.mxu0
  %v1570 = vadd.f32 0.0, %v1569
  %v1571 = vpop.f32.mrf.mxu0
  %1572 = vmatprep.mubr.bf16.mxu0 %v1336
  %1573 = vmatmul.mubr.bf16.gmra.mxu0 %v1304
  %v1574 = vpop.f32.mrf.mxu0
  %v1575 = vadd.f32 0.0, %v1574
  %v1576 = vpop.f32.mrf.mxu0
  %v1577 = vpop.f32.mrf.mxu0
  %v1578 = vadd.f32 0.0, %v1577
  %v1579 = vpop.f32.mrf.mxu0
  %1580 = vdwg.mxu0
  %1581 = vmatprep.subr.bf16.mxu0 0
  %1582 = vmatpush1.bf16.msra.mxu0 0
  %1583 = vmatprep.subr.bf16.mxu0 0
  %1584 = vmatpush1.bf16.msra.mxu0 0
  %1585 = vmatprep.subr.bf16.mxu0 0
  %1586 = vmatpush1.bf16.msra.mxu0 0
  %1587 = vmatprep.subr.bf16.mxu0 0
  %1588 = vmatpush1.bf16.msra.mxu0 0
  %1589 = vmatprep.subr.bf16.mxu0 0
  %1590 = vmatpush1.bf16.msra.mxu0 0
  %1591 = vmatprep.subr.bf16.mxu0 0
  %1592 = vmatpush1.bf16.msra.mxu0 0
  %1593 = vmatprep.subr.bf16.mxu0 0
  %1594 = vmatpush1.bf16.msra.mxu0 %v1509
  %1595 = vmatprep.subr.bf16.mxu0 0
  %1596 = vmatpush1.bf16.msra.mxu0 %v1508
  %1597 = vmatprep.subr.bf16.mxu0 0
  %1598 = vmatpush2.bf16.msra.mxu0 0
  %1599 = vmatprep.subr.bf16.mxu0 0
  %1600 = vmatpush2.bf16.msra.mxu0 0
  %1601 = vmatprep.subr.bf16.mxu0 0
  %1602 = vmatpush2.bf16.msra.mxu0 0
  %1603 = vmatprep.subr.bf16.mxu0 0
  %1604 = vmatpush2.bf16.msra.mxu0 0
  %1605 = vmatprep.subr.bf16.mxu0 0
  %1606 = vmatpush2.bf16.msra.mxu0 0
  %1607 = vmatprep.subr.bf16.mxu0 0
  %1608 = vmatpush2.bf16.msra.mxu0 0
  %1609 = vmatprep.subr.bf16.mxu0 0
  %1610 = vmatpush2.bf16.msra.mxu0 0
  %1611 = vmatprep.subr.bf16.mxu0 0
  %1612 = vmatpush2.bf16.msra.mxu0 0
  %1613 = vmatprep.mubr.bf16.mxu0 0
  %1614 = vmatmul.mubr.bf16.gmra.mxu0 %v1528
  %v1615 = vpop.f32.mrf.mxu0
  %v1616 = vadd.f32 %v1567, %v1615
  %v1617 = vpop.f32.mrf.mxu0
  %v1618 = vpop.f32.mrf.mxu0
  %v1619 = vadd.f32 %v1570, %v1618
  %v1620 = vpop.f32.mrf.mxu0
  %1621 = vmatprep.mubr.bf16.mxu0 0
  %1622 = vmatmul.mubr.bf16.gmra.mxu0 %v1530
  %v1623 = vpop.f32.mrf.mxu0
  %v1624 = vadd.f32 %v1575, %v1623
  %v1625 = vpop.f32.mrf.mxu0
  %v1626 = vpop.f32.mrf.mxu0
  %v1627 = vadd.f32 %v1578, %v1626
  %v1628 = vpop.f32.mrf.mxu0
  %1629 = vdwg.mxu0
  %v1630 = vsel %vm1274, %v1616, 0.0
  %v1631 = vsel %vm1274, %v1619, 0.0
  %v1632 = vadd.f32 %v1630, %v1631
  %v1633 = vsel %vm1274, %v1624, 0.0
  %v1634 = vadd.f32 %v1632, %v1633
  %v1635 = vsel %vm1274, %v1627, 0.0
  %v1636 = vadd.f32 %v1634, %v1635
  %v1637 = vrot.slane %v1636, 4
  %v1638 = vadd.f32 %v1636, %v1637
  %v1639 = vrot.slane %v1638, 2
  %v1640 = vadd.f32 %v1638, %v1639
  %v1641 = vrot.slane %v1640, 1
  %v1642 = vadd.f32 %v1640, %v1641
  %v1643 = vmul.f32 %v1616, %v1616
  %v1644 = vmul.f32 %v1619, %v1619
  %v1645 = vmul.f32 %v1624, %v1624
  %v1646 = vmul.f32 %v1627, %v1627
  %v1647 = vsel %vm1274, %v1643, 0.0
  %v1648 = vsel %vm1274, %v1644, 0.0
  %v1649 = vadd.f32 %v1647, %v1648
  %v1650 = vsel %vm1274, %v1645, 0.0
  %v1651 = vadd.f32 %v1649, %v1650
  %v1652 = vsel %vm1274, %v1646, 0.0
  %v1653 = vadd.f32 %v1651, %v1652
  %v1654 = vrot.slane %v1653, 4
  %v1655 = vadd.f32 %v1653, %v1654
  %v1656 = vrot.slane %v1655, 2
  %v1657 = vadd.f32 %v1655, %v1656
  %v1658 = vrot.slane %v1657, 1
  %v1659 = vadd.f32 %v1657, %v1658
  %1661 = vrot.lane.b32.xlu0 %v1642, 120
  %v1662 = vpop.permute.xlu0 %1661
  %v1664 = vadd.f32 %v1642, %v1662
  %1665 = vrot.lane.b32.xlu0 %v1642, 112
  %v1666 = vpop.permute.xlu0 %1665
  %v1668 = vadd.f32 %v1664, %v1666
  %1669 = vrot.lane.b32.xlu0 %v1642, 104
  %v1670 = vpop.permute.xlu0 %1669
  %v1672 = vadd.f32 %v1668, %v1670
  %v1673 = vmul.f32 %v1672, 0.0078125
  %1675 = vrot.lane.b32.xlu0 %v1659, 120
  %v1676 = vpop.permute.xlu0 %1675
  %v1678 = vadd.f32 %v1659, %v1676
  %1679 = vrot.lane.b32.xlu0 %v1659, 112
  %v1680 = vpop.permute.xlu0 %1679
  %v1682 = vadd.f32 %v1678, %v1680
  %1683 = vrot.lane.b32.xlu0 %v1659, 104
  %v1684 = vpop.permute.xlu0 %1683
  %v1686 = vadd.f32 %v1682, %v1684
  %v1687 = vmul.f32 %v1686, 0.0078125
  %v1688 = vmul.f32 %v1673, %v1673
  %v1689 = vsub.f32 %v1687, %v1688
  %v1690 = vadd.f32 %v1689, 1e-05
  %v1691 = vrsqrt.pop %v1690
  %1693 = vrot.lane.b32.xlu0 %v1673, 8
  %v1694 = vpop.permute.xlu0 %1693
  %1696 = vrot.lane.b32.xlu0 %v1673, 16
  %v1697 = vpop.permute.xlu0 %1696
  %1699 = vrot.lane.b32.xlu0 %v1673, 24
  %v1700 = vpop.permute.xlu0 %1699
  %vm1702 = vcmask 64512
  %v1703 = vsel %vm1702, %v1673, %v1694
  %v1704 = vsel %vm1267, %v1703, %v1697
  %vm1705 = vcmask 195584
  %v1706 = vsel %vm1705, %v1704, %v1700
  %1708 = vrot.lane.b32.xlu0 %v1691, 8
  %v1709 = vpop.permute.xlu0 %1708
  %1711 = vrot.lane.b32.xlu0 %v1691, 16
  %v1712 = vpop.permute.xlu0 %1711
  %1714 = vrot.lane.b32.xlu0 %v1691, 24
  %v1715 = vpop.permute.xlu0 %1714
  %v1717 = vsel %vm1702, %v1691, %v1709
  %v1718 = vsel %vm1267, %v1717, %v1712
  %v1719 = vsel %vm1705, %v1718, %v1715
  %v1720 = vlaneseq
  %v1721 = vshrl.u32 %v1720, 7
  %v1722 = vsub.s32 0, %v1721
  %v1723 = vrot.slane %v1706, %v1722
  %v1724 = vsub.f32 %v1616, %v1723
  %v1725 = vsub.f32 %v1619, %v1723
  %v1726 = vsub.f32 %v1624, %v1723
  %v1727 = vsub.f32 %v1627, %v1723
  %v1728 = vlaneseq
  %v1729 = vshrl.u32 %v1728, 7
  %v1730 = vsub.s32 0, %v1729
  %v1731 = vrot.slane %v1719, %v1730
  %v1732 = vmul.f32 %v1724, %v1731
  %v1733 = vmul.f32 %v1725, %v1731
  %v1734 = vmul.f32 %v1726, %v1731
  %v1735 = vmul.f32 %v1727, %v1731
  %v1736 = vld [vmem:[%s3] sm:$0x1]
  %v1738 = vlaneseq
  %v1739 = vshrl.u32 %v1738, 7
  %v1740 = vsub.s32 0, %v1739
  %v1741 = vrot.slane %v1736, %v1740
  %v1743 = vmul.f32 %v1732, %v1741
  %v1744 = vmul.f32 %v1733, %v1741
  %v1745 = vmul.f32 %v1734, %v1741
  %v1746 = vmul.f32 %v1735, %v1741
  %v1747 = vld [vmem:[%s4] sm:$0x1]
  %v1749 = vlaneseq
  %v1750 = vshrl.u32 %v1749, 7
  %v1751 = vsub.s32 0, %v1750
  %v1752 = vrot.slane %v1747, %v1751
  %v1754 = vadd.f32 %v1743, %v1752
  %v1755 = vadd.f32 %v1744, %v1752
  %v1756 = vadd.f32 %v1745, %v1752
  %v1757 = vadd.f32 %v1746, %v1752
  %1758 = vst.msk [vmem:[%s5] sm:$0xff] %vm1274, %v1754
  %1759 = vst.msk [vmem:[%s5 + $0x8] sm:$0xff] %vm1274, %v1755
  %1760 = vst.msk [vmem:[%s5 + $0x10] sm:$0xff] %vm1274, %v1756
  %1761 = vst.msk [vmem:[%s5 + $0x18] sm:$0xff] %vm1274, %v1757
  // Predicated region
  $region22: #{_lambda_.14} parent=0 // pred_check
    _
  $region23: #{_lambda_.14} parent=0 // pred_check_branch
    %1763 = sbr.rel (0) target = $region25
  $region24: #{_lambda_.14} parent=0 // pred_region
    _
  $region25: #{_lambda_.14} parent=0 // pred_fallthru
    _
  // Predicated region
  $region26: #{_lambda_.14} parent=0 // pred_check
    _
  $region27: #{_lambda_.14} parent=0 // pred_check_branch
    %1765 = sbr.rel (0) target = $region29
  $region28: #{_lambda_.14} parent=0 // pred_region
    _
  $region29: #{_lambda_.14} parent=0 // pred_fallthru
    _

// kernel: _lambda_.15
$region0: #{_lambda_.15}
  #allocation0 [shape = 'u32[]', space=smem, size = 0x4, offset = 0x4, fixed_abs, tag = 'smem constant byte address 0x4 - core index']
  #allocation1 [shape = 'u32[144,128]{1,0:T(1,128)}', space=vmem, size = 0x12000, scoped, tag = 'internal scratch']
  %s0 = inlined_call_operand.vmem [shape: bf16[2,10,10,8], index: 0, kind: input, shape index: {}]
  %s1 = inlined_call_operand.vmem [shape: bf16[2,10,10,8], index: 1, kind: input, shape index: {}]
  %s2 = inlined_call_operand.vmem [shape: bf16[144,8], index: 2, kind: input, shape index: {}]
  %s3 = inlined_call_operand.vmem [shape: f32[1,8], index: 3, kind: input, shape index: {}]
  %s4 = inlined_call_operand.vmem [shape: f32[128,8], index: 4, kind: output, shape index: {}]
  %s5 = sld [smem:[#allocation0]]
  $region26: #{_lambda_.15} parent=0
    _
  %s7 = ssub.s32 1, %s5
  %s8 = scalar_select 0, %s7, %s5
  // Predicated region
  $region2: #{_lambda_.15} parent=0 // pred_check
    _
  $region3: #{_lambda_.15} parent=0 // pred_check_branch
    %10 = sbr.rel (0) target = $region5
  $region4: #{_lambda_.15} parent=0 // pred_region
    _
  $region5: #{_lambda_.15} parent=0 // pred_fallthru
    _
  // Predicated region
  $region6: #{_lambda_.15} parent=0 // pred_check
    _
  $region7: #{_lambda_.15} parent=0 // pred_check_branch
    %12 = sbr.rel (0) target = $region9
  $region8: #{_lambda_.15} parent=0 // pred_region
    _
  $region9: #{_lambda_.15} parent=0 // pred_fallthru
    _
  // Predicated region
  $region10: #{_lambda_.15} parent=0 // pred_check
    _
  $region11: #{_lambda_.15} parent=0 // pred_check_branch
    %14 = sbr.rel (0) target = $region13
  $region12: #{_lambda_.15} parent=0 // pred_region
    _
  $region13: #{_lambda_.15} parent=0 // pred_fallthru
    _
  // Predicated region
  $region14: #{_lambda_.15} parent=0 // pred_check
    _
  $region15: #{_lambda_.15} parent=0 // pred_check_branch
    %16 = sbr.rel (0) target = $region17
  $region16: #{_lambda_.15} parent=0 // pred_region
    _
  $region17: #{_lambda_.15} parent=0 // pred_fallthru
    _
  %v18 = vld [vmem:[%s0] sm:$0xf]
  %v19 = vld [vmem:[%s0 + $0x4] sm:$0x1]
  %v20 = vld [vmem:[%s0 + $0x8] sm:$0xf]
  %v21 = vld [vmem:[%s0 + $0xc] sm:$0x1]
  %v22 = vld [vmem:[%s0 + $0x10] sm:$0xf]
  %v23 = vld [vmem:[%s0 + $0x14] sm:$0x1]
  %v24 = vld [vmem:[%s0 + $0x18] sm:$0xf]
  %v25 = vld [vmem:[%s0 + $0x1c] sm:$0x1]
  %v26 = vld [vmem:[%s0 + $0x20] sm:$0xf]
  %v27 = vld [vmem:[%s0 + $0x24] sm:$0x1]
  %v28 = vld [vmem:[%s0 + $0x28] sm:$0xf]
  %v29 = vld [vmem:[%s0 + $0x2c] sm:$0x1]
  %v30 = vld [vmem:[%s0 + $0x30] sm:$0xf]
  %v31 = vld [vmem:[%s0 + $0x34] sm:$0x1]
  %v32 = vld [vmem:[%s0 + $0x38] sm:$0xf]
  %v33 = vld [vmem:[%s0 + $0x3c] sm:$0x1]
  %v34 = vld [vmem:[%s0 + $0x40] sm:$0xf]
  %v35 = vld [vmem:[%s0 + $0x44] sm:$0x1]
  %v36 = vld [vmem:[%s0 + $0x48] sm:$0xf]
  %v37 = vld [vmem:[%s0 + $0x4c] sm:$0x1]
  %v38 = vld [vmem:[%s0 + $0x50] sm:$0xf]
  %v39 = vld [vmem:[%s0 + $0x54] sm:$0x1]
  %v40 = vld [vmem:[%s0 + $0x58] sm:$0xf]
  %v41 = vld [vmem:[%s0 + $0x5c] sm:$0x1]
  %v42 = vld [vmem:[%s0 + $0x60] sm:$0xf]
  %v43 = vld [vmem:[%s0 + $0x64] sm:$0x1]
  %v44 = vld [vmem:[%s0 + $0x68] sm:$0xf]
  %v45 = vld [vmem:[%s0 + $0x6c] sm:$0x1]
  %v46 = vld [vmem:[%s0 + $0x70] sm:$0xf]
  %v47 = vld [vmem:[%s0 + $0x74] sm:$0x1]
  %v48 = vld [vmem:[%s0 + $0x78] sm:$0xf]
  %v49 = vld [vmem:[%s0 + $0x7c] sm:$0x1]
  %v50 = vld [vmem:[%s0 + $0x80] sm:$0xf]
  %v51 = vld [vmem:[%s0 + $0x84] sm:$0x1]
  %v52 = vld [vmem:[%s0 + $0x88] sm:$0xf]
  %v53 = vld [vmem:[%s0 + $0x8c] sm:$0x1]
  %v54 = vld [vmem:[%s0 + $0x90] sm:$0xf]
  %v55 = vld [vmem:[%s0 + $0x94] sm:$0x1]
  %v56 = vld [vmem:[%s0 + $0x98] sm:$0xf]
  %v57 = vld [vmem:[%s0 + $0x9c] sm:$0x1]
  %v58 = vmax.bf16 %v18, 0
  %v59 = vmax.bf16 %v19, 0
  %v60 = vmax.bf16 %v20, 0
  %v61 = vmax.bf16 %v21, 0
  %v62 = vmax.bf16 %v22, 0
  %v63 = vmax.bf16 %v23, 0
  %v64 = vmax.bf16 %v24, 0
  %v65 = vmax.bf16 %v25, 0
  %v66 = vmax.bf16 %v26, 0
  %v67 = vmax.bf16 %v27, 0
  %v68 = vmax.bf16 %v28, 0
  %v69 = vmax.bf16 %v29, 0
  %v70 = vmax.bf16 %v30, 0
  %v71 = vmax.bf16 %v31, 0
  %v72 = vmax.bf16 %v32, 0
  %v73 = vmax.bf16 %v33, 0
  %v74 = vmax.bf16 %v34, 0
  %v75 = vmax.bf16 %v35, 0
  %v76 = vmax.bf16 %v36, 0
  %v77 = vmax.bf16 %v37, 0
  %v78 = vmax.bf16 %v38, 0
  %v79 = vmax.bf16 %v39, 0
  %v80 = vmax.bf16 %v40, 0
  %v81 = vmax.bf16 %v41, 0
  %v82 = vmax.bf16 %v42, 0
  %v83 = vmax.bf16 %v43, 0
  %v84 = vmax.bf16 %v44, 0
  %v85 = vmax.bf16 %v45, 0
  %v86 = vmax.bf16 %v46, 0
  %v87 = vmax.bf16 %v47, 0
  %v88 = vmax.bf16 %v48, 0
  %v89 = vmax.bf16 %v49, 0
  %v90 = vmax.bf16 %v50, 0
  %v91 = vmax.bf16 %v51, 0
  %v92 = vmax.bf16 %v52, 0
  %v93 = vmax.bf16 %v53, 0
  %v94 = vmax.bf16 %v54, 0
  %v95 = vmax.bf16 %v55, 0
  %v96 = vmax.bf16 %v56, 0
  %v97 = vmax.bf16 %v57, 0
  %v98 = vld [vmem:[%s1] sm:$0xf]
  %v99 = vld [vmem:[%s1 + $0x4] sm:$0x1]
  %v100 = vld [vmem:[%s1 + $0x8] sm:$0xf]
  %v101 = vld [vmem:[%s1 + $0xc] sm:$0x1]
  %v102 = vld [vmem:[%s1 + $0x10] sm:$0xf]
  %v103 = vld [vmem:[%s1 + $0x14] sm:$0x1]
  %v104 = vld [vmem:[%s1 + $0x18] sm:$0xf]
  %v105 = vld [vmem:[%s1 + $0x1c] sm:$0x1]
  %v106 = vld [vmem:[%s1 + $0x20] sm:$0xf]
  %v107 = vld [vmem:[%s1 + $0x24] sm:$0x1]
  %v108 = vld [vmem:[%s1 + $0x28] sm:$0xf]
  %v109 = vld [vmem:[%s1 + $0x2c] sm:$0x1]
  %v110 = vld [vmem:[%s1 + $0x30] sm:$0xf]
  %v111 = vld [vmem:[%s1 + $0x34] sm:$0x1]
  %v112 = vld [vmem:[%s1 + $0x38] sm:$0xf]
  %v113 = vld [vmem:[%s1 + $0x3c] sm:$0x1]
  %v114 = vld [vmem:[%s1 + $0x40] sm:$0xf]
  %v115 = vld [vmem:[%s1 + $0x44] sm:$0x1]
  %v116 = vld [vmem:[%s1 + $0x48] sm:$0xf]
  %v117 = vld [vmem:[%s1 + $0x4c] sm:$0x1]
  %v118 = vld [vmem:[%s1 + $0x50] sm:$0xf]
  %v119 = vld [vmem:[%s1 + $0x54] sm:$0x1]
  %v120 = vld [vmem:[%s1 + $0x58] sm:$0xf]
  %v121 = vld [vmem:[%s1 + $0x5c] sm:$0x1]
  %v122 = vld [vmem:[%s1 + $0x60] sm:$0xf]
  %v123 = vld [vmem:[%s1 + $0x64] sm:$0x1]
  %v124 = vld [vmem:[%s1 + $0x68] sm:$0xf]
  %v125 = vld [vmem:[%s1 + $0x6c] sm:$0x1]
  %v126 = vld [vmem:[%s1 + $0x70] sm:$0xf]
  %v127 = vld [vmem:[%s1 + $0x74] sm:$0x1]
  %v128 = vld [vmem:[%s1 + $0x78] sm:$0xf]
  %v129 = vld [vmem:[%s1 + $0x7c] sm:$0x1]
  %v130 = vld [vmem:[%s1 + $0x80] sm:$0xf]
  %v131 = vld [vmem:[%s1 + $0x84] sm:$0x1]
  %v132 = vld [vmem:[%s1 + $0x88] sm:$0xf]
  %v133 = vld [vmem:[%s1 + $0x8c] sm:$0x1]
  %v134 = vld [vmem:[%s1 + $0x90] sm:$0xf]
  %v135 = vld [vmem:[%s1 + $0x94] sm:$0x1]
  %v136 = vld [vmem:[%s1 + $0x98] sm:$0xf]
  %v137 = vld [vmem:[%s1 + $0x9c] sm:$0x1]
  %v138 = vmax.bf16 %v98, 0
  %v139 = vmax.bf16 %v99, 0
  %v140 = vmax.bf16 %v100, 0
  %v141 = vmax.bf16 %v101, 0
  %v142 = vmax.bf16 %v102, 0
  %v143 = vmax.bf16 %v103, 0
  %v144 = vmax.bf16 %v104, 0
  %v145 = vmax.bf16 %v105, 0
  %v146 = vmax.bf16 %v106, 0
  %v147 = vmax.bf16 %v107, 0
  %v148 = vmax.bf16 %v108, 0
  %v149 = vmax.bf16 %v109, 0
  %v150 = vmax.bf16 %v110, 0
  %v151 = vmax.bf16 %v111, 0
  %v152 = vmax.bf16 %v112, 0
  %v153 = vmax.bf16 %v113, 0
  %v154 = vmax.bf16 %v114, 0
  %v155 = vmax.bf16 %v115, 0
  %v156 = vmax.bf16 %v116, 0
  %v157 = vmax.bf16 %v117, 0
  %v158 = vmax.bf16 %v118, 0
  %v159 = vmax.bf16 %v119, 0
  %v160 = vmax.bf16 %v120, 0
  %v161 = vmax.bf16 %v121, 0
  %v162 = vmax.bf16 %v122, 0
  %v163 = vmax.bf16 %v123, 0
  %v164 = vmax.bf16 %v124, 0
  %v165 = vmax.bf16 %v125, 0
  %v166 = vmax.bf16 %v126, 0
  %v167 = vmax.bf16 %v127, 0
  %v168 = vmax.bf16 %v128, 0
  %v169 = vmax.bf16 %v129, 0
  %v170 = vmax.bf16 %v130, 0
  %v171 = vmax.bf16 %v131, 0
  %v172 = vmax.bf16 %v132, 0
  %v173 = vmax.bf16 %v133, 0
  %v174 = vmax.bf16 %v134, 0
  %v175 = vmax.bf16 %v135, 0
  %v176 = vmax.bf16 %v136, 0
  %v177 = vmax.bf16 %v137, 0
  %vm178 = vsmask.f32 3328
  %vm179 = vsmask.f32 7440
  %vm180 = vmor %vm178, %vm179
  %v182 = vshrl.u32 %v58, 16
  %v184 = vrot.slane %v182, 4
  %v185 = vshll.u32 %v58, 16
  %v187 = vrot.slane %v185, 5
  %v188 = vor.u32 %v184, %v187
  %v189 = vrot.slane %v188, 4
  %v191 = vshll.u32 %v59, 16
  %v193 = vrot.slane %v191, 5
  %v194 = vsel %vm180, %v189, %v193
  %v196 = vshrl.u32 %v60, 16
  %v198 = vrot.slane %v196, 4
  %v199 = vshll.u32 %v60, 16
  %v201 = vrot.slane %v199, 5
  %v202 = vor.u32 %v198, %v201
  %v203 = vrot.slane %v202, 4
  %v205 = vshll.u32 %v61, 16
  %v207 = vrot.slane %v205, 5
  %v208 = vsel %vm180, %v203, %v207
  %v210 = vshrl.u32 %v62, 16
  %v212 = vrot.slane %v210, 4
  %v213 = vshll.u32 %v62, 16
  %v215 = vrot.slane %v213, 5
  %v216 = vor.u32 %v212, %v215
  %v217 = vrot.slane %v216, 4
  %v219 = vshll.u32 %v63, 16
  %v221 = vrot.slane %v219, 5
  %v222 = vsel %vm180, %v217, %v221
  %v224 = vshrl.u32 %v64, 16
  %v226 = vrot.slane %v224, 4
  %v227 = vshll.u32 %v64, 16
  %v229 = vrot.slane %v227, 5
  %v230 = vor.u32 %v226, %v229
  %v231 = vrot.slane %v230, 4
  %v233 = vshll.u32 %v65, 16
  %v235 = vrot.slane %v233, 5
  %v236 = vsel %vm180, %v231, %v235
  %v238 = vshrl.u32 %v66, 16
  %v240 = vrot.slane %v238, 4
  %v241 = vshll.u32 %v66, 16
  %v243 = vrot.slane %v241, 5
  %v244 = vor.u32 %v240, %v243
  %v245 = vrot.slane %v244, 4
  %v247 = vshll.u32 %v67, 16
  %v249 = vrot.slane %v247, 5
  %v250 = vsel %vm180, %v245, %v249
  %v252 = vshrl.u32 %v68, 16
  %v254 = vrot.slane %v252, 4
  %v255 = vshll.u32 %v68, 16
  %v257 = vrot.slane %v255, 5
  %v258 = vor.u32 %v254, %v257
  %v259 = vrot.slane %v258, 4
  %v261 = vshll.u32 %v69, 16
  %v263 = vrot.slane %v261, 5
  %v264 = vsel %vm180, %v259, %v263
  %v266 = vshrl.u32 %v70, 16
  %v268 = vrot.slane %v266, 4
  %v269 = vshll.u32 %v70, 16
  %v271 = vrot.slane %v269, 5
  %v272 = vor.u32 %v268, %v271
  %v273 = vrot.slane %v272, 4
  %v275 = vshll.u32 %v71, 16
  %v277 = vrot.slane %v275, 5
  %v278 = vsel %vm180, %v273, %v277
  %v280 = vshrl.u32 %v72, 16
  %v282 = vrot.slane %v280, 4
  %v283 = vshll.u32 %v72, 16
  %v285 = vrot.slane %v283, 5
  %v286 = vor.u32 %v282, %v285
  %v287 = vrot.slane %v286, 4
  %v289 = vshll.u32 %v73, 16
  %v291 = vrot.slane %v289, 5
  %v292 = vsel %vm180, %v287, %v291
  %v294 = vshrl.u32 %v78, 16
  %v296 = vrot.slane %v294, 4
  %v297 = vshll.u32 %v78, 16
  %v299 = vrot.slane %v297, 5
  %v300 = vor.u32 %v296, %v299
  %v301 = vrot.slane %v300, 4
  %v303 = vshll.u32 %v79, 16
  %v305 = vrot.slane %v303, 5
  %v306 = vsel %vm180, %v301, %v305
  %v308 = vshrl.u32 %v80, 16
  %v310 = vrot.slane %v308, 4
  %v311 = vshll.u32 %v80, 16
  %v313 = vrot.slane %v311, 5
  %v314 = vor.u32 %v310, %v313
  %v315 = vrot.slane %v314, 4
  %v317 = vshll.u32 %v81, 16
  %v319 = vrot.slane %v317, 5
  %v320 = vsel %vm180, %v315, %v319
  %v322 = vshrl.u32 %v82, 16
  %v324 = vrot.slane %v322, 4
  %v325 = vshll.u32 %v82, 16
  %v327 = vrot.slane %v325, 5
  %v328 = vor.u32 %v324, %v327
  %v329 = vrot.slane %v328, 4
  %v331 = vshll.u32 %v83, 16
  %v333 = vrot.slane %v331, 5
  %v334 = vsel %vm180, %v329, %v333
  %v336 = vshrl.u32 %v84, 16
  %v338 = vrot.slane %v336, 4
  %v339 = vshll.u32 %v84, 16
  %v341 = vrot.slane %v339, 5
  %v342 = vor.u32 %v338, %v341
  %v343 = vrot.slane %v342, 4
  %v345 = vshll.u32 %v85, 16
  %v347 = vrot.slane %v345, 5
  %v348 = vsel %vm180, %v343, %v347
  %v350 = vshrl.u32 %v86, 16
  %v352 = vrot.slane %v350, 4
  %v353 = vshll.u32 %v86, 16
  %v355 = vrot.slane %v353, 5
  %v356 = vor.u32 %v352, %v355
  %v357 = vrot.slane %v356, 4
  %v359 = vshll.u32 %v87, 16
  %v361 = vrot.slane %v359, 5
  %v362 = vsel %vm180, %v357, %v361
  %v364 = vshrl.u32 %v88, 16
  %v366 = vrot.slane %v364, 4
  %v367 = vshll.u32 %v88, 16
  %v369 = vrot.slane %v367, 5
  %v370 = vor.u32 %v366, %v369
  %v371 = vrot.slane %v370, 4
  %v373 = vshll.u32 %v89, 16
  %v375 = vrot.slane %v373, 5
  %v376 = vsel %vm180, %v371, %v375
  %v378 = vshrl.u32 %v90, 16
  %v380 = vrot.slane %v378, 4
  %v381 = vshll.u32 %v90, 16
  %v383 = vrot.slane %v381, 5
  %v384 = vor.u32 %v380, %v383
  %v385 = vrot.slane %v384, 4
  %v387 = vshll.u32 %v91, 16
  %v389 = vrot.slane %v387, 5
  %v390 = vsel %vm180, %v385, %v389
  %v392 = vshrl.u32 %v92, 16
  %v394 = vrot.slane %v392, 4
  %v395 = vshll.u32 %v92, 16
  %v397 = vrot.slane %v395, 5
  %v398 = vor.u32 %v394, %v397
  %v399 = vrot.slane %v398, 4
  %v401 = vshll.u32 %v93, 16
  %v403 = vrot.slane %v401, 5
  %v404 = vsel %vm180, %v399, %v403
  %v406 = vshrl.u32 %v138, 16
  %v408 = vrot.slane %v406, 4
  %v409 = vshll.u32 %v138, 16
  %v411 = vrot.slane %v409, 5
  %v412 = vor.u32 %v408, %v411
  %v413 = vrot.slane %v412, 4
  %v415 = vshll.u32 %v139, 16
  %v417 = vrot.slane %v415, 5
  %v418 = vsel %vm180, %v413, %v417
  %v420 = vshrl.u32 %v140, 16
  %v422 = vrot.slane %v420, 4
  %v423 = vshll.u32 %v140, 16
  %v425 = vrot.slane %v423, 5
  %v426 = vor.u32 %v422, %v425
  %v427 = vrot.slane %v426, 4
  %v429 = vshll.u32 %v141, 16
  %v431 = vrot.slane %v429, 5
  %v432 = vsel %vm180, %v427, %v431
  %v434 = vshrl.u32 %v142, 16
  %v436 = vrot.slane %v434, 4
  %v437 = vshll.u32 %v142, 16
  %v439 = vrot.slane %v437, 5
  %v440 = vor.u32 %v436, %v439
  %v441 = vrot.slane %v440, 4
  %v443 = vshll.u32 %v143, 16
  %v445 = vrot.slane %v443, 5
  %v446 = vsel %vm180, %v441, %v445
  %v448 = vshrl.u32 %v144, 16
  %v450 = vrot.slane %v448, 4
  %v451 = vshll.u32 %v144, 16
  %v453 = vrot.slane %v451, 5
  %v454 = vor.u32 %v450, %v453
  %v455 = vrot.slane %v454, 4
  %v457 = vshll.u32 %v145, 16
  %v459 = vrot.slane %v457, 5
  %v460 = vsel %vm180, %v455, %v459
  %v462 = vshrl.u32 %v146, 16
  %v464 = vrot.slane %v462, 4
  %v465 = vshll.u32 %v146, 16
  %v467 = vrot.slane %v465, 5
  %v468 = vor.u32 %v464, %v467
  %v469 = vrot.slane %v468, 4
  %v471 = vshll.u32 %v147, 16
  %v473 = vrot.slane %v471, 5
  %v474 = vsel %vm180, %v469, %v473
  %v476 = vshrl.u32 %v148, 16
  %v478 = vrot.slane %v476, 4
  %v479 = vshll.u32 %v148, 16
  %v481 = vrot.slane %v479, 5
  %v482 = vor.u32 %v478, %v481
  %v483 = vrot.slane %v482, 4
  %v485 = vshll.u32 %v149, 16
  %v487 = vrot.slane %v485, 5
  %v488 = vsel %vm180, %v483, %v487
  %v490 = vshrl.u32 %v150, 16
  %v492 = vrot.slane %v490, 4
  %v493 = vshll.u32 %v150, 16
  %v495 = vrot.slane %v493, 5
  %v496 = vor.u32 %v492, %v495
  %v497 = vrot.slane %v496, 4
  %v499 = vshll.u32 %v151, 16
  %v501 = vrot.slane %v499, 5
  %v502 = vsel %vm180, %v497, %v501
  %v504 = vshrl.u32 %v152, 16
  %v506 = vrot.slane %v504, 4
  %v507 = vshll.u32 %v152, 16
  %v509 = vrot.slane %v507, 5
  %v510 = vor.u32 %v506, %v509
  %v511 = vrot.slane %v510, 4
  %v513 = vshll.u32 %v153, 16
  %v515 = vrot.slane %v513, 5
  %v516 = vsel %vm180, %v511, %v515
  %v518 = vshrl.u32 %v158, 16
  %v520 = vrot.slane %v518, 4
  %v521 = vshll.u32 %v158, 16
  %v523 = vrot.slane %v521, 5
  %v524 = vor.u32 %v520, %v523
  %v525 = vrot.slane %v524, 4
  %v527 = vshll.u32 %v159, 16
  %v529 = vrot.slane %v527, 5
  %v530 = vsel %vm180, %v525, %v529
  %v532 = vshrl.u32 %v160, 16
  %v534 = vrot.slane %v532, 4
  %v535 = vshll.u32 %v160, 16
  %v537 = vrot.slane %v535, 5
  %v538 = vor.u32 %v534, %v537
  %v539 = vrot.slane %v538, 4
  %v541 = vshll.u32 %v161, 16
  %v543 = vrot.slane %v541, 5
  %v544 = vsel %vm180, %v539, %v543
  %v546 = vshrl.u32 %v162, 16
  %v548 = vrot.slane %v546, 4
  %v549 = vshll.u32 %v162, 16
  %v551 = vrot.slane %v549, 5
  %v552 = vor.u32 %v548, %v551
  %v553 = vrot.slane %v552, 4
  %v555 = vshll.u32 %v163, 16
  %v557 = vrot.slane %v555, 5
  %v558 = vsel %vm180, %v553, %v557
  %v560 = vshrl.u32 %v164, 16
  %v562 = vrot.slane %v560, 4
  %v563 = vshll.u32 %v164, 16
  %v565 = vrot.slane %v563, 5
  %v566 = vor.u32 %v562, %v565
  %v567 = vrot.slane %v566, 4
  %v569 = vshll.u32 %v165, 16
  %v571 = vrot.slane %v569, 5
  %v572 = vsel %vm180, %v567, %v571
  %v574 = vshrl.u32 %v166, 16
  %v576 = vrot.slane %v574, 4
  %v577 = vshll.u32 %v166, 16
  %v579 = vrot.slane %v577, 5
  %v580 = vor.u32 %v576, %v579
  %v581 = vrot.slane %v580, 4
  %v583 = vshll.u32 %v167, 16
  %v585 = vrot.slane %v583, 5
  %v586 = vsel %vm180, %v581, %v585
  %v588 = vshrl.u32 %v168, 16
  %v590 = vrot.slane %v588, 4
  %v591 = vshll.u32 %v168, 16
  %v593 = vrot.slane %v591, 5
  %v594 = vor.u32 %v590, %v593
  %v595 = vrot.slane %v594, 4
  %v597 = vshll.u32 %v169, 16
  %v599 = vrot.slane %v597, 5
  %v600 = vsel %vm180, %v595, %v599
  %v602 = vshrl.u32 %v170, 16
  %v604 = vrot.slane %v602, 4
  %v605 = vshll.u32 %v170, 16
  %v607 = vrot.slane %v605, 5
  %v608 = vor.u32 %v604, %v607
  %v609 = vrot.slane %v608, 4
  %v611 = vshll.u32 %v171, 16
  %v613 = vrot.slane %v611, 5
  %v614 = vsel %vm180, %v609, %v613
  %v616 = vshrl.u32 %v172, 16
  %v618 = vrot.slane %v616, 4
  %v619 = vshll.u32 %v172, 16
  %v621 = vrot.slane %v619, 5
  %v622 = vor.u32 %v618, %v621
  %v623 = vrot.slane %v622, 4
  %v625 = vshll.u32 %v173, 16
  %v627 = vrot.slane %v625, 5
  %v628 = vsel %vm180, %v623, %v627
  %vm661 = vcmask 1042432
  %vm662 = vcmask 1046532
  %vm663 = vmor %vm661, %vm662
  %v664 = vrot.slane %v58, 5
  %v665 = vrot.slane %v664, 4
  %v666 = vrot.slane %v59, 5
  %v667 = vsel %vm663, %v665, %v666
  %v668 = vrot.slane %v60, 5
  %v669 = vrot.slane %v668, 4
  %v670 = vrot.slane %v61, 5
  %v671 = vsel %vm663, %v669, %v670
  %v672 = vrot.slane %v62, 5
  %v673 = vrot.slane %v672, 4
  %v674 = vrot.slane %v63, 5
  %v675 = vsel %vm663, %v673, %v674
  %v676 = vrot.slane %v64, 5
  %v677 = vrot.slane %v676, 4
  %v678 = vrot.slane %v65, 5
  %v679 = vsel %vm663, %v677, %v678
  %v680 = vrot.slane %v66, 5
  %v681 = vrot.slane %v680, 4
  %v682 = vrot.slane %v67, 5
  %v683 = vsel %vm663, %v681, %v682
  %v684 = vrot.slane %v68, 5
  %v685 = vrot.slane %v684, 4
  %v686 = vrot.slane %v69, 5
  %v687 = vsel %vm663, %v685, %v686
  %v688 = vrot.slane %v70, 5
  %v689 = vrot.slane %v688, 4
  %v690 = vrot.slane %v71, 5
  %v691 = vsel %vm663, %v689, %v690
  %v692 = vrot.slane %v72, 5
  %v693 = vrot.slane %v692, 4
  %v694 = vrot.slane %v73, 5
  %v695 = vsel %vm663, %v693, %v694
  %v696 = vrot.slane %v78, 5
  %v697 = vrot.slane %v696, 4
  %v698 = vrot.slane %v79, 5
  %v699 = vsel %vm663, %v697, %v698
  %v700 = vrot.slane %v80, 5
  %v701 = vrot.slane %v700, 4
  %v702 = vrot.slane %v81, 5
  %v703 = vsel %vm663, %v701, %v702
  %v704 = vrot.slane %v82, 5
  %v705 = vrot.slane %v704, 4
  %v706 = vrot.slane %v83, 5
  %v707 = vsel %vm663, %v705, %v706
  %v708 = vrot.slane %v84, 5
  %v709 = vrot.slane %v708, 4
  %v710 = vrot.slane %v85, 5
  %v711 = vsel %vm663, %v709, %v710
  %v712 = vrot.slane %v86, 5
  %v713 = vrot.slane %v712, 4
  %v714 = vrot.slane %v87, 5
  %v715 = vsel %vm663, %v713, %v714
  %v716 = vrot.slane %v88, 5
  %v717 = vrot.slane %v716, 4
  %v718 = vrot.slane %v89, 5
  %v719 = vsel %vm663, %v717, %v718
  %v720 = vrot.slane %v90, 5
  %v721 = vrot.slane %v720, 4
  %v722 = vrot.slane %v91, 5
  %v723 = vsel %vm663, %v721, %v722
  %v724 = vrot.slane %v92, 5
  %v725 = vrot.slane %v724, 4
  %v726 = vrot.slane %v93, 5
  %v727 = vsel %vm663, %v725, %v726
  %v760 = vrot.slane %v138, 5
  %v761 = vrot.slane %v760, 4
  %v762 = vrot.slane %v139, 5
  %v763 = vsel %vm663, %v761, %v762
  %v764 = vrot.slane %v140, 5
  %v765 = vrot.slane %v764, 4
  %v766 = vrot.slane %v141, 5
  %v767 = vsel %vm663, %v765, %v766
  %v768 = vrot.slane %v142, 5
  %v769 = vrot.slane %v768, 4
  %v770 = vrot.slane %v143, 5
  %v771 = vsel %vm663, %v769, %v770
  %v772 = vrot.slane %v144, 5
  %v773 = vrot.slane %v772, 4
  %v774 = vrot.slane %v145, 5
  %v775 = vsel %vm663, %v773, %v774
  %v776 = vrot.slane %v146, 5
  %v777 = vrot.slane %v776, 4
  %v778 = vrot.slane %v147, 5
  %v779 = vsel %vm663, %v777, %v778
  %v780 = vrot.slane %v148, 5
  %v781 = vrot.slane %v780, 4
  %v782 = vrot.slane %v149, 5
  %v783 = vsel %vm663, %v781, %v782
  %v784 = vrot.slane %v150, 5
  %v785 = vrot.slane %v784, 4
  %v786 = vrot.slane %v151, 5
  %v787 = vsel %vm663, %v785, %v786
  %v788 = vrot.slane %v152, 5
  %v789 = vrot.slane %v788, 4
  %v790 = vrot.slane %v153, 5
  %v791 = vsel %vm663, %v789, %v790
  %v792 = vrot.slane %v158, 5
  %v793 = vrot.slane %v792, 4
  %v794 = vrot.slane %v159, 5
  %v795 = vsel %vm663, %v793, %v794
  %v796 = vrot.slane %v160, 5
  %v797 = vrot.slane %v796, 4
  %v798 = vrot.slane %v161, 5
  %v799 = vsel %vm663, %v797, %v798
  %v800 = vrot.slane %v162, 5
  %v801 = vrot.slane %v800, 4
  %v802 = vrot.slane %v163, 5
  %v803 = vsel %vm663, %v801, %v802
  %v804 = vrot.slane %v164, 5
  %v805 = vrot.slane %v804, 4
  %v806 = vrot.slane %v165, 5
  %v807 = vsel %vm663, %v805, %v806
  %v808 = vrot.slane %v166, 5
  %v809 = vrot.slane %v808, 4
  %v810 = vrot.slane %v167, 5
  %v811 = vsel %vm663, %v809, %v810
  %v812 = vrot.slane %v168, 5
  %v813 = vrot.slane %v812, 4
  %v814 = vrot.slane %v169, 5
  %v815 = vsel %vm663, %v813, %v814
  %v816 = vrot.slane %v170, 5
  %v817 = vrot.slane %v816, 4
  %v818 = vrot.slane %v171, 5
  %v819 = vsel %vm663, %v817, %v818
  %v820 = vrot.slane %v172, 5
  %v821 = vrot.slane %v820, 4
  %v822 = vrot.slane %v173, 5
  %v823 = vsel %vm663, %v821, %v822
  %v825 = vshrl.u32 %v74, 16
  %v827 = vrot.slane %v825, 4
  %v828 = vshll.u32 %v74, 16
  %v830 = vrot.slane %v828, 5
  %v831 = vor.u32 %v827, %v830
  %v832 = vrot.slane %v831, 4
  %v834 = vshll.u32 %v75, 16
  %v836 = vrot.slane %v834, 5
  %v837 = vsel %vm180, %v832, %v836
  %v839 = vshrl.u32 %v94, 16
  %v841 = vrot.slane %v839, 4
  %v842 = vshll.u32 %v94, 16
  %v844 = vrot.slane %v842, 5
  %v845 = vor.u32 %v841, %v844
  %v846 = vrot.slane %v845, 4
  %v848 = vshll.u32 %v95, 16
  %v850 = vrot.slane %v848, 5
  %v851 = vsel %vm180, %v846, %v850
  %v853 = vshrl.u32 %v154, 16
  %v855 = vrot.slane %v853, 4
  %v856 = vshll.u32 %v154, 16
  %v858 = vrot.slane %v856, 5
  %v859 = vor.u32 %v855, %v858
  %v860 = vrot.slane %v859, 4
  %v862 = vshll.u32 %v155, 16
  %v864 = vrot.slane %v862, 5
  %v865 = vsel %vm180, %v860, %v864
  %v867 = vshrl.u32 %v174, 16
  %v869 = vrot.slane %v867, 4
  %v870 = vshll.u32 %v174, 16
  %v872 = vrot.slane %v870, 5
  %v873 = vor.u32 %v869, %v872
  %v874 = vrot.slane %v873, 4
  %v876 = vshll.u32 %v175, 16
  %v878 = vrot.slane %v876, 5
  %v879 = vsel %vm180, %v874, %v878
  %v884 = vrot.slane %v74, 5
  %v885 = vrot.slane %v884, 4
  %v886 = vrot.slane %v75, 5
  %v887 = vsel %vm663, %v885, %v886
  %v888 = vrot.slane %v94, 5
  %v889 = vrot.slane %v888, 4
  %v890 = vrot.slane %v95, 5
  %v891 = vsel %vm663, %v889, %v890
  %v896 = vrot.slane %v154, 5
  %v897 = vrot.slane %v896, 4
  %v898 = vrot.slane %v155, 5
  %v899 = vsel %vm663, %v897, %v898
  %v900 = vrot.slane %v174, 5
  %v901 = vrot.slane %v900, 4
  %v902 = vrot.slane %v175, 5
  %v903 = vsel %vm663, %v901, %v902
  %v905 = vshrl.u32 %v76, 16
  %v907 = vrot.slane %v905, 4
  %v908 = vshll.u32 %v76, 16
  %v910 = vrot.slane %v908, 5
  %v911 = vor.u32 %v907, %v910
  %v912 = vrot.slane %v911, 4
  %v914 = vshll.u32 %v77, 16
  %v916 = vrot.slane %v914, 5
  %v917 = vsel %vm180, %v912, %v916
  %v919 = vshrl.u32 %v96, 16
  %v921 = vrot.slane %v919, 4
  %v922 = vshll.u32 %v96, 16
  %v924 = vrot.slane %v922, 5
  %v925 = vor.u32 %v921, %v924
  %v926 = vrot.slane %v925, 4
  %v928 = vshll.u32 %v97, 16
  %v930 = vrot.slane %v928, 5
  %v931 = vsel %vm180, %v926, %v930
  %v933 = vshrl.u32 %v156, 16
  %v935 = vrot.slane %v933, 4
  %v936 = vshll.u32 %v156, 16
  %v938 = vrot.slane %v936, 5
  %v939 = vor.u32 %v935, %v938
  %v940 = vrot.slane %v939, 4
  %v942 = vshll.u32 %v157, 16
  %v944 = vrot.slane %v942, 5
  %v945 = vsel %vm180, %v940, %v944
  %v947 = vshrl.u32 %v176, 16
  %v949 = vrot.slane %v947, 4
  %v950 = vshll.u32 %v176, 16
  %v952 = vrot.slane %v950, 5
  %v953 = vor.u32 %v949, %v952
  %v954 = vrot.slane %v953, 4
  %v956 = vshll.u32 %v177, 16
  %v958 = vrot.slane %v956, 5
  %v959 = vsel %vm180, %v954, %v958
  %v964 = vrot.slane %v76, 5
  %v965 = vrot.slane %v964, 4
  %v966 = vrot.slane %v77, 5
  %v967 = vsel %vm663, %v965, %v966
  %v968 = vrot.slane %v96, 5
  %v969 = vrot.slane %v968, 4
  %v970 = vrot.slane %v97, 5
  %v971 = vsel %vm663, %v969, %v970
  %v976 = vrot.slane %v156, 5
  %v977 = vrot.slane %v976, 4
  %v978 = vrot.slane %v157, 5
  %v979 = vsel %vm663, %v977, %v978
  %v980 = vrot.slane %v176, 5
  %v981 = vrot.slane %v980, 4
  %v982 = vrot.slane %v177, 5
  %v983 = vsel %vm663, %v981, %v982
  %v984 = vunpack.c.l.b16 %v58
  %v985 = vunpack.c.l.b16 %v60
  %v986 = vunpack.c.l.b16 %v62
  %v987 = vunpack.c.l.b16 %v64
  %v988 = vunpack.c.l.b16 %v66
  %v989 = vunpack.c.l.b16 %v68
  %v990 = vunpack.c.l.b16 %v70
  %v991 = vunpack.c.l.b16 %v72
  %v992 = vunpack.c.l.b16 %v78
  %v993 = vunpack.c.l.b16 %v80
  %v994 = vunpack.c.l.b16 %v82
  %v995 = vunpack.c.l.b16 %v84
  %v996 = vunpack.c.l.b16 %v86
  %v997 = vunpack.c.l.b16 %v88
  %v998 = vunpack.c.l.b16 %v90
  %v999 = vunpack.c.l.b16 %v92
  %v1000 = vpack.c.b16 %v985, %v984
  %v1001 = vpack.c.b16 %v987, %v986
  %v1002 = vpack.c.b16 %v989, %v988
  %v1003 = vpack.c.b16 %v991, %v990
  %v1004 = vpack.c.b16 %v993, %v992
  %v1005 = vpack.c.b16 %v995, %v994
  %v1006 = vpack.c.b16 %v997, %v996
  %v1007 = vpack.c.b16 %v999, %v998
  %v1008 = vunpack.c.l.b16 %v138
  %v1009 = vunpack.c.l.b16 %v140
  %v1010 = vunpack.c.l.b16 %v142
  %v1011 = vunpack.c.l.b16 %v144
  %v1012 = vunpack.c.l.b16 %v146
  %v1013 = vunpack.c.l.b16 %v148
  %v1014 = vunpack.c.l.b16 %v150
  %v1015 = vunpack.c.l.b16 %v152
  %v1016 = vunpack.c.l.b16 %v158
  %v1017 = vunpack.c.l.b16 %v160
  %v1018 = vunpack.c.l.b16 %v162
  %v1019 = vunpack.c.l.b16 %v164
  %v1020 = vunpack.c.l.b16 %v166
  %v1021 = vunpack.c.l.b16 %v168
  %v1022 = vunpack.c.l.b16 %v170
  %v1023 = vunpack.c.l.b16 %v172
  %v1024 = vpack.c.b16 %v1009, %v1008
  %v1025 = vpack.c.b16 %v1011, %v1010
  %v1026 = vpack.c.b16 %v1013, %v1012
  %v1027 = vpack.c.b16 %v1015, %v1014
  %v1028 = vpack.c.b16 %v1017, %v1016
  %v1029 = vpack.c.b16 %v1019, %v1018
  %v1030 = vpack.c.b16 %v1021, %v1020
  %v1031 = vpack.c.b16 %v1023, %v1022
  %1032 = vrot.lane.b32.xlu0 %v1024, 8
  %v1033 = vpop.permute.xlu0 %1032
  %1034 = vrot.lane.b32.xlu0 %v1025, 8
  %v1035 = vpop.permute.xlu0 %1034
  %1036 = vrot.lane.b32.xlu0 %v1026, 8
  %v1037 = vpop.permute.xlu0 %1036
  %1038 = vrot.lane.b32.xlu0 %v1027, 8
  %v1039 = vpop.permute.xlu0 %1038
  %1040 = vrot.lane.b32.xlu0 %v1028, 8
  %v1041 = vpop.permute.xlu0 %1040
  %1042 = vrot.lane.b32.xlu0 %v1029, 8
  %v1043 = vpop.permute.xlu0 %1042
  %1044 = vrot.lane.b32.xlu0 %v1030, 8
  %v1045 = vpop.permute.xlu0 %1044
  %1046 = vrot.lane.b32.xlu0 %v1031, 8
  %v1047 = vpop.permute.xlu0 %1046
  %v1048 = vunpack.c.l.b16 %v194
  %v1049 = vunpack.c.l.b16 %v208
  %v1050 = vunpack.c.l.b16 %v222
  %v1051 = vunpack.c.l.b16 %v236
  %v1052 = vunpack.c.l.b16 %v250
  %v1053 = vunpack.c.l.b16 %v264
  %v1054 = vunpack.c.l.b16 %v278
  %v1055 = vunpack.c.l.b16 %v292
  %v1056 = vunpack.c.l.b16 %v306
  %v1057 = vunpack.c.l.b16 %v320
  %v1058 = vunpack.c.l.b16 %v334
  %v1059 = vunpack.c.l.b16 %v348
  %v1060 = vunpack.c.l.b16 %v362
  %v1061 = vunpack.c.l.b16 %v376
  %v1062 = vunpack.c.l.b16 %v390
  %v1063 = vunpack.c.l.b16 %v404
  %v1064 = vpack.c.b16 %v1049, %v1048
  %v1065 = vpack.c.b16 %v1051, %v1050
  %v1066 = vpack.c.b16 %v1053, %v1052
  %v1067 = vpack.c.b16 %v1055, %v1054
  %v1068 = vpack.c.b16 %v1057, %v1056
  %v1069 = vpack.c.b16 %v1059, %v1058
  %v1070 = vpack.c.b16 %v1061, %v1060
  %v1071 = vpack.c.b16 %v1063, %v1062
  %1072 = vrot.lane.b32.xlu0 %v1064, 16
  %v1073 = vpop.permute.xlu0 %1072
  %1074 = vrot.lane.b32.xlu0 %v1065, 16
  %v1075 = vpop.permute.xlu0 %1074
  %1076 = vrot.lane.b32.xlu0 %v1066, 16
  %v1077 = vpop.permute.xlu0 %1076
  %1078 = vrot.lane.b32.xlu0 %v1067, 16
  %v1079 = vpop.permute.xlu0 %1078
  %1080 = vrot.lane.b32.xlu0 %v1068, 16
  %v1081 = vpop.permute.xlu0 %1080
  %1082 = vrot.lane.b32.xlu0 %v1069, 16
  %v1083 = vpop.permute.xlu0 %1082
  %1084 = vrot.lane.b32.xlu0 %v1070, 16
  %v1085 = vpop.permute.xlu0 %1084
  %1086 = vrot.lane.b32.xlu0 %v1071, 16
  %v1087 = vpop.permute.xlu0 %1086
  %v1088 = vunpack.c.l.b16 %v418
  %v1089 = vunpack.c.l.b16 %v432
  %v1090 = vunpack.c.l.b16 %v446
  %v1091 = vunpack.c.l.b16 %v460
  %v1092 = vunpack.c.l.b16 %v474
  %v1093 = vunpack.c.l.b16 %v488
  %v1094 = vunpack.c.l.b16 %v502
  %v1095 = vunpack.c.l.b16 %v516
  %v1096 = vunpack.c.l.b16 %v530
  %v1097 = vunpack.c.l.b16 %v544
  %v1098 = vunpack.c.l.b16 %v558
  %v1099 = vunpack.c.l.b16 %v572
  %v1100 = vunpack.c.l.b16 %v586
  %v1101 = vunpack.c.l.b16 %v600
  %v1102 = vunpack.c.l.b16 %v614
  %v1103 = vunpack.c.l.b16 %v628
  %v1104 = vpack.c.b16 %v1089, %v1088
  %v1105 = vpack.c.b16 %v1091, %v1090
  %v1106 = vpack.c.b16 %v1093, %v1092
  %v1107 = vpack.c.b16 %v1095, %v1094
  %v1108 = vpack.c.b16 %v1097, %v1096
  %v1109 = vpack.c.b16 %v1099, %v1098
  %v1110 = vpack.c.b16 %v1101, %v1100
  %v1111 = vpack.c.b16 %v1103, %v1102
  %1112 = vrot.lane.b32.xlu0 %v1104, 24
  %v1113 = vpop.permute.xlu0 %1112
  %1114 = vrot.lane.b32.xlu0 %v1105, 24
  %v1115 = vpop.permute.xlu0 %1114
  %1116 = vrot.lane.b32.xlu0 %v1106, 24
  %v1117 = vpop.permute.xlu0 %1116
  %1118 = vrot.lane.b32.xlu0 %v1107, 24
  %v1119 = vpop.permute.xlu0 %1118
  %1120 = vrot.lane.b32.xlu0 %v1108, 24
  %v1121 = vpop.permute.xlu0 %1120
  %1122 = vrot.lane.b32.xlu0 %v1109, 24
  %v1123 = vpop.permute.xlu0 %1122
  %1124 = vrot.lane.b32.xlu0 %v1110, 24
  %v1125 = vpop.permute.xlu0 %1124
  %1126 = vrot.lane.b32.xlu0 %v1111, 24
  %v1127 = vpop.permute.xlu0 %1126
  %v1128 = vunpack.c.l.b16 %v667
  %v1129 = vunpack.c.l.b16 %v671
  %v1130 = vunpack.c.l.b16 %v675
  %v1131 = vunpack.c.l.b16 %v679
  %v1132 = vunpack.c.l.b16 %v683
  %v1133 = vunpack.c.l.b16 %v687
  %v1134 = vunpack.c.l.b16 %v691
  %v1135 = vunpack.c.l.b16 %v695
  %v1136 = vunpack.c.l.b16 %v699
  %v1137 = vunpack.c.l.b16 %v703
  %v1138 = vunpack.c.l.b16 %v707
  %v1139 = vunpack.c.l.b16 %v711
  %v1140 = vunpack.c.l.b16 %v715
  %v1141 = vunpack.c.l.b16 %v719
  %v1142 = vunpack.c.l.b16 %v723
  %v1143 = vunpack.c.l.b16 %v727
  %v1144 = vpack.c.b16 %v1129, %v1128
  %v1145 = vpack.c.b16 %v1131, %v1130
  %v1146 = vpack.c.b16 %v1133, %v1132
  %v1147 = vpack.c.b16 %v1135, %v1134
  %v1148 = vpack.c.b16 %v1137, %v1136
  %v1149 = vpack.c.b16 %v1139, %v1138
  %v1150 = vpack.c.b16 %v1141, %v1140
  %v1151 = vpack.c.b16 %v1143, %v1142
  %1152 = vrot.lane.b32.xlu0 %v1144, 32
  %v1153 = vpop.permute.xlu0 %1152
  %1154 = vrot.lane.b32.xlu0 %v1145, 32
  %v1155 = vpop.permute.xlu0 %1154
  %1156 = vrot.lane.b32.xlu0 %v1146, 32
  %v1157 = vpop.permute.xlu0 %1156
  %1158 = vrot.lane.b32.xlu0 %v1147, 32
  %v1159 = vpop.permute.xlu0 %1158
  %1160 = vrot.lane.b32.xlu0 %v1148, 32
  %v1161 = vpop.permute.xlu0 %1160
  %1162 = vrot.lane.b32.xlu0 %v1149, 32
  %v1163 = vpop.permute.xlu0 %1162
  %1164 = vrot.lane.b32.xlu0 %v1150, 32
  %v1165 = vpop.permute.xlu0 %1164
  %1166 = vrot.lane.b32.xlu0 %v1151, 32
  %v1167 = vpop.permute.xlu0 %1166
  %v1168 = vunpack.c.l.b16 %v763
  %v1169 = vunpack.c.l.b16 %v767
  %v1170 = vunpack.c.l.b16 %v771
  %v1171 = vunpack.c.l.b16 %v775
  %v1172 = vunpack.c.l.b16 %v779
  %v1173 = vunpack.c.l.b16 %v783
  %v1174 = vunpack.c.l.b16 %v787
  %v1175 = vunpack.c.l.b16 %v791
  %v1176 = vunpack.c.l.b16 %v795
  %v1177 = vunpack.c.l.b16 %v799
  %v1178 = vunpack.c.l.b16 %v803
  %v1179 = vunpack.c.l.b16 %v807
  %v1180 = vunpack.c.l.b16 %v811
  %v1181 = vunpack.c.l.b16 %v815
  %v1182 = vunpack.c.l.b16 %v819
  %v1183 = vunpack.c.l.b16 %v823
  %v1184 = vpack.c.b16 %v1169, %v1168
  %v1185 = vpack.c.b16 %v1171, %v1170
  %v1186 = vpack.c.b16 %v1173, %v1172
  %v1187 = vpack.c.b16 %v1175, %v1174
  %v1188 = vpack.c.b16 %v1177, %v1176
  %v1189 = vpack.c.b16 %v1179, %v1178
  %v1190 = vpack.c.b16 %v1181, %v1180
  %v1191 = vpack.c.b16 %v1183, %v1182
  %1192 = vrot.lane.b32.xlu0 %v1184, 40
  %v1193 = vpop.permute.xlu0 %1192
  %1194 = vrot.lane.b32.xlu0 %v1185, 40
  %v1195 = vpop.permute.xlu0 %1194
  %1196 = vrot.lane.b32.xlu0 %v1186, 40
  %v1197 = vpop.permute.xlu0 %1196
  %1198 = vrot.lane.b32.xlu0 %v1187, 40
  %v1199 = vpop.permute.xlu0 %1198
  %1200 = vrot.lane.b32.xlu0 %v1188, 40
  %v1201 = vpop.permute.xlu0 %1200
  %1202 = vrot.lane.b32.xlu0 %v1189, 40
  %v1203 = vpop.permute.xlu0 %1202
  %1204 = vrot.lane.b32.xlu0 %v1190, 40
  %v1205 = vpop.permute.xlu0 %1204
  %1206 = vrot.lane.b32.xlu0 %v1191, 40
  %v1207 = vpop.permute.xlu0 %1206
  %v1208 = vunpack.c.l.b16 %v74
  %v1209 = vunpack.c.l.b16 %v94
  %v1210 = vpack.c.b16 %v986, %v985
  %v1211 = vpack.c.b16 %v988, %v987
  %v1212 = vpack.c.b16 %v990, %v989
  %v1213 = vpack.c.b16 %v1208, %v991
  %v1214 = vpack.c.b16 %v994, %v993
  %v1215 = vpack.c.b16 %v996, %v995
  %v1216 = vpack.c.b16 %v998, %v997
  %v1217 = vpack.c.b16 %v1209, %v999
  %1218 = vrot.lane.b32.xlu0 %v1210, 48
  %v1219 = vpop.permute.xlu0 %1218
  %1220 = vrot.lane.b32.xlu0 %v1211, 48
  %v1221 = vpop.permute.xlu0 %1220
  %1222 = vrot.lane.b32.xlu0 %v1212, 48
  %v1223 = vpop.permute.xlu0 %1222
  %1224 = vrot.lane.b32.xlu0 %v1213, 48
  %v1225 = vpop.permute.xlu0 %1224
  %1226 = vrot.lane.b32.xlu0 %v1214, 48
  %v1227 = vpop.permute.xlu0 %1226
  %1228 = vrot.lane.b32.xlu0 %v1215, 48
  %v1229 = vpop.permute.xlu0 %1228
  %1230 = vrot.lane.b32.xlu0 %v1216, 48
  %v1231 = vpop.permute.xlu0 %1230
  %1232 = vrot.lane.b32.xlu0 %v1217, 48
  %v1233 = vpop.permute.xlu0 %1232
  %v1234 = vunpack.c.l.b16 %v154
  %v1235 = vunpack.c.l.b16 %v174
  %v1236 = vpack.c.b16 %v1010, %v1009
  %v1237 = vpack.c.b16 %v1012, %v1011
  %v1238 = vpack.c.b16 %v1014, %v1013
  %v1239 = vpack.c.b16 %v1234, %v1015
  %v1240 = vpack.c.b16 %v1018, %v1017
  %v1241 = vpack.c.b16 %v1020, %v1019
  %v1242 = vpack.c.b16 %v1022, %v1021
  %v1243 = vpack.c.b16 %v1235, %v1023
  %1244 = vrot.lane.b32.xlu0 %v1236, 56
  %v1245 = vpop.permute.xlu0 %1244
  %1246 = vrot.lane.b32.xlu0 %v1237, 56
  %v1247 = vpop.permute.xlu0 %1246
  %1248 = vrot.lane.b32.xlu0 %v1238, 56
  %v1249 = vpop.permute.xlu0 %1248
  %1250 = vrot.lane.b32.xlu0 %v1239, 56
  %v1251 = vpop.permute.xlu0 %1250
  %1252 = vrot.lane.b32.xlu0 %v1240, 56
  %v1253 = vpop.permute.xlu0 %1252
  %1254 = vrot.lane.b32.xlu0 %v1241, 56
  %v1255 = vpop.permute.xlu0 %1254
  %1256 = vrot.lane.b32.xlu0 %v1242, 56
  %v1257 = vpop.permute.xlu0 %1256
  %1258 = vrot.lane.b32.xlu0 %v1243, 56
  %v1259 = vpop.permute.xlu0 %1258
  %v1260 = vunpack.c.l.b16 %v837
  %v1261 = vunpack.c.l.b16 %v851
  %v1262 = vpack.c.b16 %v1050, %v1049
  %v1263 = vpack.c.b16 %v1052, %v1051
  %v1264 = vpack.c.b16 %v1054, %v1053
  %v1265 = vpack.c.b16 %v1260, %v1055
  %v1266 = vpack.c.b16 %v1058, %v1057
  %v1267 = vpack.c.b16 %v1060, %v1059
  %v1268 = vpack.c.b16 %v1062, %v1061
  %v1269 = vpack.c.b16 %v1261, %v1063
  %1270 = vrot.lane.b32.xlu0 %v1262, 64
  %v1271 = vpop.permute.xlu0 %1270
  %1272 = vrot.lane.b32.xlu0 %v1263, 64
  %v1273 = vpop.permute.xlu0 %1272
  %1274 = vrot.lane.b32.xlu0 %v1264, 64
  %v1275 = vpop.permute.xlu0 %1274
  %1276 = vrot.lane.b32.xlu0 %v1265, 64
  %v1277 = vpop.permute.xlu0 %1276
  %1278 = vrot.lane.b32.xlu0 %v1266, 64
  %v1279 = vpop.permute.xlu0 %1278
  %1280 = vrot.lane.b32.xlu0 %v1267, 64
  %v1281 = vpop.permute.xlu0 %1280
  %1282 = vrot.lane.b32.xlu0 %v1268, 64
  %v1283 = vpop.permute.xlu0 %1282
  %1284 = vrot.lane.b32.xlu0 %v1269, 64
  %v1285 = vpop.permute.xlu0 %1284
  %v1286 = vunpack.c.l.b16 %v865
  %v1287 = vunpack.c.l.b16 %v879
  %v1288 = vpack.c.b16 %v1090, %v1089
  %v1289 = vpack.c.b16 %v1092, %v1091
  %v1290 = vpack.c.b16 %v1094, %v1093
  %v1291 = vpack.c.b16 %v1286, %v1095
  %v1292 = vpack.c.b16 %v1098, %v1097
  %v1293 = vpack.c.b16 %v1100, %v1099
  %v1294 = vpack.c.b16 %v1102, %v1101
  %v1295 = vpack.c.b16 %v1287, %v1103
  %1296 = vrot.lane.b32.xlu0 %v1288, 72
  %v1297 = vpop.permute.xlu0 %1296
  %1298 = vrot.lane.b32.xlu0 %v1289, 72
  %v1299 = vpop.permute.xlu0 %1298
  %1300 = vrot.lane.b32.xlu0 %v1290, 72
  %v1301 = vpop.permute.xlu0 %1300
  %1302 = vrot.lane.b32.xlu0 %v1291, 72
  %v1303 = vpop.permute.xlu0 %1302
  %1304 = vrot.lane.b32.xlu0 %v1292, 72
  %v1305 = vpop.permute.xlu0 %1304
  %1306 = vrot.lane.b32.xlu0 %v1293, 72
  %v1307 = vpop.permute.xlu0 %1306
  %1308 = vrot.lane.b32.xlu0 %v1294, 72
  %v1309 = vpop.permute.xlu0 %1308
  %1310 = vrot.lane.b32.xlu0 %v1295, 72
  %v1311 = vpop.permute.xlu0 %1310
  %v1312 = vunpack.c.l.b16 %v887
  %v1313 = vunpack.c.l.b16 %v891
  %v1314 = vpack.c.b16 %v1130, %v1129
  %v1315 = vpack.c.b16 %v1132, %v1131
  %v1316 = vpack.c.b16 %v1134, %v1133
  %v1317 = vpack.c.b16 %v1312, %v1135
  %v1318 = vpack.c.b16 %v1138, %v1137
  %v1319 = vpack.c.b16 %v1140, %v1139
  %v1320 = vpack.c.b16 %v1142, %v1141
  %v1321 = vpack.c.b16 %v1313, %v1143
  %1322 = vrot.lane.b32.xlu0 %v1314, 80
  %v1323 = vpop.permute.xlu0 %1322
  %1324 = vrot.lane.b32.xlu0 %v1315, 80
  %v1325 = vpop.permute.xlu0 %1324
  %1326 = vrot.lane.b32.xlu0 %v1316, 80
  %v1327 = vpop.permute.xlu0 %1326
  %1328 = vrot.lane.b32.xlu0 %v1317, 80
  %v1329 = vpop.permute.xlu0 %1328
  %1330 = vrot.lane.b32.xlu0 %v1318, 80
  %v1331 = vpop.permute.xlu0 %1330
  %1332 = vrot.lane.b32.xlu0 %v1319, 80
  %v1333 = vpop.permute.xlu0 %1332
  %1334 = vrot.lane.b32.xlu0 %v1320, 80
  %v1335 = vpop.permute.xlu0 %1334
  %1336 = vrot.lane.b32.xlu0 %v1321, 80
  %v1337 = vpop.permute.xlu0 %1336
  %v1338 = vunpack.c.l.b16 %v899
  %v1339 = vunpack.c.l.b16 %v903
  %v1340 = vpack.c.b16 %v1170, %v1169
  %v1341 = vpack.c.b16 %v1172, %v1171
  %v1342 = vpack.c.b16 %v1174, %v1173
  %v1343 = vpack.c.b16 %v1338, %v1175
  %v1344 = vpack.c.b16 %v1178, %v1177
  %v1345 = vpack.c.b16 %v1180, %v1179
  %v1346 = vpack.c.b16 %v1182, %v1181
  %v1347 = vpack.c.b16 %v1339, %v1183
  %1348 = vrot.lane.b32.xlu0 %v1340, 88
  %v1349 = vpop.permute.xlu0 %1348
  %1350 = vrot.lane.b32.xlu0 %v1341, 88
  %v1351 = vpop.permute.xlu0 %1350
  %1352 = vrot.lane.b32.xlu0 %v1342, 88
  %v1353 = vpop.permute.xlu0 %1352
  %1354 = vrot.lane.b32.xlu0 %v1343, 88
  %v1355 = vpop.permute.xlu0 %1354
  %1356 = vrot.lane.b32.xlu0 %v1344, 88
  %v1357 = vpop.permute.xlu0 %1356
  %1358 = vrot.lane.b32.xlu0 %v1345, 88
  %v1359 = vpop.permute.xlu0 %1358
  %1360 = vrot.lane.b32.xlu0 %v1346, 88
  %v1361 = vpop.permute.xlu0 %1360
  %1362 = vrot.lane.b32.xlu0 %v1347, 88
  %v1363 = vpop.permute.xlu0 %1362
  %v1364 = vunpack.c.l.b16 %v76
  %v1365 = vunpack.c.l.b16 %v96
  %v1366 = vpack.c.b16 %v1364, %v1208
  %v1367 = vpack.c.b16 %v1365, %v1209
  %1368 = vrot.lane.b32.xlu0 %v1001, 96
  %v1369 = vpop.permute.xlu0 %1368
  %1370 = vrot.lane.b32.xlu0 %v1002, 96
  %v1371 = vpop.permute.xlu0 %1370
  %1372 = vrot.lane.b32.xlu0 %v1003, 96
  %v1373 = vpop.permute.xlu0 %1372
  %1374 = vrot.lane.b32.xlu0 %v1366, 96
  %v1375 = vpop.permute.xlu0 %1374
  %1376 = vrot.lane.b32.xlu0 %v1005, 96
  %v1377 = vpop.permute.xlu0 %1376
  %1378 = vrot.lane.b32.xlu0 %v1006, 96
  %v1379 = vpop.permute.xlu0 %1378
  %1380 = vrot.lane.b32.xlu0 %v1007, 96
  %v1381 = vpop.permute.xlu0 %1380
  %1382 = vrot.lane.b32.xlu0 %v1367, 96
  %v1383 = vpop.permute.xlu0 %1382
  %v1384 = vunpack.c.l.b16 %v156
  %v1385 = vunpack.c.l.b16 %v176
  %v1386 = vpack.c.b16 %v1384, %v1234
  %v1387 = vpack.c.b16 %v1385, %v1235
  %1388 = vrot.lane.b32.xlu0 %v1025, 104
  %v1389 = vpop.permute.xlu0 %1388
  %1390 = vrot.lane.b32.xlu0 %v1026, 104
  %v1391 = vpop.permute.xlu0 %1390
  %1392 = vrot.lane.b32.xlu0 %v1027, 104
  %v1393 = vpop.permute.xlu0 %1392
  %1394 = vrot.lane.b32.xlu0 %v1386, 104
  %v1395 = vpop.permute.xlu0 %1394
  %1396 = vrot.lane.b32.xlu0 %v1029, 104
  %v1397 = vpop.permute.xlu0 %1396
  %1398 = vrot.lane.b32.xlu0 %v1030, 104
  %v1399 = vpop.permute.xlu0 %1398
  %1400 = vrot.lane.b32.xlu0 %v1031, 104
  %v1401 = vpop.permute.xlu0 %1400
  %1402 = vrot.lane.b32.xlu0 %v1387, 104
  %v1403 = vpop.permute.xlu0 %1402
  %v1404 = vunpack.c.l.b16 %v917
  %v1405 = vunpack.c.l.b16 %v931
  %v1406 = vpack.c.b16 %v1404, %v1260
  %v1407 = vpack.c.b16 %v1405, %v1261
  %1408 = vrot.lane.b32.xlu0 %v1065, 112
  %v1409 = vpop.permute.xlu0 %1408
  %1410 = vrot.lane.b32.xlu0 %v1066, 112
  %v1411 = vpop.permute.xlu0 %1410
  %1412 = vrot.lane.b32.xlu0 %v1067, 112
  %v1413 = vpop.permute.xlu0 %1412
  %1414 = vrot.lane.b32.xlu0 %v1406, 112
  %v1415 = vpop.permute.xlu0 %1414
  %1416 = vrot.lane.b32.xlu0 %v1069, 112
  %v1417 = vpop.permute.xlu0 %1416
  %1418 = vrot.lane.b32.xlu0 %v1070, 112
  %v1419 = vpop.permute.xlu0 %1418
  %1420 = vrot.lane.b32.xlu0 %v1071, 112
  %v1421 = vpop.permute.xlu0 %1420
  %1422 = vrot.lane.b32.xlu0 %v1407, 112
  %v1423 = vpop.permute.xlu0 %1422
  %v1424 = vunpack.c.l.b16 %v945
  %v1425 = vunpack.c.l.b16 %v959
  %v1426 = vpack.c.b16 %v1424, %v1286
  %v1427 = vpack.c.b16 %v1425, %v1287
  %1428 = vrot.lane.b32.xlu0 %v1105, 120
  %v1429 = vpop.permute.xlu0 %1428
  %1430 = vrot.lane.b32.xlu0 %v1106, 120
  %v1431 = vpop.permute.xlu0 %1430
  %1432 = vrot.lane.b32.xlu0 %v1107, 120
  %v1433 = vpop.permute.xlu0 %1432
  %1434 = vrot.lane.b32.xlu0 %v1426, 120
  %v1435 = vpop.permute.xlu0 %1434
  %1436 = vrot.lane.b32.xlu0 %v1109, 120
  %v1437 = vpop.permute.xlu0 %1436
  %1438 = vrot.lane.b32.xlu0 %v1110, 120
  %v1439 = vpop.permute.xlu0 %1438
  %1440 = vrot.lane.b32.xlu0 %v1111, 120
  %v1441 = vpop.permute.xlu0 %1440
  %1442 = vrot.lane.b32.xlu0 %v1427, 120
  %v1443 = vpop.permute.xlu0 %1442
  %vm1444 = vcmask 64512
  %v1447 = vsel %vm1444, %v1000, %v1033
  %v1450 = vsel %vm1444, %v1001, %v1035
  %v1453 = vsel %vm1444, %v1002, %v1037
  %v1456 = vsel %vm1444, %v1003, %v1039
  %v1459 = vsel %vm1444, %v1004, %v1041
  %v1462 = vsel %vm1444, %v1005, %v1043
  %v1465 = vsel %vm1444, %v1006, %v1045
  %v1468 = vsel %vm1444, %v1007, %v1047
  %vm1469 = vcmask 130048
  %v1471 = vsel %vm1469, %v1447, %v1073
  %v1473 = vsel %vm1469, %v1450, %v1075
  %v1475 = vsel %vm1469, %v1453, %v1077
  %v1477 = vsel %vm1469, %v1456, %v1079
  %v1479 = vsel %vm1469, %v1459, %v1081
  %v1481 = vsel %vm1469, %v1462, %v1083
  %v1483 = vsel %vm1469, %v1465, %v1085
  %v1485 = vsel %vm1469, %v1468, %v1087
  %vm1486 = vcmask 195584
  %v1488 = vsel %vm1486, %v1471, %v1113
  %v1490 = vsel %vm1486, %v1473, %v1115
  %v1492 = vsel %vm1486, %v1475, %v1117
  %v1494 = vsel %vm1486, %v1477, %v1119
  %v1496 = vsel %vm1486, %v1479, %v1121
  %v1498 = vsel %vm1486, %v1481, %v1123
  %v1500 = vsel %vm1486, %v1483, %v1125
  %v1502 = vsel %vm1486, %v1485, %v1127
  %vm1503 = vcmask 261120
  %v1505 = vsel %vm1503, %v1488, %v1153
  %v1507 = vsel %vm1503, %v1490, %v1155
  %v1509 = vsel %vm1503, %v1492, %v1157
  %v1511 = vsel %vm1503, %v1494, %v1159
  %v1513 = vsel %vm1503, %v1496, %v1161
  %v1515 = vsel %vm1503, %v1498, %v1163
  %v1517 = vsel %vm1503, %v1500, %v1165
  %v1519 = vsel %vm1503, %v1502, %v1167
  %vm1520 = vcmask 326656
  %v1522 = vsel %vm1520, %v1505, %v1193
  %v1524 = vsel %vm1520, %v1507, %v1195
  %v1526 = vsel %vm1520, %v1509, %v1197
  %v1528 = vsel %vm1520, %v1511, %v1199
  %v1530 = vsel %vm1520, %v1513, %v1201
  %v1532 = vsel %vm1520, %v1515, %v1203
  %v1534 = vsel %vm1520, %v1517, %v1205
  %v1536 = vsel %vm1520, %v1519, %v1207
  %vm1537 = vcmask 392192
  %v1539 = vsel %vm1537, %v1522, %v1219
  %v1541 = vsel %vm1537, %v1524, %v1221
  %v1543 = vsel %vm1537, %v1526, %v1223
  %v1545 = vsel %vm1537, %v1528, %v1225
  %v1547 = vsel %vm1537, %v1530, %v1227
  %v1549 = vsel %vm1537, %v1532, %v1229
  %v1551 = vsel %vm1537, %v1534, %v1231
  %v1553 = vsel %vm1537, %v1536, %v1233
  %vm1554 = vcmask 457728
  %v1556 = vsel %vm1554, %v1539, %v1245
  %v1558 = vsel %vm1554, %v1541, %v1247
  %v1560 = vsel %vm1554, %v1543, %v1249
  %v1562 = vsel %vm1554, %v1545, %v1251
  %v1564 = vsel %vm1554, %v1547, %v1253
  %v1566 = vsel %vm1554, %v1549, %v1255
  %v1568 = vsel %vm1554, %v1551, %v1257
  %v1570 = vsel %vm1554, %v1553, %v1259
  %vm1571 = vcmask 523264
  %v1573 = vsel %vm1571, %v1556, %v1271
  %v1575 = vsel %vm1571, %v1558, %v1273
  %v1577 = vsel %vm1571, %v1560, %v1275
  %v1579 = vsel %vm1571, %v1562, %v1277
  %v1581 = vsel %vm1571, %v1564, %v1279
  %v1583 = vsel %vm1571, %v1566, %v1281
  %v1585 = vsel %vm1571, %v1568, %v1283
  %v1587 = vsel %vm1571, %v1570, %v1285
  %vm1588 = vcmask 588800
  %v1590 = vsel %vm1588, %v1573, %v1297
  %v1592 = vsel %vm1588, %v1575, %v1299
  %v1594 = vsel %vm1588, %v1577, %v1301
  %v1596 = vsel %vm1588, %v1579, %v1303
  %v1598 = vsel %vm1588, %v1581, %v1305
  %v1600 = vsel %vm1588, %v1583, %v1307
  %v1602 = vsel %vm1588, %v1585, %v1309
  %v1604 = vsel %vm1588, %v1587, %v1311
  %vm1605 = vcmask 654336
  %v1607 = vsel %vm1605, %v1590, %v1323
  %v1609 = vsel %vm1605, %v1592, %v1325
  %v1611 = vsel %vm1605, %v1594, %v1327
  %v1613 = vsel %vm1605, %v1596, %v1329
  %v1615 = vsel %vm1605, %v1598, %v1331
  %v1617 = vsel %vm1605, %v1600, %v1333
  %v1619 = vsel %vm1605, %v1602, %v1335
  %v1621 = vsel %vm1605, %v1604, %v1337
  %vm1622 = vcmask 719872
  %v1624 = vsel %vm1622, %v1607, %v1349
  %v1626 = vsel %vm1622, %v1609, %v1351
  %v1628 = vsel %vm1622, %v1611, %v1353
  %v1630 = vsel %vm1622, %v1613, %v1355
  %v1632 = vsel %vm1622, %v1615, %v1357
  %v1634 = vsel %vm1622, %v1617, %v1359
  %v1636 = vsel %vm1622, %v1619, %v1361
  %v1638 = vsel %vm1622, %v1621, %v1363
  %vm1639 = vcmask 785408
  %v1641 = vsel %vm1639, %v1624, %v1369
  %v1643 = vsel %vm1639, %v1626, %v1371
  %v1645 = vsel %vm1639, %v1628, %v1373
  %v1647 = vsel %vm1639, %v1630, %v1375
  %v1649 = vsel %vm1639, %v1632, %v1377
  %v1651 = vsel %vm1639, %v1634, %v1379
  %v1653 = vsel %vm1639, %v1636, %v1381
  %v1655 = vsel %vm1639, %v1638, %v1383
  %vm1656 = vcmask 850944
  %v1658 = vsel %vm1656, %v1641, %v1389
  %v1660 = vsel %vm1656, %v1643, %v1391
  %v1662 = vsel %vm1656, %v1645, %v1393
  %v1664 = vsel %vm1656, %v1647, %v1395
  %v1666 = vsel %vm1656, %v1649, %v1397
  %v1668 = vsel %vm1656, %v1651, %v1399
  %v1670 = vsel %vm1656, %v1653, %v1401
  %v1672 = vsel %vm1656, %v1655, %v1403
  %vm1673 = vcmask 916480
  %v1675 = vsel %vm1673, %v1658, %v1409
  %v1677 = vsel %vm1673, %v1660, %v1411
  %v1679 = vsel %vm1673, %v1662, %v1413
  %v1681 = vsel %vm1673, %v1664, %v1415
  %v1683 = vsel %vm1673, %v1666, %v1417
  %v1685 = vsel %vm1673, %v1668, %v1419
  %v1687 = vsel %vm1673, %v1670, %v1421
  %v1689 = vsel %vm1673, %v1672, %v1423
  %vm1690 = vcmask 982016
  %v1692 = vsel %vm1690, %v1675, %v1429
  %v1695 = vsel %vm1690, %v1677, %v1431
  %v1698 = vsel %vm1690, %v1679, %v1433
  %v1701 = vsel %vm1690, %v1681, %v1435
  %v1704 = vsel %vm1690, %v1683, %v1437
  %v1707 = vsel %vm1690, %v1685, %v1439
  %v1710 = vsel %vm1690, %v1687, %v1441
  %v1713 = vsel %vm1690, %v1689, %v1443
  %v1715 = vunpack.c.l.b16 %v967
  %v1716 = vunpack.c.l.b16 %v971
  %v1717 = vpack.c.b16 %v1715, %v1312
  %v1718 = vpack.c.b16 %v1716, %v1313
  %v1719 = vunpack.c.l.b16 %v979
  %v1720 = vunpack.c.l.b16 %v983
  %v1721 = vpack.c.b16 %v1719, %v1338
  %v1722 = vpack.c.b16 %v1720, %v1339
  %1723 = vrot.lane.b32.xlu0 %v1185, 8
  %v1724 = vpop.permute.xlu0 %1723
  %1725 = vrot.lane.b32.xlu0 %v1186, 8
  %v1726 = vpop.permute.xlu0 %1725
  %1727 = vrot.lane.b32.xlu0 %v1187, 8
  %v1728 = vpop.permute.xlu0 %1727
  %1729 = vrot.lane.b32.xlu0 %v1721, 8
  %v1730 = vpop.permute.xlu0 %1729
  %1731 = vrot.lane.b32.xlu0 %v1189, 8
  %v1732 = vpop.permute.xlu0 %1731
  %1733 = vrot.lane.b32.xlu0 %v1190, 8
  %v1734 = vpop.permute.xlu0 %1733
  %1735 = vrot.lane.b32.xlu0 %v1191, 8
  %v1736 = vpop.permute.xlu0 %1735
  %1737 = vrot.lane.b32.xlu0 %v1722, 8
  %v1738 = vpop.permute.xlu0 %1737
  %v1741 = vsel %vm1444, %v1145, %v1724
  %v1744 = vsel %vm1444, %v1146, %v1726
  %v1747 = vsel %vm1444, %v1147, %v1728
  %v1750 = vsel %vm1444, %v1717, %v1730
  %v1753 = vsel %vm1444, %v1149, %v1732
  %v1756 = vsel %vm1444, %v1150, %v1734
  %v1759 = vsel %vm1444, %v1151, %v1736
  %v1762 = vsel %vm1444, %v1718, %v1738
  %v1763 = vld [vmem:[%s2] sm:$0xf]
  %v1764 = vld [vmem:[%s2 + $0x4] sm:$0xf]
  %v1765 = vld [vmem:[%s2 + $0x8] sm:$0xf]
  %v1766 = vld [vmem:[%s2 + $0xc] sm:$0xf]
  %v1767 = vld [vmem:[%s2 + $0x10] sm:$0xf]
  %v1768 = vld [vmem:[%s2 + $0x14] sm:$0xf]
  %v1769 = vld [vmem:[%s2 + $0x18] sm:$0xf]
  %v1770 = vld [vmem:[%s2 + $0x1c] sm:$0xf]
  %v1771 = vld [vmem:[%s2 + $0x20] sm:$0xf]
  %v1772 = vld [vmem:[%s2 + $0x24] sm:$0xf]
  %v1773 = vld [vmem:[%s2 + $0x28] sm:$0xf]
  %v1774 = vld [vmem:[%s2 + $0x2c] sm:$0xf]
  %v1775 = vld [vmem:[%s2 + $0x30] sm:$0xf]
  %v1776 = vld [vmem:[%s2 + $0x34] sm:$0xf]
  %v1777 = vld [vmem:[%s2 + $0x38] sm:$0xf]
  %v1778 = vld [vmem:[%s2 + $0x3c] sm:$0xf]
  %v1779 = vld [vmem:[%s2 + $0x40] sm:$0xf]
  %v1780 = vld [vmem:[%s2 + $0x44] sm:$0xf]
  %v1781 = vld [vmem:[%s3] sm:$0x1]
  %v1783 = vlaneseq
  %v1784 = vshrl.u32 %v1783, 7
  %v1785 = vsub.s32 0, %v1784
  %v1786 = vrot.slane %v1781, %v1785
  %v1806 = vunpack.c.l.b16 %v1763
  %v1807 = vunpack.c.l.b16 %v1764
  %v1808 = vunpack.c.l.b16 %v1765
  %v1809 = vunpack.c.l.b16 %v1766
  %v1810 = vunpack.c.l.b16 %v1767
  %v1811 = vunpack.c.l.b16 %v1768
  %v1812 = vunpack.c.l.b16 %v1769
  %v1813 = vunpack.c.l.b16 %v1770
  %v1814 = vunpack.c.l.b16 %v1771
  %v1815 = vunpack.c.l.b16 %v1772
  %v1816 = vunpack.c.l.b16 %v1773
  %v1817 = vunpack.c.l.b16 %v1774
  %v1818 = vunpack.c.l.b16 %v1775
  %v1819 = vunpack.c.l.b16 %v1776
  %v1820 = vunpack.c.l.b16 %v1777
  %v1821 = vunpack.c.l.b16 %v1778
  %v1822 = vunpack.c.l.b16 %v1779
  %v1823 = vunpack.c.l.b16 %v1780
  %v1824 = vpack.c.b16 %v1807, %v1806
  %v1825 = vpack.c.b16 %v1809, %v1808
  %v1826 = vpack.c.b16 %v1811, %v1810
  %v1827 = vpack.c.b16 %v1813, %v1812
  %v1828 = vpack.c.b16 %v1815, %v1814
  %v1829 = vpack.c.b16 %v1817, %v1816
  %v1830 = vpack.c.b16 %v1819, %v1818
  %v1831 = vpack.c.b16 %v1821, %v1820
  %v1832 = vpack.c.b16 %v1823, %v1822
  %v1842 = vsel %vm1469, %v1741, 0
  %v1844 = vsel %vm1469, %v1744, 0
  %v1846 = vsel %vm1469, %v1747, 0
  %v1848 = vsel %vm1469, %v1750, 0
  %v1850 = vsel %vm1469, %v1753, 0
  %v1852 = vsel %vm1469, %v1756, 0
  %v1854 = vsel %vm1469, %v1759, 0
  %v1856 = vsel %vm1469, %v1762, 0
  %1858 = vmatprep.subr.bf16.mxu0 0
  %1859 = vmatpush1.bf16.msra.mxu0 %v1831
  %1860 = vmatprep.subr.bf16.mxu0 0
  %1861 = vmatpush1.bf16.msra.mxu0 %v1830
  %1862 = vmatprep.subr.bf16.mxu0 0
  %1863 = vmatpush1.bf16.msra.mxu0 %v1829
  %1864 = vmatprep.subr.bf16.mxu0 0
  %1865 = vmatpush1.bf16.msra.mxu0 %v1828
  %1866 = vmatprep.subr.bf16.mxu0 0
  %1867 = vmatpush1.bf16.msra.mxu0 %v1827
  %1868 = vmatprep.subr.bf16.mxu0 0
  %1869 = vmatpush1.bf16.msra.mxu0 %v1826
  %1870 = vmatprep.subr.bf16.mxu0 0
  %1871 = vmatpush1.bf16.msra.mxu0 %v1825
  %1872 = vmatprep.subr.bf16.mxu0 0
  %1873 = vmatpush1.bf16.msra.mxu0 %v1824
  %1874 = vmatprep.subr.bf16.mxu0 0
  %1875 = vmatpush2.bf16.msra.mxu0 0
  %1876 = vmatprep.subr.bf16.mxu0 0
  %1877 = vmatpush2.bf16.msra.mxu0 0
  %1878 = vmatprep.subr.bf16.mxu0 0
  %1879 = vmatpush2.bf16.msra.mxu0 0
  %1880 = vmatprep.subr.bf16.mxu0 0
  %1881 = vmatpush2.bf16.msra.mxu0 0
  %1882 = vmatprep.subr.bf16.mxu0 0
  %1883 = vmatpush2.bf16.msra.mxu0 0
  %1884 = vmatprep.subr.bf16.mxu0 0
  %1885 = vmatpush2.bf16.msra.mxu0 0
  %1886 = vmatprep.subr.bf16.mxu0 0
  %1887 = vmatpush2.bf16.msra.mxu0 0
  %1888 = vmatprep.subr.bf16.mxu0 0
  %1889 = vmatpush2.bf16.msra.mxu0 %v1832
  %1890 = vmatprep.mubr.bf16.mxu0 %v1842
  %1891 = vmatmul.mubr.bf16.gmra.mxu0 %v1692
  %v1892 = vpop.f32.mrf.mxu0
  %v1893 = vadd.f32 %v1786, %v1892
  %v1894 = vpop.f32.mrf.mxu0
  %v1895 = vpop.f32.mrf.mxu0
  %v1896 = vadd.f32 %v1786, %v1895
  %v1897 = vpop.f32.mrf.mxu0
  %1898 = vmatprep.mubr.bf16.mxu0 %v1844
  %1899 = vmatmul.mubr.bf16.gmra.mxu0 %v1695
  %v1900 = vpop.f32.mrf.mxu0
  %v1901 = vadd.f32 %v1786, %v1900
  %v1902 = vpop.f32.mrf.mxu0
  %v1903 = vpop.f32.mrf.mxu0
  %v1904 = vadd.f32 %v1786, %v1903
  %v1905 = vpop.f32.mrf.mxu0
  %1906 = vmatprep.mubr.bf16.mxu0 %v1846
  %1907 = vmatmul.mubr.bf16.gmra.mxu0 %v1698
  %v1908 = vpop.f32.mrf.mxu0
  %v1909 = vadd.f32 %v1786, %v1908
  %v1910 = vpop.f32.mrf.mxu0
  %v1911 = vpop.f32.mrf.mxu0
  %v1912 = vadd.f32 %v1786, %v1911
  %v1913 = vpop.f32.mrf.mxu0
  %1914 = vmatprep.mubr.bf16.mxu0 %v1848
  %1915 = vmatmul.mubr.bf16.gmra.mxu0 %v1701
  %v1916 = vpop.f32.mrf.mxu0
  %v1917 = vadd.f32 %v1786, %v1916
  %v1918 = vpop.f32.mrf.mxu0
  %v1919 = vpop.f32.mrf.mxu0
  %v1920 = vadd.f32 %v1786, %v1919
  %v1921 = vpop.f32.mrf.mxu0
  %1922 = vmatprep.mubr.bf16.mxu0 %v1850
  %1923 = vmatmul.mubr.bf16.gmra.mxu0 %v1704
  %v1924 = vpop.f32.mrf.mxu0
  %v1925 = vadd.f32 %v1786, %v1924
  %v1926 = vpop.f32.mrf.mxu0
  %v1927 = vpop.f32.mrf.mxu0
  %v1928 = vadd.f32 %v1786, %v1927
  %v1929 = vpop.f32.mrf.mxu0
  %1930 = vmatprep.mubr.bf16.mxu0 %v1852
  %1931 = vmatmul.mubr.bf16.gmra.mxu0 %v1707
  %v1932 = vpop.f32.mrf.mxu0
  %v1933 = vadd.f32 %v1786, %v1932
  %v1934 = vpop.f32.mrf.mxu0
  %v1935 = vpop.f32.mrf.mxu0
  %v1936 = vadd.f32 %v1786, %v1935
  %v1937 = vpop.f32.mrf.mxu0
  %1938 = vmatprep.mubr.bf16.mxu0 %v1854
  %1939 = vmatmul.mubr.bf16.gmra.mxu0 %v1710
  %v1940 = vpop.f32.mrf.mxu0
  %v1941 = vadd.f32 %v1786, %v1940
  %v1942 = vpop.f32.mrf.mxu0
  %v1943 = vpop.f32.mrf.mxu0
  %v1944 = vadd.f32 %v1786, %v1943
  %v1945 = vpop.f32.mrf.mxu0
  %1946 = vmatprep.mubr.bf16.mxu0 %v1856
  %1947 = vmatmul.mubr.bf16.gmra.mxu0 %v1713
  %v1948 = vpop.f32.mrf.mxu0
  %v1949 = vadd.f32 %v1786, %v1948
  %v1950 = vpop.f32.mrf.mxu0
  %v1951 = vpop.f32.mrf.mxu0
  %v1952 = vadd.f32 %v1786, %v1951
  %v1953 = vpop.f32.mrf.mxu0
  %1954 = vdwg.mxu0
  %v1955 = vtanh.pop %v1893
  %v1956 = vtanh.pop %v1896
  %v1957 = vtanh.pop %v1901
  %v1958 = vtanh.pop %v1904
  %v1959 = vtanh.pop %v1909
  %v1960 = vtanh.pop %v1912
  %v1961 = vtanh.pop %v1917
  %v1962 = vtanh.pop %v1920
  %v1963 = vtanh.pop %v1925
  %v1964 = vtanh.pop %v1928
  %v1965 = vtanh.pop %v1933
  %v1966 = vtanh.pop %v1936
  %v1967 = vtanh.pop %v1941
  %v1968 = vtanh.pop %v1944
  %v1969 = vtanh.pop %v1949
  %v1970 = vtanh.pop %v1952
  %1971 = vst.msk [vmem:[%s4] sm:$0xff] %vm1444, %v1955
  %1972 = vst.msk [vmem:[%s4 + $0x8] sm:$0xff] %vm1444, %v1956
  %1973 = vst.msk [vmem:[%s4 + $0x10] sm:$0xff] %vm1444, %v1957
  %1974 = vst.msk [vmem:[%s4 + $0x18] sm:$0xff] %vm1444, %v1958
  %1975 = vst.msk [vmem:[%s4 + $0x20] sm:$0xff] %vm1444, %v1959
  %1976 = vst.msk [vmem:[%s4 + $0x28] sm:$0xff] %vm1444, %v1960
  %1977 = vst.msk [vmem:[%s4 + $0x30] sm:$0xff] %vm1444, %v1961
  %1978 = vst.msk [vmem:[%s4 + $0x38] sm:$0xff] %vm1444, %v1962
  %1979 = vst.msk [vmem:[%s4 + $0x40] sm:$0xff] %vm1444, %v1963
  %1980 = vst.msk [vmem:[%s4 + $0x48] sm:$0xff] %vm1444, %v1964
  %1981 = vst.msk [vmem:[%s4 + $0x50] sm:$0xff] %vm1444, %v1965
  %1982 = vst.msk [vmem:[%s4 + $0x58] sm:$0xff] %vm1444, %v1966
  %1983 = vst.msk [vmem:[%s4 + $0x60] sm:$0xff] %vm1444, %v1967
  %1984 = vst.msk [vmem:[%s4 + $0x68] sm:$0xff] %vm1444, %v1968
  %1985 = vst.msk [vmem:[%s4 + $0x70] sm:$0xff] %vm1444, %v1969
  %1986 = vst.msk [vmem:[%s4 + $0x78] sm:$0xff] %vm1444, %v1970
  // Predicated region
  $region18: #{_lambda_.15} parent=0 // pred_check
    _
  $region19: #{_lambda_.15} parent=0 // pred_check_branch
    %1988 = sbr.rel (0) target = $region21
  $region20: #{_lambda_.15} parent=0 // pred_region
    _
  $region21: #{_lambda_.15} parent=0 // pred_fallthru
    _
  // Predicated region
  $region22: #{_lambda_.15} parent=0 // pred_check
    _
  $region23: #{_lambda_.15} parent=0 // pred_check_branch
    %1990 = sbr.rel (0) target = $region25
  $region24: #{_lambda_.15} parent=0 // pred_region
    _
  $region25: #{_lambda_.15} parent=0 // pred_fallthru
    _

</llo_original>
